<compile_context>
chip_gen: v6e
topology: v6e:2x2x1
jax: 0.10.0
libtpu: 0.0.40
codegen_flags: <defaults>
</compile_context>

<pallas_src>
import numpy as np
import jax
import jax.numpy as jnp
from jax import lax
from jax.experimental import pallas as pl
from jax.experimental.pallas import tpu as pltpu

LANES = 128   # all channel / feature dims are padded to the lane width
G = 8         # rows reserved per pool-2 spatial slot (keeps every slice 8-aligned)
NCLS = 10


def _full_spec(shape):
    # Whole-array block (no grid): everything lives in VMEM for the single step.
    return pl.BlockSpec(shape, lambda: (0,) * len(shape))


def _geometry(B):
    """Pool-1 row-space geometry (rows are (b, ph, pw) flattened, 12x12 grid)."""
    q1r = B * 144                          # real pool-1 rows
    # conv2 gather-slice length: must cover shifted index (q1r-53)+7 and be a
    # multiple of 128 so every bf16 matmul operand is exactly tile-aligned.
    L = -(-(q1r - 45) // 128) * 128
    pad1 = max(0, 48 + L - q1r)            # junk rows appended so slices fit
    q1 = q1r + pad1
    return q1r, q1, L


# ------------------------------ fused kernel --------------------------------

def _lenet_fused_kernel(xcol_ref, sel_ref, w1_ref, b1_ref, w2_ref, b2_ref,
                        wf1_ref, bf1_ref, wf2_ref, bf2_ref, out_ref):
    f32 = jnp.float32
    bf16 = jnp.bfloat16
    q1 = xcol_ref.shape[0] // 4            # pool-1 rows (incl. junk pad rows)
    n_rho, r2, L = sel_ref.shape           # 8 residual groups, 4*q2, slice len
    q2 = r2 // 4
    g = q2 // 16                           # == G: rows per pool-2 spatial slot

    # ---- conv1 (one bf16 im2col matmul) + bias + relu ------------------------
    y1 = jnp.dot(xcol_ref[...], w1_ref[...], preferred_element_type=f32)
    y1 = jnp.maximum(y1 + b1_ref[...], 0.0)                        # (4*q1, 128)

    # ---- pool1: rows were emitted in (hp, wp, b, ph, pw) parity order, so the
    #      2x2 max-pool is an elementwise max of 4 contiguous aligned blocks.
    p1 = jnp.maximum(jnp.maximum(y1[0:q1], y1[q1:2 * q1]),
                     jnp.maximum(y1[2 * q1:3 * q1], y1[3 * q1:4 * q1]))  # (q1,128)

    # ---- conv2 stage 1: ONE lane-dense bf16 matmul computes every tap's
    #      channel mix for every pool1 position:
    #      z[p, k*128 + co] = p1[p, :] . w2[k][:, co]
    z = jnp.dot(p1.astype(bf16), w2_ref[...], preferred_element_type=f32)  # (q1, 25*128)

    # ---- conv2 stage 2: tap k needs row p + s_k (s_k = 12*i + j).  The
    #      8-aligned part of s_k is a static aligned row-slice of z; taps are
    #      grouped by the sub-8 residual, which the precomputed one-hot
    #      selection matrices sel_ref[rho] absorb in their columns.
    zgrp = [None] * n_rho
    for k in range(25):
        i, j = divmod(k, 5)
        s_k = 12 * i + j                     # spatial shift in p1 row space
        a8 = (s_k // 8) * 8                  # 8-aligned part of the shift
        rho = s_k % 8                        # residual -> selection group
        piece = z[a8:a8 + L, k * LANES:(k + 1) * LANES]
        zgrp[rho] = piece if zgrp[rho] is None else zgrp[rho] + piece

    acc2 = jnp.zeros((r2, LANES), f32)
    for rho in range(n_rho):
        if zgrp[rho] is None:
            continue
        acc2 = acc2 + jnp.dot(sel_ref[rho], zgrp[rho].astype(bf16),
                              preferred_element_type=f32)
    y2 = jnp.maximum(acc2 + b2_ref[...], 0.0)                      # (r2, 128)

    # ---- pool2: max of the 4 contiguous parity quarters ----------------------
    p2 = jnp.maximum(jnp.maximum(y2[0:q2], y2[q2:2 * q2]),
                     jnp.maximum(y2[2 * q2:3 * q2], y2[3 * q2:4 * q2]))  # (q2,128)

    # ---- fc1: 16 per-spatial-slot dots; the torch flatten order (c*16 + slot)
    #      is folded into wf1 at init.  Slices are g(=8)-row aligned.
    h = None
    for slot in range(16):
        part = jnp.dot(p2[slot * g:(slot + 1) * g].astype(bf16), wf1_ref[slot],
                       preferred_element_type=f32)
        h = part if h is None else h + part
    h = jnp.maximum(h + bf1_ref[...], 0.0)                         # (g, 128)

    # ---- fc2 + log_softmax over the 10 real classes (padded lanes -> -1e30) --
    logits = jnp.dot(h.astype(bf16), wf2_ref[...],
                     preferred_element_type=f32) + bf2_ref[...]
    lane = lax.broadcasted_iota(jnp.int32, logits.shape, 1)
    masked = jnp.where(lane < NCLS, logits, -1e30)
    mx = jnp.max(masked, axis=-1, keepdims=True)
    sh = masked - mx
    lse = jnp.log(jnp.sum(jnp.exp(sh), axis=-1, keepdims=True))
    out_ref[...] = sh - lse                                        # (g, 128)


# ------------------------- static tables (built once) ------------------------

def _build_conv1_gather_index(B):
    """(4*q1, 32) int32: xcol[r, i*5+j] = x_flat[idx[r, i*5+j]].

    Row order (hp, wp, b, ph, pw) so pool1 is a max of 4 contiguous blocks.
    Junk pad rows / pad columns point at element 0 (absorbed by zero weights).
    """
    q1r, q1, _ = _geometry(B)
    idx = np.zeros((4 * q1, 32), np.int32)
    for hp in range(2):
        for wp in range(2):
            qbase = (hp * 2 + wp) * q1
            for b in range(B):
                for ph in range(12):
                    for pw in range(12):
                        r = qbase + b * 144 + ph * 12 + pw
                        for i in range(5):
                            for j in range(5):
                                idx[r, i * 5 + j] = (b * 784
                                                     + (2 * ph + hp + i) * 28
                                                     + (2 * pw + wp + j))
    return jnp.asarray(idx)


def _build_conv2_selects(B):
    """(8, 4*16*G, L) bf16 one-hot selection matrices for conv2's output rows.

    Output row r = (hp*2+wp)*16*G + (ph2*4+pw2)*G + b (pool2-parity quartered,
    slot-major so fc1 slices are 8-aligned); column = base(r) + rho where
    base(r) = b*144 + (2*ph2+hp)*12 + (2*pw2+wp) and rho is the sub-8 residual
    handled by group rho.  Rows with b >= B stay all-zero (padding).
    """
    _, _, L = _geometry(B)
    q2 = 16 * G
    sel = np.zeros((8, 4 * q2, L), np.float32)
    for hp in range(2):
        for wp in range(2):
            qbase = (hp * 2 + wp) * q2
            for ph2 in range(4):
                for pw2 in range(4):
                    slot = ph2 * 4 + pw2
                    for b in range(B):
                        r = qbase + slot * G + b
                        base = b * 144 + (2 * ph2 + hp) * 12 + (2 * pw2 + wp)
                        for rho in range(8):
                            sel[rho, r, base + rho] = 1.0
    return jnp.asarray(sel, dtype=jnp.bfloat16)


def prepare_params(params):
    """Pad / transpose / pack the PyTorch-layout weights once, at init (bf16)."""
    w1, b1, w2, b2, fw1, fb1, fw2, fb2 = params
    f32, bf16 = jnp.float32, jnp.bfloat16
    # conv1: (25 -> 32 K rows, 10 -> 128 out lanes)
    w1p = (jnp.zeros((32, LANES), f32).at[:25, :10]
           .set(w1.reshape(10, 25).T)).astype(bf16)
    b1p = jnp.zeros((1, LANES), f32).at[0, :10].set(b1)
    # conv2: W2_all[cin, k*128 + cout] = w2[cout, cin, i, j],  k = i*5 + j
    w2t = jnp.transpose(w2.reshape(20, 10, 25), (1, 2, 0))           # (10,25,20)
    w2all = (jnp.pad(w2t, ((0, 118), (0, 0), (0, 108)))
             .reshape(LANES, 25 * LANES).astype(bf16))
    b2p = jnp.zeros((1, LANES), f32).at[0, :20].set(b2)
    # fc1: per-slot weights  wf1p[s, c, o] = fw1[o, c*16 + s]
    wf1t = jnp.transpose(fw1.reshape(50, 20, 16), (2, 1, 0))         # (16,20,50)
    wf1p = jnp.pad(wf1t, ((0, 0), (0, 108), (0, 78))).astype(bf16)   # (16,128,128)
    bf1p = jnp.zeros((1, LANES), f32).at[0, :50].set(fb1)
    # fc2
    wf2p = (jnp.zeros((LANES, LANES), f32).at[:50, :10].set(fw2.T)).astype(bf16)
    bf2p = jnp.zeros((1, LANES), f32).at[0, :10].set(fb2)
    return (w1p, b1p, w2all, b2p, wf1p, bf1p, wf2p, bf2p)


# ------------------------------ model forward --------------------------------

def custom_model_forward(x, prepped, gather_idx, sel):
    B = x.shape[0]
    assert B <= G, "add a batch grid for B > 8 (see TODO at top of file)"
    w1p, b1p, w2all, b2p, wf1p, bf1p, wf2p, bf2p = prepped
    # TODO(synk): conv1's 5x5 patch extraction stays as ONE static jnp.take
    # gather in the wrapper (6 KB input); everything else is in the kernel.
    xcol = jnp.take(x.reshape(-1).astype(jnp.bfloat16), gather_idx)  # (4*q1, 32)
    out = pl.pallas_call(
        _lenet_fused_kernel,
        out_shape=jax.ShapeDtypeStruct((G, LANES), jnp.float32),
        in_specs=[_full_spec(xcol.shape), _full_spec(sel.shape),
                  _full_spec(w1p.shape), _full_spec(b1p.shape),
                  _full_spec(w2all.shape), _full_spec(b2p.shape),
                  _full_spec(wf1p.shape), _full_spec(bf1p.shape),
                  _full_spec(wf2p.shape), _full_spec(bf2p.shape)],
        out_specs=_full_spec((G, LANES)),
        compiler_params=pltpu.CompilerParams(
            vmem_limit_bytes=32 * 1024 * 1024),
    )(xcol, sel, w1p, b1p, w2all, b2p, wf1p, bf1p, wf2p, bf2p)
    return out[:B, :NCLS]


# --------------------------- params / reference ------------------------------

def init_params(key):
    ks = jax.random.split(key, 8)

    def u(k, shape, fan_in):
        bound = 1.0 / (fan_in ** 0.5)
        return jax.random.uniform(k, shape, jnp.float32, -bound, bound)

    w1 = u(ks[0], (10, 1, 5, 5), 1 * 5 * 5)
    b1 = u(ks[1], (10,), 1 * 5 * 5)
    w2 = u(ks[2], (20, 10, 5, 5), 10 * 5 * 5)
    b2 = u(ks[3], (20,), 10 * 5 * 5)
    fw1 = u(ks[4], (50, 320), 320)
    fb1 = u(ks[5], (50,), 320)
    fw2 = u(ks[6], (10, 50), 50)
    fb2 = u(ks[7], (10,), 50)
    return (w1, b1, w2, b2, fw1, fb1, fw2, fb2)


def reference_forward(x, params):
    (w1, b1, w2, b2, fw1, fb1, fw2, fb2) = params
    dn = ("NCHW", "OIHW", "NCHW")
    y = lax.conv_general_dilated(x, w1, (1, 1), "VALID", dimension_numbers=dn)
    y = jax.nn.relu(y + b1[None, :, None, None])
    y = lax.reduce_window(y, -jnp.inf, lax.max, (1, 1, 2, 2), (1, 1, 2, 2), "VALID")
    y = lax.conv_general_dilated(y, w2, (1, 1), "VALID", dimension_numbers=dn)
    y = jax.nn.relu(y + b2[None, :, None, None])
    y = lax.reduce_window(y, -jnp.inf, lax.max, (1, 1, 2, 2), (1, 1, 2, 2), "VALID")
    y = y.reshape(y.shape[0], -1)
    y = jax.nn.relu(y @ fw1.T + fb1)
    y = y @ fw2.T + fb2
    return jax.nn.log_softmax(y, axis=1)


# ---------------------------------- main --------------------------------------

if __name__ == "__main__":
    key = jax.random.PRNGKey(0)
    pkey, xkey = jax.random.split(key)
    params = init_params(pkey)
    prepped = prepare_params(params)            # pad / pack / cast weights once

    # fc1 in_features = 320 = 20*4*4  =>  input must be (B, 1, 28, 28)
    B = 2
    x = jax.random.normal(xkey, (B, 1, 28, 28), jnp.float32)
    gather_idx = _build_conv1_gather_index(B)   # static conv1 im2col gather table
    sel = _build_conv2_selects(B)               # static conv2 selection one-hots

    fwd = jax.jit(custom_model_forward)
    out = jax.block_until_ready(fwd(x, prepped, gather_idx, sel))

    ref = reference_forward(x, params)
    assert out.shape == (B, 10), out.shape
    assert bool(jnp.all(jnp.isfinite(out)))
    assert bool(jnp.allclose(out, ref, atol=2e-2, rtol=2e-2)), (
        float(jnp.max(jnp.abs(out - ref))))
    print("KERNEL_OK")
</pallas_src>

<mosaic_0001>
module attributes {stable_mosaic.version = 11 : i64} {
  func.func @_lenet_fused_kernel(%arg0: memref<1216x32xbf16, #tpu.memory_space<vmem>>, %arg1: memref<8x512x256xbf16, #tpu.memory_space<vmem>>, %arg2: memref<32x128xbf16, #tpu.memory_space<vmem>>, %arg3: memref<1x128xf32, #tpu.memory_space<vmem>>, %arg4: memref<128x3200xbf16, #tpu.memory_space<vmem>>, %arg5: memref<1x128xf32, #tpu.memory_space<vmem>>, %arg6: memref<16x128x128xbf16, #tpu.memory_space<vmem>>, %arg7: memref<1x128xf32, #tpu.memory_space<vmem>>, %arg8: memref<128x128xbf16, #tpu.memory_space<vmem>>, %arg9: memref<1x128xf32, #tpu.memory_space<vmem>>, %arg10: memref<8x128xf32, #tpu.memory_space<vmem>>) attributes {dimension_semantics = [], scalar_prefetch = 0 : i64, scratch_operands = 0 : i64, tpu.core_type = #tpu.core_type<tc>} {
    %c0 = arith.constant 0 : index
    %c0_0 = arith.constant 0 : index
    %0 = vector.load %arg0[%c0, %c0_0] : memref<1216x32xbf16, #tpu.memory_space<vmem>>, vector<1216x32xbf16>
    %c0_1 = arith.constant 0 : index
    %c0_2 = arith.constant 0 : index
    %1 = vector.load %arg2[%c0_1, %c0_2] : memref<32x128xbf16, #tpu.memory_space<vmem>>, vector<32x128xbf16>
    %cst = arith.constant dense<0.000000e+00> : vector<1216x128xf32>
    %2 = tpu.matmul %0, %1, %cst {dimension_numbers = #tpu.dot_dimension_numbers<[1], [0], [0], [1], [0, 0, 1, 1], [], []>} : vector<1216x32xbf16>, vector<32x128xbf16>, vector<1216x128xf32> -> vector<1216x128xf32>
    %c0_3 = arith.constant 0 : index
    %c0_4 = arith.constant 0 : index
    %3 = vector.load %arg3[%c0_3, %c0_4] : memref<1x128xf32, #tpu.memory_space<vmem>>, vector<1x128xf32>
    %4 = vector.broadcast %3 : vector<1x128xf32> to vector<1216x128xf32>
    %5 = arith.addf %2, %4 : vector<1216x128xf32>
    %cst_5 = arith.constant 0.000000e+00 : f32
    %6 = vector.broadcast %cst_5 : f32 to vector<1216x128xf32>
    %7 = arith.maximumf %5, %6 : vector<1216x128xf32>
    %8 = vector.extract_strided_slice %7 {offsets = [0, 0], sizes = [304, 128], strides = [1, 1]} : vector<1216x128xf32> to vector<304x128xf32>
    %9 = vector.extract_strided_slice %7 {offsets = [304, 0], sizes = [304, 128], strides = [1, 1]} : vector<1216x128xf32> to vector<304x128xf32>
    %10 = arith.maximumf %8, %9 : vector<304x128xf32>
    %11 = vector.extract_strided_slice %7 {offsets = [608, 0], sizes = [304, 128], strides = [1, 1]} : vector<1216x128xf32> to vector<304x128xf32>
    %12 = vector.extract_strided_slice %7 {offsets = [912, 0], sizes = [304, 128], strides = [1, 1]} : vector<1216x128xf32> to vector<304x128xf32>
    %13 = arith.maximumf %11, %12 : vector<304x128xf32>
    %14 = arith.maximumf %10, %13 : vector<304x128xf32>
    %15 = arith.truncf %14 : vector<304x128xf32> to vector<304x128xbf16>
    %c0_6 = arith.constant 0 : index
    %c0_7 = arith.constant 0 : index
    %16 = vector.load %arg4[%c0_6, %c0_7] : memref<128x3200xbf16, #tpu.memory_space<vmem>>, vector<128x3200xbf16>
    %cst_8 = arith.constant dense<0.000000e+00> : vector<304x3200xf32>
    %17 = tpu.matmul %15, %16, %cst_8 {dimension_numbers = #tpu.dot_dimension_numbers<[1], [0], [0], [1], [0, 0, 1, 1], [], []>} : vector<304x128xbf16>, vector<128x3200xbf16>, vector<304x3200xf32> -> vector<304x3200xf32>
    %18 = vector.extract_strided_slice %17 {offsets = [0, 0], sizes = [256, 128], strides = [1, 1]} : vector<304x3200xf32> to vector<256x128xf32>
    %19 = vector.extract_strided_slice %17 {offsets = [0, 128], sizes = [256, 128], strides = [1, 1]} : vector<304x3200xf32> to vector<256x128xf32>
    %20 = vector.extract_strided_slice %17 {offsets = [0, 256], sizes = [256, 128], strides = [1, 1]} : vector<304x3200xf32> to vector<256x128xf32>
    %21 = vector.extract_strided_slice %17 {offsets = [0, 384], sizes = [256, 128], strides = [1, 1]} : vector<304x3200xf32> to vector<256x128xf32>
    %22 = vector.extract_strided_slice %17 {offsets = [0, 512], sizes = [256, 128], strides = [1, 1]} : vector<304x3200xf32> to vector<256x128xf32>
    %23 = vector.extract_strided_slice %17 {offsets = [8, 640], sizes = [256, 128], strides = [1, 1]} : vector<304x3200xf32> to vector<256x128xf32>
    %24 = arith.addf %22, %23 : vector<256x128xf32>
    %25 = vector.extract_strided_slice %17 {offsets = [8, 768], sizes = [256, 128], strides = [1, 1]} : vector<304x3200xf32> to vector<256x128xf32>
    %26 = vector.extract_strided_slice %17 {offsets = [8, 896], sizes = [256, 128], strides = [1, 1]} : vector<304x3200xf32> to vector<256x128xf32>
    %27 = vector.extract_strided_slice %17 {offsets = [8, 1024], sizes = [256, 128], strides = [1, 1]} : vector<304x3200xf32> to vector<256x128xf32>
    %28 = vector.extract_strided_slice %17 {offsets = [16, 1152], sizes = [256, 128], strides = [1, 1]} : vector<304x3200xf32> to vector<256x128xf32>
    %29 = arith.addf %18, %28 : vector<256x128xf32>
    %30 = vector.extract_strided_slice %17 {offsets = [24, 1280], sizes = [256, 128], strides = [1, 1]} : vector<304x3200xf32> to vector<256x128xf32>
    %31 = arith.addf %29, %30 : vector<256x128xf32>
    %32 = vector.extract_strided_slice %17 {offsets = [24, 1408], sizes = [256, 128], strides = [1, 1]} : vector<304x3200xf32> to vector<256x128xf32>
    %33 = arith.addf %19, %32 : vector<256x128xf32>
    %34 = vector.extract_strided_slice %17 {offsets = [24, 1536], sizes = [256, 128], strides = [1, 1]} : vector<304x3200xf32> to vector<256x128xf32>
    %35 = arith.addf %20, %34 : vector<256x128xf32>
    %36 = vector.extract_strided_slice %17 {offsets = [24, 1664], sizes = [256, 128], strides = [1, 1]} : vector<304x3200xf32> to vector<256x128xf32>
    %37 = arith.addf %21, %36 : vector<256x128xf32>
    %38 = vector.extract_strided_slice %17 {offsets = [24, 1792], sizes = [256, 128], strides = [1, 1]} : vector<304x3200xf32> to vector<256x128xf32>
    %39 = arith.addf %24, %38 : vector<256x128xf32>
    %40 = vector.extract_strided_slice %17 {offsets = [32, 1920], sizes = [256, 128], strides = [1, 1]} : vector<304x3200xf32> to vector<256x128xf32>
    %41 = arith.addf %39, %40 : vector<256x128xf32>
    %42 = vector.extract_strided_slice %17 {offsets = [32, 2048], sizes = [256, 128], strides = [1, 1]} : vector<304x3200xf32> to vector<256x128xf32>
    %43 = arith.addf %25, %42 : vector<256x128xf32>
    %44 = vector.extract_strided_slice %17 {offsets = [32, 2176], sizes = [256, 128], strides = [1, 1]} : vector<304x3200xf32> to vector<256x128xf32>
    %45 = arith.addf %26, %44 : vector<256x128xf32>
    %46 = vector.extract_strided_slice %17 {offsets = [32, 2304], sizes = [256, 128], strides = [1, 1]} : vector<304x3200xf32> to vector<256x128xf32>
    %47 = arith.addf %27, %46 : vector<256x128xf32>
    %48 = vector.extract_strided_slice %17 {offsets = [40, 2432], sizes = [256, 128], strides = [1, 1]} : vector<304x3200xf32> to vector<256x128xf32>
    %49 = arith.addf %31, %48 : vector<256x128xf32>
    %50 = vector.extract_strided_slice %17 {offsets = [48, 2560], sizes = [256, 128], strides = [1, 1]} : vector<304x3200xf32> to vector<256x128xf32>
    %51 = arith.addf %49, %50 : vector<256x128xf32>
    %52 = vector.extract_strided_slice %17 {offsets = [48, 2688], sizes = [256, 128], strides = [1, 1]} : vector<304x3200xf32> to vector<256x128xf32>
    %53 = arith.addf %33, %52 : vector<256x128xf32>
    %54 = vector.extract_strided_slice %17 {offsets = [48, 2816], sizes = [256, 128], strides = [1, 1]} : vector<304x3200xf32> to vector<256x128xf32>
    %55 = arith.addf %35, %54 : vector<256x128xf32>
    %56 = vector.extract_strided_slice %17 {offsets = [48, 2944], sizes = [256, 128], strides = [1, 1]} : vector<304x3200xf32> to vector<256x128xf32>
    %57 = arith.addf %37, %56 : vector<256x128xf32>
    %58 = vector.extract_strided_slice %17 {offsets = [48, 3072], sizes = [256, 128], strides = [1, 1]} : vector<304x3200xf32> to vector<256x128xf32>
    %59 = arith.addf %41, %58 : vector<256x128xf32>
    %cst_9 = arith.constant 0.000000e+00 : f32
    %60 = vector.broadcast %cst_9 : f32 to vector<512x128xf32>
    %c0_10 = arith.constant 0 : index
    %c0_11 = arith.constant 0 : index
    %c0_12 = arith.constant 0 : index
    %61 = vector.load %arg1[%c0_10, %c0_11, %c0_12] : memref<8x512x256xbf16, #tpu.memory_space<vmem>>, vector<1x512x256xbf16>
    %62 = vector.shape_cast %61 : vector<1x512x256xbf16> to vector<512x256xbf16>
    %63 = arith.truncf %51 : vector<256x128xf32> to vector<256x128xbf16>
    %cst_13 = arith.constant dense<0.000000e+00> : vector<512x128xf32>
    %64 = tpu.matmul %62, %63, %cst_13 {dimension_numbers = #tpu.dot_dimension_numbers<[1], [0], [0], [1], [0, 0, 1, 1], [], []>} : vector<512x256xbf16>, vector<256x128xbf16>, vector<512x128xf32> -> vector<512x128xf32>
    %65 = arith.addf %60, %64 : vector<512x128xf32>
    %c1 = arith.constant 1 : index
    %c0_14 = arith.constant 0 : index
    %c0_15 = arith.constant 0 : index
    %66 = vector.load %arg1[%c1, %c0_14, %c0_15] : memref<8x512x256xbf16, #tpu.memory_space<vmem>>, vector<1x512x256xbf16>
    %67 = vector.shape_cast %66 : vector<1x512x256xbf16> to vector<512x256xbf16>
    %68 = arith.truncf %53 : vector<256x128xf32> to vector<256x128xbf16>
    %cst_16 = arith.constant dense<0.000000e+00> : vector<512x128xf32>
    %69 = tpu.matmul %67, %68, %cst_16 {dimension_numbers = #tpu.dot_dimension_numbers<[1], [0], [0], [1], [0, 0, 1, 1], [], []>} : vector<512x256xbf16>, vector<256x128xbf16>, vector<512x128xf32> -> vector<512x128xf32>
    %70 = arith.addf %65, %69 : vector<512x128xf32>
    %c2 = arith.constant 2 : index
    %c0_17 = arith.constant 0 : index
    %c0_18 = arith.constant 0 : index
    %71 = vector.load %arg1[%c2, %c0_17, %c0_18] : memref<8x512x256xbf16, #tpu.memory_space<vmem>>, vector<1x512x256xbf16>
    %72 = vector.shape_cast %71 : vector<1x512x256xbf16> to vector<512x256xbf16>
    %73 = arith.truncf %55 : vector<256x128xf32> to vector<256x128xbf16>
    %cst_19 = arith.constant dense<0.000000e+00> : vector<512x128xf32>
    %74 = tpu.matmul %72, %73, %cst_19 {dimension_numbers = #tpu.dot_dimension_numbers<[1], [0], [0], [1], [0, 0, 1, 1], [], []>} : vector<512x256xbf16>, vector<256x128xbf16>, vector<512x128xf32> -> vector<512x128xf32>
    %75 = arith.addf %70, %74 : vector<512x128xf32>
    %c3 = arith.constant 3 : index
    %c0_20 = arith.constant 0 : index
    %c0_21 = arith.constant 0 : index
    %76 = vector.load %arg1[%c3, %c0_20, %c0_21] : memref<8x512x256xbf16, #tpu.memory_space<vmem>>, vector<1x512x256xbf16>
    %77 = vector.shape_cast %76 : vector<1x512x256xbf16> to vector<512x256xbf16>
    %78 = arith.truncf %57 : vector<256x128xf32> to vector<256x128xbf16>
    %cst_22 = arith.constant dense<0.000000e+00> : vector<512x128xf32>
    %79 = tpu.matmul %77, %78, %cst_22 {dimension_numbers = #tpu.dot_dimension_numbers<[1], [0], [0], [1], [0, 0, 1, 1], [], []>} : vector<512x256xbf16>, vector<256x128xbf16>, vector<512x128xf32> -> vector<512x128xf32>
    %80 = arith.addf %75, %79 : vector<512x128xf32>
    %c4 = arith.constant 4 : index
    %c0_23 = arith.constant 0 : index
    %c0_24 = arith.constant 0 : index
    %81 = vector.load %arg1[%c4, %c0_23, %c0_24] : memref<8x512x256xbf16, #tpu.memory_space<vmem>>, vector<1x512x256xbf16>
    %82 = vector.shape_cast %81 : vector<1x512x256xbf16> to vector<512x256xbf16>
    %83 = arith.truncf %59 : vector<256x128xf32> to vector<256x128xbf16>
    %cst_25 = arith.constant dense<0.000000e+00> : vector<512x128xf32>
    %84 = tpu.matmul %82, %83, %cst_25 {dimension_numbers = #tpu.dot_dimension_numbers<[1], [0], [0], [1], [0, 0, 1, 1], [], []>} : vector<512x256xbf16>, vector<256x128xbf16>, vector<512x128xf32> -> vector<512x128xf32>
    %85 = arith.addf %80, %84 : vector<512x128xf32>
    %c5 = arith.constant 5 : index
    %c0_26 = arith.constant 0 : index
    %c0_27 = arith.constant 0 : index
    %86 = vector.load %arg1[%c5, %c0_26, %c0_27] : memref<8x512x256xbf16, #tpu.memory_space<vmem>>, vector<1x512x256xbf16>
    %87 = vector.shape_cast %86 : vector<1x512x256xbf16> to vector<512x256xbf16>
    %88 = arith.truncf %43 : vector<256x128xf32> to vector<256x128xbf16>
    %cst_28 = arith.constant dense<0.000000e+00> : vector<512x128xf32>
    %89 = tpu.matmul %87, %88, %cst_28 {dimension_numbers = #tpu.dot_dimension_numbers<[1], [0], [0], [1], [0, 0, 1, 1], [], []>} : vector<512x256xbf16>, vector<256x128xbf16>, vector<512x128xf32> -> vector<512x128xf32>
    %90 = arith.addf %85, %89 : vector<512x128xf32>
    %c6 = arith.constant 6 : index
    %c0_29 = arith.constant 0 : index
    %c0_30 = arith.constant 0 : index
    %91 = vector.load %arg1[%c6, %c0_29, %c0_30] : memref<8x512x256xbf16, #tpu.memory_space<vmem>>, vector<1x512x256xbf16>
    %92 = vector.shape_cast %91 : vector<1x512x256xbf16> to vector<512x256xbf16>
    %93 = arith.truncf %45 : vector<256x128xf32> to vector<256x128xbf16>
    %cst_31 = arith.constant dense<0.000000e+00> : vector<512x128xf32>
    %94 = tpu.matmul %92, %93, %cst_31 {dimension_numbers = #tpu.dot_dimension_numbers<[1], [0], [0], [1], [0, 0, 1, 1], [], []>} : vector<512x256xbf16>, vector<256x128xbf16>, vector<512x128xf32> -> vector<512x128xf32>
    %95 = arith.addf %90, %94 : vector<512x128xf32>
    %c7 = arith.constant 7 : index
    %c0_32 = arith.constant 0 : index
    %c0_33 = arith.constant 0 : index
    %96 = vector.load %arg1[%c7, %c0_32, %c0_33] : memref<8x512x256xbf16, #tpu.memory_space<vmem>>, vector<1x512x256xbf16>
    %97 = vector.shape_cast %96 : vector<1x512x256xbf16> to vector<512x256xbf16>
    %98 = arith.truncf %47 : vector<256x128xf32> to vector<256x128xbf16>
    %cst_34 = arith.constant dense<0.000000e+00> : vector<512x128xf32>
    %99 = tpu.matmul %97, %98, %cst_34 {dimension_numbers = #tpu.dot_dimension_numbers<[1], [0], [0], [1], [0, 0, 1, 1], [], []>} : vector<512x256xbf16>, vector<256x128xbf16>, vector<512x128xf32> -> vector<512x128xf32>
    %100 = arith.addf %95, %99 : vector<512x128xf32>
    %c0_35 = arith.constant 0 : index
    %c0_36 = arith.constant 0 : index
    %101 = vector.load %arg5[%c0_35, %c0_36] : memref<1x128xf32, #tpu.memory_space<vmem>>, vector<1x128xf32>
    %102 = vector.broadcast %101 : vector<1x128xf32> to vector<512x128xf32>
    %103 = arith.addf %100, %102 : vector<512x128xf32>
    %cst_37 = arith.constant 0.000000e+00 : f32
    %104 = vector.broadcast %cst_37 : f32 to vector<512x128xf32>
    %105 = arith.maximumf %103, %104 : vector<512x128xf32>
    %106 = vector.extract_strided_slice %105 {offsets = [0, 0], sizes = [128, 128], strides = [1, 1]} : vector<512x128xf32> to vector<128x128xf32>
    %107 = vector.extract_strided_slice %105 {offsets = [128, 0], sizes = [128, 128], strides = [1, 1]} : vector<512x128xf32> to vector<128x128xf32>
    %108 = arith.maximumf %106, %107 : vector<128x128xf32>
    %109 = vector.extract_strided_slice %105 {offsets = [256, 0], sizes = [128, 128], strides = [1, 1]} : vector<512x128xf32> to vector<128x128xf32>
    %110 = vector.extract_strided_slice %105 {offsets = [384, 0], sizes = [128, 128], strides = [1, 1]} : vector<512x128xf32> to vector<128x128xf32>
    %111 = arith.maximumf %109, %110 : vector<128x128xf32>
    %112 = arith.maximumf %108, %111 : vector<128x128xf32>
    %113 = vector.extract_strided_slice %112 {offsets = [0, 0], sizes = [8, 128], strides = [1, 1]} : vector<128x128xf32> to vector<8x128xf32>
    %114 = arith.truncf %113 : vector<8x128xf32> to vector<8x128xbf16>
    %c0_38 = arith.constant 0 : index
    %c0_39 = arith.constant 0 : index
    %c0_40 = arith.constant 0 : index
    %115 = vector.load %arg6[%c0_38, %c0_39, %c0_40] : memref<16x128x128xbf16, #tpu.memory_space<vmem>>, vector<1x128x128xbf16>
    %116 = vector.shape_cast %115 : vector<1x128x128xbf16> to vector<128x128xbf16>
    %cst_41 = arith.constant dense<0.000000e+00> : vector<8x128xf32>
    %117 = tpu.matmul %114, %116, %cst_41 {dimension_numbers = #tpu.dot_dimension_numbers<[1], [0], [0], [1], [0, 0, 1, 1], [], []>} : vector<8x128xbf16>, vector<128x128xbf16>, vector<8x128xf32> -> vector<8x128xf32>
    %118 = vector.extract_strided_slice %112 {offsets = [8, 0], sizes = [8, 128], strides = [1, 1]} : vector<128x128xf32> to vector<8x128xf32>
    %119 = arith.truncf %118 : vector<8x128xf32> to vector<8x128xbf16>
    %c1_42 = arith.constant 1 : index
    %c0_43 = arith.constant 0 : index
    %c0_44 = arith.constant 0 : index
    %120 = vector.load %arg6[%c1_42, %c0_43, %c0_44] : memref<16x128x128xbf16, #tpu.memory_space<vmem>>, vector<1x128x128xbf16>
    %121 = vector.shape_cast %120 : vector<1x128x128xbf16> to vector<128x128xbf16>
    %cst_45 = arith.constant dense<0.000000e+00> : vector<8x128xf32>
    %122 = tpu.matmul %119, %121, %cst_45 {dimension_numbers = #tpu.dot_dimension_numbers<[1], [0], [0], [1], [0, 0, 1, 1], [], []>} : vector<8x128xbf16>, vector<128x128xbf16>, vector<8x128xf32> -> vector<8x128xf32>
    %123 = arith.addf %117, %122 : vector<8x128xf32>
    %124 = vector.extract_strided_slice %112 {offsets = [16, 0], sizes = [8, 128], strides = [1, 1]} : vector<128x128xf32> to vector<8x128xf32>
    %125 = arith.truncf %124 : vector<8x128xf32> to vector<8x128xbf16>
    %c2_46 = arith.constant 2 : index
    %c0_47 = arith.constant 0 : index
    %c0_48 = arith.constant 0 : index
    %126 = vector.load %arg6[%c2_46, %c0_47, %c0_48] : memref<16x128x128xbf16, #tpu.memory_space<vmem>>, vector<1x128x128xbf16>
    %127 = vector.shape_cast %126 : vector<1x128x128xbf16> to vector<128x128xbf16>
    %cst_49 = arith.constant dense<0.000000e+00> : vector<8x128xf32>
    %128 = tpu.matmul %125, %127, %cst_49 {dimension_numbers = #tpu.dot_dimension_numbers<[1], [0], [0], [1], [0, 0, 1, 1], [], []>} : vector<8x128xbf16>, vector<128x128xbf16>, vector<8x128xf32> -> vector<8x128xf32>
    %129 = arith.addf %123, %128 : vector<8x128xf32>
    %130 = vector.extract_strided_slice %112 {offsets = [24, 0], sizes = [8, 128], strides = [1, 1]} : vector<128x128xf32> to vector<8x128xf32>
    %131 = arith.truncf %130 : vector<8x128xf32> to vector<8x128xbf16>
    %c3_50 = arith.constant 3 : index
    %c0_51 = arith.constant 0 : index
    %c0_52 = arith.constant 0 : index
    %132 = vector.load %arg6[%c3_50, %c0_51, %c0_52] : memref<16x128x128xbf16, #tpu.memory_space<vmem>>, vector<1x128x128xbf16>
    %133 = vector.shape_cast %132 : vector<1x128x128xbf16> to vector<128x128xbf16>
    %cst_53 = arith.constant dense<0.000000e+00> : vector<8x128xf32>
    %134 = tpu.matmul %131, %133, %cst_53 {dimension_numbers = #tpu.dot_dimension_numbers<[1], [0], [0], [1], [0, 0, 1, 1], [], []>} : vector<8x128xbf16>, vector<128x128xbf16>, vector<8x128xf32> -> vector<8x128xf32>
    %135 = arith.addf %129, %134 : vector<8x128xf32>
    %136 = vector.extract_strided_slice %112 {offsets = [32, 0], sizes = [8, 128], strides = [1, 1]} : vector<128x128xf32> to vector<8x128xf32>
    %137 = arith.truncf %136 : vector<8x128xf32> to vector<8x128xbf16>
    %c4_54 = arith.constant 4 : index
    %c0_55 = arith.constant 0 : index
    %c0_56 = arith.constant 0 : index
    %138 = vector.load %arg6[%c4_54, %c0_55, %c0_56] : memref<16x128x128xbf16, #tpu.memory_space<vmem>>, vector<1x128x128xbf16>
    %139 = vector.shape_cast %138 : vector<1x128x128xbf16> to vector<128x128xbf16>
    %cst_57 = arith.constant dense<0.000000e+00> : vector<8x128xf32>
    %140 = tpu.matmul %137, %139, %cst_57 {dimension_numbers = #tpu.dot_dimension_numbers<[1], [0], [0], [1], [0, 0, 1, 1], [], []>} : vector<8x128xbf16>, vector<128x128xbf16>, vector<8x128xf32> -> vector<8x128xf32>
    %141 = arith.addf %135, %140 : vector<8x128xf32>
    %142 = vector.extract_strided_slice %112 {offsets = [40, 0], sizes = [8, 128], strides = [1, 1]} : vector<128x128xf32> to vector<8x128xf32>
    %143 = arith.truncf %142 : vector<8x128xf32> to vector<8x128xbf16>
    %c5_58 = arith.constant 5 : index
    %c0_59 = arith.constant 0 : index
    %c0_60 = arith.constant 0 : index
    %144 = vector.load %arg6[%c5_58, %c0_59, %c0_60] : memref<16x128x128xbf16, #tpu.memory_space<vmem>>, vector<1x128x128xbf16>
    %145 = vector.shape_cast %144 : vector<1x128x128xbf16> to vector<128x128xbf16>
    %cst_61 = arith.constant dense<0.000000e+00> : vector<8x128xf32>
    %146 = tpu.matmul %143, %145, %cst_61 {dimension_numbers = #tpu.dot_dimension_numbers<[1], [0], [0], [1], [0, 0, 1, 1], [], []>} : vector<8x128xbf16>, vector<128x128xbf16>, vector<8x128xf32> -> vector<8x128xf32>
    %147 = arith.addf %141, %146 : vector<8x128xf32>
    %148 = vector.extract_strided_slice %112 {offsets = [48, 0], sizes = [8, 128], strides = [1, 1]} : vector<128x128xf32> to vector<8x128xf32>
    %149 = arith.truncf %148 : vector<8x128xf32> to vector<8x128xbf16>
    %c6_62 = arith.constant 6 : index
    %c0_63 = arith.constant 0 : index
    %c0_64 = arith.constant 0 : index
    %150 = vector.load %arg6[%c6_62, %c0_63, %c0_64] : memref<16x128x128xbf16, #tpu.memory_space<vmem>>, vector<1x128x128xbf16>
    %151 = vector.shape_cast %150 : vector<1x128x128xbf16> to vector<128x128xbf16>
    %cst_65 = arith.constant dense<0.000000e+00> : vector<8x128xf32>
    %152 = tpu.matmul %149, %151, %cst_65 {dimension_numbers = #tpu.dot_dimension_numbers<[1], [0], [0], [1], [0, 0, 1, 1], [], []>} : vector<8x128xbf16>, vector<128x128xbf16>, vector<8x128xf32> -> vector<8x128xf32>
    %153 = arith.addf %147, %152 : vector<8x128xf32>
    %154 = vector.extract_strided_slice %112 {offsets = [56, 0], sizes = [8, 128], strides = [1, 1]} : vector<128x128xf32> to vector<8x128xf32>
    %155 = arith.truncf %154 : vector<8x128xf32> to vector<8x128xbf16>
    %c7_66 = arith.constant 7 : index
    %c0_67 = arith.constant 0 : index
    %c0_68 = arith.constant 0 : index
    %156 = vector.load %arg6[%c7_66, %c0_67, %c0_68] : memref<16x128x128xbf16, #tpu.memory_space<vmem>>, vector<1x128x128xbf16>
    %157 = vector.shape_cast %156 : vector<1x128x128xbf16> to vector<128x128xbf16>
    %cst_69 = arith.constant dense<0.000000e+00> : vector<8x128xf32>
    %158 = tpu.matmul %155, %157, %cst_69 {dimension_numbers = #tpu.dot_dimension_numbers<[1], [0], [0], [1], [0, 0, 1, 1], [], []>} : vector<8x128xbf16>, vector<128x128xbf16>, vector<8x128xf32> -> vector<8x128xf32>
    %159 = arith.addf %153, %158 : vector<8x128xf32>
    %160 = vector.extract_strided_slice %112 {offsets = [64, 0], sizes = [8, 128], strides = [1, 1]} : vector<128x128xf32> to vector<8x128xf32>
    %161 = arith.truncf %160 : vector<8x128xf32> to vector<8x128xbf16>
    %c8 = arith.constant 8 : index
    %c0_70 = arith.constant 0 : index
    %c0_71 = arith.constant 0 : index
    %162 = vector.load %arg6[%c8, %c0_70, %c0_71] : memref<16x128x128xbf16, #tpu.memory_space<vmem>>, vector<1x128x128xbf16>
    %163 = vector.shape_cast %162 : vector<1x128x128xbf16> to vector<128x128xbf16>
    %cst_72 = arith.constant dense<0.000000e+00> : vector<8x128xf32>
    %164 = tpu.matmul %161, %163, %cst_72 {dimension_numbers = #tpu.dot_dimension_numbers<[1], [0], [0], [1], [0, 0, 1, 1], [], []>} : vector<8x128xbf16>, vector<128x128xbf16>, vector<8x128xf32> -> vector<8x128xf32>
    %165 = arith.addf %159, %164 : vector<8x128xf32>
    %166 = vector.extract_strided_slice %112 {offsets = [72, 0], sizes = [8, 128], strides = [1, 1]} : vector<128x128xf32> to vector<8x128xf32>
    %167 = arith.truncf %166 : vector<8x128xf32> to vector<8x128xbf16>
    %c9 = arith.constant 9 : index
    %c0_73 = arith.constant 0 : index
    %c0_74 = arith.constant 0 : index
    %168 = vector.load %arg6[%c9, %c0_73, %c0_74] : memref<16x128x128xbf16, #tpu.memory_space<vmem>>, vector<1x128x128xbf16>
    %169 = vector.shape_cast %168 : vector<1x128x128xbf16> to vector<128x128xbf16>
    %cst_75 = arith.constant dense<0.000000e+00> : vector<8x128xf32>
    %170 = tpu.matmul %167, %169, %cst_75 {dimension_numbers = #tpu.dot_dimension_numbers<[1], [0], [0], [1], [0, 0, 1, 1], [], []>} : vector<8x128xbf16>, vector<128x128xbf16>, vector<8x128xf32> -> vector<8x128xf32>
    %171 = arith.addf %165, %170 : vector<8x128xf32>
    %172 = vector.extract_strided_slice %112 {offsets = [80, 0], sizes = [8, 128], strides = [1, 1]} : vector<128x128xf32> to vector<8x128xf32>
    %173 = arith.truncf %172 : vector<8x128xf32> to vector<8x128xbf16>
    %c10 = arith.constant 10 : index
    %c0_76 = arith.constant 0 : index
    %c0_77 = arith.constant 0 : index
    %174 = vector.load %arg6[%c10, %c0_76, %c0_77] : memref<16x128x128xbf16, #tpu.memory_space<vmem>>, vector<1x128x128xbf16>
    %175 = vector.shape_cast %174 : vector<1x128x128xbf16> to vector<128x128xbf16>
    %cst_78 = arith.constant dense<0.000000e+00> : vector<8x128xf32>
    %176 = tpu.matmul %173, %175, %cst_78 {dimension_numbers = #tpu.dot_dimension_numbers<[1], [0], [0], [1], [0, 0, 1, 1], [], []>} : vector<8x128xbf16>, vector<128x128xbf16>, vector<8x128xf32> -> vector<8x128xf32>
    %177 = arith.addf %171, %176 : vector<8x128xf32>
    %178 = vector.extract_strided_slice %112 {offsets = [88, 0], sizes = [8, 128], strides = [1, 1]} : vector<128x128xf32> to vector<8x128xf32>
    %179 = arith.truncf %178 : vector<8x128xf32> to vector<8x128xbf16>
    %c11 = arith.constant 11 : index
    %c0_79 = arith.constant 0 : index
    %c0_80 = arith.constant 0 : index
    %180 = vector.load %arg6[%c11, %c0_79, %c0_80] : memref<16x128x128xbf16, #tpu.memory_space<vmem>>, vector<1x128x128xbf16>
    %181 = vector.shape_cast %180 : vector<1x128x128xbf16> to vector<128x128xbf16>
    %cst_81 = arith.constant dense<0.000000e+00> : vector<8x128xf32>
    %182 = tpu.matmul %179, %181, %cst_81 {dimension_numbers = #tpu.dot_dimension_numbers<[1], [0], [0], [1], [0, 0, 1, 1], [], []>} : vector<8x128xbf16>, vector<128x128xbf16>, vector<8x128xf32> -> vector<8x128xf32>
    %183 = arith.addf %177, %182 : vector<8x128xf32>
    %184 = vector.extract_strided_slice %112 {offsets = [96, 0], sizes = [8, 128], strides = [1, 1]} : vector<128x128xf32> to vector<8x128xf32>
    %185 = arith.truncf %184 : vector<8x128xf32> to vector<8x128xbf16>
    %c12 = arith.constant 12 : index
    %c0_82 = arith.constant 0 : index
    %c0_83 = arith.constant 0 : index
    %186 = vector.load %arg6[%c12, %c0_82, %c0_83] : memref<16x128x128xbf16, #tpu.memory_space<vmem>>, vector<1x128x128xbf16>
    %187 = vector.shape_cast %186 : vector<1x128x128xbf16> to vector<128x128xbf16>
    %cst_84 = arith.constant dense<0.000000e+00> : vector<8x128xf32>
    %188 = tpu.matmul %185, %187, %cst_84 {dimension_numbers = #tpu.dot_dimension_numbers<[1], [0], [0], [1], [0, 0, 1, 1], [], []>} : vector<8x128xbf16>, vector<128x128xbf16>, vector<8x128xf32> -> vector<8x128xf32>
    %189 = arith.addf %183, %188 : vector<8x128xf32>
    %190 = vector.extract_strided_slice %112 {offsets = [104, 0], sizes = [8, 128], strides = [1, 1]} : vector<128x128xf32> to vector<8x128xf32>
    %191 = arith.truncf %190 : vector<8x128xf32> to vector<8x128xbf16>
    %c13 = arith.constant 13 : index
    %c0_85 = arith.constant 0 : index
    %c0_86 = arith.constant 0 : index
    %192 = vector.load %arg6[%c13, %c0_85, %c0_86] : memref<16x128x128xbf16, #tpu.memory_space<vmem>>, vector<1x128x128xbf16>
    %193 = vector.shape_cast %192 : vector<1x128x128xbf16> to vector<128x128xbf16>
    %cst_87 = arith.constant dense<0.000000e+00> : vector<8x128xf32>
    %194 = tpu.matmul %191, %193, %cst_87 {dimension_numbers = #tpu.dot_dimension_numbers<[1], [0], [0], [1], [0, 0, 1, 1], [], []>} : vector<8x128xbf16>, vector<128x128xbf16>, vector<8x128xf32> -> vector<8x128xf32>
    %195 = arith.addf %189, %194 : vector<8x128xf32>
    %196 = vector.extract_strided_slice %112 {offsets = [112, 0], sizes = [8, 128], strides = [1, 1]} : vector<128x128xf32> to vector<8x128xf32>
    %197 = arith.truncf %196 : vector<8x128xf32> to vector<8x128xbf16>
    %c14 = arith.constant 14 : index
    %c0_88 = arith.constant 0 : index
    %c0_89 = arith.constant 0 : index
    %198 = vector.load %arg6[%c14, %c0_88, %c0_89] : memref<16x128x128xbf16, #tpu.memory_space<vmem>>, vector<1x128x128xbf16>
    %199 = vector.shape_cast %198 : vector<1x128x128xbf16> to vector<128x128xbf16>
    %cst_90 = arith.constant dense<0.000000e+00> : vector<8x128xf32>
    %200 = tpu.matmul %197, %199, %cst_90 {dimension_numbers = #tpu.dot_dimension_numbers<[1], [0], [0], [1], [0, 0, 1, 1], [], []>} : vector<8x128xbf16>, vector<128x128xbf16>, vector<8x128xf32> -> vector<8x128xf32>
    %201 = arith.addf %195, %200 : vector<8x128xf32>
    %202 = vector.extract_strided_slice %112 {offsets = [120, 0], sizes = [8, 128], strides = [1, 1]} : vector<128x128xf32> to vector<8x128xf32>
    %203 = arith.truncf %202 : vector<8x128xf32> to vector<8x128xbf16>
    %c15 = arith.constant 15 : index
    %c0_91 = arith.constant 0 : index
    %c0_92 = arith.constant 0 : index
    %204 = vector.load %arg6[%c15, %c0_91, %c0_92] : memref<16x128x128xbf16, #tpu.memory_space<vmem>>, vector<1x128x128xbf16>
    %205 = vector.shape_cast %204 : vector<1x128x128xbf16> to vector<128x128xbf16>
    %cst_93 = arith.constant dense<0.000000e+00> : vector<8x128xf32>
    %206 = tpu.matmul %203, %205, %cst_93 {dimension_numbers = #tpu.dot_dimension_numbers<[1], [0], [0], [1], [0, 0, 1, 1], [], []>} : vector<8x128xbf16>, vector<128x128xbf16>, vector<8x128xf32> -> vector<8x128xf32>
    %207 = arith.addf %201, %206 : vector<8x128xf32>
    %c0_94 = arith.constant 0 : index
    %c0_95 = arith.constant 0 : index
    %208 = vector.load %arg7[%c0_94, %c0_95] : memref<1x128xf32, #tpu.memory_space<vmem>>, vector<1x128xf32>
    %209 = vector.broadcast %208 : vector<1x128xf32> to vector<8x128xf32>
    %210 = arith.addf %207, %209 : vector<8x128xf32>
    %cst_96 = arith.constant 0.000000e+00 : f32
    %211 = vector.broadcast %cst_96 : f32 to vector<8x128xf32>
    %212 = arith.maximumf %210, %211 : vector<8x128xf32>
    %213 = arith.truncf %212 : vector<8x128xf32> to vector<8x128xbf16>
    %c0_97 = arith.constant 0 : index
    %c0_98 = arith.constant 0 : index
    %214 = vector.load %arg8[%c0_97, %c0_98] : memref<128x128xbf16, #tpu.memory_space<vmem>>, vector<128x128xbf16>
    %cst_99 = arith.constant dense<0.000000e+00> : vector<8x128xf32>
    %215 = tpu.matmul %213, %214, %cst_99 {dimension_numbers = #tpu.dot_dimension_numbers<[1], [0], [0], [1], [0, 0, 1, 1], [], []>} : vector<8x128xbf16>, vector<128x128xbf16>, vector<8x128xf32> -> vector<8x128xf32>
    %c0_100 = arith.constant 0 : index
    %c0_101 = arith.constant 0 : index
    %216 = vector.load %arg9[%c0_100, %c0_101] : memref<1x128xf32, #tpu.memory_space<vmem>>, vector<1x128xf32>
    %217 = vector.broadcast %216 : vector<1x128xf32> to vector<8x128xf32>
    %218 = arith.addf %215, %217 : vector<8x128xf32>
    %219 = tpu.iota {dimensions = array<i32: 1>} : vector<8x128xi32>
    %c10_i32 = arith.constant 10 : i32
    %220 = vector.broadcast %c10_i32 : i32 to vector<8x128xi32>
    %221 = arith.cmpi slt, %219, %220 : vector<8x128xi32>
    %cst_102 = arith.constant -1.000000e+30 : f32
    %222 = vector.broadcast %cst_102 : f32 to vector<8x128xf32>
    %223 = arith.select %221, %218, %222 : vector<8x128xi1>, vector<8x128xf32>
    %cst_103 = arith.constant dense<0xFF800000> : vector<8xf32>
    %224 = vector.multi_reduction <maximumf>, %223, %cst_103 [1] : vector<8x128xf32> to vector<8xf32>
    %225 = vector.shape_cast %224 : vector<8xf32> to vector<8x1xf32>
    %226 = vector.broadcast %225 : vector<8x1xf32> to vector<8x128xf32>
    %227 = arith.subf %223, %226 : vector<8x128xf32>
    %228 = math.exp %227 : vector<8x128xf32>
    %cst_104 = arith.constant dense<0.000000e+00> : vector<8xf32>
    %229 = vector.multi_reduction <add>, %228, %cst_104 [1] : vector<8x128xf32> to vector<8xf32>
    %230 = vector.shape_cast %229 : vector<8xf32> to vector<8x1xf32>
    %231 = math.log %230 : vector<8x1xf32>
    %232 = vector.broadcast %231 : vector<8x1xf32> to vector<8x128xf32>
    %233 = arith.subf %227, %232 : vector<8x128xf32>
    %c0_105 = arith.constant 0 : index
    %c0_106 = arith.constant 0 : index
    %234 = vector.load %arg10[%c0_105, %c0_106] : memref<8x128xf32, #tpu.memory_space<vmem>>, vector<8x128xf32>
    tpu.vector_store %arg10[%c0_105, %c0_106], %233 {strides = array<i32>} : memref<8x128xf32, #tpu.memory_space<vmem>>, vector<8x128xf32>,
    return
  }
}

</mosaic_0001>

<llo_original>
// kernel: custom_model_forward.1
$region0: #{custom_model_forward.1}
  #allocation0 [shape = 'u32[]', space=smem, size = 0x4, offset = 0x4, fixed_abs, tag = 'smem constant byte address 0x4 - core index']
  #allocation1 [shape = 'u32[144,128]{1,0:T(1,128)}', space=vmem, size = 0x12000, scoped, tag = 'internal scratch']
  %s0 = inlined_call_operand.vmem [shape: bf16[1216,32], index: 0, kind: input, shape index: {}]
  %s1 = inlined_call_operand.vmem [shape: bf16[8,512,256], index: 1, kind: input, shape index: {}]
  %s2 = inlined_call_operand.vmem [shape: bf16[32,128], index: 2, kind: input, shape index: {}]
  %s3 = inlined_call_operand.vmem [shape: f32[1,128], index: 3, kind: input, shape index: {}]
  %s4 = inlined_call_operand.vmem [shape: bf16[128,3200], index: 4, kind: input, shape index: {}]
  %s5 = inlined_call_operand.vmem [shape: f32[1,128], index: 5, kind: input, shape index: {}]
  %s6 = inlined_call_operand.vmem [shape: bf16[16,128,128], index: 6, kind: input, shape index: {}]
  %s7 = inlined_call_operand.vmem [shape: f32[1,128], index: 7, kind: input, shape index: {}]
  %s8 = inlined_call_operand.vmem [shape: bf16[128,128], index: 8, kind: input, shape index: {}]
  %s9 = inlined_call_operand.vmem [shape: f32[1,128], index: 9, kind: input, shape index: {}]
  %s10 = inlined_call_operand.vmem [shape: f32[8,128], index: 10, kind: output, shape index: {}]
  %s11 = sld [smem:[#allocation0]]
  $region50: #{custom_model_forward.1} parent=0
    _
  %s13 = ssub.s32 1, %s11
  %s14 = scalar_select 0, %s13, %s11
  // Predicated region
  $region2: #{custom_model_forward.1} parent=0 // pred_check
    _
  $region3: #{custom_model_forward.1} parent=0 // pred_check_branch
    %16 = sbr.rel (0) target = $region5
  $region4: #{custom_model_forward.1} parent=0 // pred_region
    _
  $region5: #{custom_model_forward.1} parent=0 // pred_fallthru
    _
  // Predicated region
  $region6: #{custom_model_forward.1} parent=0 // pred_check
    _
  $region7: #{custom_model_forward.1} parent=0 // pred_check_branch
    %18 = sbr.rel (0) target = $region9
  $region8: #{custom_model_forward.1} parent=0 // pred_region
    _
  $region9: #{custom_model_forward.1} parent=0 // pred_fallthru
    _
  // Predicated region
  $region10: #{custom_model_forward.1} parent=0 // pred_check
    _
  $region11: #{custom_model_forward.1} parent=0 // pred_check_branch
    %20 = sbr.rel (0) target = $region13
  $region12: #{custom_model_forward.1} parent=0 // pred_region
    _
  $region13: #{custom_model_forward.1} parent=0 // pred_fallthru
    _
  // Predicated region
  $region14: #{custom_model_forward.1} parent=0 // pred_check
    _
  $region15: #{custom_model_forward.1} parent=0 // pred_check_branch
    %22 = sbr.rel (0) target = $region17
  $region16: #{custom_model_forward.1} parent=0 // pred_region
    _
  $region17: #{custom_model_forward.1} parent=0 // pred_fallthru
    _
  // Predicated region
  $region18: #{custom_model_forward.1} parent=0 // pred_check
    _
  $region19: #{custom_model_forward.1} parent=0 // pred_check_branch
    %24 = sbr.rel (0) target = $region21
  $region20: #{custom_model_forward.1} parent=0 // pred_region
    _
  $region21: #{custom_model_forward.1} parent=0 // pred_fallthru
    _
  // Predicated region
  $region22: #{custom_model_forward.1} parent=0 // pred_check
    _
  $region23: #{custom_model_forward.1} parent=0 // pred_check_branch
    %26 = sbr.rel (0) target = $region25
  $region24: #{custom_model_forward.1} parent=0 // pred_region
    _
  $region25: #{custom_model_forward.1} parent=0 // pred_fallthru
    _
  // Predicated region
  $region26: #{custom_model_forward.1} parent=0 // pred_check
    _
  $region27: #{custom_model_forward.1} parent=0 // pred_check_branch
    %28 = sbr.rel (0) target = $region29
  $region28: #{custom_model_forward.1} parent=0 // pred_region
    _
  $region29: #{custom_model_forward.1} parent=0 // pred_fallthru
    _
  // Predicated region
  $region30: #{custom_model_forward.1} parent=0 // pred_check
    _
  $region31: #{custom_model_forward.1} parent=0 // pred_check_branch
    %30 = sbr.rel (0) target = $region33
  $region32: #{custom_model_forward.1} parent=0 // pred_region
    _
  $region33: #{custom_model_forward.1} parent=0 // pred_fallthru
    _
  // Predicated region
  $region34: #{custom_model_forward.1} parent=0 // pred_check
    _
  $region35: #{custom_model_forward.1} parent=0 // pred_check_branch
    %32 = sbr.rel (0) target = $region37
  $region36: #{custom_model_forward.1} parent=0 // pred_region
    _
  $region37: #{custom_model_forward.1} parent=0 // pred_fallthru
    _
  // Predicated region
  $region38: #{custom_model_forward.1} parent=0 // pred_check
    _
  $region39: #{custom_model_forward.1} parent=0 // pred_check_branch
    %34 = sbr.rel (0) target = $region41
  $region40: #{custom_model_forward.1} parent=0 // pred_region
    _
  $region41: #{custom_model_forward.1} parent=0 // pred_fallthru
    _
  %v36 = vld [vmem:[%s0] sm:$0xf]
  %v37 = vld [vmem:[%s0 + $0x4] sm:$0xf]
  %v38 = vld [vmem:[%s0 + $0x8] sm:$0xf]
  %v39 = vld [vmem:[%s0 + $0xc] sm:$0xf]
  %v40 = vld [vmem:[%s0 + $0x10] sm:$0xf]
  %v41 = vld [vmem:[%s0 + $0x14] sm:$0xf]
  %v42 = vld [vmem:[%s0 + $0x18] sm:$0xf]
  %v43 = vld [vmem:[%s0 + $0x1c] sm:$0xf]
  %v44 = vld [vmem:[%s0 + $0x20] sm:$0xf]
  %v45 = vld [vmem:[%s0 + $0x24] sm:$0xf]
  %v46 = vld [vmem:[%s0 + $0x28] sm:$0xf]
  %v47 = vld [vmem:[%s0 + $0x2c] sm:$0xf]
  %v48 = vld [vmem:[%s0 + $0x30] sm:$0xf]
  %v49 = vld [vmem:[%s0 + $0x34] sm:$0xf]
  %v50 = vld [vmem:[%s0 + $0x38] sm:$0xf]
  %v51 = vld [vmem:[%s0 + $0x3c] sm:$0xf]
  %v52 = vld [vmem:[%s0 + $0x40] sm:$0xf]
  %v53 = vld [vmem:[%s0 + $0x44] sm:$0xf]
  %v54 = vld [vmem:[%s0 + $0x48] sm:$0xf]
  %v55 = vld [vmem:[%s0 + $0x4c] sm:$0xf]
  %v56 = vld [vmem:[%s0 + $0x50] sm:$0xf]
  %v57 = vld [vmem:[%s0 + $0x54] sm:$0xf]
  %v58 = vld [vmem:[%s0 + $0x58] sm:$0xf]
  %v59 = vld [vmem:[%s0 + $0x5c] sm:$0xf]
  %v60 = vld [vmem:[%s0 + $0x60] sm:$0xf]
  %v61 = vld [vmem:[%s0 + $0x64] sm:$0xf]
  %v62 = vld [vmem:[%s0 + $0x68] sm:$0xf]
  %v63 = vld [vmem:[%s0 + $0x6c] sm:$0xf]
  %v64 = vld [vmem:[%s0 + $0x70] sm:$0xf]
  %v65 = vld [vmem:[%s0 + $0x74] sm:$0xf]
  %v66 = vld [vmem:[%s0 + $0x78] sm:$0xf]
  %v67 = vld [vmem:[%s0 + $0x7c] sm:$0xf]
  %v68 = vld [vmem:[%s0 + $0x80] sm:$0xf]
  %v69 = vld [vmem:[%s0 + $0x84] sm:$0xf]
  %v70 = vld [vmem:[%s0 + $0x88] sm:$0xf]
  %v71 = vld [vmem:[%s0 + $0x8c] sm:$0xf]
  %v72 = vld [vmem:[%s0 + $0x90] sm:$0xf]
  %v73 = vld [vmem:[%s0 + $0x94] sm:$0xf]
  %v74 = vld [vmem:[%s0 + $0x98] sm:$0xf]
  %v75 = vld [vmem:[%s0 + $0x9c] sm:$0xf]
  %v76 = vld [vmem:[%s0 + $0xa0] sm:$0xf]
  %v77 = vld [vmem:[%s0 + $0xa4] sm:$0xf]
  %v78 = vld [vmem:[%s0 + $0xa8] sm:$0xf]
  %v79 = vld [vmem:[%s0 + $0xac] sm:$0xf]
  %v80 = vld [vmem:[%s0 + $0xb0] sm:$0xf]
  %v81 = vld [vmem:[%s0 + $0xb4] sm:$0xf]
  %v82 = vld [vmem:[%s0 + $0xb8] sm:$0xf]
  %v83 = vld [vmem:[%s0 + $0xbc] sm:$0xf]
  %v84 = vld [vmem:[%s0 + $0xc0] sm:$0xf]
  %v85 = vld [vmem:[%s0 + $0xc4] sm:$0xf]
  %v86 = vld [vmem:[%s0 + $0xc8] sm:$0xf]
  %v87 = vld [vmem:[%s0 + $0xcc] sm:$0xf]
  %v88 = vld [vmem:[%s0 + $0xd0] sm:$0xf]
  %v89 = vld [vmem:[%s0 + $0xd4] sm:$0xf]
  %v90 = vld [vmem:[%s0 + $0xd8] sm:$0xf]
  %v91 = vld [vmem:[%s0 + $0xdc] sm:$0xf]
  %v92 = vld [vmem:[%s0 + $0xe0] sm:$0xf]
  %v93 = vld [vmem:[%s0 + $0xe4] sm:$0xf]
  %v94 = vld [vmem:[%s0 + $0xe8] sm:$0xf]
  %v95 = vld [vmem:[%s0 + $0xec] sm:$0xf]
  %v96 = vld [vmem:[%s0 + $0xf0] sm:$0xf]
  %v97 = vld [vmem:[%s0 + $0xf4] sm:$0xf]
  %v98 = vld [vmem:[%s0 + $0xf8] sm:$0xf]
  %v99 = vld [vmem:[%s0 + $0xfc] sm:$0xf]
  %v100 = vld [vmem:[%s0 + $0x100] sm:$0xf]
  %v101 = vld [vmem:[%s0 + $0x104] sm:$0xf]
  %v102 = vld [vmem:[%s0 + $0x108] sm:$0xf]
  %v103 = vld [vmem:[%s0 + $0x10c] sm:$0xf]
  %v104 = vld [vmem:[%s0 + $0x110] sm:$0xf]
  %v105 = vld [vmem:[%s0 + $0x114] sm:$0xf]
  %v106 = vld [vmem:[%s0 + $0x118] sm:$0xf]
  %v107 = vld [vmem:[%s0 + $0x11c] sm:$0xf]
  %v108 = vld [vmem:[%s0 + $0x120] sm:$0xf]
  %v109 = vld [vmem:[%s0 + $0x124] sm:$0xf]
  %v110 = vld [vmem:[%s0 + $0x128] sm:$0xf]
  %v111 = vld [vmem:[%s0 + $0x12c] sm:$0xf]
  %v112 = vld [vmem:[%s0 + $0x130] sm:$0xf]
  %v113 = vld [vmem:[%s0 + $0x134] sm:$0xf]
  %v114 = vld [vmem:[%s0 + $0x138] sm:$0xf]
  %v115 = vld [vmem:[%s0 + $0x13c] sm:$0xf]
  %v116 = vld [vmem:[%s0 + $0x140] sm:$0xf]
  %v117 = vld [vmem:[%s0 + $0x144] sm:$0xf]
  %v118 = vld [vmem:[%s0 + $0x148] sm:$0xf]
  %v119 = vld [vmem:[%s0 + $0x14c] sm:$0xf]
  %v120 = vld [vmem:[%s0 + $0x150] sm:$0xf]
  %v121 = vld [vmem:[%s0 + $0x154] sm:$0xf]
  %v122 = vld [vmem:[%s0 + $0x158] sm:$0xf]
  %v123 = vld [vmem:[%s0 + $0x15c] sm:$0xf]
  %v124 = vld [vmem:[%s0 + $0x160] sm:$0xf]
  %v125 = vld [vmem:[%s0 + $0x164] sm:$0xf]
  %v126 = vld [vmem:[%s0 + $0x168] sm:$0xf]
  %v127 = vld [vmem:[%s0 + $0x16c] sm:$0xf]
  %v128 = vld [vmem:[%s0 + $0x170] sm:$0xf]
  %v129 = vld [vmem:[%s0 + $0x174] sm:$0xf]
  %v130 = vld [vmem:[%s0 + $0x178] sm:$0xf]
  %v131 = vld [vmem:[%s0 + $0x17c] sm:$0xf]
  %v132 = vld [vmem:[%s0 + $0x180] sm:$0xf]
  %v133 = vld [vmem:[%s0 + $0x184] sm:$0xf]
  %v134 = vld [vmem:[%s0 + $0x188] sm:$0xf]
  %v135 = vld [vmem:[%s0 + $0x18c] sm:$0xf]
  %v136 = vld [vmem:[%s0 + $0x190] sm:$0xf]
  %v137 = vld [vmem:[%s0 + $0x194] sm:$0xf]
  %v138 = vld [vmem:[%s0 + $0x198] sm:$0xf]
  %v139 = vld [vmem:[%s0 + $0x19c] sm:$0xf]
  %v140 = vld [vmem:[%s0 + $0x1a0] sm:$0xf]
  %v141 = vld [vmem:[%s0 + $0x1a4] sm:$0xf]
  %v142 = vld [vmem:[%s0 + $0x1a8] sm:$0xf]
  %v143 = vld [vmem:[%s0 + $0x1ac] sm:$0xf]
  %v144 = vld [vmem:[%s0 + $0x1b0] sm:$0xf]
  %v145 = vld [vmem:[%s0 + $0x1b4] sm:$0xf]
  %v146 = vld [vmem:[%s0 + $0x1b8] sm:$0xf]
  %v147 = vld [vmem:[%s0 + $0x1bc] sm:$0xf]
  %v148 = vld [vmem:[%s0 + $0x1c0] sm:$0xf]
  %v149 = vld [vmem:[%s0 + $0x1c4] sm:$0xf]
  %v150 = vld [vmem:[%s0 + $0x1c8] sm:$0xf]
  %v151 = vld [vmem:[%s0 + $0x1cc] sm:$0xf]
  %v152 = vld [vmem:[%s0 + $0x1d0] sm:$0xf]
  %v153 = vld [vmem:[%s0 + $0x1d4] sm:$0xf]
  %v154 = vld [vmem:[%s0 + $0x1d8] sm:$0xf]
  %v155 = vld [vmem:[%s0 + $0x1dc] sm:$0xf]
  %v156 = vld [vmem:[%s0 + $0x1e0] sm:$0xf]
  %v157 = vld [vmem:[%s0 + $0x1e4] sm:$0xf]
  %v158 = vld [vmem:[%s0 + $0x1e8] sm:$0xf]
  %v159 = vld [vmem:[%s0 + $0x1ec] sm:$0xf]
  %v160 = vld [vmem:[%s0 + $0x1f0] sm:$0xf]
  %v161 = vld [vmem:[%s0 + $0x1f4] sm:$0xf]
  %v162 = vld [vmem:[%s0 + $0x1f8] sm:$0xf]
  %v163 = vld [vmem:[%s0 + $0x1fc] sm:$0xf]
  %v164 = vld [vmem:[%s0 + $0x200] sm:$0xf]
  %v165 = vld [vmem:[%s0 + $0x204] sm:$0xf]
  %v166 = vld [vmem:[%s0 + $0x208] sm:$0xf]
  %v167 = vld [vmem:[%s0 + $0x20c] sm:$0xf]
  %v168 = vld [vmem:[%s0 + $0x210] sm:$0xf]
  %v169 = vld [vmem:[%s0 + $0x214] sm:$0xf]
  %v170 = vld [vmem:[%s0 + $0x218] sm:$0xf]
  %v171 = vld [vmem:[%s0 + $0x21c] sm:$0xf]
  %v172 = vld [vmem:[%s0 + $0x220] sm:$0xf]
  %v173 = vld [vmem:[%s0 + $0x224] sm:$0xf]
  %v174 = vld [vmem:[%s0 + $0x228] sm:$0xf]
  %v175 = vld [vmem:[%s0 + $0x22c] sm:$0xf]
  %v176 = vld [vmem:[%s0 + $0x230] sm:$0xf]
  %v177 = vld [vmem:[%s0 + $0x234] sm:$0xf]
  %v178 = vld [vmem:[%s0 + $0x238] sm:$0xf]
  %v179 = vld [vmem:[%s0 + $0x23c] sm:$0xf]
  %v180 = vld [vmem:[%s0 + $0x240] sm:$0xf]
  %v181 = vld [vmem:[%s0 + $0x244] sm:$0xf]
  %v182 = vld [vmem:[%s0 + $0x248] sm:$0xf]
  %v183 = vld [vmem:[%s0 + $0x24c] sm:$0xf]
  %v184 = vld [vmem:[%s0 + $0x250] sm:$0xf]
  %v185 = vld [vmem:[%s0 + $0x254] sm:$0xf]
  %v186 = vld [vmem:[%s0 + $0x258] sm:$0xf]
  %v187 = vld [vmem:[%s0 + $0x25c] sm:$0xf]
  %v188 = vld [vmem:[%s2] sm:$0xf]
  %v189 = vld [vmem:[%s2 + $0x4] sm:$0xf]
  %v190 = vld [vmem:[%s2 + $0x8] sm:$0xf]
  %v191 = vld [vmem:[%s2 + $0xc] sm:$0xf]
  %v192 = vld [vmem:[%s3] sm:$0x1]
  %v194 = vlaneseq
  %v195 = vshrl.u32 %v194, 7
  %v196 = vsub.s32 0, %v195
  %v197 = vrot.slane %v192, %v196
  %v351 = vunpack.c.l.b16 %v36
  %v352 = vunpack.c.l.b16 %v37
  %v353 = vunpack.c.l.b16 %v38
  %v354 = vunpack.c.l.b16 %v39
  %v355 = vunpack.c.l.b16 %v40
  %v356 = vunpack.c.l.b16 %v41
  %v357 = vunpack.c.l.b16 %v42
  %v358 = vunpack.c.l.b16 %v43
  %v359 = vunpack.c.l.b16 %v44
  %v360 = vunpack.c.l.b16 %v45
  %v361 = vunpack.c.l.b16 %v46
  %v362 = vunpack.c.l.b16 %v47
  %v363 = vunpack.c.l.b16 %v48
  %v364 = vunpack.c.l.b16 %v49
  %v365 = vunpack.c.l.b16 %v50
  %v366 = vunpack.c.l.b16 %v51
  %v367 = vunpack.c.l.b16 %v52
  %v368 = vunpack.c.l.b16 %v53
  %v369 = vunpack.c.l.b16 %v54
  %v370 = vunpack.c.l.b16 %v55
  %v371 = vunpack.c.l.b16 %v56
  %v372 = vunpack.c.l.b16 %v57
  %v373 = vunpack.c.l.b16 %v58
  %v374 = vunpack.c.l.b16 %v59
  %v375 = vunpack.c.l.b16 %v60
  %v376 = vunpack.c.l.b16 %v61
  %v377 = vunpack.c.l.b16 %v62
  %v378 = vunpack.c.l.b16 %v63
  %v379 = vunpack.c.l.b16 %v64
  %v380 = vunpack.c.l.b16 %v65
  %v381 = vunpack.c.l.b16 %v66
  %v382 = vunpack.c.l.b16 %v67
  %v383 = vunpack.c.l.b16 %v68
  %v384 = vunpack.c.l.b16 %v69
  %v385 = vunpack.c.l.b16 %v70
  %v386 = vunpack.c.l.b16 %v71
  %v387 = vunpack.c.l.b16 %v72
  %v388 = vunpack.c.l.b16 %v73
  %v389 = vunpack.c.l.b16 %v74
  %v390 = vunpack.c.l.b16 %v75
  %v391 = vunpack.c.l.b16 %v76
  %v392 = vunpack.c.l.b16 %v77
  %v393 = vunpack.c.l.b16 %v78
  %v394 = vunpack.c.l.b16 %v79
  %v395 = vunpack.c.l.b16 %v80
  %v396 = vunpack.c.l.b16 %v81
  %v397 = vunpack.c.l.b16 %v82
  %v398 = vunpack.c.l.b16 %v83
  %v399 = vunpack.c.l.b16 %v84
  %v400 = vunpack.c.l.b16 %v85
  %v401 = vunpack.c.l.b16 %v86
  %v402 = vunpack.c.l.b16 %v87
  %v403 = vunpack.c.l.b16 %v88
  %v404 = vunpack.c.l.b16 %v89
  %v405 = vunpack.c.l.b16 %v90
  %v406 = vunpack.c.l.b16 %v91
  %v407 = vunpack.c.l.b16 %v92
  %v408 = vunpack.c.l.b16 %v93
  %v409 = vunpack.c.l.b16 %v94
  %v410 = vunpack.c.l.b16 %v95
  %v411 = vunpack.c.l.b16 %v96
  %v412 = vunpack.c.l.b16 %v97
  %v413 = vunpack.c.l.b16 %v98
  %v414 = vunpack.c.l.b16 %v99
  %v415 = vunpack.c.l.b16 %v100
  %v416 = vunpack.c.l.b16 %v101
  %v417 = vunpack.c.l.b16 %v102
  %v418 = vunpack.c.l.b16 %v103
  %v419 = vunpack.c.l.b16 %v104
  %v420 = vunpack.c.l.b16 %v105
  %v421 = vunpack.c.l.b16 %v106
  %v422 = vunpack.c.l.b16 %v107
  %v423 = vunpack.c.l.b16 %v108
  %v424 = vunpack.c.l.b16 %v109
  %v425 = vunpack.c.l.b16 %v110
  %v426 = vunpack.c.l.b16 %v111
  %v427 = vunpack.c.l.b16 %v112
  %v428 = vunpack.c.l.b16 %v113
  %v429 = vunpack.c.l.b16 %v114
  %v430 = vunpack.c.l.b16 %v115
  %v431 = vunpack.c.l.b16 %v116
  %v432 = vunpack.c.l.b16 %v117
  %v433 = vunpack.c.l.b16 %v118
  %v434 = vunpack.c.l.b16 %v119
  %v435 = vunpack.c.l.b16 %v120
  %v436 = vunpack.c.l.b16 %v121
  %v437 = vunpack.c.l.b16 %v122
  %v438 = vunpack.c.l.b16 %v123
  %v439 = vunpack.c.l.b16 %v124
  %v440 = vunpack.c.l.b16 %v125
  %v441 = vunpack.c.l.b16 %v126
  %v442 = vunpack.c.l.b16 %v127
  %v443 = vunpack.c.l.b16 %v128
  %v444 = vunpack.c.l.b16 %v129
  %v445 = vunpack.c.l.b16 %v130
  %v446 = vunpack.c.l.b16 %v131
  %v447 = vunpack.c.l.b16 %v132
  %v448 = vunpack.c.l.b16 %v133
  %v449 = vunpack.c.l.b16 %v134
  %v450 = vunpack.c.l.b16 %v135
  %v451 = vunpack.c.l.b16 %v136
  %v452 = vunpack.c.l.b16 %v137
  %v453 = vunpack.c.l.b16 %v138
  %v454 = vunpack.c.l.b16 %v139
  %v455 = vunpack.c.l.b16 %v140
  %v456 = vunpack.c.l.b16 %v141
  %v457 = vunpack.c.l.b16 %v142
  %v458 = vunpack.c.l.b16 %v143
  %v459 = vunpack.c.l.b16 %v144
  %v460 = vunpack.c.l.b16 %v145
  %v461 = vunpack.c.l.b16 %v146
  %v462 = vunpack.c.l.b16 %v147
  %v463 = vunpack.c.l.b16 %v148
  %v464 = vunpack.c.l.b16 %v149
  %v465 = vunpack.c.l.b16 %v150
  %v466 = vunpack.c.l.b16 %v151
  %v467 = vunpack.c.l.b16 %v152
  %v468 = vunpack.c.l.b16 %v153
  %v469 = vunpack.c.l.b16 %v154
  %v470 = vunpack.c.l.b16 %v155
  %v471 = vunpack.c.l.b16 %v156
  %v472 = vunpack.c.l.b16 %v157
  %v473 = vunpack.c.l.b16 %v158
  %v474 = vunpack.c.l.b16 %v159
  %v475 = vunpack.c.l.b16 %v160
  %v476 = vunpack.c.l.b16 %v161
  %v477 = vunpack.c.l.b16 %v162
  %v478 = vunpack.c.l.b16 %v163
  %v479 = vunpack.c.l.b16 %v164
  %v480 = vunpack.c.l.b16 %v165
  %v481 = vunpack.c.l.b16 %v166
  %v482 = vunpack.c.l.b16 %v167
  %v483 = vunpack.c.l.b16 %v168
  %v484 = vunpack.c.l.b16 %v169
  %v485 = vunpack.c.l.b16 %v170
  %v486 = vunpack.c.l.b16 %v171
  %v487 = vunpack.c.l.b16 %v172
  %v488 = vunpack.c.l.b16 %v173
  %v489 = vunpack.c.l.b16 %v174
  %v490 = vunpack.c.l.b16 %v175
  %v491 = vunpack.c.l.b16 %v176
  %v492 = vunpack.c.l.b16 %v177
  %v493 = vunpack.c.l.b16 %v178
  %v494 = vunpack.c.l.b16 %v179
  %v495 = vunpack.c.l.b16 %v180
  %v496 = vunpack.c.l.b16 %v181
  %v497 = vunpack.c.l.b16 %v182
  %v498 = vunpack.c.l.b16 %v183
  %v499 = vunpack.c.l.b16 %v184
  %v500 = vunpack.c.l.b16 %v185
  %v501 = vunpack.c.l.b16 %v186
  %v502 = vunpack.c.l.b16 %v187
  %v503 = vpack.c.b16 %v352, %v351
  %v504 = vpack.c.b16 %v354, %v353
  %v505 = vpack.c.b16 %v356, %v355
  %v506 = vpack.c.b16 %v358, %v357
  %v507 = vpack.c.b16 %v360, %v359
  %v508 = vpack.c.b16 %v362, %v361
  %v509 = vpack.c.b16 %v364, %v363
  %v510 = vpack.c.b16 %v366, %v365
  %v511 = vpack.c.b16 %v368, %v367
  %v512 = vpack.c.b16 %v370, %v369
  %v513 = vpack.c.b16 %v372, %v371
  %v514 = vpack.c.b16 %v374, %v373
  %v515 = vpack.c.b16 %v376, %v375
  %v516 = vpack.c.b16 %v378, %v377
  %v517 = vpack.c.b16 %v380, %v379
  %v518 = vpack.c.b16 %v382, %v381
  %v519 = vpack.c.b16 %v384, %v383
  %v520 = vpack.c.b16 %v386, %v385
  %v521 = vpack.c.b16 %v388, %v387
  %v522 = vpack.c.b16 %v390, %v389
  %v523 = vpack.c.b16 %v392, %v391
  %v524 = vpack.c.b16 %v394, %v393
  %v525 = vpack.c.b16 %v396, %v395
  %v526 = vpack.c.b16 %v398, %v397
  %v527 = vpack.c.b16 %v400, %v399
  %v528 = vpack.c.b16 %v402, %v401
  %v529 = vpack.c.b16 %v404, %v403
  %v530 = vpack.c.b16 %v406, %v405
  %v531 = vpack.c.b16 %v408, %v407
  %v532 = vpack.c.b16 %v410, %v409
  %v533 = vpack.c.b16 %v412, %v411
  %v534 = vpack.c.b16 %v414, %v413
  %v535 = vpack.c.b16 %v416, %v415
  %v536 = vpack.c.b16 %v418, %v417
  %v537 = vpack.c.b16 %v420, %v419
  %v538 = vpack.c.b16 %v422, %v421
  %v539 = vpack.c.b16 %v424, %v423
  %v540 = vpack.c.b16 %v426, %v425
  %v541 = vpack.c.b16 %v428, %v427
  %v542 = vpack.c.b16 %v430, %v429
  %v543 = vpack.c.b16 %v432, %v431
  %v544 = vpack.c.b16 %v434, %v433
  %v545 = vpack.c.b16 %v436, %v435
  %v546 = vpack.c.b16 %v438, %v437
  %v547 = vpack.c.b16 %v440, %v439
  %v548 = vpack.c.b16 %v442, %v441
  %v549 = vpack.c.b16 %v444, %v443
  %v550 = vpack.c.b16 %v446, %v445
  %v551 = vpack.c.b16 %v448, %v447
  %v552 = vpack.c.b16 %v450, %v449
  %v553 = vpack.c.b16 %v452, %v451
  %v554 = vpack.c.b16 %v454, %v453
  %v555 = vpack.c.b16 %v456, %v455
  %v556 = vpack.c.b16 %v458, %v457
  %v557 = vpack.c.b16 %v460, %v459
  %v558 = vpack.c.b16 %v462, %v461
  %v559 = vpack.c.b16 %v464, %v463
  %v560 = vpack.c.b16 %v466, %v465
  %v561 = vpack.c.b16 %v468, %v467
  %v562 = vpack.c.b16 %v470, %v469
  %v563 = vpack.c.b16 %v472, %v471
  %v564 = vpack.c.b16 %v474, %v473
  %v565 = vpack.c.b16 %v476, %v475
  %v566 = vpack.c.b16 %v478, %v477
  %v567 = vpack.c.b16 %v480, %v479
  %v568 = vpack.c.b16 %v482, %v481
  %v569 = vpack.c.b16 %v484, %v483
  %v570 = vpack.c.b16 %v486, %v485
  %v571 = vpack.c.b16 %v488, %v487
  %v572 = vpack.c.b16 %v490, %v489
  %v573 = vpack.c.b16 %v492, %v491
  %v574 = vpack.c.b16 %v494, %v493
  %v575 = vpack.c.b16 %v496, %v495
  %v576 = vpack.c.b16 %v498, %v497
  %v577 = vpack.c.b16 %v500, %v499
  %v578 = vpack.c.b16 %v502, %v501
  %v583 = vunpack.c.l.b16 %v188
  %v584 = vunpack.c.l.b16 %v189
  %v585 = vunpack.c.l.b16 %v190
  %v586 = vunpack.c.l.b16 %v191
  %v587 = vpack.c.b16 %v584, %v583
  %v588 = vpack.c.b16 %v586, %v585
  %vm591 = vcmask 261120
  %v593 = vsel %vm591, %v503, 0
  %v596 = vsel %vm591, %v504, 0
  %v599 = vsel %vm591, %v505, 0
  %v602 = vsel %vm591, %v506, 0
  %v605 = vsel %vm591, %v507, 0
  %v608 = vsel %vm591, %v508, 0
  %v611 = vsel %vm591, %v509, 0
  %v614 = vsel %vm591, %v510, 0
  %v617 = vsel %vm591, %v511, 0
  %v620 = vsel %vm591, %v512, 0
  %v623 = vsel %vm591, %v513, 0
  %v626 = vsel %vm591, %v514, 0
  %v629 = vsel %vm591, %v515, 0
  %v632 = vsel %vm591, %v516, 0
  %v635 = vsel %vm591, %v517, 0
  %v638 = vsel %vm591, %v518, 0
  %v641 = vsel %vm591, %v519, 0
  %v644 = vsel %vm591, %v520, 0
  %v647 = vsel %vm591, %v521, 0
  %v650 = vsel %vm591, %v522, 0
  %v653 = vsel %vm591, %v523, 0
  %v656 = vsel %vm591, %v524, 0
  %v659 = vsel %vm591, %v525, 0
  %v662 = vsel %vm591, %v526, 0
  %v665 = vsel %vm591, %v527, 0
  %v668 = vsel %vm591, %v528, 0
  %v671 = vsel %vm591, %v529, 0
  %v674 = vsel %vm591, %v530, 0
  %v677 = vsel %vm591, %v531, 0
  %v680 = vsel %vm591, %v532, 0
  %v683 = vsel %vm591, %v533, 0
  %v686 = vsel %vm591, %v534, 0
  %v689 = vsel %vm591, %v535, 0
  %v692 = vsel %vm591, %v536, 0
  %v695 = vsel %vm591, %v537, 0
  %v698 = vsel %vm591, %v538, 0
  %v701 = vsel %vm591, %v539, 0
  %v704 = vsel %vm591, %v540, 0
  %v707 = vsel %vm591, %v541, 0
  %v710 = vsel %vm591, %v542, 0
  %v713 = vsel %vm591, %v543, 0
  %v716 = vsel %vm591, %v544, 0
  %v719 = vsel %vm591, %v545, 0
  %v722 = vsel %vm591, %v546, 0
  %v725 = vsel %vm591, %v547, 0
  %v728 = vsel %vm591, %v548, 0
  %v731 = vsel %vm591, %v549, 0
  %v734 = vsel %vm591, %v550, 0
  %v737 = vsel %vm591, %v551, 0
  %v740 = vsel %vm591, %v552, 0
  %v743 = vsel %vm591, %v553, 0
  %v746 = vsel %vm591, %v554, 0
  %v749 = vsel %vm591, %v555, 0
  %v752 = vsel %vm591, %v556, 0
  %v755 = vsel %vm591, %v557, 0
  %v758 = vsel %vm591, %v558, 0
  %v761 = vsel %vm591, %v559, 0
  %v764 = vsel %vm591, %v560, 0
  %v767 = vsel %vm591, %v561, 0
  %v770 = vsel %vm591, %v562, 0
  %v773 = vsel %vm591, %v563, 0
  %v776 = vsel %vm591, %v564, 0
  %v779 = vsel %vm591, %v565, 0
  %v782 = vsel %vm591, %v566, 0
  %v785 = vsel %vm591, %v567, 0
  %v788 = vsel %vm591, %v568, 0
  %v791 = vsel %vm591, %v569, 0
  %v794 = vsel %vm591, %v570, 0
  %v797 = vsel %vm591, %v571, 0
  %v800 = vsel %vm591, %v572, 0
  %v803 = vsel %vm591, %v573, 0
  %v806 = vsel %vm591, %v574, 0
  %v809 = vsel %vm591, %v575, 0
  %v812 = vsel %vm591, %v576, 0
  %v815 = vsel %vm591, %v577, 0
  %v818 = vsel %vm591, %v578, 0
  %820 = vmatprep.subr.bf16.mxu0 0
  %821 = vmatpush1.bf16.msra.mxu0 0
  %822 = vmatprep.subr.bf16.mxu0 0
  %823 = vmatpush1.bf16.msra.mxu0 0
  %824 = vmatprep.subr.bf16.mxu0 0
  %825 = vmatpush1.bf16.msra.mxu0 0
  %826 = vmatprep.subr.bf16.mxu0 0
  %827 = vmatpush1.bf16.msra.mxu0 0
  %828 = vmatprep.subr.bf16.mxu0 0
  %829 = vmatpush1.bf16.msra.mxu0 0
  %830 = vmatprep.subr.bf16.mxu0 0
  %831 = vmatpush1.bf16.msra.mxu0 0
  %832 = vmatprep.subr.bf16.mxu0 0
  %833 = vmatpush1.bf16.msra.mxu0 %v588
  %834 = vmatprep.subr.bf16.mxu0 0
  %835 = vmatpush1.bf16.msra.mxu0 %v587
  %836 = vmatprep.subr.bf16.mxu0 0
  %837 = vmatpush2.bf16.msra.mxu0 0
  %838 = vmatprep.subr.bf16.mxu0 0
  %839 = vmatpush2.bf16.msra.mxu0 0
  %840 = vmatprep.subr.bf16.mxu0 0
  %841 = vmatpush2.bf16.msra.mxu0 0
  %842 = vmatprep.subr.bf16.mxu0 0
  %843 = vmatpush2.bf16.msra.mxu0 0
  %844 = vmatprep.subr.bf16.mxu0 0
  %845 = vmatpush2.bf16.msra.mxu0 0
  %846 = vmatprep.subr.bf16.mxu0 0
  %847 = vmatpush2.bf16.msra.mxu0 0
  %848 = vmatprep.subr.bf16.mxu0 0
  %849 = vmatpush2.bf16.msra.mxu0 0
  %850 = vmatprep.subr.bf16.mxu0 0
  %851 = vmatpush2.bf16.msra.mxu0 0
  %852 = vmatprep.mubr.bf16.mxu0 0
  %853 = vmatmul.mubr.bf16.gmra.mxu0 %v593
  %v854 = vpop.f32.mrf.mxu0
  %v855 = vadd.f32 %v197, %v854
  %v856 = vpop.f32.mrf.mxu0
  %v857 = vpop.f32.mrf.mxu0
  %v858 = vadd.f32 %v197, %v857
  %v859 = vpop.f32.mrf.mxu0
  %860 = vmatprep.mubr.bf16.mxu0 0
  %861 = vmatmul.mubr.bf16.gmra.mxu0 %v596
  %v862 = vpop.f32.mrf.mxu0
  %v863 = vadd.f32 %v197, %v862
  %v864 = vpop.f32.mrf.mxu0
  %v865 = vpop.f32.mrf.mxu0
  %v866 = vadd.f32 %v197, %v865
  %v867 = vpop.f32.mrf.mxu0
  %868 = vmatprep.mubr.bf16.mxu0 0
  %869 = vmatmul.mubr.bf16.gmra.mxu0 %v599
  %v870 = vpop.f32.mrf.mxu0
  %v871 = vadd.f32 %v197, %v870
  %v872 = vpop.f32.mrf.mxu0
  %v873 = vpop.f32.mrf.mxu0
  %v874 = vadd.f32 %v197, %v873
  %v875 = vpop.f32.mrf.mxu0
  %876 = vmatprep.mubr.bf16.mxu0 0
  %877 = vmatmul.mubr.bf16.gmra.mxu0 %v602
  %v878 = vpop.f32.mrf.mxu0
  %v879 = vadd.f32 %v197, %v878
  %v880 = vpop.f32.mrf.mxu0
  %v881 = vpop.f32.mrf.mxu0
  %v882 = vadd.f32 %v197, %v881
  %v883 = vpop.f32.mrf.mxu0
  %884 = vmatprep.mubr.bf16.mxu0 0
  %885 = vmatmul.mubr.bf16.gmra.mxu0 %v605
  %v886 = vpop.f32.mrf.mxu0
  %v887 = vadd.f32 %v197, %v886
  %v888 = vpop.f32.mrf.mxu0
  %v889 = vpop.f32.mrf.mxu0
  %v890 = vadd.f32 %v197, %v889
  %v891 = vpop.f32.mrf.mxu0
  %892 = vmatprep.mubr.bf16.mxu0 0
  %893 = vmatmul.mubr.bf16.gmra.mxu0 %v608
  %v894 = vpop.f32.mrf.mxu0
  %v895 = vadd.f32 %v197, %v894
  %v896 = vpop.f32.mrf.mxu0
  %v897 = vpop.f32.mrf.mxu0
  %v898 = vadd.f32 %v197, %v897
  %v899 = vpop.f32.mrf.mxu0
  %900 = vmatprep.mubr.bf16.mxu0 0
  %901 = vmatmul.mubr.bf16.gmra.mxu0 %v611
  %v902 = vpop.f32.mrf.mxu0
  %v903 = vadd.f32 %v197, %v902
  %v904 = vpop.f32.mrf.mxu0
  %v905 = vpop.f32.mrf.mxu0
  %v906 = vadd.f32 %v197, %v905
  %v907 = vpop.f32.mrf.mxu0
  %908 = vmatprep.mubr.bf16.mxu0 0
  %909 = vmatmul.mubr.bf16.gmra.mxu0 %v614
  %v910 = vpop.f32.mrf.mxu0
  %v911 = vadd.f32 %v197, %v910
  %v912 = vpop.f32.mrf.mxu0
  %v913 = vpop.f32.mrf.mxu0
  %v914 = vadd.f32 %v197, %v913
  %v915 = vpop.f32.mrf.mxu0
  %916 = vmatprep.mubr.bf16.mxu0 0
  %917 = vmatmul.mubr.bf16.gmra.mxu0 %v617
  %v918 = vpop.f32.mrf.mxu0
  %v919 = vadd.f32 %v197, %v918
  %v920 = vpop.f32.mrf.mxu0
  %v921 = vpop.f32.mrf.mxu0
  %v922 = vadd.f32 %v197, %v921
  %v923 = vpop.f32.mrf.mxu0
  %924 = vmatprep.mubr.bf16.mxu0 0
  %925 = vmatmul.mubr.bf16.gmra.mxu0 %v620
  %v926 = vpop.f32.mrf.mxu0
  %v927 = vadd.f32 %v197, %v926
  %v928 = vpop.f32.mrf.mxu0
  %v929 = vpop.f32.mrf.mxu0
  %v930 = vadd.f32 %v197, %v929
  %v931 = vpop.f32.mrf.mxu0
  %932 = vmatprep.mubr.bf16.mxu0 0
  %933 = vmatmul.mubr.bf16.gmra.mxu0 %v623
  %v934 = vpop.f32.mrf.mxu0
  %v935 = vadd.f32 %v197, %v934
  %v936 = vpop.f32.mrf.mxu0
  %v937 = vpop.f32.mrf.mxu0
  %v938 = vadd.f32 %v197, %v937
  %v939 = vpop.f32.mrf.mxu0
  %940 = vmatprep.mubr.bf16.mxu0 0
  %941 = vmatmul.mubr.bf16.gmra.mxu0 %v626
  %v942 = vpop.f32.mrf.mxu0
  %v943 = vadd.f32 %v197, %v942
  %v944 = vpop.f32.mrf.mxu0
  %v945 = vpop.f32.mrf.mxu0
  %v946 = vadd.f32 %v197, %v945
  %v947 = vpop.f32.mrf.mxu0
  %948 = vmatprep.mubr.bf16.mxu0 0
  %949 = vmatmul.mubr.bf16.gmra.mxu0 %v629
  %v950 = vpop.f32.mrf.mxu0
  %v951 = vadd.f32 %v197, %v950
  %v952 = vpop.f32.mrf.mxu0
  %v953 = vpop.f32.mrf.mxu0
  %v954 = vadd.f32 %v197, %v953
  %v955 = vpop.f32.mrf.mxu0
  %956 = vmatprep.mubr.bf16.mxu0 0
  %957 = vmatmul.mubr.bf16.gmra.mxu0 %v632
  %v958 = vpop.f32.mrf.mxu0
  %v959 = vadd.f32 %v197, %v958
  %v960 = vpop.f32.mrf.mxu0
  %v961 = vpop.f32.mrf.mxu0
  %v962 = vadd.f32 %v197, %v961
  %v963 = vpop.f32.mrf.mxu0
  %964 = vmatprep.mubr.bf16.mxu0 0
  %965 = vmatmul.mubr.bf16.gmra.mxu0 %v635
  %v966 = vpop.f32.mrf.mxu0
  %v967 = vadd.f32 %v197, %v966
  %v968 = vpop.f32.mrf.mxu0
  %v969 = vpop.f32.mrf.mxu0
  %v970 = vadd.f32 %v197, %v969
  %v971 = vpop.f32.mrf.mxu0
  %972 = vmatprep.mubr.bf16.mxu0 0
  %973 = vmatmul.mubr.bf16.gmra.mxu0 %v638
  %v974 = vpop.f32.mrf.mxu0
  %v975 = vadd.f32 %v197, %v974
  %v976 = vpop.f32.mrf.mxu0
  %v977 = vpop.f32.mrf.mxu0
  %v978 = vadd.f32 %v197, %v977
  %v979 = vpop.f32.mrf.mxu0
  %980 = vmatprep.mubr.bf16.mxu0 0
  %981 = vmatmul.mubr.bf16.gmra.mxu0 %v641
  %v982 = vpop.f32.mrf.mxu0
  %v983 = vadd.f32 %v197, %v982
  %v984 = vpop.f32.mrf.mxu0
  %v985 = vpop.f32.mrf.mxu0
  %v986 = vadd.f32 %v197, %v985
  %v987 = vpop.f32.mrf.mxu0
  %988 = vmatprep.mubr.bf16.mxu0 0
  %989 = vmatmul.mubr.bf16.gmra.mxu0 %v644
  %v990 = vpop.f32.mrf.mxu0
  %v991 = vadd.f32 %v197, %v990
  %v992 = vpop.f32.mrf.mxu0
  %v993 = vpop.f32.mrf.mxu0
  %v994 = vadd.f32 %v197, %v993
  %v995 = vpop.f32.mrf.mxu0
  %996 = vmatprep.mubr.bf16.mxu0 0
  %997 = vmatmul.mubr.bf16.gmra.mxu0 %v647
  %v998 = vpop.f32.mrf.mxu0
  %v999 = vadd.f32 %v197, %v998
  %v1000 = vpop.f32.mrf.mxu0
  %v1001 = vpop.f32.mrf.mxu0
  %v1002 = vadd.f32 %v197, %v1001
  %v1003 = vpop.f32.mrf.mxu0
  %1004 = vmatprep.mubr.bf16.mxu0 0
  %1005 = vmatmul.mubr.bf16.gmra.mxu0 %v650
  %v1006 = vpop.f32.mrf.mxu0
  %v1007 = vadd.f32 %v197, %v1006
  %v1008 = vpop.f32.mrf.mxu0
  %v1009 = vpop.f32.mrf.mxu0
  %v1010 = vadd.f32 %v197, %v1009
  %v1011 = vpop.f32.mrf.mxu0
  %1012 = vmatprep.mubr.bf16.mxu0 0
  %1013 = vmatmul.mubr.bf16.gmra.mxu0 %v653
  %v1014 = vpop.f32.mrf.mxu0
  %v1015 = vadd.f32 %v197, %v1014
  %v1016 = vpop.f32.mrf.mxu0
  %v1017 = vpop.f32.mrf.mxu0
  %v1018 = vadd.f32 %v197, %v1017
  %v1019 = vpop.f32.mrf.mxu0
  %1020 = vmatprep.mubr.bf16.mxu0 0
  %1021 = vmatmul.mubr.bf16.gmra.mxu0 %v656
  %v1022 = vpop.f32.mrf.mxu0
  %v1023 = vadd.f32 %v197, %v1022
  %v1024 = vpop.f32.mrf.mxu0
  %v1025 = vpop.f32.mrf.mxu0
  %v1026 = vadd.f32 %v197, %v1025
  %v1027 = vpop.f32.mrf.mxu0
  %1028 = vmatprep.mubr.bf16.mxu0 0
  %1029 = vmatmul.mubr.bf16.gmra.mxu0 %v659
  %v1030 = vpop.f32.mrf.mxu0
  %v1031 = vadd.f32 %v197, %v1030
  %v1032 = vpop.f32.mrf.mxu0
  %v1033 = vpop.f32.mrf.mxu0
  %v1034 = vadd.f32 %v197, %v1033
  %v1035 = vpop.f32.mrf.mxu0
  %1036 = vmatprep.mubr.bf16.mxu0 0
  %1037 = vmatmul.mubr.bf16.gmra.mxu0 %v662
  %v1038 = vpop.f32.mrf.mxu0
  %v1039 = vadd.f32 %v197, %v1038
  %v1040 = vpop.f32.mrf.mxu0
  %v1041 = vpop.f32.mrf.mxu0
  %v1042 = vadd.f32 %v197, %v1041
  %v1043 = vpop.f32.mrf.mxu0
  %1044 = vmatprep.mubr.bf16.mxu0 0
  %1045 = vmatmul.mubr.bf16.gmra.mxu0 %v665
  %v1046 = vpop.f32.mrf.mxu0
  %v1047 = vadd.f32 %v197, %v1046
  %v1048 = vpop.f32.mrf.mxu0
  %v1049 = vpop.f32.mrf.mxu0
  %v1050 = vadd.f32 %v197, %v1049
  %v1051 = vpop.f32.mrf.mxu0
  %1052 = vmatprep.mubr.bf16.mxu0 0
  %1053 = vmatmul.mubr.bf16.gmra.mxu0 %v668
  %v1054 = vpop.f32.mrf.mxu0
  %v1055 = vadd.f32 %v197, %v1054
  %v1056 = vpop.f32.mrf.mxu0
  %v1057 = vpop.f32.mrf.mxu0
  %v1058 = vadd.f32 %v197, %v1057
  %v1059 = vpop.f32.mrf.mxu0
  %1060 = vmatprep.mubr.bf16.mxu0 0
  %1061 = vmatmul.mubr.bf16.gmra.mxu0 %v671
  %v1062 = vpop.f32.mrf.mxu0
  %v1063 = vadd.f32 %v197, %v1062
  %v1064 = vpop.f32.mrf.mxu0
  %v1065 = vpop.f32.mrf.mxu0
  %v1066 = vadd.f32 %v197, %v1065
  %v1067 = vpop.f32.mrf.mxu0
  %1068 = vmatprep.mubr.bf16.mxu0 0
  %1069 = vmatmul.mubr.bf16.gmra.mxu0 %v674
  %v1070 = vpop.f32.mrf.mxu0
  %v1071 = vadd.f32 %v197, %v1070
  %v1072 = vpop.f32.mrf.mxu0
  %v1073 = vpop.f32.mrf.mxu0
  %v1074 = vadd.f32 %v197, %v1073
  %v1075 = vpop.f32.mrf.mxu0
  %1076 = vmatprep.mubr.bf16.mxu0 0
  %1077 = vmatmul.mubr.bf16.gmra.mxu0 %v677
  %v1078 = vpop.f32.mrf.mxu0
  %v1079 = vadd.f32 %v197, %v1078
  %v1080 = vpop.f32.mrf.mxu0
  %v1081 = vpop.f32.mrf.mxu0
  %v1082 = vadd.f32 %v197, %v1081
  %v1083 = vpop.f32.mrf.mxu0
  %1084 = vmatprep.mubr.bf16.mxu0 0
  %1085 = vmatmul.mubr.bf16.gmra.mxu0 %v680
  %v1086 = vpop.f32.mrf.mxu0
  %v1087 = vadd.f32 %v197, %v1086
  %v1088 = vpop.f32.mrf.mxu0
  %v1089 = vpop.f32.mrf.mxu0
  %v1090 = vadd.f32 %v197, %v1089
  %v1091 = vpop.f32.mrf.mxu0
  %1092 = vmatprep.mubr.bf16.mxu0 0
  %1093 = vmatmul.mubr.bf16.gmra.mxu0 %v683
  %v1094 = vpop.f32.mrf.mxu0
  %v1095 = vadd.f32 %v197, %v1094
  %v1096 = vpop.f32.mrf.mxu0
  %v1097 = vpop.f32.mrf.mxu0
  %v1098 = vadd.f32 %v197, %v1097
  %v1099 = vpop.f32.mrf.mxu0
  %1100 = vmatprep.mubr.bf16.mxu0 0
  %1101 = vmatmul.mubr.bf16.gmra.mxu0 %v686
  %v1102 = vpop.f32.mrf.mxu0
  %v1103 = vadd.f32 %v197, %v1102
  %v1104 = vpop.f32.mrf.mxu0
  %v1105 = vpop.f32.mrf.mxu0
  %v1106 = vadd.f32 %v197, %v1105
  %v1107 = vpop.f32.mrf.mxu0
  %1108 = vmatprep.mubr.bf16.mxu0 0
  %1109 = vmatmul.mubr.bf16.gmra.mxu0 %v689
  %v1110 = vpop.f32.mrf.mxu0
  %v1111 = vadd.f32 %v197, %v1110
  %v1112 = vpop.f32.mrf.mxu0
  %v1113 = vpop.f32.mrf.mxu0
  %v1114 = vadd.f32 %v197, %v1113
  %v1115 = vpop.f32.mrf.mxu0
  %1116 = vmatprep.mubr.bf16.mxu0 0
  %1117 = vmatmul.mubr.bf16.gmra.mxu0 %v692
  %v1118 = vpop.f32.mrf.mxu0
  %v1119 = vadd.f32 %v197, %v1118
  %v1120 = vpop.f32.mrf.mxu0
  %v1121 = vpop.f32.mrf.mxu0
  %v1122 = vadd.f32 %v197, %v1121
  %v1123 = vpop.f32.mrf.mxu0
  %1124 = vmatprep.mubr.bf16.mxu0 0
  %1125 = vmatmul.mubr.bf16.gmra.mxu0 %v695
  %v1126 = vpop.f32.mrf.mxu0
  %v1127 = vadd.f32 %v197, %v1126
  %v1128 = vpop.f32.mrf.mxu0
  %v1129 = vpop.f32.mrf.mxu0
  %v1130 = vadd.f32 %v197, %v1129
  %v1131 = vpop.f32.mrf.mxu0
  %1132 = vmatprep.mubr.bf16.mxu0 0
  %1133 = vmatmul.mubr.bf16.gmra.mxu0 %v698
  %v1134 = vpop.f32.mrf.mxu0
  %v1135 = vadd.f32 %v197, %v1134
  %v1136 = vpop.f32.mrf.mxu0
  %v1137 = vpop.f32.mrf.mxu0
  %v1138 = vadd.f32 %v197, %v1137
  %v1139 = vpop.f32.mrf.mxu0
  %1140 = vmatprep.mubr.bf16.mxu0 0
  %1141 = vmatmul.mubr.bf16.gmra.mxu0 %v701
  %v1142 = vpop.f32.mrf.mxu0
  %v1143 = vadd.f32 %v197, %v1142
  %v1144 = vpop.f32.mrf.mxu0
  %v1145 = vpop.f32.mrf.mxu0
  %v1146 = vadd.f32 %v197, %v1145
  %v1147 = vpop.f32.mrf.mxu0
  %1148 = vmatprep.mubr.bf16.mxu0 0
  %1149 = vmatmul.mubr.bf16.gmra.mxu0 %v704
  %v1150 = vpop.f32.mrf.mxu0
  %v1151 = vadd.f32 %v197, %v1150
  %v1152 = vpop.f32.mrf.mxu0
  %v1153 = vpop.f32.mrf.mxu0
  %v1154 = vadd.f32 %v197, %v1153
  %v1155 = vpop.f32.mrf.mxu0
  %1156 = vmatprep.mubr.bf16.mxu0 0
  %1157 = vmatmul.mubr.bf16.gmra.mxu0 %v707
  %v1158 = vpop.f32.mrf.mxu0
  %v1159 = vadd.f32 %v197, %v1158
  %v1160 = vpop.f32.mrf.mxu0
  %v1161 = vpop.f32.mrf.mxu0
  %v1162 = vadd.f32 %v197, %v1161
  %v1163 = vpop.f32.mrf.mxu0
  %1164 = vmatprep.mubr.bf16.mxu0 0
  %1165 = vmatmul.mubr.bf16.gmra.mxu0 %v710
  %v1166 = vpop.f32.mrf.mxu0
  %v1167 = vadd.f32 %v197, %v1166
  %v1168 = vpop.f32.mrf.mxu0
  %v1169 = vpop.f32.mrf.mxu0
  %v1170 = vadd.f32 %v197, %v1169
  %v1171 = vpop.f32.mrf.mxu0
  %1172 = vmatprep.mubr.bf16.mxu0 0
  %1173 = vmatmul.mubr.bf16.gmra.mxu0 %v713
  %v1174 = vpop.f32.mrf.mxu0
  %v1175 = vadd.f32 %v197, %v1174
  %v1176 = vpop.f32.mrf.mxu0
  %v1177 = vpop.f32.mrf.mxu0
  %v1178 = vadd.f32 %v197, %v1177
  %v1179 = vpop.f32.mrf.mxu0
  %1180 = vmatprep.mubr.bf16.mxu0 0
  %1181 = vmatmul.mubr.bf16.gmra.mxu0 %v716
  %v1182 = vpop.f32.mrf.mxu0
  %v1183 = vadd.f32 %v197, %v1182
  %v1184 = vpop.f32.mrf.mxu0
  %v1185 = vpop.f32.mrf.mxu0
  %v1186 = vadd.f32 %v197, %v1185
  %v1187 = vpop.f32.mrf.mxu0
  %1188 = vmatprep.mubr.bf16.mxu0 0
  %1189 = vmatmul.mubr.bf16.gmra.mxu0 %v719
  %v1190 = vpop.f32.mrf.mxu0
  %v1191 = vadd.f32 %v197, %v1190
  %v1192 = vpop.f32.mrf.mxu0
  %v1193 = vpop.f32.mrf.mxu0
  %v1194 = vadd.f32 %v197, %v1193
  %v1195 = vpop.f32.mrf.mxu0
  %1196 = vmatprep.mubr.bf16.mxu0 0
  %1197 = vmatmul.mubr.bf16.gmra.mxu0 %v722
  %v1198 = vpop.f32.mrf.mxu0
  %v1199 = vadd.f32 %v197, %v1198
  %v1200 = vpop.f32.mrf.mxu0
  %v1201 = vpop.f32.mrf.mxu0
  %v1202 = vadd.f32 %v197, %v1201
  %v1203 = vpop.f32.mrf.mxu0
  %1204 = vmatprep.mubr.bf16.mxu0 0
  %1205 = vmatmul.mubr.bf16.gmra.mxu0 %v725
  %v1206 = vpop.f32.mrf.mxu0
  %v1207 = vadd.f32 %v197, %v1206
  %v1208 = vpop.f32.mrf.mxu0
  %v1209 = vpop.f32.mrf.mxu0
  %v1210 = vadd.f32 %v197, %v1209
  %v1211 = vpop.f32.mrf.mxu0
  %1212 = vmatprep.mubr.bf16.mxu0 0
  %1213 = vmatmul.mubr.bf16.gmra.mxu0 %v728
  %v1214 = vpop.f32.mrf.mxu0
  %v1215 = vadd.f32 %v197, %v1214
  %v1216 = vpop.f32.mrf.mxu0
  %v1217 = vpop.f32.mrf.mxu0
  %v1218 = vadd.f32 %v197, %v1217
  %v1219 = vpop.f32.mrf.mxu0
  %1220 = vmatprep.mubr.bf16.mxu0 0
  %1221 = vmatmul.mubr.bf16.gmra.mxu0 %v731
  %v1222 = vpop.f32.mrf.mxu0
  %v1223 = vadd.f32 %v197, %v1222
  %v1224 = vpop.f32.mrf.mxu0
  %v1225 = vpop.f32.mrf.mxu0
  %v1226 = vadd.f32 %v197, %v1225
  %v1227 = vpop.f32.mrf.mxu0
  %1228 = vmatprep.mubr.bf16.mxu0 0
  %1229 = vmatmul.mubr.bf16.gmra.mxu0 %v734
  %v1230 = vpop.f32.mrf.mxu0
  %v1231 = vadd.f32 %v197, %v1230
  %v1232 = vpop.f32.mrf.mxu0
  %v1233 = vpop.f32.mrf.mxu0
  %v1234 = vadd.f32 %v197, %v1233
  %v1235 = vpop.f32.mrf.mxu0
  %1236 = vmatprep.mubr.bf16.mxu0 0
  %1237 = vmatmul.mubr.bf16.gmra.mxu0 %v737
  %v1238 = vpop.f32.mrf.mxu0
  %v1239 = vadd.f32 %v197, %v1238
  %v1240 = vpop.f32.mrf.mxu0
  %v1241 = vpop.f32.mrf.mxu0
  %v1242 = vadd.f32 %v197, %v1241
  %v1243 = vpop.f32.mrf.mxu0
  %1244 = vmatprep.mubr.bf16.mxu0 0
  %1245 = vmatmul.mubr.bf16.gmra.mxu0 %v740
  %v1246 = vpop.f32.mrf.mxu0
  %v1247 = vadd.f32 %v197, %v1246
  %v1248 = vpop.f32.mrf.mxu0
  %v1249 = vpop.f32.mrf.mxu0
  %v1250 = vadd.f32 %v197, %v1249
  %v1251 = vpop.f32.mrf.mxu0
  %1252 = vmatprep.mubr.bf16.mxu0 0
  %1253 = vmatmul.mubr.bf16.gmra.mxu0 %v743
  %v1254 = vpop.f32.mrf.mxu0
  %v1255 = vadd.f32 %v197, %v1254
  %v1256 = vpop.f32.mrf.mxu0
  %v1257 = vpop.f32.mrf.mxu0
  %v1258 = vadd.f32 %v197, %v1257
  %v1259 = vpop.f32.mrf.mxu0
  %1260 = vmatprep.mubr.bf16.mxu0 0
  %1261 = vmatmul.mubr.bf16.gmra.mxu0 %v746
  %v1262 = vpop.f32.mrf.mxu0
  %v1263 = vadd.f32 %v197, %v1262
  %v1264 = vpop.f32.mrf.mxu0
  %v1265 = vpop.f32.mrf.mxu0
  %v1266 = vadd.f32 %v197, %v1265
  %v1267 = vpop.f32.mrf.mxu0
  %1268 = vmatprep.mubr.bf16.mxu0 0
  %1269 = vmatmul.mubr.bf16.gmra.mxu0 %v749
  %v1270 = vpop.f32.mrf.mxu0
  %v1271 = vadd.f32 %v197, %v1270
  %v1272 = vpop.f32.mrf.mxu0
  %v1273 = vpop.f32.mrf.mxu0
  %v1274 = vadd.f32 %v197, %v1273
  %v1275 = vpop.f32.mrf.mxu0
  %1276 = vmatprep.mubr.bf16.mxu0 0
  %1277 = vmatmul.mubr.bf16.gmra.mxu0 %v752
  %v1278 = vpop.f32.mrf.mxu0
  %v1279 = vadd.f32 %v197, %v1278
  %v1280 = vpop.f32.mrf.mxu0
  %v1281 = vpop.f32.mrf.mxu0
  %v1282 = vadd.f32 %v197, %v1281
  %v1283 = vpop.f32.mrf.mxu0
  %1284 = vmatprep.mubr.bf16.mxu0 0
  %1285 = vmatmul.mubr.bf16.gmra.mxu0 %v755
  %v1286 = vpop.f32.mrf.mxu0
  %v1287 = vadd.f32 %v197, %v1286
  %v1288 = vpop.f32.mrf.mxu0
  %v1289 = vpop.f32.mrf.mxu0
  %v1290 = vadd.f32 %v197, %v1289
  %v1291 = vpop.f32.mrf.mxu0
  %1292 = vmatprep.mubr.bf16.mxu0 0
  %1293 = vmatmul.mubr.bf16.gmra.mxu0 %v758
  %v1294 = vpop.f32.mrf.mxu0
  %v1295 = vadd.f32 %v197, %v1294
  %v1296 = vpop.f32.mrf.mxu0
  %v1297 = vpop.f32.mrf.mxu0
  %v1298 = vadd.f32 %v197, %v1297
  %v1299 = vpop.f32.mrf.mxu0
  %1300 = vmatprep.mubr.bf16.mxu0 0
  %1301 = vmatmul.mubr.bf16.gmra.mxu0 %v761
  %v1302 = vpop.f32.mrf.mxu0
  %v1303 = vadd.f32 %v197, %v1302
  %v1304 = vpop.f32.mrf.mxu0
  %v1305 = vpop.f32.mrf.mxu0
  %v1306 = vadd.f32 %v197, %v1305
  %v1307 = vpop.f32.mrf.mxu0
  %1308 = vmatprep.mubr.bf16.mxu0 0
  %1309 = vmatmul.mubr.bf16.gmra.mxu0 %v764
  %v1310 = vpop.f32.mrf.mxu0
  %v1311 = vadd.f32 %v197, %v1310
  %v1312 = vpop.f32.mrf.mxu0
  %v1313 = vpop.f32.mrf.mxu0
  %v1314 = vadd.f32 %v197, %v1313
  %v1315 = vpop.f32.mrf.mxu0
  %1316 = vmatprep.mubr.bf16.mxu0 0
  %1317 = vmatmul.mubr.bf16.gmra.mxu0 %v767
  %v1318 = vpop.f32.mrf.mxu0
  %v1319 = vadd.f32 %v197, %v1318
  %v1320 = vpop.f32.mrf.mxu0
  %v1321 = vpop.f32.mrf.mxu0
  %v1322 = vadd.f32 %v197, %v1321
  %v1323 = vpop.f32.mrf.mxu0
  %1324 = vmatprep.mubr.bf16.mxu0 0
  %1325 = vmatmul.mubr.bf16.gmra.mxu0 %v770
  %v1326 = vpop.f32.mrf.mxu0
  %v1327 = vadd.f32 %v197, %v1326
  %v1328 = vpop.f32.mrf.mxu0
  %v1329 = vpop.f32.mrf.mxu0
  %v1330 = vadd.f32 %v197, %v1329
  %v1331 = vpop.f32.mrf.mxu0
  %1332 = vmatprep.mubr.bf16.mxu0 0
  %1333 = vmatmul.mubr.bf16.gmra.mxu0 %v773
  %v1334 = vpop.f32.mrf.mxu0
  %v1335 = vadd.f32 %v197, %v1334
  %v1336 = vpop.f32.mrf.mxu0
  %v1337 = vpop.f32.mrf.mxu0
  %v1338 = vadd.f32 %v197, %v1337
  %v1339 = vpop.f32.mrf.mxu0
  %1340 = vmatprep.mubr.bf16.mxu0 0
  %1341 = vmatmul.mubr.bf16.gmra.mxu0 %v776
  %v1342 = vpop.f32.mrf.mxu0
  %v1343 = vadd.f32 %v197, %v1342
  %v1344 = vpop.f32.mrf.mxu0
  %v1345 = vpop.f32.mrf.mxu0
  %v1346 = vadd.f32 %v197, %v1345
  %v1347 = vpop.f32.mrf.mxu0
  %1348 = vmatprep.mubr.bf16.mxu0 0
  %1349 = vmatmul.mubr.bf16.gmra.mxu0 %v779
  %v1350 = vpop.f32.mrf.mxu0
  %v1351 = vadd.f32 %v197, %v1350
  %v1352 = vpop.f32.mrf.mxu0
  %v1353 = vpop.f32.mrf.mxu0
  %v1354 = vadd.f32 %v197, %v1353
  %v1355 = vpop.f32.mrf.mxu0
  %1356 = vmatprep.mubr.bf16.mxu0 0
  %1357 = vmatmul.mubr.bf16.gmra.mxu0 %v782
  %v1358 = vpop.f32.mrf.mxu0
  %v1359 = vadd.f32 %v197, %v1358
  %v1360 = vpop.f32.mrf.mxu0
  %v1361 = vpop.f32.mrf.mxu0
  %v1362 = vadd.f32 %v197, %v1361
  %v1363 = vpop.f32.mrf.mxu0
  %1364 = vmatprep.mubr.bf16.mxu0 0
  %1365 = vmatmul.mubr.bf16.gmra.mxu0 %v785
  %v1366 = vpop.f32.mrf.mxu0
  %v1367 = vadd.f32 %v197, %v1366
  %v1368 = vpop.f32.mrf.mxu0
  %v1369 = vpop.f32.mrf.mxu0
  %v1370 = vadd.f32 %v197, %v1369
  %v1371 = vpop.f32.mrf.mxu0
  %1372 = vmatprep.mubr.bf16.mxu0 0
  %1373 = vmatmul.mubr.bf16.gmra.mxu0 %v788
  %v1374 = vpop.f32.mrf.mxu0
  %v1375 = vadd.f32 %v197, %v1374
  %v1376 = vpop.f32.mrf.mxu0
  %v1377 = vpop.f32.mrf.mxu0
  %v1378 = vadd.f32 %v197, %v1377
  %v1379 = vpop.f32.mrf.mxu0
  %1380 = vmatprep.mubr.bf16.mxu0 0
  %1381 = vmatmul.mubr.bf16.gmra.mxu0 %v791
  %v1382 = vpop.f32.mrf.mxu0
  %v1383 = vadd.f32 %v197, %v1382
  %v1384 = vpop.f32.mrf.mxu0
  %v1385 = vpop.f32.mrf.mxu0
  %v1386 = vadd.f32 %v197, %v1385
  %v1387 = vpop.f32.mrf.mxu0
  %1388 = vmatprep.mubr.bf16.mxu0 0
  %1389 = vmatmul.mubr.bf16.gmra.mxu0 %v794
  %v1390 = vpop.f32.mrf.mxu0
  %v1391 = vadd.f32 %v197, %v1390
  %v1392 = vpop.f32.mrf.mxu0
  %v1393 = vpop.f32.mrf.mxu0
  %v1394 = vadd.f32 %v197, %v1393
  %v1395 = vpop.f32.mrf.mxu0
  %1396 = vmatprep.mubr.bf16.mxu0 0
  %1397 = vmatmul.mubr.bf16.gmra.mxu0 %v797
  %v1398 = vpop.f32.mrf.mxu0
  %v1399 = vadd.f32 %v197, %v1398
  %v1400 = vpop.f32.mrf.mxu0
  %v1401 = vpop.f32.mrf.mxu0
  %v1402 = vadd.f32 %v197, %v1401
  %v1403 = vpop.f32.mrf.mxu0
  %1404 = vmatprep.mubr.bf16.mxu0 0
  %1405 = vmatmul.mubr.bf16.gmra.mxu0 %v800
  %v1406 = vpop.f32.mrf.mxu0
  %v1407 = vadd.f32 %v197, %v1406
  %v1408 = vpop.f32.mrf.mxu0
  %v1409 = vpop.f32.mrf.mxu0
  %v1410 = vadd.f32 %v197, %v1409
  %v1411 = vpop.f32.mrf.mxu0
  %1412 = vmatprep.mubr.bf16.mxu0 0
  %1413 = vmatmul.mubr.bf16.gmra.mxu0 %v803
  %v1414 = vpop.f32.mrf.mxu0
  %v1415 = vadd.f32 %v197, %v1414
  %v1416 = vpop.f32.mrf.mxu0
  %v1417 = vpop.f32.mrf.mxu0
  %v1418 = vadd.f32 %v197, %v1417
  %v1419 = vpop.f32.mrf.mxu0
  %1420 = vmatprep.mubr.bf16.mxu0 0
  %1421 = vmatmul.mubr.bf16.gmra.mxu0 %v806
  %v1422 = vpop.f32.mrf.mxu0
  %v1423 = vadd.f32 %v197, %v1422
  %v1424 = vpop.f32.mrf.mxu0
  %v1425 = vpop.f32.mrf.mxu0
  %v1426 = vadd.f32 %v197, %v1425
  %v1427 = vpop.f32.mrf.mxu0
  %1428 = vmatprep.mubr.bf16.mxu0 0
  %1429 = vmatmul.mubr.bf16.gmra.mxu0 %v809
  %v1430 = vpop.f32.mrf.mxu0
  %v1431 = vadd.f32 %v197, %v1430
  %v1432 = vpop.f32.mrf.mxu0
  %v1433 = vpop.f32.mrf.mxu0
  %v1434 = vadd.f32 %v197, %v1433
  %v1435 = vpop.f32.mrf.mxu0
  %1436 = vmatprep.mubr.bf16.mxu0 0
  %1437 = vmatmul.mubr.bf16.gmra.mxu0 %v812
  %v1438 = vpop.f32.mrf.mxu0
  %v1439 = vadd.f32 %v197, %v1438
  %v1440 = vpop.f32.mrf.mxu0
  %v1441 = vpop.f32.mrf.mxu0
  %v1442 = vadd.f32 %v197, %v1441
  %v1443 = vpop.f32.mrf.mxu0
  %1444 = vmatprep.mubr.bf16.mxu0 0
  %1445 = vmatmul.mubr.bf16.gmra.mxu0 %v815
  %v1446 = vpop.f32.mrf.mxu0
  %v1447 = vadd.f32 %v197, %v1446
  %v1448 = vpop.f32.mrf.mxu0
  %v1449 = vpop.f32.mrf.mxu0
  %v1450 = vadd.f32 %v197, %v1449
  %v1451 = vpop.f32.mrf.mxu0
  %1452 = vmatprep.mubr.bf16.mxu0 0
  %1453 = vmatmul.mubr.bf16.gmra.mxu0 %v818
  %v1454 = vpop.f32.mrf.mxu0
  %v1455 = vadd.f32 %v197, %v1454
  %v1456 = vpop.f32.mrf.mxu0
  %v1457 = vpop.f32.mrf.mxu0
  %v1458 = vadd.f32 %v197, %v1457
  %v1459 = vpop.f32.mrf.mxu0
  %1460 = vdwg.mxu0
  %v1461 = vmax.f32 %v855, 0.0
  %v1462 = vmax.f32 %v858, 0.0
  %v1463 = vmax.f32 %v863, 0.0
  %v1464 = vmax.f32 %v866, 0.0
  %v1465 = vmax.f32 %v871, 0.0
  %v1466 = vmax.f32 %v874, 0.0
  %v1467 = vmax.f32 %v879, 0.0
  %v1468 = vmax.f32 %v882, 0.0
  %v1469 = vmax.f32 %v887, 0.0
  %v1470 = vmax.f32 %v890, 0.0
  %v1471 = vmax.f32 %v895, 0.0
  %v1472 = vmax.f32 %v898, 0.0
  %v1473 = vmax.f32 %v903, 0.0
  %v1474 = vmax.f32 %v906, 0.0
  %v1475 = vmax.f32 %v911, 0.0
  %v1476 = vmax.f32 %v914, 0.0
  %v1477 = vmax.f32 %v919, 0.0
  %v1478 = vmax.f32 %v922, 0.0
  %v1479 = vmax.f32 %v927, 0.0
  %v1480 = vmax.f32 %v930, 0.0
  %v1481 = vmax.f32 %v935, 0.0
  %v1482 = vmax.f32 %v938, 0.0
  %v1483 = vmax.f32 %v943, 0.0
  %v1484 = vmax.f32 %v946, 0.0
  %v1485 = vmax.f32 %v951, 0.0
  %v1486 = vmax.f32 %v954, 0.0
  %v1487 = vmax.f32 %v959, 0.0
  %v1488 = vmax.f32 %v962, 0.0
  %v1489 = vmax.f32 %v967, 0.0
  %v1490 = vmax.f32 %v970, 0.0
  %v1491 = vmax.f32 %v975, 0.0
  %v1492 = vmax.f32 %v978, 0.0
  %v1493 = vmax.f32 %v983, 0.0
  %v1494 = vmax.f32 %v986, 0.0
  %v1495 = vmax.f32 %v991, 0.0
  %v1496 = vmax.f32 %v994, 0.0
  %v1497 = vmax.f32 %v999, 0.0
  %v1498 = vmax.f32 %v1002, 0.0
  %v1499 = vmax.f32 %v1007, 0.0
  %v1500 = vmax.f32 %v1010, 0.0
  %v1501 = vmax.f32 %v1015, 0.0
  %v1502 = vmax.f32 %v1018, 0.0
  %v1503 = vmax.f32 %v1023, 0.0
  %v1504 = vmax.f32 %v1026, 0.0
  %v1505 = vmax.f32 %v1031, 0.0
  %v1506 = vmax.f32 %v1034, 0.0
  %v1507 = vmax.f32 %v1039, 0.0
  %v1508 = vmax.f32 %v1042, 0.0
  %v1509 = vmax.f32 %v1047, 0.0
  %v1510 = vmax.f32 %v1050, 0.0
  %v1511 = vmax.f32 %v1055, 0.0
  %v1512 = vmax.f32 %v1058, 0.0
  %v1513 = vmax.f32 %v1063, 0.0
  %v1514 = vmax.f32 %v1066, 0.0
  %v1515 = vmax.f32 %v1071, 0.0
  %v1516 = vmax.f32 %v1074, 0.0
  %v1517 = vmax.f32 %v1079, 0.0
  %v1518 = vmax.f32 %v1082, 0.0
  %v1519 = vmax.f32 %v1087, 0.0
  %v1520 = vmax.f32 %v1090, 0.0
  %v1521 = vmax.f32 %v1095, 0.0
  %v1522 = vmax.f32 %v1098, 0.0
  %v1523 = vmax.f32 %v1103, 0.0
  %v1524 = vmax.f32 %v1106, 0.0
  %v1525 = vmax.f32 %v1111, 0.0
  %v1526 = vmax.f32 %v1114, 0.0
  %v1527 = vmax.f32 %v1119, 0.0
  %v1528 = vmax.f32 %v1122, 0.0
  %v1529 = vmax.f32 %v1127, 0.0
  %v1530 = vmax.f32 %v1130, 0.0
  %v1531 = vmax.f32 %v1135, 0.0
  %v1532 = vmax.f32 %v1138, 0.0
  %v1533 = vmax.f32 %v1143, 0.0
  %v1534 = vmax.f32 %v1146, 0.0
  %v1535 = vmax.f32 %v1151, 0.0
  %v1536 = vmax.f32 %v1154, 0.0
  %v1537 = vmax.f32 %v1159, 0.0
  %v1538 = vmax.f32 %v1162, 0.0
  %v1539 = vmax.f32 %v1167, 0.0
  %v1540 = vmax.f32 %v1170, 0.0
  %v1541 = vmax.f32 %v1175, 0.0
  %v1542 = vmax.f32 %v1178, 0.0
  %v1543 = vmax.f32 %v1183, 0.0
  %v1544 = vmax.f32 %v1186, 0.0
  %v1545 = vmax.f32 %v1191, 0.0
  %v1546 = vmax.f32 %v1194, 0.0
  %v1547 = vmax.f32 %v1199, 0.0
  %v1548 = vmax.f32 %v1202, 0.0
  %v1549 = vmax.f32 %v1207, 0.0
  %v1550 = vmax.f32 %v1210, 0.0
  %v1551 = vmax.f32 %v1215, 0.0
  %v1552 = vmax.f32 %v1218, 0.0
  %v1553 = vmax.f32 %v1223, 0.0
  %v1554 = vmax.f32 %v1226, 0.0
  %v1555 = vmax.f32 %v1231, 0.0
  %v1556 = vmax.f32 %v1234, 0.0
  %v1557 = vmax.f32 %v1239, 0.0
  %v1558 = vmax.f32 %v1242, 0.0
  %v1559 = vmax.f32 %v1247, 0.0
  %v1560 = vmax.f32 %v1250, 0.0
  %v1561 = vmax.f32 %v1255, 0.0
  %v1562 = vmax.f32 %v1258, 0.0
  %v1563 = vmax.f32 %v1263, 0.0
  %v1564 = vmax.f32 %v1266, 0.0
  %v1565 = vmax.f32 %v1271, 0.0
  %v1566 = vmax.f32 %v1274, 0.0
  %v1567 = vmax.f32 %v1279, 0.0
  %v1568 = vmax.f32 %v1282, 0.0
  %v1569 = vmax.f32 %v1287, 0.0
  %v1570 = vmax.f32 %v1290, 0.0
  %v1571 = vmax.f32 %v1295, 0.0
  %v1572 = vmax.f32 %v1298, 0.0
  %v1573 = vmax.f32 %v1303, 0.0
  %v1574 = vmax.f32 %v1306, 0.0
  %v1575 = vmax.f32 %v1311, 0.0
  %v1576 = vmax.f32 %v1314, 0.0
  %v1577 = vmax.f32 %v1319, 0.0
  %v1578 = vmax.f32 %v1322, 0.0
  %v1579 = vmax.f32 %v1327, 0.0
  %v1580 = vmax.f32 %v1330, 0.0
  %v1581 = vmax.f32 %v1335, 0.0
  %v1582 = vmax.f32 %v1338, 0.0
  %v1583 = vmax.f32 %v1343, 0.0
  %v1584 = vmax.f32 %v1346, 0.0
  %v1585 = vmax.f32 %v1351, 0.0
  %v1586 = vmax.f32 %v1354, 0.0
  %v1587 = vmax.f32 %v1359, 0.0
  %v1588 = vmax.f32 %v1362, 0.0
  %v1589 = vmax.f32 %v1367, 0.0
  %v1590 = vmax.f32 %v1370, 0.0
  %v1591 = vmax.f32 %v1375, 0.0
  %v1592 = vmax.f32 %v1378, 0.0
  %v1593 = vmax.f32 %v1383, 0.0
  %v1594 = vmax.f32 %v1386, 0.0
  %v1595 = vmax.f32 %v1391, 0.0
  %v1596 = vmax.f32 %v1394, 0.0
  %v1597 = vmax.f32 %v1399, 0.0
  %v1598 = vmax.f32 %v1402, 0.0
  %v1599 = vmax.f32 %v1407, 0.0
  %v1600 = vmax.f32 %v1410, 0.0
  %v1601 = vmax.f32 %v1415, 0.0
  %v1602 = vmax.f32 %v1418, 0.0
  %v1603 = vmax.f32 %v1423, 0.0
  %v1604 = vmax.f32 %v1426, 0.0
  %v1605 = vmax.f32 %v1431, 0.0
  %v1606 = vmax.f32 %v1434, 0.0
  %v1607 = vmax.f32 %v1439, 0.0
  %v1608 = vmax.f32 %v1442, 0.0
  %v1609 = vmax.f32 %v1447, 0.0
  %v1610 = vmax.f32 %v1450, 0.0
  %v1611 = vmax.f32 %v1455, 0.0
  %v1612 = vmax.f32 %v1458, 0.0
  %v1613 = vmax.f32 %v1461, %v1499
  %v1614 = vmax.f32 %v1462, %v1500
  %v1615 = vmax.f32 %v1463, %v1501
  %v1616 = vmax.f32 %v1464, %v1502
  %v1617 = vmax.f32 %v1465, %v1503
  %v1618 = vmax.f32 %v1466, %v1504
  %v1619 = vmax.f32 %v1467, %v1505
  %v1620 = vmax.f32 %v1468, %v1506
  %v1621 = vmax.f32 %v1469, %v1507
  %v1622 = vmax.f32 %v1470, %v1508
  %v1623 = vmax.f32 %v1471, %v1509
  %v1624 = vmax.f32 %v1472, %v1510
  %v1625 = vmax.f32 %v1473, %v1511
  %v1626 = vmax.f32 %v1474, %v1512
  %v1627 = vmax.f32 %v1475, %v1513
  %v1628 = vmax.f32 %v1476, %v1514
  %v1629 = vmax.f32 %v1477, %v1515
  %v1630 = vmax.f32 %v1478, %v1516
  %v1631 = vmax.f32 %v1479, %v1517
  %v1632 = vmax.f32 %v1480, %v1518
  %v1633 = vmax.f32 %v1481, %v1519
  %v1634 = vmax.f32 %v1482, %v1520
  %v1635 = vmax.f32 %v1483, %v1521
  %v1636 = vmax.f32 %v1484, %v1522
  %v1637 = vmax.f32 %v1485, %v1523
  %v1638 = vmax.f32 %v1486, %v1524
  %v1639 = vmax.f32 %v1487, %v1525
  %v1640 = vmax.f32 %v1488, %v1526
  %v1641 = vmax.f32 %v1489, %v1527
  %v1642 = vmax.f32 %v1490, %v1528
  %v1643 = vmax.f32 %v1491, %v1529
  %v1644 = vmax.f32 %v1492, %v1530
  %v1645 = vmax.f32 %v1493, %v1531
  %v1646 = vmax.f32 %v1494, %v1532
  %v1647 = vmax.f32 %v1495, %v1533
  %v1648 = vmax.f32 %v1496, %v1534
  %v1649 = vmax.f32 %v1497, %v1535
  %v1650 = vmax.f32 %v1498, %v1536
  %v1651 = vmax.f32 %v1537, %v1575
  %v1652 = vmax.f32 %v1538, %v1576
  %v1653 = vmax.f32 %v1539, %v1577
  %v1654 = vmax.f32 %v1540, %v1578
  %v1655 = vmax.f32 %v1541, %v1579
  %v1656 = vmax.f32 %v1542, %v1580
  %v1657 = vmax.f32 %v1543, %v1581
  %v1658 = vmax.f32 %v1544, %v1582
  %v1659 = vmax.f32 %v1545, %v1583
  %v1660 = vmax.f32 %v1546, %v1584
  %v1661 = vmax.f32 %v1547, %v1585
  %v1662 = vmax.f32 %v1548, %v1586
  %v1663 = vmax.f32 %v1549, %v1587
  %v1664 = vmax.f32 %v1550, %v1588
  %v1665 = vmax.f32 %v1551, %v1589
  %v1666 = vmax.f32 %v1552, %v1590
  %v1667 = vmax.f32 %v1553, %v1591
  %v1668 = vmax.f32 %v1554, %v1592
  %v1669 = vmax.f32 %v1555, %v1593
  %v1670 = vmax.f32 %v1556, %v1594
  %v1671 = vmax.f32 %v1557, %v1595
  %v1672 = vmax.f32 %v1558, %v1596
  %v1673 = vmax.f32 %v1559, %v1597
  %v1674 = vmax.f32 %v1560, %v1598
  %v1675 = vmax.f32 %v1561, %v1599
  %v1676 = vmax.f32 %v1562, %v1600
  %v1677 = vmax.f32 %v1563, %v1601
  %v1678 = vmax.f32 %v1564, %v1602
  %v1679 = vmax.f32 %v1565, %v1603
  %v1680 = vmax.f32 %v1566, %v1604
  %v1681 = vmax.f32 %v1567, %v1605
  %v1682 = vmax.f32 %v1568, %v1606
  %v1683 = vmax.f32 %v1569, %v1607
  %v1684 = vmax.f32 %v1570, %v1608
  %v1685 = vmax.f32 %v1571, %v1609
  %v1686 = vmax.f32 %v1572, %v1610
  %v1687 = vmax.f32 %v1573, %v1611
  %v1688 = vmax.f32 %v1574, %v1612
  %v1689 = vmax.f32 %v1613, %v1651
  %v1690 = vmax.f32 %v1614, %v1652
  %v1691 = vmax.f32 %v1615, %v1653
  %v1692 = vmax.f32 %v1616, %v1654
  %v1693 = vmax.f32 %v1617, %v1655
  %v1694 = vmax.f32 %v1618, %v1656
  %v1695 = vmax.f32 %v1619, %v1657
  %v1696 = vmax.f32 %v1620, %v1658
  %v1697 = vmax.f32 %v1621, %v1659
  %v1698 = vmax.f32 %v1622, %v1660
  %v1699 = vmax.f32 %v1623, %v1661
  %v1700 = vmax.f32 %v1624, %v1662
  %v1701 = vmax.f32 %v1625, %v1663
  %v1702 = vmax.f32 %v1626, %v1664
  %v1703 = vmax.f32 %v1627, %v1665
  %v1704 = vmax.f32 %v1628, %v1666
  %v1705 = vmax.f32 %v1629, %v1667
  %v1706 = vmax.f32 %v1630, %v1668
  %v1707 = vmax.f32 %v1631, %v1669
  %v1708 = vmax.f32 %v1632, %v1670
  %v1709 = vmax.f32 %v1633, %v1671
  %v1710 = vmax.f32 %v1634, %v1672
  %v1711 = vmax.f32 %v1635, %v1673
  %v1712 = vmax.f32 %v1636, %v1674
  %v1713 = vmax.f32 %v1637, %v1675
  %v1714 = vmax.f32 %v1638, %v1676
  %v1715 = vmax.f32 %v1639, %v1677
  %v1716 = vmax.f32 %v1640, %v1678
  %v1717 = vmax.f32 %v1641, %v1679
  %v1718 = vmax.f32 %v1642, %v1680
  %v1719 = vmax.f32 %v1643, %v1681
  %v1720 = vmax.f32 %v1644, %v1682
  %v1721 = vmax.f32 %v1645, %v1683
  %v1722 = vmax.f32 %v1646, %v1684
  %v1723 = vmax.f32 %v1647, %v1685
  %v1724 = vmax.f32 %v1648, %v1686
  %v1725 = vmax.f32 %v1649, %v1687
  %v1726 = vmax.f32 %v1650, %v1688
  %v1727 = vpack.c.bf16 %v1690, %v1689
  %v1728 = vpack.c.bf16 %v1692, %v1691
  %v1729 = vpack.c.bf16 %v1694, %v1693
  %v1730 = vpack.c.bf16 %v1696, %v1695
  %v1731 = vpack.c.bf16 %v1698, %v1697
  %v1732 = vpack.c.bf16 %v1700, %v1699
  %v1733 = vpack.c.bf16 %v1702, %v1701
  %v1734 = vpack.c.bf16 %v1704, %v1703
  %v1735 = vpack.c.bf16 %v1706, %v1705
  %v1736 = vpack.c.bf16 %v1708, %v1707
  %v1737 = vpack.c.bf16 %v1710, %v1709
  %v1738 = vpack.c.bf16 %v1712, %v1711
  %v1739 = vpack.c.bf16 %v1714, %v1713
  %v1740 = vpack.c.bf16 %v1716, %v1715
  %v1741 = vpack.c.bf16 %v1718, %v1717
  %v1742 = vpack.c.bf16 %v1720, %v1719
  %v1743 = vpack.c.bf16 %v1722, %v1721
  %v1744 = vpack.c.bf16 %v1724, %v1723
  %v1745 = vpack.c.bf16 %v1726, %v1725
  %v1746 = vld [vmem:[%s4] sm:$0xff]
  %v1747 = vld [vmem:[%s4 + $0x8] sm:$0xff]
  %v1748 = vld [vmem:[%s4 + $0x10] sm:$0xff]
  %v1749 = vld [vmem:[%s4 + $0x18] sm:$0xff]
  %v1750 = vld [vmem:[%s4 + $0x20] sm:$0xff]
  %v1751 = vld [vmem:[%s4 + $0x28] sm:$0xff]
  %v1752 = vld [vmem:[%s4 + $0x30] sm:$0xff]
  %v1753 = vld [vmem:[%s4 + $0x38] sm:$0xff]
  %v1754 = vld [vmem:[%s4 + $0x40] sm:$0xff]
  %v1755 = vld [vmem:[%s4 + $0x48] sm:$0xff]
  %v1756 = vld [vmem:[%s4 + $0x50] sm:$0xff]
  %v1757 = vld [vmem:[%s4 + $0x58] sm:$0xff]
  %v1758 = vld [vmem:[%s4 + $0x60] sm:$0xf]
  %v1759 = vld [vmem:[%s4 + $0x64] sm:$0xff]
  %v1760 = vld [vmem:[%s4 + $0x6c] sm:$0xff]
  %v1761 = vld [vmem:[%s4 + $0x74] sm:$0xff]
  %v1762 = vld [vmem:[%s4 + $0x7c] sm:$0xff]
  %v1763 = vld [vmem:[%s4 + $0x84] sm:$0xff]
  %v1764 = vld [vmem:[%s4 + $0x8c] sm:$0xff]
  %v1765 = vld [vmem:[%s4 + $0x94] sm:$0xff]
  %v1766 = vld [vmem:[%s4 + $0x9c] sm:$0xff]
  %v1767 = vld [vmem:[%s4 + $0xa4] sm:$0xff]
  %v1768 = vld [vmem:[%s4 + $0xac] sm:$0xff]
  %v1769 = vld [vmem:[%s4 + $0xb4] sm:$0xff]
  %v1770 = vld [vmem:[%s4 + $0xbc] sm:$0xff]
  %v1771 = vld [vmem:[%s4 + $0xc4] sm:$0xf]
  %v1772 = vld [vmem:[%s4 + $0xc8] sm:$0xff]
  %v1773 = vld [vmem:[%s4 + $0xd0] sm:$0xff]
  %v1774 = vld [vmem:[%s4 + $0xd8] sm:$0xff]
  %v1775 = vld [vmem:[%s4 + $0xe0] sm:$0xff]
  %v1776 = vld [vmem:[%s4 + $0xe8] sm:$0xff]
  %v1777 = vld [vmem:[%s4 + $0xf0] sm:$0xff]
  %v1778 = vld [vmem:[%s4 + $0xf8] sm:$0xff]
  %v1779 = vld [vmem:[%s4 + $0x100] sm:$0xff]
  %v1780 = vld [vmem:[%s4 + $0x108] sm:$0xff]
  %v1781 = vld [vmem:[%s4 + $0x110] sm:$0xff]
  %v1782 = vld [vmem:[%s4 + $0x118] sm:$0xff]
  %v1783 = vld [vmem:[%s4 + $0x120] sm:$0xff]
  %v1784 = vld [vmem:[%s4 + $0x128] sm:$0xf]
  %v1785 = vld [vmem:[%s4 + $0x12c] sm:$0xff]
  %v1786 = vld [vmem:[%s4 + $0x134] sm:$0xff]
  %v1787 = vld [vmem:[%s4 + $0x13c] sm:$0xff]
  %v1788 = vld [vmem:[%s4 + $0x144] sm:$0xff]
  %v1789 = vld [vmem:[%s4 + $0x14c] sm:$0xff]
  %v1790 = vld [vmem:[%s4 + $0x154] sm:$0xff]
  %v1791 = vld [vmem:[%s4 + $0x15c] sm:$0xff]
  %v1792 = vld [vmem:[%s4 + $0x164] sm:$0xff]
  %v1793 = vld [vmem:[%s4 + $0x16c] sm:$0xff]
  %v1794 = vld [vmem:[%s4 + $0x174] sm:$0xff]
  %v1795 = vld [vmem:[%s4 + $0x17c] sm:$0xff]
  %v1796 = vld [vmem:[%s4 + $0x184] sm:$0xff]
  %v1797 = vld [vmem:[%s4 + $0x18c] sm:$0xf]
  %v1798 = vld [vmem:[%s4 + $0x190] sm:$0xff]
  %v1799 = vld [vmem:[%s4 + $0x198] sm:$0xff]
  %v1800 = vld [vmem:[%s4 + $0x1a0] sm:$0xff]
  %v1801 = vld [vmem:[%s4 + $0x1a8] sm:$0xff]
  %v1802 = vld [vmem:[%s4 + $0x1b0] sm:$0xff]
  %v1803 = vld [vmem:[%s4 + $0x1b8] sm:$0xff]
  %v1804 = vld [vmem:[%s4 + $0x1c0] sm:$0xff]
  %v1805 = vld [vmem:[%s4 + $0x1c8] sm:$0xff]
  %v1806 = vld [vmem:[%s4 + $0x1d0] sm:$0xff]
  %v1807 = vld [vmem:[%s4 + $0x1d8] sm:$0xff]
  %v1808 = vld [vmem:[%s4 + $0x1e0] sm:$0xff]
  %v1809 = vld [vmem:[%s4 + $0x1e8] sm:$0xff]
  %v1810 = vld [vmem:[%s4 + $0x1f0] sm:$0xf]
  %v1811 = vld [vmem:[%s4 + $0x1f4] sm:$0xff]
  %v1812 = vld [vmem:[%s4 + $0x1fc] sm:$0xff]
  %v1813 = vld [vmem:[%s4 + $0x204] sm:$0xff]
  %v1814 = vld [vmem:[%s4 + $0x20c] sm:$0xff]
  %v1815 = vld [vmem:[%s4 + $0x214] sm:$0xff]
  %v1816 = vld [vmem:[%s4 + $0x21c] sm:$0xff]
  %v1817 = vld [vmem:[%s4 + $0x224] sm:$0xff]
  %v1818 = vld [vmem:[%s4 + $0x22c] sm:$0xff]
  %v1819 = vld [vmem:[%s4 + $0x234] sm:$0xff]
  %v1820 = vld [vmem:[%s4 + $0x23c] sm:$0xff]
  %v1821 = vld [vmem:[%s4 + $0x244] sm:$0xff]
  %v1822 = vld [vmem:[%s4 + $0x24c] sm:$0xff]
  %v1823 = vld [vmem:[%s4 + $0x254] sm:$0xf]
  %v1824 = vld [vmem:[%s4 + $0x258] sm:$0xff]
  %v1825 = vld [vmem:[%s4 + $0x260] sm:$0xff]
  %v1826 = vld [vmem:[%s4 + $0x268] sm:$0xff]
  %v1827 = vld [vmem:[%s4 + $0x270] sm:$0xff]
  %v1828 = vld [vmem:[%s4 + $0x278] sm:$0xff]
  %v1829 = vld [vmem:[%s4 + $0x280] sm:$0xff]
  %v1830 = vld [vmem:[%s4 + $0x288] sm:$0xff]
  %v1831 = vld [vmem:[%s4 + $0x290] sm:$0xff]
  %v1832 = vld [vmem:[%s4 + $0x298] sm:$0xff]
  %v1833 = vld [vmem:[%s4 + $0x2a0] sm:$0xff]
  %v1834 = vld [vmem:[%s4 + $0x2a8] sm:$0xff]
  %v1835 = vld [vmem:[%s4 + $0x2b0] sm:$0xff]
  %v1836 = vld [vmem:[%s4 + $0x2b8] sm:$0xf]
  %v1837 = vld [vmem:[%s4 + $0x2bc] sm:$0xff]
  %v1838 = vld [vmem:[%s4 + $0x2c4] sm:$0xff]
  %v1839 = vld [vmem:[%s4 + $0x2cc] sm:$0xff]
  %v1840 = vld [vmem:[%s4 + $0x2d4] sm:$0xff]
  %v1841 = vld [vmem:[%s4 + $0x2dc] sm:$0xff]
  %v1842 = vld [vmem:[%s4 + $0x2e4] sm:$0xff]
  %v1843 = vld [vmem:[%s4 + $0x2ec] sm:$0xff]
  %v1844 = vld [vmem:[%s4 + $0x2f4] sm:$0xff]
  %v1845 = vld [vmem:[%s4 + $0x2fc] sm:$0xff]
  %v1846 = vld [vmem:[%s4 + $0x304] sm:$0xff]
  %v1847 = vld [vmem:[%s4 + $0x30c] sm:$0xff]
  %v1848 = vld [vmem:[%s4 + $0x314] sm:$0xff]
  %v1849 = vld [vmem:[%s4 + $0x31c] sm:$0xf]
  %v1850 = vld [vmem:[%s4 + $0x320] sm:$0xff]
  %v1851 = vld [vmem:[%s4 + $0x328] sm:$0xff]
  %v1852 = vld [vmem:[%s4 + $0x330] sm:$0xff]
  %v1853 = vld [vmem:[%s4 + $0x338] sm:$0xff]
  %v1854 = vld [vmem:[%s4 + $0x340] sm:$0xff]
  %v1855 = vld [vmem:[%s4 + $0x348] sm:$0xff]
  %v1856 = vld [vmem:[%s4 + $0x350] sm:$0xff]
  %v1857 = vld [vmem:[%s4 + $0x358] sm:$0xff]
  %v1858 = vld [vmem:[%s4 + $0x360] sm:$0xff]
  %v1859 = vld [vmem:[%s4 + $0x368] sm:$0xff]
  %v1860 = vld [vmem:[%s4 + $0x370] sm:$0xff]
  %v1861 = vld [vmem:[%s4 + $0x378] sm:$0xff]
  %v1862 = vld [vmem:[%s4 + $0x380] sm:$0xf]
  %v1863 = vld [vmem:[%s4 + $0x384] sm:$0xff]
  %v1864 = vld [vmem:[%s4 + $0x38c] sm:$0xff]
  %v1865 = vld [vmem:[%s4 + $0x394] sm:$0xff]
  %v1866 = vld [vmem:[%s4 + $0x39c] sm:$0xff]
  %v1867 = vld [vmem:[%s4 + $0x3a4] sm:$0xff]
  %v1868 = vld [vmem:[%s4 + $0x3ac] sm:$0xff]
  %v1869 = vld [vmem:[%s4 + $0x3b4] sm:$0xff]
  %v1870 = vld [vmem:[%s4 + $0x3bc] sm:$0xff]
  %v1871 = vld [vmem:[%s4 + $0x3c4] sm:$0xff]
  %v1872 = vld [vmem:[%s4 + $0x3cc] sm:$0xff]
  %v1873 = vld [vmem:[%s4 + $0x3d4] sm:$0xff]
  %v1874 = vld [vmem:[%s4 + $0x3dc] sm:$0xff]
  %v1875 = vld [vmem:[%s4 + $0x3e4] sm:$0xf]
  %v1876 = vld [vmem:[%s4 + $0x3e8] sm:$0xff]
  %v1877 = vld [vmem:[%s4 + $0x3f0] sm:$0xff]
  %v1878 = vld [vmem:[%s4 + $0x3f8] sm:$0xff]
  %v1879 = vld [vmem:[%s4 + $0x400] sm:$0xff]
  %v1880 = vld [vmem:[%s4 + $0x408] sm:$0xff]
  %v1881 = vld [vmem:[%s4 + $0x410] sm:$0xff]
  %v1882 = vld [vmem:[%s4 + $0x418] sm:$0xff]
  %v1883 = vld [vmem:[%s4 + $0x420] sm:$0xff]
  %v1884 = vld [vmem:[%s4 + $0x428] sm:$0xff]
  %v1885 = vld [vmem:[%s4 + $0x430] sm:$0xff]
  %v1886 = vld [vmem:[%s4 + $0x438] sm:$0xff]
  %v1887 = vld [vmem:[%s4 + $0x440] sm:$0xff]
  %v1888 = vld [vmem:[%s4 + $0x448] sm:$0xf]
  %v1889 = vld [vmem:[%s4 + $0x44c] sm:$0xff]
  %v1890 = vld [vmem:[%s4 + $0x454] sm:$0xff]
  %v1891 = vld [vmem:[%s4 + $0x45c] sm:$0xff]
  %v1892 = vld [vmem:[%s4 + $0x464] sm:$0xff]
  %v1893 = vld [vmem:[%s4 + $0x46c] sm:$0xff]
  %v1894 = vld [vmem:[%s4 + $0x474] sm:$0xff]
  %v1895 = vld [vmem:[%s4 + $0x47c] sm:$0xff]
  %v1896 = vld [vmem:[%s4 + $0x484] sm:$0xff]
  %v1897 = vld [vmem:[%s4 + $0x48c] sm:$0xff]
  %v1898 = vld [vmem:[%s4 + $0x494] sm:$0xff]
  %v1899 = vld [vmem:[%s4 + $0x49c] sm:$0xff]
  %v1900 = vld [vmem:[%s4 + $0x4a4] sm:$0xff]
  %v1901 = vld [vmem:[%s4 + $0x4ac] sm:$0xf]
  %v1902 = vld [vmem:[%s4 + $0x4b0] sm:$0xff]
  %v1903 = vld [vmem:[%s4 + $0x4b8] sm:$0xff]
  %v1904 = vld [vmem:[%s4 + $0x4c0] sm:$0xff]
  %v1905 = vld [vmem:[%s4 + $0x4c8] sm:$0xff]
  %v1906 = vld [vmem:[%s4 + $0x4d0] sm:$0xff]
  %v1907 = vld [vmem:[%s4 + $0x4d8] sm:$0xff]
  %v1908 = vld [vmem:[%s4 + $0x4e0] sm:$0xff]
  %v1909 = vld [vmem:[%s4 + $0x4e8] sm:$0xff]
  %v1910 = vld [vmem:[%s4 + $0x4f0] sm:$0xff]
  %v1911 = vld [vmem:[%s4 + $0x4f8] sm:$0xff]
  %v1912 = vld [vmem:[%s4 + $0x500] sm:$0xff]
  %v1913 = vld [vmem:[%s4 + $0x508] sm:$0xff]
  %v1914 = vld [vmem:[%s4 + $0x510] sm:$0xf]
  %v1915 = vld [vmem:[%s4 + $0x514] sm:$0xff]
  %v1916 = vld [vmem:[%s4 + $0x51c] sm:$0xff]
  %v1917 = vld [vmem:[%s4 + $0x524] sm:$0xff]
  %v1918 = vld [vmem:[%s4 + $0x52c] sm:$0xff]
  %v1919 = vld [vmem:[%s4 + $0x534] sm:$0xff]
  %v1920 = vld [vmem:[%s4 + $0x53c] sm:$0xff]
  %v1921 = vld [vmem:[%s4 + $0x544] sm:$0xff]
  %v1922 = vld [vmem:[%s4 + $0x54c] sm:$0xff]
  %v1923 = vld [vmem:[%s4 + $0x554] sm:$0xff]
  %v1924 = vld [vmem:[%s4 + $0x55c] sm:$0xff]
  %v1925 = vld [vmem:[%s4 + $0x564] sm:$0xff]
  %v1926 = vld [vmem:[%s4 + $0x56c] sm:$0xff]
  %v1927 = vld [vmem:[%s4 + $0x574] sm:$0xf]
  %v1928 = vld [vmem:[%s4 + $0x578] sm:$0xff]
  %v1929 = vld [vmem:[%s4 + $0x580] sm:$0xff]
  %v1930 = vld [vmem:[%s4 + $0x588] sm:$0xff]
  %v1931 = vld [vmem:[%s4 + $0x590] sm:$0xff]
  %v1932 = vld [vmem:[%s4 + $0x598] sm:$0xff]
  %v1933 = vld [vmem:[%s4 + $0x5a0] sm:$0xff]
  %v1934 = vld [vmem:[%s4 + $0x5a8] sm:$0xff]
  %v1935 = vld [vmem:[%s4 + $0x5b0] sm:$0xff]
  %v1936 = vld [vmem:[%s4 + $0x5b8] sm:$0xff]
  %v1937 = vld [vmem:[%s4 + $0x5c0] sm:$0xff]
  %v1938 = vld [vmem:[%s4 + $0x5c8] sm:$0xff]
  %v1939 = vld [vmem:[%s4 + $0x5d0] sm:$0xff]
  %v1940 = vld [vmem:[%s4 + $0x5d8] sm:$0xf]
  %v1941 = vld [vmem:[%s4 + $0x5dc] sm:$0xff]
  %v1942 = vld [vmem:[%s4 + $0x5e4] sm:$0xff]
  %v1943 = vld [vmem:[%s4 + $0x5ec] sm:$0xff]
  %v1944 = vld [vmem:[%s4 + $0x5f4] sm:$0xff]
  %v1945 = vld [vmem:[%s4 + $0x5fc] sm:$0xff]
  %v1946 = vld [vmem:[%s4 + $0x604] sm:$0xff]
  %v1947 = vld [vmem:[%s4 + $0x60c] sm:$0xff]
  %v1948 = vld [vmem:[%s4 + $0x614] sm:$0xff]
  %v1949 = vld [vmem:[%s4 + $0x61c] sm:$0xff]
  %v1950 = vld [vmem:[%s4 + $0x624] sm:$0xff]
  %v1951 = vld [vmem:[%s4 + $0x62c] sm:$0xff]
  %v1952 = vld [vmem:[%s4 + $0x634] sm:$0xff]
  %v1953 = vld [vmem:[%s4 + $0x63c] sm:$0xf]
  %v2162 = vunpack.c.l.b16 %v1746
  %v2163 = vunpack.c.h.b16 %v1746
  %v2164 = vunpack.c.l.b16 %v1747
  %v2165 = vunpack.c.h.b16 %v1747
  %v2166 = vunpack.c.l.b16 %v1748
  %v2167 = vunpack.c.h.b16 %v1748
  %v2168 = vunpack.c.l.b16 %v1749
  %v2169 = vunpack.c.h.b16 %v1749
  %v2170 = vunpack.c.l.b16 %v1750
  %v2171 = vunpack.c.h.b16 %v1750
  %v2172 = vunpack.c.l.b16 %v1751
  %v2173 = vunpack.c.h.b16 %v1751
  %v2174 = vunpack.c.l.b16 %v1752
  %v2175 = vunpack.c.h.b16 %v1752
  %v2176 = vunpack.c.l.b16 %v1753
  %v2177 = vunpack.c.h.b16 %v1753
  %v2178 = vunpack.c.l.b16 %v1754
  %v2179 = vunpack.c.h.b16 %v1754
  %v2180 = vunpack.c.l.b16 %v1755
  %v2181 = vunpack.c.h.b16 %v1755
  %v2182 = vunpack.c.l.b16 %v1756
  %v2183 = vunpack.c.h.b16 %v1756
  %v2184 = vunpack.c.l.b16 %v1757
  %v2185 = vunpack.c.h.b16 %v1757
  %v2186 = vunpack.c.l.b16 %v1758
  %v2187 = vunpack.c.l.b16 %v1759
  %v2188 = vunpack.c.h.b16 %v1759
  %v2189 = vunpack.c.l.b16 %v1760
  %v2190 = vunpack.c.h.b16 %v1760
  %v2191 = vunpack.c.l.b16 %v1761
  %v2192 = vunpack.c.h.b16 %v1761
  %v2193 = vunpack.c.l.b16 %v1762
  %v2194 = vunpack.c.h.b16 %v1762
  %v2195 = vunpack.c.l.b16 %v1763
  %v2196 = vunpack.c.h.b16 %v1763
  %v2197 = vunpack.c.l.b16 %v1764
  %v2198 = vunpack.c.h.b16 %v1764
  %v2199 = vunpack.c.l.b16 %v1765
  %v2200 = vunpack.c.h.b16 %v1765
  %v2201 = vunpack.c.l.b16 %v1766
  %v2202 = vunpack.c.h.b16 %v1766
  %v2203 = vunpack.c.l.b16 %v1767
  %v2204 = vunpack.c.h.b16 %v1767
  %v2205 = vunpack.c.l.b16 %v1768
  %v2206 = vunpack.c.h.b16 %v1768
  %v2207 = vunpack.c.l.b16 %v1769
  %v2208 = vunpack.c.h.b16 %v1769
  %v2209 = vunpack.c.l.b16 %v1770
  %v2210 = vunpack.c.h.b16 %v1770
  %v2211 = vunpack.c.l.b16 %v1771
  %v2212 = vunpack.c.l.b16 %v1772
  %v2213 = vunpack.c.h.b16 %v1772
  %v2214 = vunpack.c.l.b16 %v1773
  %v2215 = vunpack.c.h.b16 %v1773
  %v2216 = vunpack.c.l.b16 %v1774
  %v2217 = vunpack.c.h.b16 %v1774
  %v2218 = vunpack.c.l.b16 %v1775
  %v2219 = vunpack.c.h.b16 %v1775
  %v2220 = vunpack.c.l.b16 %v1776
  %v2221 = vunpack.c.h.b16 %v1776
  %v2222 = vunpack.c.l.b16 %v1777
  %v2223 = vunpack.c.h.b16 %v1777
  %v2224 = vunpack.c.l.b16 %v1778
  %v2225 = vunpack.c.h.b16 %v1778
  %v2226 = vunpack.c.l.b16 %v1779
  %v2227 = vunpack.c.h.b16 %v1779
  %v2228 = vunpack.c.l.b16 %v1780
  %v2229 = vunpack.c.h.b16 %v1780
  %v2230 = vunpack.c.l.b16 %v1781
  %v2231 = vunpack.c.h.b16 %v1781
  %v2232 = vunpack.c.l.b16 %v1782
  %v2233 = vunpack.c.h.b16 %v1782
  %v2234 = vunpack.c.l.b16 %v1783
  %v2235 = vunpack.c.h.b16 %v1783
  %v2236 = vunpack.c.l.b16 %v1784
  %v2237 = vunpack.c.l.b16 %v1785
  %v2238 = vunpack.c.h.b16 %v1785
  %v2239 = vunpack.c.l.b16 %v1786
  %v2240 = vunpack.c.h.b16 %v1786
  %v2241 = vunpack.c.l.b16 %v1787
  %v2242 = vunpack.c.h.b16 %v1787
  %v2243 = vunpack.c.l.b16 %v1788
  %v2244 = vunpack.c.h.b16 %v1788
  %v2245 = vunpack.c.l.b16 %v1789
  %v2246 = vunpack.c.h.b16 %v1789
  %v2247 = vunpack.c.l.b16 %v1790
  %v2248 = vunpack.c.h.b16 %v1790
  %v2249 = vunpack.c.l.b16 %v1791
  %v2250 = vunpack.c.h.b16 %v1791
  %v2251 = vunpack.c.l.b16 %v1792
  %v2252 = vunpack.c.h.b16 %v1792
  %v2253 = vunpack.c.l.b16 %v1793
  %v2254 = vunpack.c.h.b16 %v1793
  %v2255 = vunpack.c.l.b16 %v1794
  %v2256 = vunpack.c.h.b16 %v1794
  %v2257 = vunpack.c.l.b16 %v1795
  %v2258 = vunpack.c.h.b16 %v1795
  %v2259 = vunpack.c.l.b16 %v1796
  %v2260 = vunpack.c.h.b16 %v1796
  %v2261 = vunpack.c.l.b16 %v1797
  %v2262 = vunpack.c.l.b16 %v1798
  %v2263 = vunpack.c.h.b16 %v1798
  %v2264 = vunpack.c.l.b16 %v1799
  %v2265 = vunpack.c.h.b16 %v1799
  %v2266 = vunpack.c.l.b16 %v1800
  %v2267 = vunpack.c.h.b16 %v1800
  %v2268 = vunpack.c.l.b16 %v1801
  %v2269 = vunpack.c.h.b16 %v1801
  %v2270 = vunpack.c.l.b16 %v1802
  %v2271 = vunpack.c.h.b16 %v1802
  %v2272 = vunpack.c.l.b16 %v1803
  %v2273 = vunpack.c.h.b16 %v1803
  %v2274 = vunpack.c.l.b16 %v1804
  %v2275 = vunpack.c.h.b16 %v1804
  %v2276 = vunpack.c.l.b16 %v1805
  %v2277 = vunpack.c.h.b16 %v1805
  %v2278 = vunpack.c.l.b16 %v1806
  %v2279 = vunpack.c.h.b16 %v1806
  %v2280 = vunpack.c.l.b16 %v1807
  %v2281 = vunpack.c.h.b16 %v1807
  %v2282 = vunpack.c.l.b16 %v1808
  %v2283 = vunpack.c.h.b16 %v1808
  %v2284 = vunpack.c.l.b16 %v1809
  %v2285 = vunpack.c.h.b16 %v1809
  %v2286 = vunpack.c.l.b16 %v1810
  %v2287 = vunpack.c.l.b16 %v1811
  %v2288 = vunpack.c.h.b16 %v1811
  %v2289 = vunpack.c.l.b16 %v1812
  %v2290 = vunpack.c.h.b16 %v1812
  %v2291 = vunpack.c.l.b16 %v1813
  %v2292 = vunpack.c.h.b16 %v1813
  %v2293 = vunpack.c.l.b16 %v1814
  %v2294 = vunpack.c.h.b16 %v1814
  %v2295 = vunpack.c.l.b16 %v1815
  %v2296 = vunpack.c.h.b16 %v1815
  %v2297 = vunpack.c.l.b16 %v1816
  %v2298 = vunpack.c.h.b16 %v1816
  %v2299 = vunpack.c.l.b16 %v1817
  %v2300 = vunpack.c.h.b16 %v1817
  %v2301 = vunpack.c.l.b16 %v1818
  %v2302 = vunpack.c.h.b16 %v1818
  %v2303 = vunpack.c.l.b16 %v1819
  %v2304 = vunpack.c.h.b16 %v1819
  %v2305 = vunpack.c.l.b16 %v1820
  %v2306 = vunpack.c.h.b16 %v1820
  %v2307 = vunpack.c.l.b16 %v1821
  %v2308 = vunpack.c.h.b16 %v1821
  %v2309 = vunpack.c.l.b16 %v1822
  %v2310 = vunpack.c.h.b16 %v1822
  %v2311 = vunpack.c.l.b16 %v1823
  %v2312 = vunpack.c.l.b16 %v1824
  %v2313 = vunpack.c.h.b16 %v1824
  %v2314 = vunpack.c.l.b16 %v1825
  %v2315 = vunpack.c.h.b16 %v1825
  %v2316 = vunpack.c.l.b16 %v1826
  %v2317 = vunpack.c.h.b16 %v1826
  %v2318 = vunpack.c.l.b16 %v1827
  %v2319 = vunpack.c.h.b16 %v1827
  %v2320 = vunpack.c.l.b16 %v1828
  %v2321 = vunpack.c.h.b16 %v1828
  %v2322 = vunpack.c.l.b16 %v1829
  %v2323 = vunpack.c.h.b16 %v1829
  %v2324 = vunpack.c.l.b16 %v1830
  %v2325 = vunpack.c.h.b16 %v1830
  %v2326 = vunpack.c.l.b16 %v1831
  %v2327 = vunpack.c.h.b16 %v1831
  %v2328 = vunpack.c.l.b16 %v1832
  %v2329 = vunpack.c.h.b16 %v1832
  %v2330 = vunpack.c.l.b16 %v1833
  %v2331 = vunpack.c.h.b16 %v1833
  %v2332 = vunpack.c.l.b16 %v1834
  %v2333 = vunpack.c.h.b16 %v1834
  %v2334 = vunpack.c.l.b16 %v1835
  %v2335 = vunpack.c.h.b16 %v1835
  %v2336 = vunpack.c.l.b16 %v1836
  %v2337 = vunpack.c.l.b16 %v1837
  %v2338 = vunpack.c.h.b16 %v1837
  %v2339 = vunpack.c.l.b16 %v1838
  %v2340 = vunpack.c.h.b16 %v1838
  %v2341 = vunpack.c.l.b16 %v1839
  %v2342 = vunpack.c.h.b16 %v1839
  %v2343 = vunpack.c.l.b16 %v1840
  %v2344 = vunpack.c.h.b16 %v1840
  %v2345 = vunpack.c.l.b16 %v1841
  %v2346 = vunpack.c.h.b16 %v1841
  %v2347 = vunpack.c.l.b16 %v1842
  %v2348 = vunpack.c.h.b16 %v1842
  %v2349 = vunpack.c.l.b16 %v1843
  %v2350 = vunpack.c.h.b16 %v1843
  %v2351 = vunpack.c.l.b16 %v1844
  %v2352 = vunpack.c.h.b16 %v1844
  %v2353 = vunpack.c.l.b16 %v1845
  %v2354 = vunpack.c.h.b16 %v1845
  %v2355 = vunpack.c.l.b16 %v1846
  %v2356 = vunpack.c.h.b16 %v1846
  %v2357 = vunpack.c.l.b16 %v1847
  %v2358 = vunpack.c.h.b16 %v1847
  %v2359 = vunpack.c.l.b16 %v1848
  %v2360 = vunpack.c.h.b16 %v1848
  %v2361 = vunpack.c.l.b16 %v1849
  %v2362 = vunpack.c.l.b16 %v1850
  %v2363 = vunpack.c.h.b16 %v1850
  %v2364 = vunpack.c.l.b16 %v1851
  %v2365 = vunpack.c.h.b16 %v1851
  %v2366 = vunpack.c.l.b16 %v1852
  %v2367 = vunpack.c.h.b16 %v1852
  %v2368 = vunpack.c.l.b16 %v1853
  %v2369 = vunpack.c.h.b16 %v1853
  %v2370 = vunpack.c.l.b16 %v1854
  %v2371 = vunpack.c.h.b16 %v1854
  %v2372 = vunpack.c.l.b16 %v1855
  %v2373 = vunpack.c.h.b16 %v1855
  %v2374 = vunpack.c.l.b16 %v1856
  %v2375 = vunpack.c.h.b16 %v1856
  %v2376 = vunpack.c.l.b16 %v1857
  %v2377 = vunpack.c.h.b16 %v1857
  %v2378 = vunpack.c.l.b16 %v1858
  %v2379 = vunpack.c.h.b16 %v1858
  %v2380 = vunpack.c.l.b16 %v1859
  %v2381 = vunpack.c.h.b16 %v1859
  %v2382 = vunpack.c.l.b16 %v1860
  %v2383 = vunpack.c.h.b16 %v1860
  %v2384 = vunpack.c.l.b16 %v1861
  %v2385 = vunpack.c.h.b16 %v1861
  %v2386 = vunpack.c.l.b16 %v1862
  %v2387 = vunpack.c.l.b16 %v1863
  %v2388 = vunpack.c.h.b16 %v1863
  %v2389 = vunpack.c.l.b16 %v1864
  %v2390 = vunpack.c.h.b16 %v1864
  %v2391 = vunpack.c.l.b16 %v1865
  %v2392 = vunpack.c.h.b16 %v1865
  %v2393 = vunpack.c.l.b16 %v1866
  %v2394 = vunpack.c.h.b16 %v1866
  %v2395 = vunpack.c.l.b16 %v1867
  %v2396 = vunpack.c.h.b16 %v1867
  %v2397 = vunpack.c.l.b16 %v1868
  %v2398 = vunpack.c.h.b16 %v1868
  %v2399 = vunpack.c.l.b16 %v1869
  %v2400 = vunpack.c.h.b16 %v1869
  %v2401 = vunpack.c.l.b16 %v1870
  %v2402 = vunpack.c.h.b16 %v1870
  %v2403 = vunpack.c.l.b16 %v1871
  %v2404 = vunpack.c.h.b16 %v1871
  %v2405 = vunpack.c.l.b16 %v1872
  %v2406 = vunpack.c.h.b16 %v1872
  %v2407 = vunpack.c.l.b16 %v1873
  %v2408 = vunpack.c.h.b16 %v1873
  %v2409 = vunpack.c.l.b16 %v1874
  %v2410 = vunpack.c.h.b16 %v1874
  %v2411 = vunpack.c.l.b16 %v1875
  %v2412 = vunpack.c.l.b16 %v1876
  %v2413 = vunpack.c.h.b16 %v1876
  %v2414 = vunpack.c.l.b16 %v1877
  %v2415 = vunpack.c.h.b16 %v1877
  %v2416 = vunpack.c.l.b16 %v1878
  %v2417 = vunpack.c.h.b16 %v1878
  %v2418 = vunpack.c.l.b16 %v1879
  %v2419 = vunpack.c.h.b16 %v1879
  %v2420 = vunpack.c.l.b16 %v1880
  %v2421 = vunpack.c.h.b16 %v1880
  %v2422 = vunpack.c.l.b16 %v1881
  %v2423 = vunpack.c.h.b16 %v1881
  %v2424 = vunpack.c.l.b16 %v1882
  %v2425 = vunpack.c.h.b16 %v1882
  %v2426 = vunpack.c.l.b16 %v1883
  %v2427 = vunpack.c.h.b16 %v1883
  %v2428 = vunpack.c.l.b16 %v1884
  %v2429 = vunpack.c.h.b16 %v1884
  %v2430 = vunpack.c.l.b16 %v1885
  %v2431 = vunpack.c.h.b16 %v1885
  %v2432 = vunpack.c.l.b16 %v1886
  %v2433 = vunpack.c.h.b16 %v1886
  %v2434 = vunpack.c.l.b16 %v1887
  %v2435 = vunpack.c.h.b16 %v1887
  %v2436 = vunpack.c.l.b16 %v1888
  %v2437 = vunpack.c.l.b16 %v1889
  %v2438 = vunpack.c.h.b16 %v1889
  %v2439 = vunpack.c.l.b16 %v1890
  %v2440 = vunpack.c.h.b16 %v1890
  %v2441 = vunpack.c.l.b16 %v1891
  %v2442 = vunpack.c.h.b16 %v1891
  %v2443 = vunpack.c.l.b16 %v1892
  %v2444 = vunpack.c.h.b16 %v1892
  %v2445 = vunpack.c.l.b16 %v1893
  %v2446 = vunpack.c.h.b16 %v1893
  %v2447 = vunpack.c.l.b16 %v1894
  %v2448 = vunpack.c.h.b16 %v1894
  %v2449 = vunpack.c.l.b16 %v1895
  %v2450 = vunpack.c.h.b16 %v1895
  %v2451 = vunpack.c.l.b16 %v1896
  %v2452 = vunpack.c.h.b16 %v1896
  %v2453 = vunpack.c.l.b16 %v1897
  %v2454 = vunpack.c.h.b16 %v1897
  %v2455 = vunpack.c.l.b16 %v1898
  %v2456 = vunpack.c.h.b16 %v1898
  %v2457 = vunpack.c.l.b16 %v1899
  %v2458 = vunpack.c.h.b16 %v1899
  %v2459 = vunpack.c.l.b16 %v1900
  %v2460 = vunpack.c.h.b16 %v1900
  %v2461 = vunpack.c.l.b16 %v1901
  %v2462 = vunpack.c.l.b16 %v1902
  %v2463 = vunpack.c.h.b16 %v1902
  %v2464 = vunpack.c.l.b16 %v1903
  %v2465 = vunpack.c.h.b16 %v1903
  %v2466 = vunpack.c.l.b16 %v1904
  %v2467 = vunpack.c.h.b16 %v1904
  %v2468 = vunpack.c.l.b16 %v1905
  %v2469 = vunpack.c.h.b16 %v1905
  %v2470 = vunpack.c.l.b16 %v1906
  %v2471 = vunpack.c.h.b16 %v1906
  %v2472 = vunpack.c.l.b16 %v1907
  %v2473 = vunpack.c.h.b16 %v1907
  %v2474 = vunpack.c.l.b16 %v1908
  %v2475 = vunpack.c.h.b16 %v1908
  %v2476 = vunpack.c.l.b16 %v1909
  %v2477 = vunpack.c.h.b16 %v1909
  %v2478 = vunpack.c.l.b16 %v1910
  %v2479 = vunpack.c.h.b16 %v1910
  %v2480 = vunpack.c.l.b16 %v1911
  %v2481 = vunpack.c.h.b16 %v1911
  %v2482 = vunpack.c.l.b16 %v1912
  %v2483 = vunpack.c.h.b16 %v1912
  %v2484 = vunpack.c.l.b16 %v1913
  %v2485 = vunpack.c.h.b16 %v1913
  %v2486 = vunpack.c.l.b16 %v1914
  %v2487 = vunpack.c.l.b16 %v1915
  %v2488 = vunpack.c.h.b16 %v1915
  %v2489 = vunpack.c.l.b16 %v1916
  %v2490 = vunpack.c.h.b16 %v1916
  %v2491 = vunpack.c.l.b16 %v1917
  %v2492 = vunpack.c.h.b16 %v1917
  %v2493 = vunpack.c.l.b16 %v1918
  %v2494 = vunpack.c.h.b16 %v1918
  %v2495 = vunpack.c.l.b16 %v1919
  %v2496 = vunpack.c.h.b16 %v1919
  %v2497 = vunpack.c.l.b16 %v1920
  %v2498 = vunpack.c.h.b16 %v1920
  %v2499 = vunpack.c.l.b16 %v1921
  %v2500 = vunpack.c.h.b16 %v1921
  %v2501 = vunpack.c.l.b16 %v1922
  %v2502 = vunpack.c.h.b16 %v1922
  %v2503 = vunpack.c.l.b16 %v1923
  %v2504 = vunpack.c.h.b16 %v1923
  %v2505 = vunpack.c.l.b16 %v1924
  %v2506 = vunpack.c.h.b16 %v1924
  %v2507 = vunpack.c.l.b16 %v1925
  %v2508 = vunpack.c.h.b16 %v1925
  %v2509 = vunpack.c.l.b16 %v1926
  %v2510 = vunpack.c.h.b16 %v1926
  %v2511 = vunpack.c.l.b16 %v1927
  %v2512 = vunpack.c.l.b16 %v1928
  %v2513 = vunpack.c.h.b16 %v1928
  %v2514 = vunpack.c.l.b16 %v1929
  %v2515 = vunpack.c.h.b16 %v1929
  %v2516 = vunpack.c.l.b16 %v1930
  %v2517 = vunpack.c.h.b16 %v1930
  %v2518 = vunpack.c.l.b16 %v1931
  %v2519 = vunpack.c.h.b16 %v1931
  %v2520 = vunpack.c.l.b16 %v1932
  %v2521 = vunpack.c.h.b16 %v1932
  %v2522 = vunpack.c.l.b16 %v1933
  %v2523 = vunpack.c.h.b16 %v1933
  %v2524 = vunpack.c.l.b16 %v1934
  %v2525 = vunpack.c.h.b16 %v1934
  %v2526 = vunpack.c.l.b16 %v1935
  %v2527 = vunpack.c.h.b16 %v1935
  %v2528 = vunpack.c.l.b16 %v1936
  %v2529 = vunpack.c.h.b16 %v1936
  %v2530 = vunpack.c.l.b16 %v1937
  %v2531 = vunpack.c.h.b16 %v1937
  %v2532 = vunpack.c.l.b16 %v1938
  %v2533 = vunpack.c.h.b16 %v1938
  %v2534 = vunpack.c.l.b16 %v1939
  %v2535 = vunpack.c.h.b16 %v1939
  %v2536 = vunpack.c.l.b16 %v1940
  %v2537 = vunpack.c.l.b16 %v1941
  %v2538 = vunpack.c.h.b16 %v1941
  %v2539 = vunpack.c.l.b16 %v1942
  %v2540 = vunpack.c.h.b16 %v1942
  %v2541 = vunpack.c.l.b16 %v1943
  %v2542 = vunpack.c.h.b16 %v1943
  %v2543 = vunpack.c.l.b16 %v1944
  %v2544 = vunpack.c.h.b16 %v1944
  %v2545 = vunpack.c.l.b16 %v1945
  %v2546 = vunpack.c.h.b16 %v1945
  %v2547 = vunpack.c.l.b16 %v1946
  %v2548 = vunpack.c.h.b16 %v1946
  %v2549 = vunpack.c.l.b16 %v1947
  %v2550 = vunpack.c.h.b16 %v1947
  %v2551 = vunpack.c.l.b16 %v1948
  %v2552 = vunpack.c.h.b16 %v1948
  %v2553 = vunpack.c.l.b16 %v1949
  %v2554 = vunpack.c.h.b16 %v1949
  %v2555 = vunpack.c.l.b16 %v1950
  %v2556 = vunpack.c.h.b16 %v1950
  %v2557 = vunpack.c.l.b16 %v1951
  %v2558 = vunpack.c.h.b16 %v1951
  %v2559 = vunpack.c.l.b16 %v1952
  %v2560 = vunpack.c.h.b16 %v1952
  %v2561 = vunpack.c.l.b16 %v1953
  %v2562 = vpack.c.b16 %v2187, %v2162
  %v2563 = vpack.c.b16 %v2188, %v2163
  %v2564 = vpack.c.b16 %v2189, %v2164
  %v2565 = vpack.c.b16 %v2190, %v2165
  %v2566 = vpack.c.b16 %v2191, %v2166
  %v2567 = vpack.c.b16 %v2192, %v2167
  %v2568 = vpack.c.b16 %v2193, %v2168
  %v2569 = vpack.c.b16 %v2194, %v2169
  %v2570 = vpack.c.b16 %v2195, %v2170
  %v2571 = vpack.c.b16 %v2196, %v2171
  %v2572 = vpack.c.b16 %v2197, %v2172
  %v2573 = vpack.c.b16 %v2198, %v2173
  %v2574 = vpack.c.b16 %v2199, %v2174
  %v2575 = vpack.c.b16 %v2200, %v2175
  %v2576 = vpack.c.b16 %v2201, %v2176
  %v2577 = vpack.c.b16 %v2202, %v2177
  %v2578 = vpack.c.b16 %v2203, %v2178
  %v2579 = vpack.c.b16 %v2204, %v2179
  %v2580 = vpack.c.b16 %v2205, %v2180
  %v2581 = vpack.c.b16 %v2206, %v2181
  %v2582 = vpack.c.b16 %v2207, %v2182
  %v2583 = vpack.c.b16 %v2208, %v2183
  %v2584 = vpack.c.b16 %v2209, %v2184
  %v2585 = vpack.c.b16 %v2210, %v2185
  %v2586 = vpack.c.b16 %v2211, %v2186
  %v2587 = vpack.c.b16 %v2237, %v2212
  %v2588 = vpack.c.b16 %v2238, %v2213
  %v2589 = vpack.c.b16 %v2239, %v2214
  %v2590 = vpack.c.b16 %v2240, %v2215
  %v2591 = vpack.c.b16 %v2241, %v2216
  %v2592 = vpack.c.b16 %v2242, %v2217
  %v2593 = vpack.c.b16 %v2243, %v2218
  %v2594 = vpack.c.b16 %v2244, %v2219
  %v2595 = vpack.c.b16 %v2245, %v2220
  %v2596 = vpack.c.b16 %v2246, %v2221
  %v2597 = vpack.c.b16 %v2247, %v2222
  %v2598 = vpack.c.b16 %v2248, %v2223
  %v2599 = vpack.c.b16 %v2249, %v2224
  %v2600 = vpack.c.b16 %v2250, %v2225
  %v2601 = vpack.c.b16 %v2251, %v2226
  %v2602 = vpack.c.b16 %v2252, %v2227
  %v2603 = vpack.c.b16 %v2253, %v2228
  %v2604 = vpack.c.b16 %v2254, %v2229
  %v2605 = vpack.c.b16 %v2255, %v2230
  %v2606 = vpack.c.b16 %v2256, %v2231
  %v2607 = vpack.c.b16 %v2257, %v2232
  %v2608 = vpack.c.b16 %v2258, %v2233
  %v2609 = vpack.c.b16 %v2259, %v2234
  %v2610 = vpack.c.b16 %v2260, %v2235
  %v2611 = vpack.c.b16 %v2261, %v2236
  %v2612 = vpack.c.b16 %v2287, %v2262
  %v2613 = vpack.c.b16 %v2288, %v2263
  %v2614 = vpack.c.b16 %v2289, %v2264
  %v2615 = vpack.c.b16 %v2290, %v2265
  %v2616 = vpack.c.b16 %v2291, %v2266
  %v2617 = vpack.c.b16 %v2292, %v2267
  %v2618 = vpack.c.b16 %v2293, %v2268
  %v2619 = vpack.c.b16 %v2294, %v2269
  %v2620 = vpack.c.b16 %v2295, %v2270
  %v2621 = vpack.c.b16 %v2296, %v2271
  %v2622 = vpack.c.b16 %v2297, %v2272
  %v2623 = vpack.c.b16 %v2298, %v2273
  %v2624 = vpack.c.b16 %v2299, %v2274
  %v2625 = vpack.c.b16 %v2300, %v2275
  %v2626 = vpack.c.b16 %v2301, %v2276
  %v2627 = vpack.c.b16 %v2302, %v2277
  %v2628 = vpack.c.b16 %v2303, %v2278
  %v2629 = vpack.c.b16 %v2304, %v2279
  %v2630 = vpack.c.b16 %v2305, %v2280
  %v2631 = vpack.c.b16 %v2306, %v2281
  %v2632 = vpack.c.b16 %v2307, %v2282
  %v2633 = vpack.c.b16 %v2308, %v2283
  %v2634 = vpack.c.b16 %v2309, %v2284
  %v2635 = vpack.c.b16 %v2310, %v2285
  %v2636 = vpack.c.b16 %v2311, %v2286
  %v2637 = vpack.c.b16 %v2337, %v2312
  %v2638 = vpack.c.b16 %v2338, %v2313
  %v2639 = vpack.c.b16 %v2339, %v2314
  %v2640 = vpack.c.b16 %v2340, %v2315
  %v2641 = vpack.c.b16 %v2341, %v2316
  %v2642 = vpack.c.b16 %v2342, %v2317
  %v2643 = vpack.c.b16 %v2343, %v2318
  %v2644 = vpack.c.b16 %v2344, %v2319
  %v2645 = vpack.c.b16 %v2345, %v2320
  %v2646 = vpack.c.b16 %v2346, %v2321
  %v2647 = vpack.c.b16 %v2347, %v2322
  %v2648 = vpack.c.b16 %v2348, %v2323
  %v2649 = vpack.c.b16 %v2349, %v2324
  %v2650 = vpack.c.b16 %v2350, %v2325
  %v2651 = vpack.c.b16 %v2351, %v2326
  %v2652 = vpack.c.b16 %v2352, %v2327
  %v2653 = vpack.c.b16 %v2353, %v2328
  %v2654 = vpack.c.b16 %v2354, %v2329
  %v2655 = vpack.c.b16 %v2355, %v2330
  %v2656 = vpack.c.b16 %v2356, %v2331
  %v2657 = vpack.c.b16 %v2357, %v2332
  %v2658 = vpack.c.b16 %v2358, %v2333
  %v2659 = vpack.c.b16 %v2359, %v2334
  %v2660 = vpack.c.b16 %v2360, %v2335
  %v2661 = vpack.c.b16 %v2361, %v2336
  %v2662 = vpack.c.b16 %v2387, %v2362
  %v2663 = vpack.c.b16 %v2388, %v2363
  %v2664 = vpack.c.b16 %v2389, %v2364
  %v2665 = vpack.c.b16 %v2390, %v2365
  %v2666 = vpack.c.b16 %v2391, %v2366
  %v2667 = vpack.c.b16 %v2392, %v2367
  %v2668 = vpack.c.b16 %v2393, %v2368
  %v2669 = vpack.c.b16 %v2394, %v2369
  %v2670 = vpack.c.b16 %v2395, %v2370
  %v2671 = vpack.c.b16 %v2396, %v2371
  %v2672 = vpack.c.b16 %v2397, %v2372
  %v2673 = vpack.c.b16 %v2398, %v2373
  %v2674 = vpack.c.b16 %v2399, %v2374
  %v2675 = vpack.c.b16 %v2400, %v2375
  %v2676 = vpack.c.b16 %v2401, %v2376
  %v2677 = vpack.c.b16 %v2402, %v2377
  %v2678 = vpack.c.b16 %v2403, %v2378
  %v2679 = vpack.c.b16 %v2404, %v2379
  %v2680 = vpack.c.b16 %v2405, %v2380
  %v2681 = vpack.c.b16 %v2406, %v2381
  %v2682 = vpack.c.b16 %v2407, %v2382
  %v2683 = vpack.c.b16 %v2408, %v2383
  %v2684 = vpack.c.b16 %v2409, %v2384
  %v2685 = vpack.c.b16 %v2410, %v2385
  %v2686 = vpack.c.b16 %v2411, %v2386
  %v2687 = vpack.c.b16 %v2437, %v2412
  %v2688 = vpack.c.b16 %v2438, %v2413
  %v2689 = vpack.c.b16 %v2439, %v2414
  %v2690 = vpack.c.b16 %v2440, %v2415
  %v2691 = vpack.c.b16 %v2441, %v2416
  %v2692 = vpack.c.b16 %v2442, %v2417
  %v2693 = vpack.c.b16 %v2443, %v2418
  %v2694 = vpack.c.b16 %v2444, %v2419
  %v2695 = vpack.c.b16 %v2445, %v2420
  %v2696 = vpack.c.b16 %v2446, %v2421
  %v2697 = vpack.c.b16 %v2447, %v2422
  %v2698 = vpack.c.b16 %v2448, %v2423
  %v2699 = vpack.c.b16 %v2449, %v2424
  %v2700 = vpack.c.b16 %v2450, %v2425
  %v2701 = vpack.c.b16 %v2451, %v2426
  %v2702 = vpack.c.b16 %v2452, %v2427
  %v2703 = vpack.c.b16 %v2453, %v2428
  %v2704 = vpack.c.b16 %v2454, %v2429
  %v2705 = vpack.c.b16 %v2455, %v2430
  %v2706 = vpack.c.b16 %v2456, %v2431
  %v2707 = vpack.c.b16 %v2457, %v2432
  %v2708 = vpack.c.b16 %v2458, %v2433
  %v2709 = vpack.c.b16 %v2459, %v2434
  %v2710 = vpack.c.b16 %v2460, %v2435
  %v2711 = vpack.c.b16 %v2461, %v2436
  %v2712 = vpack.c.b16 %v2487, %v2462
  %v2713 = vpack.c.b16 %v2488, %v2463
  %v2714 = vpack.c.b16 %v2489, %v2464
  %v2715 = vpack.c.b16 %v2490, %v2465
  %v2716 = vpack.c.b16 %v2491, %v2466
  %v2717 = vpack.c.b16 %v2492, %v2467
  %v2718 = vpack.c.b16 %v2493, %v2468
  %v2719 = vpack.c.b16 %v2494, %v2469
  %v2720 = vpack.c.b16 %v2495, %v2470
  %v2721 = vpack.c.b16 %v2496, %v2471
  %v2722 = vpack.c.b16 %v2497, %v2472
  %v2723 = vpack.c.b16 %v2498, %v2473
  %v2724 = vpack.c.b16 %v2499, %v2474
  %v2725 = vpack.c.b16 %v2500, %v2475
  %v2726 = vpack.c.b16 %v2501, %v2476
  %v2727 = vpack.c.b16 %v2502, %v2477
  %v2728 = vpack.c.b16 %v2503, %v2478
  %v2729 = vpack.c.b16 %v2504, %v2479
  %v2730 = vpack.c.b16 %v2505, %v2480
  %v2731 = vpack.c.b16 %v2506, %v2481
  %v2732 = vpack.c.b16 %v2507, %v2482
  %v2733 = vpack.c.b16 %v2508, %v2483
  %v2734 = vpack.c.b16 %v2509, %v2484
  %v2735 = vpack.c.b16 %v2510, %v2485
  %v2736 = vpack.c.b16 %v2511, %v2486
  %v2737 = vpack.c.b16 %v2537, %v2512
  %v2738 = vpack.c.b16 %v2538, %v2513
  %v2739 = vpack.c.b16 %v2539, %v2514
  %v2740 = vpack.c.b16 %v2540, %v2515
  %v2741 = vpack.c.b16 %v2541, %v2516
  %v2742 = vpack.c.b16 %v2542, %v2517
  %v2743 = vpack.c.b16 %v2543, %v2518
  %v2744 = vpack.c.b16 %v2544, %v2519
  %v2745 = vpack.c.b16 %v2545, %v2520
  %v2746 = vpack.c.b16 %v2546, %v2521
  %v2747 = vpack.c.b16 %v2547, %v2522
  %v2748 = vpack.c.b16 %v2548, %v2523
  %v2749 = vpack.c.b16 %v2549, %v2524
  %v2750 = vpack.c.b16 %v2550, %v2525
  %v2751 = vpack.c.b16 %v2551, %v2526
  %v2752 = vpack.c.b16 %v2552, %v2527
  %v2753 = vpack.c.b16 %v2553, %v2528
  %v2754 = vpack.c.b16 %v2554, %v2529
  %v2755 = vpack.c.b16 %v2555, %v2530
  %v2756 = vpack.c.b16 %v2556, %v2531
  %v2757 = vpack.c.b16 %v2557, %v2532
  %v2758 = vpack.c.b16 %v2558, %v2533
  %v2759 = vpack.c.b16 %v2559, %v2534
  %v2760 = vpack.c.b16 %v2560, %v2535
  %v2761 = vpack.c.b16 %v2561, %v2536
  %2962 = vmatprep.subr.bf16.mxu0 %v2738
  %2963 = vmatpush1.bf16.msra.mxu0 %v2737
  %2964 = vmatprep.subr.bf16.mxu0 %v2713
  %2965 = vmatpush1.bf16.msra.mxu0 %v2712
  %2966 = vmatprep.subr.bf16.mxu0 %v2688
  %2967 = vmatpush1.bf16.msra.mxu0 %v2687
  %2968 = vmatprep.subr.bf16.mxu0 %v2663
  %2969 = vmatpush1.bf16.msra.mxu0 %v2662
  %2970 = vmatprep.subr.bf16.mxu0 %v2638
  %2971 = vmatpush1.bf16.msra.mxu0 %v2637
  %2972 = vmatprep.subr.bf16.mxu0 %v2613
  %2973 = vmatpush1.bf16.msra.mxu0 %v2612
  %2974 = vmatprep.subr.bf16.mxu0 %v2588
  %2975 = vmatpush1.bf16.msra.mxu0 %v2587
  %2976 = vmatprep.subr.bf16.mxu0 %v2563
  %2977 = vmatpush1.bf16.msra.mxu0 %v2562
  %2978 = vmatprep.subr.bf16.mxu0 0
  %2979 = vmatpush2.bf16.msra.mxu0 0
  %2980 = vmatprep.subr.bf16.mxu0 0
  %2981 = vmatpush2.bf16.msra.mxu0 0
  %2982 = vmatprep.subr.bf16.mxu0 0
  %2983 = vmatpush2.bf16.msra.mxu0 0
  %2984 = vmatprep.subr.bf16.mxu0 0
  %2985 = vmatpush2.bf16.msra.mxu0 0
  %2986 = vmatprep.subr.bf16.mxu0 0
  %2987 = vmatpush2.bf16.msra.mxu0 0
  %2988 = vmatprep.subr.bf16.mxu0 0
  %2989 = vmatpush2.bf16.msra.mxu0 0
  %2990 = vmatprep.subr.bf16.mxu0 0
  %2991 = vmatpush2.bf16.msra.mxu0 0
  %2992 = vmatprep.subr.bf16.mxu0 0
  %2993 = vmatpush2.bf16.msra.mxu0 0
  %2994 = vmatprep.mubr.bf16.mxu0 0
  %2995 = vmatmul.mubr.bf16.gmra.mxu0 %v1727
  %v2996 = vpop.f32.mrf.mxu0
  %v2997 = vadd.f32 0.0, %v2996
  %v2998 = vpop.f32.mrf.mxu0
  %v2999 = vadd.f32 0.0, %v2998
  %v3000 = vpop.f32.mrf.mxu0
  %v3001 = vadd.f32 0.0, %v3000
  %v3002 = vpop.f32.mrf.mxu0
  %v3003 = vadd.f32 0.0, %v3002
  %3004 = vmatprep.mubr.bf16.mxu0 0
  %3005 = vmatmul.mubr.bf16.gmra.mxu0 %v1728
  %v3006 = vpop.f32.mrf.mxu0
  %v3007 = vadd.f32 0.0, %v3006
  %v3008 = vpop.f32.mrf.mxu0
  %v3009 = vadd.f32 0.0, %v3008
  %v3010 = vpop.f32.mrf.mxu0
  %v3011 = vadd.f32 0.0, %v3010
  %v3012 = vpop.f32.mrf.mxu0
  %v3013 = vadd.f32 0.0, %v3012
  %3014 = vmatprep.mubr.bf16.mxu0 0
  %3015 = vmatmul.mubr.bf16.gmra.mxu0 %v1729
  %v3016 = vpop.f32.mrf.mxu0
  %v3017 = vadd.f32 0.0, %v3016
  %v3018 = vpop.f32.mrf.mxu0
  %v3019 = vadd.f32 0.0, %v3018
  %v3020 = vpop.f32.mrf.mxu0
  %v3021 = vadd.f32 0.0, %v3020
  %v3022 = vpop.f32.mrf.mxu0
  %v3023 = vadd.f32 0.0, %v3022
  %3024 = vmatprep.mubr.bf16.mxu0 0
  %3025 = vmatmul.mubr.bf16.gmra.mxu0 %v1730
  %v3026 = vpop.f32.mrf.mxu0
  %v3027 = vadd.f32 0.0, %v3026
  %v3028 = vpop.f32.mrf.mxu0
  %v3029 = vadd.f32 0.0, %v3028
  %v3030 = vpop.f32.mrf.mxu0
  %v3031 = vadd.f32 0.0, %v3030
  %v3032 = vpop.f32.mrf.mxu0
  %v3033 = vadd.f32 0.0, %v3032
  %3034 = vmatprep.mubr.bf16.mxu0 0
  %3035 = vmatmul.mubr.bf16.gmra.mxu0 %v1731
  %v3036 = vpop.f32.mrf.mxu0
  %v3037 = vadd.f32 0.0, %v3036
  %v3038 = vpop.f32.mrf.mxu0
  %v3039 = vadd.f32 0.0, %v3038
  %v3040 = vpop.f32.mrf.mxu0
  %v3041 = vadd.f32 0.0, %v3040
  %v3042 = vpop.f32.mrf.mxu0
  %v3043 = vadd.f32 0.0, %v3042
  %3044 = vmatprep.mubr.bf16.mxu0 0
  %3045 = vmatmul.mubr.bf16.gmra.mxu0 %v1732
  %v3046 = vpop.f32.mrf.mxu0
  %v3047 = vadd.f32 0.0, %v3046
  %v3048 = vpop.f32.mrf.mxu0
  %v3049 = vadd.f32 0.0, %v3048
  %v3050 = vpop.f32.mrf.mxu0
  %v3051 = vadd.f32 0.0, %v3050
  %v3052 = vpop.f32.mrf.mxu0
  %v3053 = vadd.f32 0.0, %v3052
  %3054 = vmatprep.mubr.bf16.mxu0 0
  %3055 = vmatmul.mubr.bf16.gmra.mxu0 %v1733
  %v3056 = vpop.f32.mrf.mxu0
  %v3057 = vadd.f32 0.0, %v3056
  %v3058 = vpop.f32.mrf.mxu0
  %v3059 = vadd.f32 0.0, %v3058
  %v3060 = vpop.f32.mrf.mxu0
  %v3061 = vadd.f32 0.0, %v3060
  %v3062 = vpop.f32.mrf.mxu0
  %v3063 = vadd.f32 0.0, %v3062
  %3064 = vmatprep.mubr.bf16.mxu0 0
  %3065 = vmatmul.mubr.bf16.gmra.mxu0 %v1734
  %v3066 = vpop.f32.mrf.mxu0
  %v3067 = vadd.f32 0.0, %v3066
  %v3068 = vpop.f32.mrf.mxu0
  %v3069 = vadd.f32 0.0, %v3068
  %v3070 = vpop.f32.mrf.mxu0
  %v3071 = vadd.f32 0.0, %v3070
  %v3072 = vpop.f32.mrf.mxu0
  %v3073 = vadd.f32 0.0, %v3072
  %3074 = vmatprep.mubr.bf16.mxu0 0
  %3075 = vmatmul.mubr.bf16.gmra.mxu0 %v1735
  %v3076 = vpop.f32.mrf.mxu0
  %v3077 = vadd.f32 0.0, %v3076
  %v3078 = vpop.f32.mrf.mxu0
  %v3079 = vadd.f32 0.0, %v3078
  %v3080 = vpop.f32.mrf.mxu0
  %v3081 = vadd.f32 0.0, %v3080
  %v3082 = vpop.f32.mrf.mxu0
  %v3083 = vadd.f32 0.0, %v3082
  %3084 = vmatprep.mubr.bf16.mxu0 0
  %3085 = vmatmul.mubr.bf16.gmra.mxu0 %v1736
  %v3086 = vpop.f32.mrf.mxu0
  %v3087 = vadd.f32 0.0, %v3086
  %v3088 = vpop.f32.mrf.mxu0
  %v3089 = vadd.f32 0.0, %v3088
  %v3090 = vpop.f32.mrf.mxu0
  %v3091 = vadd.f32 0.0, %v3090
  %v3092 = vpop.f32.mrf.mxu0
  %v3093 = vadd.f32 0.0, %v3092
  %3094 = vmatprep.mubr.bf16.mxu0 0
  %3095 = vmatmul.mubr.bf16.gmra.mxu0 %v1737
  %v3096 = vpop.f32.mrf.mxu0
  %v3097 = vadd.f32 0.0, %v3096
  %v3098 = vpop.f32.mrf.mxu0
  %v3099 = vadd.f32 0.0, %v3098
  %v3100 = vpop.f32.mrf.mxu0
  %v3101 = vadd.f32 0.0, %v3100
  %v3102 = vpop.f32.mrf.mxu0
  %v3103 = vadd.f32 0.0, %v3102
  %3104 = vmatprep.mubr.bf16.mxu0 0
  %3105 = vmatmul.mubr.bf16.gmra.mxu0 %v1738
  %v3106 = vpop.f32.mrf.mxu0
  %v3107 = vadd.f32 0.0, %v3106
  %v3108 = vpop.f32.mrf.mxu0
  %v3109 = vadd.f32 0.0, %v3108
  %v3110 = vpop.f32.mrf.mxu0
  %v3111 = vadd.f32 0.0, %v3110
  %v3112 = vpop.f32.mrf.mxu0
  %v3113 = vadd.f32 0.0, %v3112
  %3114 = vmatprep.mubr.bf16.mxu0 0
  %3115 = vmatmul.mubr.bf16.gmra.mxu0 %v1739
  %v3116 = vpop.f32.mrf.mxu0
  %v3117 = vadd.f32 0.0, %v3116
  %v3118 = vpop.f32.mrf.mxu0
  %v3119 = vadd.f32 0.0, %v3118
  %v3120 = vpop.f32.mrf.mxu0
  %v3121 = vadd.f32 0.0, %v3120
  %v3122 = vpop.f32.mrf.mxu0
  %v3123 = vadd.f32 0.0, %v3122
  %3124 = vmatprep.mubr.bf16.mxu0 0
  %3125 = vmatmul.mubr.bf16.gmra.mxu0 %v1740
  %v3126 = vpop.f32.mrf.mxu0
  %v3127 = vadd.f32 0.0, %v3126
  %v3128 = vpop.f32.mrf.mxu0
  %v3129 = vadd.f32 0.0, %v3128
  %v3130 = vpop.f32.mrf.mxu0
  %v3131 = vadd.f32 0.0, %v3130
  %v3132 = vpop.f32.mrf.mxu0
  %v3133 = vadd.f32 0.0, %v3132
  %3134 = vmatprep.mubr.bf16.mxu0 0
  %3135 = vmatmul.mubr.bf16.gmra.mxu0 %v1741
  %v3136 = vpop.f32.mrf.mxu0
  %v3137 = vadd.f32 0.0, %v3136
  %v3138 = vpop.f32.mrf.mxu0
  %v3139 = vadd.f32 0.0, %v3138
  %v3140 = vpop.f32.mrf.mxu0
  %v3141 = vadd.f32 0.0, %v3140
  %v3142 = vpop.f32.mrf.mxu0
  %v3143 = vadd.f32 0.0, %v3142
  %3144 = vmatprep.mubr.bf16.mxu0 0
  %3145 = vmatmul.mubr.bf16.gmra.mxu0 %v1742
  %v3146 = vpop.f32.mrf.mxu0
  %v3147 = vadd.f32 0.0, %v3146
  %v3148 = vpop.f32.mrf.mxu0
  %v3149 = vadd.f32 0.0, %v3148
  %v3150 = vpop.f32.mrf.mxu0
  %v3151 = vadd.f32 0.0, %v3150
  %v3152 = vpop.f32.mrf.mxu0
  %v3153 = vadd.f32 0.0, %v3152
  %3154 = vmatprep.mubr.bf16.mxu0 0
  %3155 = vmatmul.mubr.bf16.gmra.mxu0 %v1743
  %v3156 = vpop.f32.mrf.mxu0
  %v3157 = vpop.f32.mrf.mxu0
  %v3158 = vpop.f32.mrf.mxu0
  %v3159 = vpop.f32.mrf.mxu0
  %3160 = vmatprep.mubr.bf16.mxu0 0
  %3161 = vmatmul.mubr.bf16.gmra.mxu0 %v1744
  %v3162 = vpop.f32.mrf.mxu0
  %v3163 = vpop.f32.mrf.mxu0
  %v3164 = vpop.f32.mrf.mxu0
  %v3165 = vpop.f32.mrf.mxu0
  %3166 = vmatprep.mubr.bf16.mxu0 0
  %3167 = vmatmul.mubr.bf16.gmra.mxu0 %v1745
  %v3168 = vpop.f32.mrf.mxu0
  %v3169 = vpop.f32.mrf.mxu0
  %v3170 = vpop.f32.mrf.mxu0
  %v3171 = vpop.f32.mrf.mxu0
  %3172 = vdwg.mxu0
  %3173 = vmatprep.subr.bf16.mxu0 %v2740
  %3174 = vmatpush1.bf16.msra.mxu0 %v2739
  %3175 = vmatprep.subr.bf16.mxu0 %v2715
  %3176 = vmatpush1.bf16.msra.mxu0 %v2714
  %3177 = vmatprep.subr.bf16.mxu0 %v2690
  %3178 = vmatpush1.bf16.msra.mxu0 %v2689
  %3179 = vmatprep.subr.bf16.mxu0 %v2665
  %3180 = vmatpush1.bf16.msra.mxu0 %v2664
  %3181 = vmatprep.subr.bf16.mxu0 %v2640
  %3182 = vmatpush1.bf16.msra.mxu0 %v2639
  %3183 = vmatprep.subr.bf16.mxu0 %v2615
  %3184 = vmatpush1.bf16.msra.mxu0 %v2614
  %3185 = vmatprep.subr.bf16.mxu0 %v2590
  %3186 = vmatpush1.bf16.msra.mxu0 %v2589
  %3187 = vmatprep.subr.bf16.mxu0 %v2565
  %3188 = vmatpush1.bf16.msra.mxu0 %v2564
  %3189 = vmatprep.subr.bf16.mxu0 0
  %3190 = vmatpush2.bf16.msra.mxu0 0
  %3191 = vmatprep.subr.bf16.mxu0 0
  %3192 = vmatpush2.bf16.msra.mxu0 0
  %3193 = vmatprep.subr.bf16.mxu0 0
  %3194 = vmatpush2.bf16.msra.mxu0 0
  %3195 = vmatprep.subr.bf16.mxu0 0
  %3196 = vmatpush2.bf16.msra.mxu0 0
  %3197 = vmatprep.subr.bf16.mxu0 0
  %3198 = vmatpush2.bf16.msra.mxu0 0
  %3199 = vmatprep.subr.bf16.mxu0 0
  %3200 = vmatpush2.bf16.msra.mxu0 0
  %3201 = vmatprep.subr.bf16.mxu0 0
  %3202 = vmatpush2.bf16.msra.mxu0 0
  %3203 = vmatprep.subr.bf16.mxu0 0
  %3204 = vmatpush2.bf16.msra.mxu0 0
  %3205 = vmatprep.mubr.bf16.mxu0 0
  %3206 = vmatmul.mubr.bf16.gmra.mxu0 %v1727
  %v3207 = vpop.f32.mrf.mxu0
  %v3208 = vadd.f32 0.0, %v3207
  %v3209 = vpop.f32.mrf.mxu0
  %v3210 = vadd.f32 0.0, %v3209
  %v3211 = vpop.f32.mrf.mxu0
  %v3212 = vadd.f32 0.0, %v3211
  %v3213 = vpop.f32.mrf.mxu0
  %v3214 = vadd.f32 0.0, %v3213
  %3215 = vmatprep.mubr.bf16.mxu0 0
  %3216 = vmatmul.mubr.bf16.gmra.mxu0 %v1728
  %v3217 = vpop.f32.mrf.mxu0
  %v3218 = vadd.f32 0.0, %v3217
  %v3219 = vpop.f32.mrf.mxu0
  %v3220 = vadd.f32 0.0, %v3219
  %v3221 = vpop.f32.mrf.mxu0
  %v3222 = vadd.f32 0.0, %v3221
  %v3223 = vpop.f32.mrf.mxu0
  %v3224 = vadd.f32 0.0, %v3223
  %3225 = vmatprep.mubr.bf16.mxu0 0
  %3226 = vmatmul.mubr.bf16.gmra.mxu0 %v1729
  %v3227 = vpop.f32.mrf.mxu0
  %v3228 = vadd.f32 0.0, %v3227
  %v3229 = vpop.f32.mrf.mxu0
  %v3230 = vadd.f32 0.0, %v3229
  %v3231 = vpop.f32.mrf.mxu0
  %v3232 = vadd.f32 0.0, %v3231
  %v3233 = vpop.f32.mrf.mxu0
  %v3234 = vadd.f32 0.0, %v3233
  %3235 = vmatprep.mubr.bf16.mxu0 0
  %3236 = vmatmul.mubr.bf16.gmra.mxu0 %v1730
  %v3237 = vpop.f32.mrf.mxu0
  %v3238 = vadd.f32 0.0, %v3237
  %v3239 = vpop.f32.mrf.mxu0
  %v3240 = vadd.f32 0.0, %v3239
  %v3241 = vpop.f32.mrf.mxu0
  %v3242 = vadd.f32 0.0, %v3241
  %v3243 = vpop.f32.mrf.mxu0
  %v3244 = vadd.f32 0.0, %v3243
  %3245 = vmatprep.mubr.bf16.mxu0 0
  %3246 = vmatmul.mubr.bf16.gmra.mxu0 %v1731
  %v3247 = vpop.f32.mrf.mxu0
  %v3248 = vadd.f32 0.0, %v3247
  %v3249 = vpop.f32.mrf.mxu0
  %v3250 = vadd.f32 0.0, %v3249
  %v3251 = vpop.f32.mrf.mxu0
  %v3252 = vadd.f32 0.0, %v3251
  %v3253 = vpop.f32.mrf.mxu0
  %v3254 = vadd.f32 0.0, %v3253
  %3255 = vmatprep.mubr.bf16.mxu0 0
  %3256 = vmatmul.mubr.bf16.gmra.mxu0 %v1732
  %v3257 = vpop.f32.mrf.mxu0
  %v3258 = vadd.f32 0.0, %v3257
  %v3259 = vpop.f32.mrf.mxu0
  %v3260 = vadd.f32 0.0, %v3259
  %v3261 = vpop.f32.mrf.mxu0
  %v3262 = vadd.f32 0.0, %v3261
  %v3263 = vpop.f32.mrf.mxu0
  %v3264 = vadd.f32 0.0, %v3263
  %3265 = vmatprep.mubr.bf16.mxu0 0
  %3266 = vmatmul.mubr.bf16.gmra.mxu0 %v1733
  %v3267 = vpop.f32.mrf.mxu0
  %v3268 = vadd.f32 0.0, %v3267
  %v3269 = vpop.f32.mrf.mxu0
  %v3270 = vadd.f32 0.0, %v3269
  %v3271 = vpop.f32.mrf.mxu0
  %v3272 = vadd.f32 0.0, %v3271
  %v3273 = vpop.f32.mrf.mxu0
  %v3274 = vadd.f32 0.0, %v3273
  %3275 = vmatprep.mubr.bf16.mxu0 0
  %3276 = vmatmul.mubr.bf16.gmra.mxu0 %v1734
  %v3277 = vpop.f32.mrf.mxu0
  %v3278 = vadd.f32 0.0, %v3277
  %v3279 = vpop.f32.mrf.mxu0
  %v3280 = vadd.f32 0.0, %v3279
  %v3281 = vpop.f32.mrf.mxu0
  %v3282 = vadd.f32 0.0, %v3281
  %v3283 = vpop.f32.mrf.mxu0
  %v3284 = vadd.f32 0.0, %v3283
  %3285 = vmatprep.mubr.bf16.mxu0 0
  %3286 = vmatmul.mubr.bf16.gmra.mxu0 %v1735
  %v3287 = vpop.f32.mrf.mxu0
  %v3288 = vadd.f32 0.0, %v3287
  %v3289 = vpop.f32.mrf.mxu0
  %v3290 = vadd.f32 0.0, %v3289
  %v3291 = vpop.f32.mrf.mxu0
  %v3292 = vadd.f32 0.0, %v3291
  %v3293 = vpop.f32.mrf.mxu0
  %v3294 = vadd.f32 0.0, %v3293
  %3295 = vmatprep.mubr.bf16.mxu0 0
  %3296 = vmatmul.mubr.bf16.gmra.mxu0 %v1736
  %v3297 = vpop.f32.mrf.mxu0
  %v3298 = vadd.f32 0.0, %v3297
  %v3299 = vpop.f32.mrf.mxu0
  %v3300 = vadd.f32 0.0, %v3299
  %v3301 = vpop.f32.mrf.mxu0
  %v3302 = vadd.f32 0.0, %v3301
  %v3303 = vpop.f32.mrf.mxu0
  %v3304 = vadd.f32 0.0, %v3303
  %3305 = vmatprep.mubr.bf16.mxu0 0
  %3306 = vmatmul.mubr.bf16.gmra.mxu0 %v1737
  %v3307 = vpop.f32.mrf.mxu0
  %v3308 = vadd.f32 0.0, %v3307
  %v3309 = vpop.f32.mrf.mxu0
  %v3310 = vadd.f32 0.0, %v3309
  %v3311 = vpop.f32.mrf.mxu0
  %v3312 = vadd.f32 0.0, %v3311
  %v3313 = vpop.f32.mrf.mxu0
  %v3314 = vadd.f32 0.0, %v3313
  %3315 = vmatprep.mubr.bf16.mxu0 0
  %3316 = vmatmul.mubr.bf16.gmra.mxu0 %v1738
  %v3317 = vpop.f32.mrf.mxu0
  %v3318 = vadd.f32 0.0, %v3317
  %v3319 = vpop.f32.mrf.mxu0
  %v3320 = vadd.f32 0.0, %v3319
  %v3321 = vpop.f32.mrf.mxu0
  %v3322 = vadd.f32 0.0, %v3321
  %v3323 = vpop.f32.mrf.mxu0
  %v3324 = vadd.f32 0.0, %v3323
  %3325 = vmatprep.mubr.bf16.mxu0 0
  %3326 = vmatmul.mubr.bf16.gmra.mxu0 %v1739
  %v3327 = vpop.f32.mrf.mxu0
  %v3328 = vadd.f32 0.0, %v3327
  %v3329 = vpop.f32.mrf.mxu0
  %v3330 = vadd.f32 0.0, %v3329
  %v3331 = vpop.f32.mrf.mxu0
  %v3332 = vadd.f32 0.0, %v3331
  %v3333 = vpop.f32.mrf.mxu0
  %v3334 = vadd.f32 0.0, %v3333
  %3335 = vmatprep.mubr.bf16.mxu0 0
  %3336 = vmatmul.mubr.bf16.gmra.mxu0 %v1740
  %v3337 = vpop.f32.mrf.mxu0
  %v3338 = vadd.f32 0.0, %v3337
  %v3339 = vpop.f32.mrf.mxu0
  %v3340 = vadd.f32 0.0, %v3339
  %v3341 = vpop.f32.mrf.mxu0
  %v3342 = vadd.f32 0.0, %v3341
  %v3343 = vpop.f32.mrf.mxu0
  %v3344 = vadd.f32 0.0, %v3343
  %3345 = vmatprep.mubr.bf16.mxu0 0
  %3346 = vmatmul.mubr.bf16.gmra.mxu0 %v1741
  %v3347 = vpop.f32.mrf.mxu0
  %v3348 = vadd.f32 0.0, %v3347
  %v3349 = vpop.f32.mrf.mxu0
  %v3350 = vadd.f32 0.0, %v3349
  %v3351 = vpop.f32.mrf.mxu0
  %v3352 = vadd.f32 0.0, %v3351
  %v3353 = vpop.f32.mrf.mxu0
  %v3354 = vadd.f32 0.0, %v3353
  %3355 = vmatprep.mubr.bf16.mxu0 0
  %3356 = vmatmul.mubr.bf16.gmra.mxu0 %v1742
  %v3357 = vpop.f32.mrf.mxu0
  %v3358 = vadd.f32 0.0, %v3357
  %v3359 = vpop.f32.mrf.mxu0
  %v3360 = vadd.f32 0.0, %v3359
  %v3361 = vpop.f32.mrf.mxu0
  %v3362 = vadd.f32 0.0, %v3361
  %v3363 = vpop.f32.mrf.mxu0
  %v3364 = vadd.f32 0.0, %v3363
  %3365 = vmatprep.mubr.bf16.mxu0 0
  %3366 = vmatmul.mubr.bf16.gmra.mxu0 %v1743
  %v3367 = vpop.f32.mrf.mxu0
  %v3368 = vpop.f32.mrf.mxu0
  %v3369 = vpop.f32.mrf.mxu0
  %v3370 = vpop.f32.mrf.mxu0
  %3371 = vmatprep.mubr.bf16.mxu0 0
  %3372 = vmatmul.mubr.bf16.gmra.mxu0 %v1744
  %v3373 = vpop.f32.mrf.mxu0
  %v3374 = vpop.f32.mrf.mxu0
  %v3375 = vpop.f32.mrf.mxu0
  %v3376 = vpop.f32.mrf.mxu0
  %3377 = vmatprep.mubr.bf16.mxu0 0
  %3378 = vmatmul.mubr.bf16.gmra.mxu0 %v1745
  %v3379 = vpop.f32.mrf.mxu0
  %v3380 = vpop.f32.mrf.mxu0
  %v3381 = vpop.f32.mrf.mxu0
  %v3382 = vpop.f32.mrf.mxu0
  %3383 = vdwg.mxu0
  %3384 = vmatprep.subr.bf16.mxu0 %v2742
  %3385 = vmatpush1.bf16.msra.mxu0 %v2741
  %3386 = vmatprep.subr.bf16.mxu0 %v2717
  %3387 = vmatpush1.bf16.msra.mxu0 %v2716
  %3388 = vmatprep.subr.bf16.mxu0 %v2692
  %3389 = vmatpush1.bf16.msra.mxu0 %v2691
  %3390 = vmatprep.subr.bf16.mxu0 %v2667
  %3391 = vmatpush1.bf16.msra.mxu0 %v2666
  %3392 = vmatprep.subr.bf16.mxu0 %v2642
  %3393 = vmatpush1.bf16.msra.mxu0 %v2641
  %3394 = vmatprep.subr.bf16.mxu0 %v2617
  %3395 = vmatpush1.bf16.msra.mxu0 %v2616
  %3396 = vmatprep.subr.bf16.mxu0 %v2592
  %3397 = vmatpush1.bf16.msra.mxu0 %v2591
  %3398 = vmatprep.subr.bf16.mxu0 %v2567
  %3399 = vmatpush1.bf16.msra.mxu0 %v2566
  %3400 = vmatprep.subr.bf16.mxu0 0
  %3401 = vmatpush2.bf16.msra.mxu0 0
  %3402 = vmatprep.subr.bf16.mxu0 0
  %3403 = vmatpush2.bf16.msra.mxu0 0
  %3404 = vmatprep.subr.bf16.mxu0 0
  %3405 = vmatpush2.bf16.msra.mxu0 0
  %3406 = vmatprep.subr.bf16.mxu0 0
  %3407 = vmatpush2.bf16.msra.mxu0 0
  %3408 = vmatprep.subr.bf16.mxu0 0
  %3409 = vmatpush2.bf16.msra.mxu0 0
  %3410 = vmatprep.subr.bf16.mxu0 0
  %3411 = vmatpush2.bf16.msra.mxu0 0
  %3412 = vmatprep.subr.bf16.mxu0 0
  %3413 = vmatpush2.bf16.msra.mxu0 0
  %3414 = vmatprep.subr.bf16.mxu0 0
  %3415 = vmatpush2.bf16.msra.mxu0 0
  %3416 = vmatprep.mubr.bf16.mxu0 0
  %3417 = vmatmul.mubr.bf16.gmra.mxu0 %v1727
  %v3418 = vpop.f32.mrf.mxu0
  %v3419 = vadd.f32 0.0, %v3418
  %v3420 = vpop.f32.mrf.mxu0
  %v3421 = vpop.f32.mrf.mxu0
  %v3422 = vadd.f32 0.0, %v3421
  %v3423 = vpop.f32.mrf.mxu0
  %v3424 = vadd.f32 0.0, %v3423
  %3425 = vmatprep.mubr.bf16.mxu0 0
  %3426 = vmatmul.mubr.bf16.gmra.mxu0 %v1728
  %v3427 = vpop.f32.mrf.mxu0
  %v3428 = vadd.f32 0.0, %v3427
  %v3429 = vpop.f32.mrf.mxu0
  %v3430 = vadd.f32 0.0, %v3429
  %v3431 = vpop.f32.mrf.mxu0
  %v3432 = vadd.f32 0.0, %v3431
  %v3433 = vpop.f32.mrf.mxu0
  %v3434 = vadd.f32 0.0, %v3433
  %3435 = vmatprep.mubr.bf16.mxu0 0
  %3436 = vmatmul.mubr.bf16.gmra.mxu0 %v1729
  %v3437 = vpop.f32.mrf.mxu0
  %v3438 = vadd.f32 0.0, %v3437
  %v3439 = vpop.f32.mrf.mxu0
  %v3440 = vadd.f32 0.0, %v3439
  %v3441 = vpop.f32.mrf.mxu0
  %v3442 = vadd.f32 0.0, %v3441
  %v3443 = vpop.f32.mrf.mxu0
  %v3444 = vadd.f32 0.0, %v3443
  %3445 = vmatprep.mubr.bf16.mxu0 0
  %3446 = vmatmul.mubr.bf16.gmra.mxu0 %v1730
  %v3447 = vpop.f32.mrf.mxu0
  %v3448 = vadd.f32 0.0, %v3447
  %v3449 = vpop.f32.mrf.mxu0
  %v3450 = vadd.f32 0.0, %v3449
  %v3451 = vpop.f32.mrf.mxu0
  %v3452 = vadd.f32 0.0, %v3451
  %v3453 = vpop.f32.mrf.mxu0
  %v3454 = vadd.f32 0.0, %v3453
  %3455 = vmatprep.mubr.bf16.mxu0 0
  %3456 = vmatmul.mubr.bf16.gmra.mxu0 %v1731
  %v3457 = vpop.f32.mrf.mxu0
  %v3458 = vadd.f32 0.0, %v3457
  %v3459 = vpop.f32.mrf.mxu0
  %v3460 = vadd.f32 0.0, %v3459
  %v3461 = vpop.f32.mrf.mxu0
  %v3462 = vadd.f32 0.0, %v3461
  %v3463 = vpop.f32.mrf.mxu0
  %v3464 = vadd.f32 0.0, %v3463
  %3465 = vmatprep.mubr.bf16.mxu0 0
  %3466 = vmatmul.mubr.bf16.gmra.mxu0 %v1732
  %v3467 = vpop.f32.mrf.mxu0
  %v3468 = vadd.f32 0.0, %v3467
  %v3469 = vpop.f32.mrf.mxu0
  %v3470 = vadd.f32 0.0, %v3469
  %v3471 = vpop.f32.mrf.mxu0
  %v3472 = vadd.f32 0.0, %v3471
  %v3473 = vpop.f32.mrf.mxu0
  %v3474 = vadd.f32 0.0, %v3473
  %3475 = vmatprep.mubr.bf16.mxu0 0
  %3476 = vmatmul.mubr.bf16.gmra.mxu0 %v1733
  %v3477 = vpop.f32.mrf.mxu0
  %v3478 = vadd.f32 0.0, %v3477
  %v3479 = vpop.f32.mrf.mxu0
  %v3480 = vadd.f32 0.0, %v3479
  %v3481 = vpop.f32.mrf.mxu0
  %v3482 = vadd.f32 0.0, %v3481
  %v3483 = vpop.f32.mrf.mxu0
  %v3484 = vadd.f32 0.0, %v3483
  %3485 = vmatprep.mubr.bf16.mxu0 0
  %3486 = vmatmul.mubr.bf16.gmra.mxu0 %v1734
  %v3487 = vpop.f32.mrf.mxu0
  %v3488 = vadd.f32 0.0, %v3487
  %v3489 = vpop.f32.mrf.mxu0
  %v3490 = vadd.f32 0.0, %v3489
  %v3491 = vpop.f32.mrf.mxu0
  %v3492 = vadd.f32 0.0, %v3491
  %v3493 = vpop.f32.mrf.mxu0
  %v3494 = vadd.f32 0.0, %v3493
  %3495 = vmatprep.mubr.bf16.mxu0 0
  %3496 = vmatmul.mubr.bf16.gmra.mxu0 %v1735
  %v3497 = vpop.f32.mrf.mxu0
  %v3498 = vadd.f32 0.0, %v3497
  %v3499 = vpop.f32.mrf.mxu0
  %v3500 = vadd.f32 0.0, %v3499
  %v3501 = vpop.f32.mrf.mxu0
  %v3502 = vadd.f32 0.0, %v3501
  %v3503 = vpop.f32.mrf.mxu0
  %v3504 = vadd.f32 0.0, %v3503
  %3505 = vmatprep.mubr.bf16.mxu0 0
  %3506 = vmatmul.mubr.bf16.gmra.mxu0 %v1736
  %v3507 = vpop.f32.mrf.mxu0
  %v3508 = vadd.f32 0.0, %v3507
  %v3509 = vpop.f32.mrf.mxu0
  %v3510 = vadd.f32 0.0, %v3509
  %v3511 = vpop.f32.mrf.mxu0
  %v3512 = vadd.f32 0.0, %v3511
  %v3513 = vpop.f32.mrf.mxu0
  %v3514 = vadd.f32 0.0, %v3513
  %3515 = vmatprep.mubr.bf16.mxu0 0
  %3516 = vmatmul.mubr.bf16.gmra.mxu0 %v1737
  %v3517 = vpop.f32.mrf.mxu0
  %v3518 = vadd.f32 0.0, %v3517
  %v3519 = vpop.f32.mrf.mxu0
  %v3520 = vadd.f32 0.0, %v3519
  %v3521 = vpop.f32.mrf.mxu0
  %v3522 = vadd.f32 0.0, %v3521
  %v3523 = vpop.f32.mrf.mxu0
  %v3524 = vadd.f32 0.0, %v3523
  %3525 = vmatprep.mubr.bf16.mxu0 0
  %3526 = vmatmul.mubr.bf16.gmra.mxu0 %v1738
  %v3527 = vpop.f32.mrf.mxu0
  %v3528 = vadd.f32 0.0, %v3527
  %v3529 = vpop.f32.mrf.mxu0
  %v3530 = vadd.f32 0.0, %v3529
  %v3531 = vpop.f32.mrf.mxu0
  %v3532 = vadd.f32 0.0, %v3531
  %v3533 = vpop.f32.mrf.mxu0
  %v3534 = vadd.f32 0.0, %v3533
  %3535 = vmatprep.mubr.bf16.mxu0 0
  %3536 = vmatmul.mubr.bf16.gmra.mxu0 %v1739
  %v3537 = vpop.f32.mrf.mxu0
  %v3538 = vadd.f32 0.0, %v3537
  %v3539 = vpop.f32.mrf.mxu0
  %v3540 = vadd.f32 0.0, %v3539
  %v3541 = vpop.f32.mrf.mxu0
  %v3542 = vadd.f32 0.0, %v3541
  %v3543 = vpop.f32.mrf.mxu0
  %v3544 = vadd.f32 0.0, %v3543
  %3545 = vmatprep.mubr.bf16.mxu0 0
  %3546 = vmatmul.mubr.bf16.gmra.mxu0 %v1740
  %v3547 = vpop.f32.mrf.mxu0
  %v3548 = vadd.f32 0.0, %v3547
  %v3549 = vpop.f32.mrf.mxu0
  %v3550 = vadd.f32 0.0, %v3549
  %v3551 = vpop.f32.mrf.mxu0
  %v3552 = vadd.f32 0.0, %v3551
  %v3553 = vpop.f32.mrf.mxu0
  %v3554 = vadd.f32 0.0, %v3553
  %3555 = vmatprep.mubr.bf16.mxu0 0
  %3556 = vmatmul.mubr.bf16.gmra.mxu0 %v1741
  %v3557 = vpop.f32.mrf.mxu0
  %v3558 = vadd.f32 0.0, %v3557
  %v3559 = vpop.f32.mrf.mxu0
  %v3560 = vadd.f32 0.0, %v3559
  %v3561 = vpop.f32.mrf.mxu0
  %v3562 = vadd.f32 0.0, %v3561
  %v3563 = vpop.f32.mrf.mxu0
  %v3564 = vadd.f32 0.0, %v3563
  %3565 = vmatprep.mubr.bf16.mxu0 0
  %3566 = vmatmul.mubr.bf16.gmra.mxu0 %v1742
  %v3567 = vpop.f32.mrf.mxu0
  %v3568 = vadd.f32 0.0, %v3567
  %v3569 = vpop.f32.mrf.mxu0
  %v3570 = vadd.f32 0.0, %v3569
  %v3571 = vpop.f32.mrf.mxu0
  %v3572 = vadd.f32 0.0, %v3571
  %v3573 = vpop.f32.mrf.mxu0
  %v3574 = vadd.f32 0.0, %v3573
  %3575 = vmatprep.mubr.bf16.mxu0 0
  %3576 = vmatmul.mubr.bf16.gmra.mxu0 %v1743
  %v3577 = vpop.f32.mrf.mxu0
  %v3578 = vpop.f32.mrf.mxu0
  %v3579 = vadd.f32 0.0, %v3578
  %v3580 = vpop.f32.mrf.mxu0
  %v3581 = vpop.f32.mrf.mxu0
  %3582 = vmatprep.mubr.bf16.mxu0 0
  %3583 = vmatmul.mubr.bf16.gmra.mxu0 %v1744
  %v3584 = vpop.f32.mrf.mxu0
  %v3585 = vpop.f32.mrf.mxu0
  %v3586 = vpop.f32.mrf.mxu0
  %v3587 = vpop.f32.mrf.mxu0
  %3588 = vmatprep.mubr.bf16.mxu0 0
  %3589 = vmatmul.mubr.bf16.gmra.mxu0 %v1745
  %v3590 = vpop.f32.mrf.mxu0
  %v3591 = vpop.f32.mrf.mxu0
  %v3592 = vpop.f32.mrf.mxu0
  %v3593 = vpop.f32.mrf.mxu0
  %3594 = vdwg.mxu0
  %3595 = vmatprep.subr.bf16.mxu0 %v2744
  %3596 = vmatpush1.bf16.msra.mxu0 %v2743
  %3597 = vmatprep.subr.bf16.mxu0 %v2719
  %3598 = vmatpush1.bf16.msra.mxu0 %v2718
  %3599 = vmatprep.subr.bf16.mxu0 %v2694
  %3600 = vmatpush1.bf16.msra.mxu0 %v2693
  %3601 = vmatprep.subr.bf16.mxu0 %v2669
  %3602 = vmatpush1.bf16.msra.mxu0 %v2668
  %3603 = vmatprep.subr.bf16.mxu0 %v2644
  %3604 = vmatpush1.bf16.msra.mxu0 %v2643
  %3605 = vmatprep.subr.bf16.mxu0 %v2619
  %3606 = vmatpush1.bf16.msra.mxu0 %v2618
  %3607 = vmatprep.subr.bf16.mxu0 %v2594
  %3608 = vmatpush1.bf16.msra.mxu0 %v2593
  %3609 = vmatprep.subr.bf16.mxu0 %v2569
  %3610 = vmatpush1.bf16.msra.mxu0 %v2568
  %3611 = vmatprep.subr.bf16.mxu0 0
  %3612 = vmatpush2.bf16.msra.mxu0 0
  %3613 = vmatprep.subr.bf16.mxu0 0
  %3614 = vmatpush2.bf16.msra.mxu0 0
  %3615 = vmatprep.subr.bf16.mxu0 0
  %3616 = vmatpush2.bf16.msra.mxu0 0
  %3617 = vmatprep.subr.bf16.mxu0 0
  %3618 = vmatpush2.bf16.msra.mxu0 0
  %3619 = vmatprep.subr.bf16.mxu0 0
  %3620 = vmatpush2.bf16.msra.mxu0 0
  %3621 = vmatprep.subr.bf16.mxu0 0
  %3622 = vmatpush2.bf16.msra.mxu0 0
  %3623 = vmatprep.subr.bf16.mxu0 0
  %3624 = vmatpush2.bf16.msra.mxu0 0
  %3625 = vmatprep.subr.bf16.mxu0 0
  %3626 = vmatpush2.bf16.msra.mxu0 0
  %3627 = vmatprep.mubr.bf16.mxu0 0
  %3628 = vmatmul.mubr.bf16.gmra.mxu0 %v1727
  %v3629 = vpop.f32.mrf.mxu0
  %v3630 = vpop.f32.mrf.mxu0
  %v3631 = vpop.f32.mrf.mxu0
  %v3632 = vadd.f32 0.0, %v3631
  %v3633 = vpop.f32.mrf.mxu0
  %v3634 = vadd.f32 0.0, %v3633
  %3635 = vmatprep.mubr.bf16.mxu0 0
  %3636 = vmatmul.mubr.bf16.gmra.mxu0 %v1728
  %v3637 = vpop.f32.mrf.mxu0
  %v3638 = vadd.f32 0.0, %v3637
  %v3639 = vpop.f32.mrf.mxu0
  %v3640 = vadd.f32 0.0, %v3639
  %v3641 = vpop.f32.mrf.mxu0
  %v3642 = vadd.f32 0.0, %v3641
  %v3643 = vpop.f32.mrf.mxu0
  %v3644 = vadd.f32 0.0, %v3643
  %3645 = vmatprep.mubr.bf16.mxu0 0
  %3646 = vmatmul.mubr.bf16.gmra.mxu0 %v1729
  %v3647 = vpop.f32.mrf.mxu0
  %v3648 = vadd.f32 0.0, %v3647
  %v3649 = vpop.f32.mrf.mxu0
  %v3650 = vadd.f32 0.0, %v3649
  %v3651 = vpop.f32.mrf.mxu0
  %v3652 = vadd.f32 0.0, %v3651
  %v3653 = vpop.f32.mrf.mxu0
  %v3654 = vadd.f32 0.0, %v3653
  %3655 = vmatprep.mubr.bf16.mxu0 0
  %3656 = vmatmul.mubr.bf16.gmra.mxu0 %v1730
  %v3657 = vpop.f32.mrf.mxu0
  %v3658 = vadd.f32 0.0, %v3657
  %v3659 = vpop.f32.mrf.mxu0
  %v3660 = vadd.f32 0.0, %v3659
  %v3661 = vpop.f32.mrf.mxu0
  %v3662 = vadd.f32 0.0, %v3661
  %v3663 = vpop.f32.mrf.mxu0
  %v3664 = vadd.f32 0.0, %v3663
  %3665 = vmatprep.mubr.bf16.mxu0 0
  %3666 = vmatmul.mubr.bf16.gmra.mxu0 %v1731
  %v3667 = vpop.f32.mrf.mxu0
  %v3668 = vadd.f32 0.0, %v3667
  %v3669 = vpop.f32.mrf.mxu0
  %v3670 = vadd.f32 0.0, %v3669
  %v3671 = vpop.f32.mrf.mxu0
  %v3672 = vadd.f32 0.0, %v3671
  %v3673 = vpop.f32.mrf.mxu0
  %v3674 = vadd.f32 0.0, %v3673
  %3675 = vmatprep.mubr.bf16.mxu0 0
  %3676 = vmatmul.mubr.bf16.gmra.mxu0 %v1732
  %v3677 = vpop.f32.mrf.mxu0
  %v3678 = vadd.f32 0.0, %v3677
  %v3679 = vpop.f32.mrf.mxu0
  %v3680 = vadd.f32 0.0, %v3679
  %v3681 = vpop.f32.mrf.mxu0
  %v3682 = vadd.f32 0.0, %v3681
  %v3683 = vpop.f32.mrf.mxu0
  %v3684 = vadd.f32 0.0, %v3683
  %3685 = vmatprep.mubr.bf16.mxu0 0
  %3686 = vmatmul.mubr.bf16.gmra.mxu0 %v1733
  %v3687 = vpop.f32.mrf.mxu0
  %v3688 = vadd.f32 0.0, %v3687
  %v3689 = vpop.f32.mrf.mxu0
  %v3690 = vadd.f32 0.0, %v3689
  %v3691 = vpop.f32.mrf.mxu0
  %v3692 = vadd.f32 0.0, %v3691
  %v3693 = vpop.f32.mrf.mxu0
  %v3694 = vadd.f32 0.0, %v3693
  %3695 = vmatprep.mubr.bf16.mxu0 0
  %3696 = vmatmul.mubr.bf16.gmra.mxu0 %v1734
  %v3697 = vpop.f32.mrf.mxu0
  %v3698 = vadd.f32 0.0, %v3697
  %v3699 = vpop.f32.mrf.mxu0
  %v3700 = vadd.f32 0.0, %v3699
  %v3701 = vpop.f32.mrf.mxu0
  %v3702 = vadd.f32 0.0, %v3701
  %v3703 = vpop.f32.mrf.mxu0
  %v3704 = vadd.f32 0.0, %v3703
  %3705 = vmatprep.mubr.bf16.mxu0 0
  %3706 = vmatmul.mubr.bf16.gmra.mxu0 %v1735
  %v3707 = vpop.f32.mrf.mxu0
  %v3708 = vadd.f32 0.0, %v3707
  %v3709 = vpop.f32.mrf.mxu0
  %v3710 = vadd.f32 0.0, %v3709
  %v3711 = vpop.f32.mrf.mxu0
  %v3712 = vadd.f32 0.0, %v3711
  %v3713 = vpop.f32.mrf.mxu0
  %v3714 = vadd.f32 0.0, %v3713
  %3715 = vmatprep.mubr.bf16.mxu0 0
  %3716 = vmatmul.mubr.bf16.gmra.mxu0 %v1736
  %v3717 = vpop.f32.mrf.mxu0
  %v3718 = vadd.f32 0.0, %v3717
  %v3719 = vpop.f32.mrf.mxu0
  %v3720 = vadd.f32 0.0, %v3719
  %v3721 = vpop.f32.mrf.mxu0
  %v3722 = vadd.f32 0.0, %v3721
  %v3723 = vpop.f32.mrf.mxu0
  %v3724 = vadd.f32 0.0, %v3723
  %3725 = vmatprep.mubr.bf16.mxu0 0
  %3726 = vmatmul.mubr.bf16.gmra.mxu0 %v1737
  %v3727 = vpop.f32.mrf.mxu0
  %v3728 = vadd.f32 0.0, %v3727
  %v3729 = vpop.f32.mrf.mxu0
  %v3730 = vadd.f32 0.0, %v3729
  %v3731 = vpop.f32.mrf.mxu0
  %v3732 = vadd.f32 0.0, %v3731
  %v3733 = vpop.f32.mrf.mxu0
  %v3734 = vadd.f32 0.0, %v3733
  %3735 = vmatprep.mubr.bf16.mxu0 0
  %3736 = vmatmul.mubr.bf16.gmra.mxu0 %v1738
  %v3737 = vpop.f32.mrf.mxu0
  %v3738 = vadd.f32 0.0, %v3737
  %v3739 = vpop.f32.mrf.mxu0
  %v3740 = vadd.f32 0.0, %v3739
  %v3741 = vpop.f32.mrf.mxu0
  %v3742 = vadd.f32 0.0, %v3741
  %v3743 = vpop.f32.mrf.mxu0
  %v3744 = vadd.f32 0.0, %v3743
  %3745 = vmatprep.mubr.bf16.mxu0 0
  %3746 = vmatmul.mubr.bf16.gmra.mxu0 %v1739
  %v3747 = vpop.f32.mrf.mxu0
  %v3748 = vadd.f32 0.0, %v3747
  %v3749 = vpop.f32.mrf.mxu0
  %v3750 = vadd.f32 0.0, %v3749
  %v3751 = vpop.f32.mrf.mxu0
  %v3752 = vadd.f32 0.0, %v3751
  %v3753 = vpop.f32.mrf.mxu0
  %v3754 = vadd.f32 0.0, %v3753
  %3755 = vmatprep.mubr.bf16.mxu0 0
  %3756 = vmatmul.mubr.bf16.gmra.mxu0 %v1740
  %v3757 = vpop.f32.mrf.mxu0
  %v3758 = vadd.f32 0.0, %v3757
  %v3759 = vpop.f32.mrf.mxu0
  %v3760 = vadd.f32 0.0, %v3759
  %v3761 = vpop.f32.mrf.mxu0
  %v3762 = vadd.f32 0.0, %v3761
  %v3763 = vpop.f32.mrf.mxu0
  %v3764 = vadd.f32 0.0, %v3763
  %3765 = vmatprep.mubr.bf16.mxu0 0
  %3766 = vmatmul.mubr.bf16.gmra.mxu0 %v1741
  %v3767 = vpop.f32.mrf.mxu0
  %v3768 = vadd.f32 0.0, %v3767
  %v3769 = vpop.f32.mrf.mxu0
  %v3770 = vadd.f32 0.0, %v3769
  %v3771 = vpop.f32.mrf.mxu0
  %v3772 = vadd.f32 0.0, %v3771
  %v3773 = vpop.f32.mrf.mxu0
  %v3774 = vadd.f32 0.0, %v3773
  %3775 = vmatprep.mubr.bf16.mxu0 0
  %3776 = vmatmul.mubr.bf16.gmra.mxu0 %v1742
  %v3777 = vpop.f32.mrf.mxu0
  %v3778 = vadd.f32 0.0, %v3777
  %v3779 = vpop.f32.mrf.mxu0
  %v3780 = vadd.f32 0.0, %v3779
  %v3781 = vpop.f32.mrf.mxu0
  %v3782 = vadd.f32 0.0, %v3781
  %v3783 = vpop.f32.mrf.mxu0
  %v3784 = vadd.f32 0.0, %v3783
  %3785 = vmatprep.mubr.bf16.mxu0 0
  %3786 = vmatmul.mubr.bf16.gmra.mxu0 %v1743
  %v3787 = vpop.f32.mrf.mxu0
  %v3788 = vadd.f32 0.0, %v3787
  %v3789 = vpop.f32.mrf.mxu0
  %v3790 = vadd.f32 0.0, %v3789
  %v3791 = vpop.f32.mrf.mxu0
  %v3792 = vpop.f32.mrf.mxu0
  %3793 = vmatprep.mubr.bf16.mxu0 0
  %3794 = vmatmul.mubr.bf16.gmra.mxu0 %v1744
  %v3795 = vpop.f32.mrf.mxu0
  %v3796 = vpop.f32.mrf.mxu0
  %v3797 = vpop.f32.mrf.mxu0
  %v3798 = vpop.f32.mrf.mxu0
  %3799 = vmatprep.mubr.bf16.mxu0 0
  %3800 = vmatmul.mubr.bf16.gmra.mxu0 %v1745
  %v3801 = vpop.f32.mrf.mxu0
  %v3802 = vpop.f32.mrf.mxu0
  %v3803 = vpop.f32.mrf.mxu0
  %v3804 = vpop.f32.mrf.mxu0
  %3805 = vdwg.mxu0
  %3806 = vmatprep.subr.bf16.mxu0 %v2746
  %3807 = vmatpush1.bf16.msra.mxu0 %v2745
  %3808 = vmatprep.subr.bf16.mxu0 %v2721
  %3809 = vmatpush1.bf16.msra.mxu0 %v2720
  %3810 = vmatprep.subr.bf16.mxu0 %v2696
  %3811 = vmatpush1.bf16.msra.mxu0 %v2695
  %3812 = vmatprep.subr.bf16.mxu0 %v2671
  %3813 = vmatpush1.bf16.msra.mxu0 %v2670
  %3814 = vmatprep.subr.bf16.mxu0 %v2646
  %3815 = vmatpush1.bf16.msra.mxu0 %v2645
  %3816 = vmatprep.subr.bf16.mxu0 %v2621
  %3817 = vmatpush1.bf16.msra.mxu0 %v2620
  %3818 = vmatprep.subr.bf16.mxu0 %v2596
  %3819 = vmatpush1.bf16.msra.mxu0 %v2595
  %3820 = vmatprep.subr.bf16.mxu0 %v2571
  %3821 = vmatpush1.bf16.msra.mxu0 %v2570
  %3822 = vmatprep.subr.bf16.mxu0 0
  %3823 = vmatpush2.bf16.msra.mxu0 0
  %3824 = vmatprep.subr.bf16.mxu0 0
  %3825 = vmatpush2.bf16.msra.mxu0 0
  %3826 = vmatprep.subr.bf16.mxu0 0
  %3827 = vmatpush2.bf16.msra.mxu0 0
  %3828 = vmatprep.subr.bf16.mxu0 0
  %3829 = vmatpush2.bf16.msra.mxu0 0
  %3830 = vmatprep.subr.bf16.mxu0 0
  %3831 = vmatpush2.bf16.msra.mxu0 0
  %3832 = vmatprep.subr.bf16.mxu0 0
  %3833 = vmatpush2.bf16.msra.mxu0 0
  %3834 = vmatprep.subr.bf16.mxu0 0
  %3835 = vmatpush2.bf16.msra.mxu0 0
  %3836 = vmatprep.subr.bf16.mxu0 0
  %3837 = vmatpush2.bf16.msra.mxu0 0
  %3838 = vmatprep.mubr.bf16.mxu0 0
  %3839 = vmatmul.mubr.bf16.gmra.mxu0 %v1727
  %v3840 = vpop.f32.mrf.mxu0
  %v3841 = vpop.f32.mrf.mxu0
  %v3842 = vpop.f32.mrf.mxu0
  %v3843 = vadd.f32 0.0, %v3842
  %v3844 = vpop.f32.mrf.mxu0
  %3845 = vmatprep.mubr.bf16.mxu0 0
  %3846 = vmatmul.mubr.bf16.gmra.mxu0 %v1728
  %v3847 = vpop.f32.mrf.mxu0
  %v3848 = vadd.f32 0.0, %v3847
  %v3849 = vpop.f32.mrf.mxu0
  %v3850 = vadd.f32 0.0, %v3849
  %v3851 = vpop.f32.mrf.mxu0
  %v3852 = vadd.f32 0.0, %v3851
  %v3853 = vpop.f32.mrf.mxu0
  %v3854 = vadd.f32 0.0, %v3853
  %3855 = vmatprep.mubr.bf16.mxu0 0
  %3856 = vmatmul.mubr.bf16.gmra.mxu0 %v1729
  %v3857 = vpop.f32.mrf.mxu0
  %v3858 = vadd.f32 0.0, %v3857
  %v3859 = vpop.f32.mrf.mxu0
  %v3860 = vadd.f32 0.0, %v3859
  %v3861 = vpop.f32.mrf.mxu0
  %v3862 = vadd.f32 0.0, %v3861
  %v3863 = vpop.f32.mrf.mxu0
  %v3864 = vadd.f32 0.0, %v3863
  %3865 = vmatprep.mubr.bf16.mxu0 0
  %3866 = vmatmul.mubr.bf16.gmra.mxu0 %v1730
  %v3867 = vpop.f32.mrf.mxu0
  %v3868 = vadd.f32 0.0, %v3867
  %v3869 = vpop.f32.mrf.mxu0
  %v3870 = vadd.f32 0.0, %v3869
  %v3871 = vpop.f32.mrf.mxu0
  %v3872 = vadd.f32 0.0, %v3871
  %v3873 = vpop.f32.mrf.mxu0
  %v3874 = vadd.f32 0.0, %v3873
  %3875 = vmatprep.mubr.bf16.mxu0 0
  %3876 = vmatmul.mubr.bf16.gmra.mxu0 %v1731
  %v3877 = vpop.f32.mrf.mxu0
  %v3878 = vadd.f32 0.0, %v3877
  %v3879 = vpop.f32.mrf.mxu0
  %v3880 = vadd.f32 0.0, %v3879
  %v3881 = vpop.f32.mrf.mxu0
  %v3882 = vadd.f32 0.0, %v3881
  %v3883 = vpop.f32.mrf.mxu0
  %v3884 = vadd.f32 0.0, %v3883
  %3885 = vmatprep.mubr.bf16.mxu0 0
  %3886 = vmatmul.mubr.bf16.gmra.mxu0 %v1732
  %v3887 = vpop.f32.mrf.mxu0
  %v3888 = vadd.f32 0.0, %v3887
  %v3889 = vpop.f32.mrf.mxu0
  %v3890 = vadd.f32 0.0, %v3889
  %v3891 = vpop.f32.mrf.mxu0
  %v3892 = vadd.f32 0.0, %v3891
  %v3893 = vpop.f32.mrf.mxu0
  %v3894 = vadd.f32 0.0, %v3893
  %3895 = vmatprep.mubr.bf16.mxu0 0
  %3896 = vmatmul.mubr.bf16.gmra.mxu0 %v1733
  %v3897 = vpop.f32.mrf.mxu0
  %v3898 = vadd.f32 0.0, %v3897
  %v3899 = vpop.f32.mrf.mxu0
  %v3900 = vadd.f32 0.0, %v3899
  %v3901 = vpop.f32.mrf.mxu0
  %v3902 = vadd.f32 0.0, %v3901
  %v3903 = vpop.f32.mrf.mxu0
  %v3904 = vadd.f32 0.0, %v3903
  %3905 = vmatprep.mubr.bf16.mxu0 0
  %3906 = vmatmul.mubr.bf16.gmra.mxu0 %v1734
  %v3907 = vpop.f32.mrf.mxu0
  %v3908 = vadd.f32 0.0, %v3907
  %v3909 = vpop.f32.mrf.mxu0
  %v3910 = vadd.f32 0.0, %v3909
  %v3911 = vpop.f32.mrf.mxu0
  %v3912 = vadd.f32 0.0, %v3911
  %v3913 = vpop.f32.mrf.mxu0
  %v3914 = vadd.f32 0.0, %v3913
  %3915 = vmatprep.mubr.bf16.mxu0 0
  %3916 = vmatmul.mubr.bf16.gmra.mxu0 %v1735
  %v3917 = vpop.f32.mrf.mxu0
  %v3918 = vadd.f32 0.0, %v3917
  %v3919 = vpop.f32.mrf.mxu0
  %v3920 = vadd.f32 0.0, %v3919
  %v3921 = vpop.f32.mrf.mxu0
  %v3922 = vadd.f32 0.0, %v3921
  %v3923 = vpop.f32.mrf.mxu0
  %v3924 = vadd.f32 0.0, %v3923
  %3925 = vmatprep.mubr.bf16.mxu0 0
  %3926 = vmatmul.mubr.bf16.gmra.mxu0 %v1736
  %v3927 = vpop.f32.mrf.mxu0
  %v3928 = vadd.f32 0.0, %v3927
  %v3929 = vpop.f32.mrf.mxu0
  %v3930 = vadd.f32 0.0, %v3929
  %v3931 = vpop.f32.mrf.mxu0
  %v3932 = vadd.f32 0.0, %v3931
  %v3933 = vpop.f32.mrf.mxu0
  %v3934 = vadd.f32 0.0, %v3933
  %3935 = vmatprep.mubr.bf16.mxu0 0
  %3936 = vmatmul.mubr.bf16.gmra.mxu0 %v1737
  %v3937 = vpop.f32.mrf.mxu0
  %v3938 = vadd.f32 0.0, %v3937
  %v3939 = vpop.f32.mrf.mxu0
  %v3940 = vadd.f32 0.0, %v3939
  %v3941 = vpop.f32.mrf.mxu0
  %v3942 = vadd.f32 0.0, %v3941
  %v3943 = vpop.f32.mrf.mxu0
  %v3944 = vadd.f32 0.0, %v3943
  %3945 = vmatprep.mubr.bf16.mxu0 0
  %3946 = vmatmul.mubr.bf16.gmra.mxu0 %v1738
  %v3947 = vpop.f32.mrf.mxu0
  %v3948 = vadd.f32 0.0, %v3947
  %v3949 = vpop.f32.mrf.mxu0
  %v3950 = vadd.f32 0.0, %v3949
  %v3951 = vpop.f32.mrf.mxu0
  %v3952 = vadd.f32 0.0, %v3951
  %v3953 = vpop.f32.mrf.mxu0
  %v3954 = vadd.f32 0.0, %v3953
  %3955 = vmatprep.mubr.bf16.mxu0 0
  %3956 = vmatmul.mubr.bf16.gmra.mxu0 %v1739
  %v3957 = vpop.f32.mrf.mxu0
  %v3958 = vadd.f32 0.0, %v3957
  %v3959 = vpop.f32.mrf.mxu0
  %v3960 = vadd.f32 0.0, %v3959
  %v3961 = vpop.f32.mrf.mxu0
  %v3962 = vadd.f32 0.0, %v3961
  %v3963 = vpop.f32.mrf.mxu0
  %v3964 = vadd.f32 0.0, %v3963
  %3965 = vmatprep.mubr.bf16.mxu0 0
  %3966 = vmatmul.mubr.bf16.gmra.mxu0 %v1740
  %v3967 = vpop.f32.mrf.mxu0
  %v3968 = vadd.f32 0.0, %v3967
  %v3969 = vpop.f32.mrf.mxu0
  %v3970 = vadd.f32 0.0, %v3969
  %v3971 = vpop.f32.mrf.mxu0
  %v3972 = vadd.f32 0.0, %v3971
  %v3973 = vpop.f32.mrf.mxu0
  %v3974 = vadd.f32 0.0, %v3973
  %3975 = vmatprep.mubr.bf16.mxu0 0
  %3976 = vmatmul.mubr.bf16.gmra.mxu0 %v1741
  %v3977 = vpop.f32.mrf.mxu0
  %v3978 = vadd.f32 0.0, %v3977
  %v3979 = vpop.f32.mrf.mxu0
  %v3980 = vadd.f32 0.0, %v3979
  %v3981 = vpop.f32.mrf.mxu0
  %v3982 = vadd.f32 0.0, %v3981
  %v3983 = vpop.f32.mrf.mxu0
  %v3984 = vadd.f32 0.0, %v3983
  %3985 = vmatprep.mubr.bf16.mxu0 0
  %3986 = vmatmul.mubr.bf16.gmra.mxu0 %v1742
  %v3987 = vpop.f32.mrf.mxu0
  %v3988 = vadd.f32 0.0, %v3987
  %v3989 = vpop.f32.mrf.mxu0
  %v3990 = vadd.f32 0.0, %v3989
  %v3991 = vpop.f32.mrf.mxu0
  %v3992 = vadd.f32 0.0, %v3991
  %v3993 = vpop.f32.mrf.mxu0
  %v3994 = vadd.f32 0.0, %v3993
  %3995 = vmatprep.mubr.bf16.mxu0 0
  %3996 = vmatmul.mubr.bf16.gmra.mxu0 %v1743
  %v3997 = vpop.f32.mrf.mxu0
  %v3998 = vadd.f32 0.0, %v3997
  %v3999 = vpop.f32.mrf.mxu0
  %v4000 = vadd.f32 0.0, %v3999
  %v4001 = vpop.f32.mrf.mxu0
  %v4002 = vpop.f32.mrf.mxu0
  %v4003 = vadd.f32 0.0, %v4002
  %4004 = vmatprep.mubr.bf16.mxu0 0
  %4005 = vmatmul.mubr.bf16.gmra.mxu0 %v1744
  %v4006 = vpop.f32.mrf.mxu0
  %v4007 = vpop.f32.mrf.mxu0
  %v4008 = vpop.f32.mrf.mxu0
  %v4009 = vpop.f32.mrf.mxu0
  %4010 = vmatprep.mubr.bf16.mxu0 0
  %4011 = vmatmul.mubr.bf16.gmra.mxu0 %v1745
  %v4012 = vpop.f32.mrf.mxu0
  %v4013 = vpop.f32.mrf.mxu0
  %v4014 = vpop.f32.mrf.mxu0
  %v4015 = vpop.f32.mrf.mxu0
  %4016 = vdwg.mxu0
  %4017 = vmatprep.subr.bf16.mxu0 %v2748
  %4018 = vmatpush1.bf16.msra.mxu0 %v2747
  %4019 = vmatprep.subr.bf16.mxu0 %v2723
  %4020 = vmatpush1.bf16.msra.mxu0 %v2722
  %4021 = vmatprep.subr.bf16.mxu0 %v2698
  %4022 = vmatpush1.bf16.msra.mxu0 %v2697
  %4023 = vmatprep.subr.bf16.mxu0 %v2673
  %4024 = vmatpush1.bf16.msra.mxu0 %v2672
  %4025 = vmatprep.subr.bf16.mxu0 %v2648
  %4026 = vmatpush1.bf16.msra.mxu0 %v2647
  %4027 = vmatprep.subr.bf16.mxu0 %v2623
  %4028 = vmatpush1.bf16.msra.mxu0 %v2622
  %4029 = vmatprep.subr.bf16.mxu0 %v2598
  %4030 = vmatpush1.bf16.msra.mxu0 %v2597
  %4031 = vmatprep.subr.bf16.mxu0 %v2573
  %4032 = vmatpush1.bf16.msra.mxu0 %v2572
  %4033 = vmatprep.subr.bf16.mxu0 0
  %4034 = vmatpush2.bf16.msra.mxu0 0
  %4035 = vmatprep.subr.bf16.mxu0 0
  %4036 = vmatpush2.bf16.msra.mxu0 0
  %4037 = vmatprep.subr.bf16.mxu0 0
  %4038 = vmatpush2.bf16.msra.mxu0 0
  %4039 = vmatprep.subr.bf16.mxu0 0
  %4040 = vmatpush2.bf16.msra.mxu0 0
  %4041 = vmatprep.subr.bf16.mxu0 0
  %4042 = vmatpush2.bf16.msra.mxu0 0
  %4043 = vmatprep.subr.bf16.mxu0 0
  %4044 = vmatpush2.bf16.msra.mxu0 0
  %4045 = vmatprep.subr.bf16.mxu0 0
  %4046 = vmatpush2.bf16.msra.mxu0 0
  %4047 = vmatprep.subr.bf16.mxu0 0
  %4048 = vmatpush2.bf16.msra.mxu0 0
  %4049 = vmatprep.mubr.bf16.mxu0 0
  %4050 = vmatmul.mubr.bf16.gmra.mxu0 %v1727
  %v4051 = vpop.f32.mrf.mxu0
  %v4052 = vpop.f32.mrf.mxu0
  %v4053 = vpop.f32.mrf.mxu0
  %v4054 = vpop.f32.mrf.mxu0
  %4055 = vmatprep.mubr.bf16.mxu0 0
  %4056 = vmatmul.mubr.bf16.gmra.mxu0 %v1728
  %v4057 = vpop.f32.mrf.mxu0
  %v4058 = vpop.f32.mrf.mxu0
  %v4059 = vpop.f32.mrf.mxu0
  %v4060 = vadd.f32 0.0, %v4059
  %v4061 = vpop.f32.mrf.mxu0
  %v4062 = vadd.f32 0.0, %v4061
  %4063 = vmatprep.mubr.bf16.mxu0 0
  %4064 = vmatmul.mubr.bf16.gmra.mxu0 %v1729
  %v4065 = vpop.f32.mrf.mxu0
  %v4066 = vadd.f32 0.0, %v4065
  %v4067 = vpop.f32.mrf.mxu0
  %v4068 = vadd.f32 0.0, %v4067
  %v4069 = vpop.f32.mrf.mxu0
  %v4070 = vadd.f32 0.0, %v4069
  %v4071 = vpop.f32.mrf.mxu0
  %v4072 = vadd.f32 0.0, %v4071
  %4073 = vmatprep.mubr.bf16.mxu0 0
  %4074 = vmatmul.mubr.bf16.gmra.mxu0 %v1730
  %v4075 = vpop.f32.mrf.mxu0
  %v4076 = vadd.f32 0.0, %v4075
  %v4077 = vpop.f32.mrf.mxu0
  %v4078 = vadd.f32 0.0, %v4077
  %v4079 = vpop.f32.mrf.mxu0
  %v4080 = vadd.f32 0.0, %v4079
  %v4081 = vpop.f32.mrf.mxu0
  %v4082 = vadd.f32 0.0, %v4081
  %4083 = vmatprep.mubr.bf16.mxu0 0
  %4084 = vmatmul.mubr.bf16.gmra.mxu0 %v1731
  %v4085 = vpop.f32.mrf.mxu0
  %v4086 = vadd.f32 0.0, %v4085
  %v4087 = vpop.f32.mrf.mxu0
  %v4088 = vadd.f32 0.0, %v4087
  %v4089 = vpop.f32.mrf.mxu0
  %v4090 = vadd.f32 0.0, %v4089
  %v4091 = vpop.f32.mrf.mxu0
  %v4092 = vadd.f32 0.0, %v4091
  %4093 = vmatprep.mubr.bf16.mxu0 0
  %4094 = vmatmul.mubr.bf16.gmra.mxu0 %v1732
  %v4095 = vpop.f32.mrf.mxu0
  %v4096 = vadd.f32 0.0, %v4095
  %v4097 = vpop.f32.mrf.mxu0
  %v4098 = vadd.f32 0.0, %v4097
  %v4099 = vpop.f32.mrf.mxu0
  %v4100 = vadd.f32 0.0, %v4099
  %v4101 = vpop.f32.mrf.mxu0
  %v4102 = vadd.f32 0.0, %v4101
  %4103 = vmatprep.mubr.bf16.mxu0 0
  %4104 = vmatmul.mubr.bf16.gmra.mxu0 %v1733
  %v4105 = vpop.f32.mrf.mxu0
  %v4106 = vadd.f32 0.0, %v4105
  %v4107 = vpop.f32.mrf.mxu0
  %v4108 = vadd.f32 0.0, %v4107
  %v4109 = vpop.f32.mrf.mxu0
  %v4110 = vadd.f32 0.0, %v4109
  %v4111 = vpop.f32.mrf.mxu0
  %v4112 = vadd.f32 0.0, %v4111
  %4113 = vmatprep.mubr.bf16.mxu0 0
  %4114 = vmatmul.mubr.bf16.gmra.mxu0 %v1734
  %v4115 = vpop.f32.mrf.mxu0
  %v4116 = vadd.f32 0.0, %v4115
  %v4117 = vpop.f32.mrf.mxu0
  %v4118 = vadd.f32 0.0, %v4117
  %v4119 = vpop.f32.mrf.mxu0
  %v4120 = vadd.f32 0.0, %v4119
  %v4121 = vpop.f32.mrf.mxu0
  %v4122 = vadd.f32 0.0, %v4121
  %4123 = vmatprep.mubr.bf16.mxu0 0
  %4124 = vmatmul.mubr.bf16.gmra.mxu0 %v1735
  %v4125 = vpop.f32.mrf.mxu0
  %v4126 = vadd.f32 0.0, %v4125
  %v4127 = vpop.f32.mrf.mxu0
  %v4128 = vadd.f32 0.0, %v4127
  %v4129 = vpop.f32.mrf.mxu0
  %v4130 = vadd.f32 0.0, %v4129
  %v4131 = vpop.f32.mrf.mxu0
  %v4132 = vadd.f32 0.0, %v4131
  %4133 = vmatprep.mubr.bf16.mxu0 0
  %4134 = vmatmul.mubr.bf16.gmra.mxu0 %v1736
  %v4135 = vpop.f32.mrf.mxu0
  %v4136 = vadd.f32 0.0, %v4135
  %v4137 = vpop.f32.mrf.mxu0
  %v4138 = vadd.f32 0.0, %v4137
  %v4139 = vpop.f32.mrf.mxu0
  %v4140 = vadd.f32 0.0, %v4139
  %v4141 = vpop.f32.mrf.mxu0
  %v4142 = vadd.f32 0.0, %v4141
  %4143 = vmatprep.mubr.bf16.mxu0 0
  %4144 = vmatmul.mubr.bf16.gmra.mxu0 %v1737
  %v4145 = vpop.f32.mrf.mxu0
  %v4146 = vadd.f32 0.0, %v4145
  %v4147 = vpop.f32.mrf.mxu0
  %v4148 = vadd.f32 0.0, %v4147
  %v4149 = vpop.f32.mrf.mxu0
  %v4150 = vadd.f32 0.0, %v4149
  %v4151 = vpop.f32.mrf.mxu0
  %v4152 = vadd.f32 0.0, %v4151
  %4153 = vmatprep.mubr.bf16.mxu0 0
  %4154 = vmatmul.mubr.bf16.gmra.mxu0 %v1738
  %v4155 = vpop.f32.mrf.mxu0
  %v4156 = vadd.f32 0.0, %v4155
  %v4157 = vpop.f32.mrf.mxu0
  %v4158 = vadd.f32 0.0, %v4157
  %v4159 = vpop.f32.mrf.mxu0
  %v4160 = vadd.f32 0.0, %v4159
  %v4161 = vpop.f32.mrf.mxu0
  %v4162 = vadd.f32 0.0, %v4161
  %4163 = vmatprep.mubr.bf16.mxu0 0
  %4164 = vmatmul.mubr.bf16.gmra.mxu0 %v1739
  %v4165 = vpop.f32.mrf.mxu0
  %v4166 = vadd.f32 0.0, %v4165
  %v4167 = vpop.f32.mrf.mxu0
  %v4168 = vadd.f32 0.0, %v4167
  %v4169 = vpop.f32.mrf.mxu0
  %v4170 = vadd.f32 0.0, %v4169
  %v4171 = vpop.f32.mrf.mxu0
  %v4172 = vadd.f32 0.0, %v4171
  %4173 = vmatprep.mubr.bf16.mxu0 0
  %4174 = vmatmul.mubr.bf16.gmra.mxu0 %v1740
  %v4175 = vpop.f32.mrf.mxu0
  %v4176 = vadd.f32 0.0, %v4175
  %v4177 = vpop.f32.mrf.mxu0
  %v4178 = vadd.f32 0.0, %v4177
  %v4179 = vpop.f32.mrf.mxu0
  %v4180 = vadd.f32 0.0, %v4179
  %v4181 = vpop.f32.mrf.mxu0
  %v4182 = vadd.f32 0.0, %v4181
  %4183 = vmatprep.mubr.bf16.mxu0 0
  %4184 = vmatmul.mubr.bf16.gmra.mxu0 %v1741
  %v4185 = vpop.f32.mrf.mxu0
  %v4186 = vadd.f32 0.0, %v4185
  %v4187 = vpop.f32.mrf.mxu0
  %v4188 = vadd.f32 0.0, %v4187
  %v4189 = vpop.f32.mrf.mxu0
  %v4190 = vadd.f32 0.0, %v4189
  %v4191 = vpop.f32.mrf.mxu0
  %v4192 = vadd.f32 0.0, %v4191
  %4193 = vmatprep.mubr.bf16.mxu0 0
  %4194 = vmatmul.mubr.bf16.gmra.mxu0 %v1742
  %v4195 = vpop.f32.mrf.mxu0
  %v4196 = vadd.f32 0.0, %v4195
  %v4197 = vpop.f32.mrf.mxu0
  %v4198 = vadd.f32 0.0, %v4197
  %v4199 = vpop.f32.mrf.mxu0
  %v4200 = vadd.f32 0.0, %v4199
  %v4201 = vpop.f32.mrf.mxu0
  %v4202 = vadd.f32 0.0, %v4201
  %4203 = vmatprep.mubr.bf16.mxu0 0
  %4204 = vmatmul.mubr.bf16.gmra.mxu0 %v1743
  %v4205 = vpop.f32.mrf.mxu0
  %v4206 = vadd.f32 0.0, %v4205
  %v4207 = vpop.f32.mrf.mxu0
  %v4208 = vadd.f32 0.0, %v4207
  %v4209 = vpop.f32.mrf.mxu0
  %v4210 = vadd.f32 0.0, %v4209
  %v4211 = vpop.f32.mrf.mxu0
  %v4212 = vadd.f32 0.0, %v4211
  %4213 = vmatprep.mubr.bf16.mxu0 0
  %4214 = vmatmul.mubr.bf16.gmra.mxu0 %v1744
  %v4215 = vpop.f32.mrf.mxu0
  %v4216 = vadd.f32 0.0, %v4215
  %v4217 = vpop.f32.mrf.mxu0
  %v4218 = vadd.f32 0.0, %v4217
  %v4219 = vpop.f32.mrf.mxu0
  %v4220 = vpop.f32.mrf.mxu0
  %4221 = vmatprep.mubr.bf16.mxu0 0
  %4222 = vmatmul.mubr.bf16.gmra.mxu0 %v1745
  %v4223 = vpop.f32.mrf.mxu0
  %v4224 = vpop.f32.mrf.mxu0
  %v4225 = vpop.f32.mrf.mxu0
  %v4226 = vpop.f32.mrf.mxu0
  %4227 = vdwg.mxu0
  %4228 = vmatprep.subr.bf16.mxu0 %v2750
  %4229 = vmatpush1.bf16.msra.mxu0 %v2749
  %4230 = vmatprep.subr.bf16.mxu0 %v2725
  %4231 = vmatpush1.bf16.msra.mxu0 %v2724
  %4232 = vmatprep.subr.bf16.mxu0 %v2700
  %4233 = vmatpush1.bf16.msra.mxu0 %v2699
  %4234 = vmatprep.subr.bf16.mxu0 %v2675
  %4235 = vmatpush1.bf16.msra.mxu0 %v2674
  %4236 = vmatprep.subr.bf16.mxu0 %v2650
  %4237 = vmatpush1.bf16.msra.mxu0 %v2649
  %4238 = vmatprep.subr.bf16.mxu0 %v2625
  %4239 = vmatpush1.bf16.msra.mxu0 %v2624
  %4240 = vmatprep.subr.bf16.mxu0 %v2600
  %4241 = vmatpush1.bf16.msra.mxu0 %v2599
  %4242 = vmatprep.subr.bf16.mxu0 %v2575
  %4243 = vmatpush1.bf16.msra.mxu0 %v2574
  %4244 = vmatprep.subr.bf16.mxu0 0
  %4245 = vmatpush2.bf16.msra.mxu0 0
  %4246 = vmatprep.subr.bf16.mxu0 0
  %4247 = vmatpush2.bf16.msra.mxu0 0
  %4248 = vmatprep.subr.bf16.mxu0 0
  %4249 = vmatpush2.bf16.msra.mxu0 0
  %4250 = vmatprep.subr.bf16.mxu0 0
  %4251 = vmatpush2.bf16.msra.mxu0 0
  %4252 = vmatprep.subr.bf16.mxu0 0
  %4253 = vmatpush2.bf16.msra.mxu0 0
  %4254 = vmatprep.subr.bf16.mxu0 0
  %4255 = vmatpush2.bf16.msra.mxu0 0
  %4256 = vmatprep.subr.bf16.mxu0 0
  %4257 = vmatpush2.bf16.msra.mxu0 0
  %4258 = vmatprep.subr.bf16.mxu0 0
  %4259 = vmatpush2.bf16.msra.mxu0 0
  %4260 = vmatprep.mubr.bf16.mxu0 0
  %4261 = vmatmul.mubr.bf16.gmra.mxu0 %v1727
  %v4262 = vpop.f32.mrf.mxu0
  %v4263 = vpop.f32.mrf.mxu0
  %v4264 = vpop.f32.mrf.mxu0
  %v4265 = vpop.f32.mrf.mxu0
  %4266 = vmatprep.mubr.bf16.mxu0 0
  %4267 = vmatmul.mubr.bf16.gmra.mxu0 %v1728
  %v4268 = vpop.f32.mrf.mxu0
  %v4269 = vpop.f32.mrf.mxu0
  %v4270 = vpop.f32.mrf.mxu0
  %v4271 = vadd.f32 0.0, %v4270
  %v4272 = vpop.f32.mrf.mxu0
  %v4273 = vadd.f32 0.0, %v4272
  %4274 = vmatprep.mubr.bf16.mxu0 0
  %4275 = vmatmul.mubr.bf16.gmra.mxu0 %v1729
  %v4276 = vpop.f32.mrf.mxu0
  %v4277 = vadd.f32 0.0, %v4276
  %v4278 = vpop.f32.mrf.mxu0
  %v4279 = vadd.f32 0.0, %v4278
  %v4280 = vpop.f32.mrf.mxu0
  %v4281 = vadd.f32 0.0, %v4280
  %v4282 = vpop.f32.mrf.mxu0
  %v4283 = vadd.f32 0.0, %v4282
  %4284 = vmatprep.mubr.bf16.mxu0 0
  %4285 = vmatmul.mubr.bf16.gmra.mxu0 %v1730
  %v4286 = vpop.f32.mrf.mxu0
  %v4287 = vadd.f32 0.0, %v4286
  %v4288 = vpop.f32.mrf.mxu0
  %v4289 = vadd.f32 0.0, %v4288
  %v4290 = vpop.f32.mrf.mxu0
  %v4291 = vadd.f32 0.0, %v4290
  %v4292 = vpop.f32.mrf.mxu0
  %v4293 = vadd.f32 0.0, %v4292
  %4294 = vmatprep.mubr.bf16.mxu0 0
  %4295 = vmatmul.mubr.bf16.gmra.mxu0 %v1731
  %v4296 = vpop.f32.mrf.mxu0
  %v4297 = vadd.f32 0.0, %v4296
  %v4298 = vpop.f32.mrf.mxu0
  %v4299 = vadd.f32 0.0, %v4298
  %v4300 = vpop.f32.mrf.mxu0
  %v4301 = vadd.f32 0.0, %v4300
  %v4302 = vpop.f32.mrf.mxu0
  %v4303 = vadd.f32 0.0, %v4302
  %4304 = vmatprep.mubr.bf16.mxu0 0
  %4305 = vmatmul.mubr.bf16.gmra.mxu0 %v1732
  %v4306 = vpop.f32.mrf.mxu0
  %v4307 = vadd.f32 0.0, %v4306
  %v4308 = vpop.f32.mrf.mxu0
  %v4309 = vadd.f32 0.0, %v4308
  %v4310 = vpop.f32.mrf.mxu0
  %v4311 = vadd.f32 0.0, %v4310
  %v4312 = vpop.f32.mrf.mxu0
  %v4313 = vadd.f32 0.0, %v4312
  %4314 = vmatprep.mubr.bf16.mxu0 0
  %4315 = vmatmul.mubr.bf16.gmra.mxu0 %v1733
  %v4316 = vpop.f32.mrf.mxu0
  %v4317 = vadd.f32 0.0, %v4316
  %v4318 = vpop.f32.mrf.mxu0
  %v4319 = vadd.f32 0.0, %v4318
  %v4320 = vpop.f32.mrf.mxu0
  %v4321 = vadd.f32 0.0, %v4320
  %v4322 = vpop.f32.mrf.mxu0
  %v4323 = vadd.f32 0.0, %v4322
  %4324 = vmatprep.mubr.bf16.mxu0 0
  %4325 = vmatmul.mubr.bf16.gmra.mxu0 %v1734
  %v4326 = vpop.f32.mrf.mxu0
  %v4327 = vadd.f32 0.0, %v4326
  %v4328 = vpop.f32.mrf.mxu0
  %v4329 = vadd.f32 0.0, %v4328
  %v4330 = vpop.f32.mrf.mxu0
  %v4331 = vadd.f32 0.0, %v4330
  %v4332 = vpop.f32.mrf.mxu0
  %v4333 = vadd.f32 0.0, %v4332
  %4334 = vmatprep.mubr.bf16.mxu0 0
  %4335 = vmatmul.mubr.bf16.gmra.mxu0 %v1735
  %v4336 = vpop.f32.mrf.mxu0
  %v4337 = vadd.f32 0.0, %v4336
  %v4338 = vpop.f32.mrf.mxu0
  %v4339 = vadd.f32 0.0, %v4338
  %v4340 = vpop.f32.mrf.mxu0
  %v4341 = vadd.f32 0.0, %v4340
  %v4342 = vpop.f32.mrf.mxu0
  %v4343 = vadd.f32 0.0, %v4342
  %4344 = vmatprep.mubr.bf16.mxu0 0
  %4345 = vmatmul.mubr.bf16.gmra.mxu0 %v1736
  %v4346 = vpop.f32.mrf.mxu0
  %v4347 = vadd.f32 0.0, %v4346
  %v4348 = vpop.f32.mrf.mxu0
  %v4349 = vadd.f32 0.0, %v4348
  %v4350 = vpop.f32.mrf.mxu0
  %v4351 = vadd.f32 0.0, %v4350
  %v4352 = vpop.f32.mrf.mxu0
  %v4353 = vadd.f32 0.0, %v4352
  %4354 = vmatprep.mubr.bf16.mxu0 0
  %4355 = vmatmul.mubr.bf16.gmra.mxu0 %v1737
  %v4356 = vpop.f32.mrf.mxu0
  %v4357 = vadd.f32 0.0, %v4356
  %v4358 = vpop.f32.mrf.mxu0
  %v4359 = vadd.f32 0.0, %v4358
  %v4360 = vpop.f32.mrf.mxu0
  %v4361 = vadd.f32 0.0, %v4360
  %v4362 = vpop.f32.mrf.mxu0
  %v4363 = vadd.f32 0.0, %v4362
  %4364 = vmatprep.mubr.bf16.mxu0 0
  %4365 = vmatmul.mubr.bf16.gmra.mxu0 %v1738
  %v4366 = vpop.f32.mrf.mxu0
  %v4367 = vadd.f32 0.0, %v4366
  %v4368 = vpop.f32.mrf.mxu0
  %v4369 = vadd.f32 0.0, %v4368
  %v4370 = vpop.f32.mrf.mxu0
  %v4371 = vadd.f32 0.0, %v4370
  %v4372 = vpop.f32.mrf.mxu0
  %v4373 = vadd.f32 0.0, %v4372
  %4374 = vmatprep.mubr.bf16.mxu0 0
  %4375 = vmatmul.mubr.bf16.gmra.mxu0 %v1739
  %v4376 = vpop.f32.mrf.mxu0
  %v4377 = vadd.f32 0.0, %v4376
  %v4378 = vpop.f32.mrf.mxu0
  %v4379 = vadd.f32 0.0, %v4378
  %v4380 = vpop.f32.mrf.mxu0
  %v4381 = vadd.f32 0.0, %v4380
  %v4382 = vpop.f32.mrf.mxu0
  %v4383 = vadd.f32 0.0, %v4382
  %4384 = vmatprep.mubr.bf16.mxu0 0
  %4385 = vmatmul.mubr.bf16.gmra.mxu0 %v1740
  %v4386 = vpop.f32.mrf.mxu0
  %v4387 = vadd.f32 0.0, %v4386
  %v4388 = vpop.f32.mrf.mxu0
  %v4389 = vadd.f32 0.0, %v4388
  %v4390 = vpop.f32.mrf.mxu0
  %v4391 = vadd.f32 0.0, %v4390
  %v4392 = vpop.f32.mrf.mxu0
  %v4393 = vadd.f32 0.0, %v4392
  %4394 = vmatprep.mubr.bf16.mxu0 0
  %4395 = vmatmul.mubr.bf16.gmra.mxu0 %v1741
  %v4396 = vpop.f32.mrf.mxu0
  %v4397 = vadd.f32 0.0, %v4396
  %v4398 = vpop.f32.mrf.mxu0
  %v4399 = vadd.f32 0.0, %v4398
  %v4400 = vpop.f32.mrf.mxu0
  %v4401 = vadd.f32 0.0, %v4400
  %v4402 = vpop.f32.mrf.mxu0
  %v4403 = vadd.f32 0.0, %v4402
  %4404 = vmatprep.mubr.bf16.mxu0 0
  %4405 = vmatmul.mubr.bf16.gmra.mxu0 %v1742
  %v4406 = vpop.f32.mrf.mxu0
  %v4407 = vadd.f32 0.0, %v4406
  %v4408 = vpop.f32.mrf.mxu0
  %v4409 = vadd.f32 0.0, %v4408
  %v4410 = vpop.f32.mrf.mxu0
  %v4411 = vadd.f32 0.0, %v4410
  %v4412 = vpop.f32.mrf.mxu0
  %v4413 = vadd.f32 0.0, %v4412
  %4414 = vmatprep.mubr.bf16.mxu0 0
  %4415 = vmatmul.mubr.bf16.gmra.mxu0 %v1743
  %v4416 = vpop.f32.mrf.mxu0
  %v4417 = vadd.f32 0.0, %v4416
  %v4418 = vpop.f32.mrf.mxu0
  %v4419 = vadd.f32 0.0, %v4418
  %v4420 = vpop.f32.mrf.mxu0
  %v4421 = vadd.f32 0.0, %v4420
  %v4422 = vpop.f32.mrf.mxu0
  %v4423 = vadd.f32 0.0, %v4422
  %4424 = vmatprep.mubr.bf16.mxu0 0
  %4425 = vmatmul.mubr.bf16.gmra.mxu0 %v1744
  %v4426 = vpop.f32.mrf.mxu0
  %v4427 = vadd.f32 0.0, %v4426
  %v4428 = vpop.f32.mrf.mxu0
  %v4429 = vadd.f32 0.0, %v4428
  %v4430 = vpop.f32.mrf.mxu0
  %v4431 = vpop.f32.mrf.mxu0
  %4432 = vmatprep.mubr.bf16.mxu0 0
  %4433 = vmatmul.mubr.bf16.gmra.mxu0 %v1745
  %v4434 = vpop.f32.mrf.mxu0
  %v4435 = vpop.f32.mrf.mxu0
  %v4436 = vpop.f32.mrf.mxu0
  %v4437 = vpop.f32.mrf.mxu0
  %4438 = vdwg.mxu0
  %4439 = vmatprep.subr.bf16.mxu0 %v2752
  %4440 = vmatpush1.bf16.msra.mxu0 %v2751
  %4441 = vmatprep.subr.bf16.mxu0 %v2727
  %4442 = vmatpush1.bf16.msra.mxu0 %v2726
  %4443 = vmatprep.subr.bf16.mxu0 %v2702
  %4444 = vmatpush1.bf16.msra.mxu0 %v2701
  %4445 = vmatprep.subr.bf16.mxu0 %v2677
  %4446 = vmatpush1.bf16.msra.mxu0 %v2676
  %4447 = vmatprep.subr.bf16.mxu0 %v2652
  %4448 = vmatpush1.bf16.msra.mxu0 %v2651
  %4449 = vmatprep.subr.bf16.mxu0 %v2627
  %4450 = vmatpush1.bf16.msra.mxu0 %v2626
  %4451 = vmatprep.subr.bf16.mxu0 %v2602
  %4452 = vmatpush1.bf16.msra.mxu0 %v2601
  %4453 = vmatprep.subr.bf16.mxu0 %v2577
  %4454 = vmatpush1.bf16.msra.mxu0 %v2576
  %4455 = vmatprep.subr.bf16.mxu0 0
  %4456 = vmatpush2.bf16.msra.mxu0 0
  %4457 = vmatprep.subr.bf16.mxu0 0
  %4458 = vmatpush2.bf16.msra.mxu0 0
  %4459 = vmatprep.subr.bf16.mxu0 0
  %4460 = vmatpush2.bf16.msra.mxu0 0
  %4461 = vmatprep.subr.bf16.mxu0 0
  %4462 = vmatpush2.bf16.msra.mxu0 0
  %4463 = vmatprep.subr.bf16.mxu0 0
  %4464 = vmatpush2.bf16.msra.mxu0 0
  %4465 = vmatprep.subr.bf16.mxu0 0
  %4466 = vmatpush2.bf16.msra.mxu0 0
  %4467 = vmatprep.subr.bf16.mxu0 0
  %4468 = vmatpush2.bf16.msra.mxu0 0
  %4469 = vmatprep.subr.bf16.mxu0 0
  %4470 = vmatpush2.bf16.msra.mxu0 0
  %4471 = vmatprep.mubr.bf16.mxu0 0
  %4472 = vmatmul.mubr.bf16.gmra.mxu0 %v1727
  %v4473 = vpop.f32.mrf.mxu0
  %v4474 = vpop.f32.mrf.mxu0
  %v4475 = vpop.f32.mrf.mxu0
  %v4476 = vpop.f32.mrf.mxu0
  %4477 = vmatprep.mubr.bf16.mxu0 0
  %4478 = vmatmul.mubr.bf16.gmra.mxu0 %v1728
  %v4479 = vpop.f32.mrf.mxu0
  %v4480 = vpop.f32.mrf.mxu0
  %v4481 = vpop.f32.mrf.mxu0
  %v4482 = vadd.f32 0.0, %v4481
  %v4483 = vpop.f32.mrf.mxu0
  %4484 = vmatprep.mubr.bf16.mxu0 0
  %4485 = vmatmul.mubr.bf16.gmra.mxu0 %v1729
  %v4486 = vpop.f32.mrf.mxu0
  %v4487 = vadd.f32 0.0, %v4486
  %v4488 = vpop.f32.mrf.mxu0
  %v4489 = vadd.f32 0.0, %v4488
  %v4490 = vpop.f32.mrf.mxu0
  %v4491 = vadd.f32 0.0, %v4490
  %v4492 = vpop.f32.mrf.mxu0
  %v4493 = vadd.f32 0.0, %v4492
  %4494 = vmatprep.mubr.bf16.mxu0 0
  %4495 = vmatmul.mubr.bf16.gmra.mxu0 %v1730
  %v4496 = vpop.f32.mrf.mxu0
  %v4497 = vadd.f32 0.0, %v4496
  %v4498 = vpop.f32.mrf.mxu0
  %v4499 = vadd.f32 0.0, %v4498
  %v4500 = vpop.f32.mrf.mxu0
  %v4501 = vadd.f32 0.0, %v4500
  %v4502 = vpop.f32.mrf.mxu0
  %v4503 = vadd.f32 0.0, %v4502
  %4504 = vmatprep.mubr.bf16.mxu0 0
  %4505 = vmatmul.mubr.bf16.gmra.mxu0 %v1731
  %v4506 = vpop.f32.mrf.mxu0
  %v4507 = vadd.f32 0.0, %v4506
  %v4508 = vpop.f32.mrf.mxu0
  %v4509 = vadd.f32 0.0, %v4508
  %v4510 = vpop.f32.mrf.mxu0
  %v4511 = vadd.f32 0.0, %v4510
  %v4512 = vpop.f32.mrf.mxu0
  %v4513 = vadd.f32 0.0, %v4512
  %4514 = vmatprep.mubr.bf16.mxu0 0
  %4515 = vmatmul.mubr.bf16.gmra.mxu0 %v1732
  %v4516 = vpop.f32.mrf.mxu0
  %v4517 = vadd.f32 0.0, %v4516
  %v4518 = vpop.f32.mrf.mxu0
  %v4519 = vadd.f32 0.0, %v4518
  %v4520 = vpop.f32.mrf.mxu0
  %v4521 = vadd.f32 0.0, %v4520
  %v4522 = vpop.f32.mrf.mxu0
  %v4523 = vadd.f32 0.0, %v4522
  %4524 = vmatprep.mubr.bf16.mxu0 0
  %4525 = vmatmul.mubr.bf16.gmra.mxu0 %v1733
  %v4526 = vpop.f32.mrf.mxu0
  %v4527 = vadd.f32 0.0, %v4526
  %v4528 = vpop.f32.mrf.mxu0
  %v4529 = vadd.f32 0.0, %v4528
  %v4530 = vpop.f32.mrf.mxu0
  %v4531 = vadd.f32 0.0, %v4530
  %v4532 = vpop.f32.mrf.mxu0
  %v4533 = vadd.f32 0.0, %v4532
  %4534 = vmatprep.mubr.bf16.mxu0 0
  %4535 = vmatmul.mubr.bf16.gmra.mxu0 %v1734
  %v4536 = vpop.f32.mrf.mxu0
  %v4537 = vadd.f32 0.0, %v4536
  %v4538 = vpop.f32.mrf.mxu0
  %v4539 = vadd.f32 0.0, %v4538
  %v4540 = vpop.f32.mrf.mxu0
  %v4541 = vadd.f32 0.0, %v4540
  %v4542 = vpop.f32.mrf.mxu0
  %v4543 = vadd.f32 0.0, %v4542
  %4544 = vmatprep.mubr.bf16.mxu0 0
  %4545 = vmatmul.mubr.bf16.gmra.mxu0 %v1735
  %v4546 = vpop.f32.mrf.mxu0
  %v4547 = vadd.f32 0.0, %v4546
  %v4548 = vpop.f32.mrf.mxu0
  %v4549 = vadd.f32 0.0, %v4548
  %v4550 = vpop.f32.mrf.mxu0
  %v4551 = vadd.f32 0.0, %v4550
  %v4552 = vpop.f32.mrf.mxu0
  %v4553 = vadd.f32 0.0, %v4552
  %4554 = vmatprep.mubr.bf16.mxu0 0
  %4555 = vmatmul.mubr.bf16.gmra.mxu0 %v1736
  %v4556 = vpop.f32.mrf.mxu0
  %v4557 = vadd.f32 0.0, %v4556
  %v4558 = vpop.f32.mrf.mxu0
  %v4559 = vadd.f32 0.0, %v4558
  %v4560 = vpop.f32.mrf.mxu0
  %v4561 = vadd.f32 0.0, %v4560
  %v4562 = vpop.f32.mrf.mxu0
  %v4563 = vadd.f32 0.0, %v4562
  %4564 = vmatprep.mubr.bf16.mxu0 0
  %4565 = vmatmul.mubr.bf16.gmra.mxu0 %v1737
  %v4566 = vpop.f32.mrf.mxu0
  %v4567 = vadd.f32 0.0, %v4566
  %v4568 = vpop.f32.mrf.mxu0
  %v4569 = vadd.f32 0.0, %v4568
  %v4570 = vpop.f32.mrf.mxu0
  %v4571 = vadd.f32 0.0, %v4570
  %v4572 = vpop.f32.mrf.mxu0
  %v4573 = vadd.f32 0.0, %v4572
  %4574 = vmatprep.mubr.bf16.mxu0 0
  %4575 = vmatmul.mubr.bf16.gmra.mxu0 %v1738
  %v4576 = vpop.f32.mrf.mxu0
  %v4577 = vadd.f32 0.0, %v4576
  %v4578 = vpop.f32.mrf.mxu0
  %v4579 = vadd.f32 0.0, %v4578
  %v4580 = vpop.f32.mrf.mxu0
  %v4581 = vadd.f32 0.0, %v4580
  %v4582 = vpop.f32.mrf.mxu0
  %v4583 = vadd.f32 0.0, %v4582
  %4584 = vmatprep.mubr.bf16.mxu0 0
  %4585 = vmatmul.mubr.bf16.gmra.mxu0 %v1739
  %v4586 = vpop.f32.mrf.mxu0
  %v4587 = vadd.f32 0.0, %v4586
  %v4588 = vpop.f32.mrf.mxu0
  %v4589 = vadd.f32 0.0, %v4588
  %v4590 = vpop.f32.mrf.mxu0
  %v4591 = vadd.f32 0.0, %v4590
  %v4592 = vpop.f32.mrf.mxu0
  %v4593 = vadd.f32 0.0, %v4592
  %4594 = vmatprep.mubr.bf16.mxu0 0
  %4595 = vmatmul.mubr.bf16.gmra.mxu0 %v1740
  %v4596 = vpop.f32.mrf.mxu0
  %v4597 = vadd.f32 0.0, %v4596
  %v4598 = vpop.f32.mrf.mxu0
  %v4599 = vadd.f32 0.0, %v4598
  %v4600 = vpop.f32.mrf.mxu0
  %v4601 = vadd.f32 0.0, %v4600
  %v4602 = vpop.f32.mrf.mxu0
  %v4603 = vadd.f32 0.0, %v4602
  %4604 = vmatprep.mubr.bf16.mxu0 0
  %4605 = vmatmul.mubr.bf16.gmra.mxu0 %v1741
  %v4606 = vpop.f32.mrf.mxu0
  %v4607 = vadd.f32 0.0, %v4606
  %v4608 = vpop.f32.mrf.mxu0
  %v4609 = vadd.f32 0.0, %v4608
  %v4610 = vpop.f32.mrf.mxu0
  %v4611 = vadd.f32 0.0, %v4610
  %v4612 = vpop.f32.mrf.mxu0
  %v4613 = vadd.f32 0.0, %v4612
  %4614 = vmatprep.mubr.bf16.mxu0 0
  %4615 = vmatmul.mubr.bf16.gmra.mxu0 %v1742
  %v4616 = vpop.f32.mrf.mxu0
  %v4617 = vadd.f32 0.0, %v4616
  %v4618 = vpop.f32.mrf.mxu0
  %v4619 = vadd.f32 0.0, %v4618
  %v4620 = vpop.f32.mrf.mxu0
  %v4621 = vadd.f32 0.0, %v4620
  %v4622 = vpop.f32.mrf.mxu0
  %v4623 = vadd.f32 0.0, %v4622
  %4624 = vmatprep.mubr.bf16.mxu0 0
  %4625 = vmatmul.mubr.bf16.gmra.mxu0 %v1743
  %v4626 = vpop.f32.mrf.mxu0
  %v4627 = vadd.f32 0.0, %v4626
  %v4628 = vpop.f32.mrf.mxu0
  %v4629 = vadd.f32 0.0, %v4628
  %v4630 = vpop.f32.mrf.mxu0
  %v4631 = vadd.f32 0.0, %v4630
  %v4632 = vpop.f32.mrf.mxu0
  %v4633 = vadd.f32 0.0, %v4632
  %4634 = vmatprep.mubr.bf16.mxu0 0
  %4635 = vmatmul.mubr.bf16.gmra.mxu0 %v1744
  %v4636 = vpop.f32.mrf.mxu0
  %v4637 = vadd.f32 0.0, %v4636
  %v4638 = vpop.f32.mrf.mxu0
  %v4639 = vadd.f32 0.0, %v4638
  %v4640 = vpop.f32.mrf.mxu0
  %v4641 = vpop.f32.mrf.mxu0
  %v4642 = vadd.f32 0.0, %v4641
  %4643 = vmatprep.mubr.bf16.mxu0 0
  %4644 = vmatmul.mubr.bf16.gmra.mxu0 %v1745
  %v4645 = vpop.f32.mrf.mxu0
  %v4646 = vpop.f32.mrf.mxu0
  %v4647 = vpop.f32.mrf.mxu0
  %v4648 = vpop.f32.mrf.mxu0
  %4649 = vdwg.mxu0
  %4650 = vmatprep.subr.bf16.mxu0 %v2754
  %4651 = vmatpush1.bf16.msra.mxu0 %v2753
  %4652 = vmatprep.subr.bf16.mxu0 %v2729
  %4653 = vmatpush1.bf16.msra.mxu0 %v2728
  %4654 = vmatprep.subr.bf16.mxu0 %v2704
  %4655 = vmatpush1.bf16.msra.mxu0 %v2703
  %4656 = vmatprep.subr.bf16.mxu0 %v2679
  %4657 = vmatpush1.bf16.msra.mxu0 %v2678
  %4658 = vmatprep.subr.bf16.mxu0 %v2654
  %4659 = vmatpush1.bf16.msra.mxu0 %v2653
  %4660 = vmatprep.subr.bf16.mxu0 %v2629
  %4661 = vmatpush1.bf16.msra.mxu0 %v2628
  %4662 = vmatprep.subr.bf16.mxu0 %v2604
  %4663 = vmatpush1.bf16.msra.mxu0 %v2603
  %4664 = vmatprep.subr.bf16.mxu0 %v2579
  %4665 = vmatpush1.bf16.msra.mxu0 %v2578
  %4666 = vmatprep.subr.bf16.mxu0 0
  %4667 = vmatpush2.bf16.msra.mxu0 0
  %4668 = vmatprep.subr.bf16.mxu0 0
  %4669 = vmatpush2.bf16.msra.mxu0 0
  %4670 = vmatprep.subr.bf16.mxu0 0
  %4671 = vmatpush2.bf16.msra.mxu0 0
  %4672 = vmatprep.subr.bf16.mxu0 0
  %4673 = vmatpush2.bf16.msra.mxu0 0
  %4674 = vmatprep.subr.bf16.mxu0 0
  %4675 = vmatpush2.bf16.msra.mxu0 0
  %4676 = vmatprep.subr.bf16.mxu0 0
  %4677 = vmatpush2.bf16.msra.mxu0 0
  %4678 = vmatprep.subr.bf16.mxu0 0
  %4679 = vmatpush2.bf16.msra.mxu0 0
  %4680 = vmatprep.subr.bf16.mxu0 0
  %4681 = vmatpush2.bf16.msra.mxu0 0
  %4682 = vmatprep.mubr.bf16.mxu0 0
  %4683 = vmatmul.mubr.bf16.gmra.mxu0 %v1727
  %v4684 = vpop.f32.mrf.mxu0
  %v4685 = vpop.f32.mrf.mxu0
  %v4686 = vpop.f32.mrf.mxu0
  %v4687 = vpop.f32.mrf.mxu0
  %4688 = vmatprep.mubr.bf16.mxu0 0
  %4689 = vmatmul.mubr.bf16.gmra.mxu0 %v1728
  %v4690 = vpop.f32.mrf.mxu0
  %v4691 = vpop.f32.mrf.mxu0
  %v4692 = vpop.f32.mrf.mxu0
  %v4693 = vpop.f32.mrf.mxu0
  %4694 = vmatprep.mubr.bf16.mxu0 0
  %4695 = vmatmul.mubr.bf16.gmra.mxu0 %v1729
  %v4696 = vpop.f32.mrf.mxu0
  %v4697 = vadd.f32 0.0, %v4696
  %v4698 = vpop.f32.mrf.mxu0
  %v4699 = vadd.f32 0.0, %v4698
  %v4700 = vpop.f32.mrf.mxu0
  %v4701 = vadd.f32 0.0, %v4700
  %v4702 = vpop.f32.mrf.mxu0
  %v4703 = vadd.f32 0.0, %v4702
  %4704 = vmatprep.mubr.bf16.mxu0 0
  %4705 = vmatmul.mubr.bf16.gmra.mxu0 %v1730
  %v4706 = vpop.f32.mrf.mxu0
  %v4707 = vadd.f32 0.0, %v4706
  %v4708 = vpop.f32.mrf.mxu0
  %v4709 = vadd.f32 0.0, %v4708
  %v4710 = vpop.f32.mrf.mxu0
  %v4711 = vadd.f32 0.0, %v4710
  %v4712 = vpop.f32.mrf.mxu0
  %v4713 = vadd.f32 0.0, %v4712
  %4714 = vmatprep.mubr.bf16.mxu0 0
  %4715 = vmatmul.mubr.bf16.gmra.mxu0 %v1731
  %v4716 = vpop.f32.mrf.mxu0
  %v4717 = vadd.f32 0.0, %v4716
  %v4718 = vpop.f32.mrf.mxu0
  %v4719 = vadd.f32 0.0, %v4718
  %v4720 = vpop.f32.mrf.mxu0
  %v4721 = vadd.f32 0.0, %v4720
  %v4722 = vpop.f32.mrf.mxu0
  %v4723 = vadd.f32 0.0, %v4722
  %4724 = vmatprep.mubr.bf16.mxu0 0
  %4725 = vmatmul.mubr.bf16.gmra.mxu0 %v1732
  %v4726 = vpop.f32.mrf.mxu0
  %v4727 = vadd.f32 0.0, %v4726
  %v4728 = vpop.f32.mrf.mxu0
  %v4729 = vadd.f32 0.0, %v4728
  %v4730 = vpop.f32.mrf.mxu0
  %v4731 = vadd.f32 0.0, %v4730
  %v4732 = vpop.f32.mrf.mxu0
  %v4733 = vadd.f32 0.0, %v4732
  %4734 = vmatprep.mubr.bf16.mxu0 0
  %4735 = vmatmul.mubr.bf16.gmra.mxu0 %v1733
  %v4736 = vpop.f32.mrf.mxu0
  %v4737 = vadd.f32 0.0, %v4736
  %v4738 = vpop.f32.mrf.mxu0
  %v4739 = vadd.f32 0.0, %v4738
  %v4740 = vpop.f32.mrf.mxu0
  %v4741 = vadd.f32 0.0, %v4740
  %v4742 = vpop.f32.mrf.mxu0
  %v4743 = vadd.f32 0.0, %v4742
  %4744 = vmatprep.mubr.bf16.mxu0 0
  %4745 = vmatmul.mubr.bf16.gmra.mxu0 %v1734
  %v4746 = vpop.f32.mrf.mxu0
  %v4747 = vadd.f32 0.0, %v4746
  %v4748 = vpop.f32.mrf.mxu0
  %v4749 = vadd.f32 0.0, %v4748
  %v4750 = vpop.f32.mrf.mxu0
  %v4751 = vadd.f32 0.0, %v4750
  %v4752 = vpop.f32.mrf.mxu0
  %v4753 = vadd.f32 0.0, %v4752
  %4754 = vmatprep.mubr.bf16.mxu0 0
  %4755 = vmatmul.mubr.bf16.gmra.mxu0 %v1735
  %v4756 = vpop.f32.mrf.mxu0
  %v4757 = vadd.f32 0.0, %v4756
  %v4758 = vpop.f32.mrf.mxu0
  %v4759 = vadd.f32 0.0, %v4758
  %v4760 = vpop.f32.mrf.mxu0
  %v4761 = vadd.f32 0.0, %v4760
  %v4762 = vpop.f32.mrf.mxu0
  %v4763 = vadd.f32 0.0, %v4762
  %4764 = vmatprep.mubr.bf16.mxu0 0
  %4765 = vmatmul.mubr.bf16.gmra.mxu0 %v1736
  %v4766 = vpop.f32.mrf.mxu0
  %v4767 = vadd.f32 0.0, %v4766
  %v4768 = vpop.f32.mrf.mxu0
  %v4769 = vadd.f32 0.0, %v4768
  %v4770 = vpop.f32.mrf.mxu0
  %v4771 = vadd.f32 0.0, %v4770
  %v4772 = vpop.f32.mrf.mxu0
  %v4773 = vadd.f32 0.0, %v4772
  %4774 = vmatprep.mubr.bf16.mxu0 0
  %4775 = vmatmul.mubr.bf16.gmra.mxu0 %v1737
  %v4776 = vpop.f32.mrf.mxu0
  %v4777 = vadd.f32 0.0, %v4776
  %v4778 = vpop.f32.mrf.mxu0
  %v4779 = vadd.f32 0.0, %v4778
  %v4780 = vpop.f32.mrf.mxu0
  %v4781 = vadd.f32 0.0, %v4780
  %v4782 = vpop.f32.mrf.mxu0
  %v4783 = vadd.f32 0.0, %v4782
  %4784 = vmatprep.mubr.bf16.mxu0 0
  %4785 = vmatmul.mubr.bf16.gmra.mxu0 %v1738
  %v4786 = vpop.f32.mrf.mxu0
  %v4787 = vadd.f32 0.0, %v4786
  %v4788 = vpop.f32.mrf.mxu0
  %v4789 = vadd.f32 0.0, %v4788
  %v4790 = vpop.f32.mrf.mxu0
  %v4791 = vadd.f32 0.0, %v4790
  %v4792 = vpop.f32.mrf.mxu0
  %v4793 = vadd.f32 0.0, %v4792
  %4794 = vmatprep.mubr.bf16.mxu0 0
  %4795 = vmatmul.mubr.bf16.gmra.mxu0 %v1739
  %v4796 = vpop.f32.mrf.mxu0
  %v4797 = vadd.f32 0.0, %v4796
  %v4798 = vpop.f32.mrf.mxu0
  %v4799 = vadd.f32 0.0, %v4798
  %v4800 = vpop.f32.mrf.mxu0
  %v4801 = vadd.f32 0.0, %v4800
  %v4802 = vpop.f32.mrf.mxu0
  %v4803 = vadd.f32 0.0, %v4802
  %4804 = vmatprep.mubr.bf16.mxu0 0
  %4805 = vmatmul.mubr.bf16.gmra.mxu0 %v1740
  %v4806 = vpop.f32.mrf.mxu0
  %v4807 = vadd.f32 0.0, %v4806
  %v4808 = vpop.f32.mrf.mxu0
  %v4809 = vadd.f32 0.0, %v4808
  %v4810 = vpop.f32.mrf.mxu0
  %v4811 = vadd.f32 0.0, %v4810
  %v4812 = vpop.f32.mrf.mxu0
  %v4813 = vadd.f32 0.0, %v4812
  %4814 = vmatprep.mubr.bf16.mxu0 0
  %4815 = vmatmul.mubr.bf16.gmra.mxu0 %v1741
  %v4816 = vpop.f32.mrf.mxu0
  %v4817 = vadd.f32 0.0, %v4816
  %v4818 = vpop.f32.mrf.mxu0
  %v4819 = vadd.f32 0.0, %v4818
  %v4820 = vpop.f32.mrf.mxu0
  %v4821 = vadd.f32 0.0, %v4820
  %v4822 = vpop.f32.mrf.mxu0
  %v4823 = vadd.f32 0.0, %v4822
  %4824 = vmatprep.mubr.bf16.mxu0 0
  %4825 = vmatmul.mubr.bf16.gmra.mxu0 %v1742
  %v4826 = vpop.f32.mrf.mxu0
  %v4827 = vadd.f32 0.0, %v4826
  %v4828 = vpop.f32.mrf.mxu0
  %v4829 = vadd.f32 0.0, %v4828
  %v4830 = vpop.f32.mrf.mxu0
  %v4831 = vadd.f32 0.0, %v4830
  %v4832 = vpop.f32.mrf.mxu0
  %v4833 = vadd.f32 0.0, %v4832
  %4834 = vmatprep.mubr.bf16.mxu0 0
  %4835 = vmatmul.mubr.bf16.gmra.mxu0 %v1743
  %v4836 = vpop.f32.mrf.mxu0
  %v4837 = vadd.f32 0.0, %v4836
  %v4838 = vpop.f32.mrf.mxu0
  %v4839 = vadd.f32 0.0, %v4838
  %v4840 = vpop.f32.mrf.mxu0
  %v4841 = vadd.f32 0.0, %v4840
  %v4842 = vpop.f32.mrf.mxu0
  %v4843 = vadd.f32 0.0, %v4842
  %4844 = vmatprep.mubr.bf16.mxu0 0
  %4845 = vmatmul.mubr.bf16.gmra.mxu0 %v1744
  %v4846 = vpop.f32.mrf.mxu0
  %v4847 = vadd.f32 0.0, %v4846
  %v4848 = vpop.f32.mrf.mxu0
  %v4849 = vadd.f32 0.0, %v4848
  %v4850 = vpop.f32.mrf.mxu0
  %v4851 = vadd.f32 0.0, %v4850
  %v4852 = vpop.f32.mrf.mxu0
  %v4853 = vadd.f32 0.0, %v4852
  %4854 = vmatprep.mubr.bf16.mxu0 0
  %4855 = vmatmul.mubr.bf16.gmra.mxu0 %v1745
  %v4856 = vpop.f32.mrf.mxu0
  %v4857 = vpop.f32.mrf.mxu0
  %v4858 = vpop.f32.mrf.mxu0
  %v4859 = vpop.f32.mrf.mxu0
  %4860 = vdwg.mxu0
  %4861 = vmatprep.subr.bf16.mxu0 %v2756
  %4862 = vmatpush1.bf16.msra.mxu0 %v2755
  %4863 = vmatprep.subr.bf16.mxu0 %v2731
  %4864 = vmatpush1.bf16.msra.mxu0 %v2730
  %4865 = vmatprep.subr.bf16.mxu0 %v2706
  %4866 = vmatpush1.bf16.msra.mxu0 %v2705
  %4867 = vmatprep.subr.bf16.mxu0 %v2681
  %4868 = vmatpush1.bf16.msra.mxu0 %v2680
  %4869 = vmatprep.subr.bf16.mxu0 %v2656
  %4870 = vmatpush1.bf16.msra.mxu0 %v2655
  %4871 = vmatprep.subr.bf16.mxu0 %v2631
  %4872 = vmatpush1.bf16.msra.mxu0 %v2630
  %4873 = vmatprep.subr.bf16.mxu0 %v2606
  %4874 = vmatpush1.bf16.msra.mxu0 %v2605
  %4875 = vmatprep.subr.bf16.mxu0 %v2581
  %4876 = vmatpush1.bf16.msra.mxu0 %v2580
  %4877 = vmatprep.subr.bf16.mxu0 0
  %4878 = vmatpush2.bf16.msra.mxu0 0
  %4879 = vmatprep.subr.bf16.mxu0 0
  %4880 = vmatpush2.bf16.msra.mxu0 0
  %4881 = vmatprep.subr.bf16.mxu0 0
  %4882 = vmatpush2.bf16.msra.mxu0 0
  %4883 = vmatprep.subr.bf16.mxu0 0
  %4884 = vmatpush2.bf16.msra.mxu0 0
  %4885 = vmatprep.subr.bf16.mxu0 0
  %4886 = vmatpush2.bf16.msra.mxu0 0
  %4887 = vmatprep.subr.bf16.mxu0 0
  %4888 = vmatpush2.bf16.msra.mxu0 0
  %4889 = vmatprep.subr.bf16.mxu0 0
  %4890 = vmatpush2.bf16.msra.mxu0 0
  %4891 = vmatprep.subr.bf16.mxu0 0
  %4892 = vmatpush2.bf16.msra.mxu0 0
  %4893 = vmatprep.mubr.bf16.mxu0 0
  %4894 = vmatmul.mubr.bf16.gmra.mxu0 %v1727
  %v4895 = vpop.f32.mrf.mxu0
  %v4896 = vpop.f32.mrf.mxu0
  %v4897 = vpop.f32.mrf.mxu0
  %v4898 = vpop.f32.mrf.mxu0
  %4899 = vmatprep.mubr.bf16.mxu0 0
  %4900 = vmatmul.mubr.bf16.gmra.mxu0 %v1728
  %v4901 = vpop.f32.mrf.mxu0
  %v4902 = vpop.f32.mrf.mxu0
  %v4903 = vpop.f32.mrf.mxu0
  %v4904 = vpop.f32.mrf.mxu0
  %4905 = vmatprep.mubr.bf16.mxu0 0
  %4906 = vmatmul.mubr.bf16.gmra.mxu0 %v1729
  %v4907 = vpop.f32.mrf.mxu0
  %v4908 = vadd.f32 0.0, %v4907
  %v4909 = vpop.f32.mrf.mxu0
  %v4910 = vpop.f32.mrf.mxu0
  %v4911 = vadd.f32 0.0, %v4910
  %v4912 = vpop.f32.mrf.mxu0
  %v4913 = vadd.f32 0.0, %v4912
  %4914 = vmatprep.mubr.bf16.mxu0 0
  %4915 = vmatmul.mubr.bf16.gmra.mxu0 %v1730
  %v4916 = vpop.f32.mrf.mxu0
  %v4917 = vadd.f32 0.0, %v4916
  %v4918 = vpop.f32.mrf.mxu0
  %v4919 = vadd.f32 0.0, %v4918
  %v4920 = vpop.f32.mrf.mxu0
  %v4921 = vadd.f32 0.0, %v4920
  %v4922 = vpop.f32.mrf.mxu0
  %v4923 = vadd.f32 0.0, %v4922
  %4924 = vmatprep.mubr.bf16.mxu0 0
  %4925 = vmatmul.mubr.bf16.gmra.mxu0 %v1731
  %v4926 = vpop.f32.mrf.mxu0
  %v4927 = vadd.f32 0.0, %v4926
  %v4928 = vpop.f32.mrf.mxu0
  %v4929 = vadd.f32 0.0, %v4928
  %v4930 = vpop.f32.mrf.mxu0
  %v4931 = vadd.f32 0.0, %v4930
  %v4932 = vpop.f32.mrf.mxu0
  %v4933 = vadd.f32 0.0, %v4932
  %4934 = vmatprep.mubr.bf16.mxu0 0
  %4935 = vmatmul.mubr.bf16.gmra.mxu0 %v1732
  %v4936 = vpop.f32.mrf.mxu0
  %v4937 = vadd.f32 0.0, %v4936
  %v4938 = vpop.f32.mrf.mxu0
  %v4939 = vadd.f32 0.0, %v4938
  %v4940 = vpop.f32.mrf.mxu0
  %v4941 = vadd.f32 0.0, %v4940
  %v4942 = vpop.f32.mrf.mxu0
  %v4943 = vadd.f32 0.0, %v4942
  %4944 = vmatprep.mubr.bf16.mxu0 0
  %4945 = vmatmul.mubr.bf16.gmra.mxu0 %v1733
  %v4946 = vpop.f32.mrf.mxu0
  %v4947 = vadd.f32 0.0, %v4946
  %v4948 = vpop.f32.mrf.mxu0
  %v4949 = vadd.f32 0.0, %v4948
  %v4950 = vpop.f32.mrf.mxu0
  %v4951 = vadd.f32 0.0, %v4950
  %v4952 = vpop.f32.mrf.mxu0
  %v4953 = vadd.f32 0.0, %v4952
  %4954 = vmatprep.mubr.bf16.mxu0 0
  %4955 = vmatmul.mubr.bf16.gmra.mxu0 %v1734
  %v4956 = vpop.f32.mrf.mxu0
  %v4957 = vadd.f32 0.0, %v4956
  %v4958 = vpop.f32.mrf.mxu0
  %v4959 = vadd.f32 0.0, %v4958
  %v4960 = vpop.f32.mrf.mxu0
  %v4961 = vadd.f32 0.0, %v4960
  %v4962 = vpop.f32.mrf.mxu0
  %v4963 = vadd.f32 0.0, %v4962
  %4964 = vmatprep.mubr.bf16.mxu0 0
  %4965 = vmatmul.mubr.bf16.gmra.mxu0 %v1735
  %v4966 = vpop.f32.mrf.mxu0
  %v4967 = vadd.f32 0.0, %v4966
  %v4968 = vpop.f32.mrf.mxu0
  %v4969 = vadd.f32 0.0, %v4968
  %v4970 = vpop.f32.mrf.mxu0
  %v4971 = vadd.f32 0.0, %v4970
  %v4972 = vpop.f32.mrf.mxu0
  %v4973 = vadd.f32 0.0, %v4972
  %4974 = vmatprep.mubr.bf16.mxu0 0
  %4975 = vmatmul.mubr.bf16.gmra.mxu0 %v1736
  %v4976 = vpop.f32.mrf.mxu0
  %v4977 = vadd.f32 0.0, %v4976
  %v4978 = vpop.f32.mrf.mxu0
  %v4979 = vadd.f32 0.0, %v4978
  %v4980 = vpop.f32.mrf.mxu0
  %v4981 = vadd.f32 0.0, %v4980
  %v4982 = vpop.f32.mrf.mxu0
  %v4983 = vadd.f32 0.0, %v4982
  %4984 = vmatprep.mubr.bf16.mxu0 0
  %4985 = vmatmul.mubr.bf16.gmra.mxu0 %v1737
  %v4986 = vpop.f32.mrf.mxu0
  %v4987 = vadd.f32 0.0, %v4986
  %v4988 = vpop.f32.mrf.mxu0
  %v4989 = vadd.f32 0.0, %v4988
  %v4990 = vpop.f32.mrf.mxu0
  %v4991 = vadd.f32 0.0, %v4990
  %v4992 = vpop.f32.mrf.mxu0
  %v4993 = vadd.f32 0.0, %v4992
  %4994 = vmatprep.mubr.bf16.mxu0 0
  %4995 = vmatmul.mubr.bf16.gmra.mxu0 %v1738
  %v4996 = vpop.f32.mrf.mxu0
  %v4997 = vadd.f32 0.0, %v4996
  %v4998 = vpop.f32.mrf.mxu0
  %v4999 = vadd.f32 0.0, %v4998
  %v5000 = vpop.f32.mrf.mxu0
  %v5001 = vadd.f32 0.0, %v5000
  %v5002 = vpop.f32.mrf.mxu0
  %v5003 = vadd.f32 0.0, %v5002
  %5004 = vmatprep.mubr.bf16.mxu0 0
  %5005 = vmatmul.mubr.bf16.gmra.mxu0 %v1739
  %v5006 = vpop.f32.mrf.mxu0
  %v5007 = vadd.f32 0.0, %v5006
  %v5008 = vpop.f32.mrf.mxu0
  %v5009 = vadd.f32 0.0, %v5008
  %v5010 = vpop.f32.mrf.mxu0
  %v5011 = vadd.f32 0.0, %v5010
  %v5012 = vpop.f32.mrf.mxu0
  %v5013 = vadd.f32 0.0, %v5012
  %5014 = vmatprep.mubr.bf16.mxu0 0
  %5015 = vmatmul.mubr.bf16.gmra.mxu0 %v1740
  %v5016 = vpop.f32.mrf.mxu0
  %v5017 = vadd.f32 0.0, %v5016
  %v5018 = vpop.f32.mrf.mxu0
  %v5019 = vadd.f32 0.0, %v5018
  %v5020 = vpop.f32.mrf.mxu0
  %v5021 = vadd.f32 0.0, %v5020
  %v5022 = vpop.f32.mrf.mxu0
  %v5023 = vadd.f32 0.0, %v5022
  %5024 = vmatprep.mubr.bf16.mxu0 0
  %5025 = vmatmul.mubr.bf16.gmra.mxu0 %v1741
  %v5026 = vpop.f32.mrf.mxu0
  %v5027 = vadd.f32 0.0, %v5026
  %v5028 = vpop.f32.mrf.mxu0
  %v5029 = vadd.f32 0.0, %v5028
  %v5030 = vpop.f32.mrf.mxu0
  %v5031 = vadd.f32 0.0, %v5030
  %v5032 = vpop.f32.mrf.mxu0
  %v5033 = vadd.f32 0.0, %v5032
  %5034 = vmatprep.mubr.bf16.mxu0 0
  %5035 = vmatmul.mubr.bf16.gmra.mxu0 %v1742
  %v5036 = vpop.f32.mrf.mxu0
  %v5037 = vadd.f32 0.0, %v5036
  %v5038 = vpop.f32.mrf.mxu0
  %v5039 = vadd.f32 0.0, %v5038
  %v5040 = vpop.f32.mrf.mxu0
  %v5041 = vadd.f32 0.0, %v5040
  %v5042 = vpop.f32.mrf.mxu0
  %v5043 = vadd.f32 0.0, %v5042
  %5044 = vmatprep.mubr.bf16.mxu0 0
  %5045 = vmatmul.mubr.bf16.gmra.mxu0 %v1743
  %v5046 = vpop.f32.mrf.mxu0
  %v5047 = vadd.f32 0.0, %v5046
  %v5048 = vpop.f32.mrf.mxu0
  %v5049 = vadd.f32 0.0, %v5048
  %v5050 = vpop.f32.mrf.mxu0
  %v5051 = vadd.f32 0.0, %v5050
  %v5052 = vpop.f32.mrf.mxu0
  %v5053 = vadd.f32 0.0, %v5052
  %5054 = vmatprep.mubr.bf16.mxu0 0
  %5055 = vmatmul.mubr.bf16.gmra.mxu0 %v1744
  %v5056 = vpop.f32.mrf.mxu0
  %v5057 = vadd.f32 0.0, %v5056
  %v5058 = vpop.f32.mrf.mxu0
  %v5059 = vadd.f32 0.0, %v5058
  %v5060 = vpop.f32.mrf.mxu0
  %v5061 = vadd.f32 0.0, %v5060
  %v5062 = vpop.f32.mrf.mxu0
  %v5063 = vadd.f32 0.0, %v5062
  %5064 = vmatprep.mubr.bf16.mxu0 0
  %5065 = vmatmul.mubr.bf16.gmra.mxu0 %v1745
  %v5066 = vpop.f32.mrf.mxu0
  %v5067 = vpop.f32.mrf.mxu0
  %v5068 = vadd.f32 0.0, %v5067
  %v5069 = vpop.f32.mrf.mxu0
  %v5070 = vpop.f32.mrf.mxu0
  %5071 = vdwg.mxu0
  %5072 = vmatprep.subr.bf16.mxu0 %v2758
  %5073 = vmatpush1.bf16.msra.mxu0 %v2757
  %5074 = vmatprep.subr.bf16.mxu0 %v2733
  %5075 = vmatpush1.bf16.msra.mxu0 %v2732
  %5076 = vmatprep.subr.bf16.mxu0 %v2708
  %5077 = vmatpush1.bf16.msra.mxu0 %v2707
  %5078 = vmatprep.subr.bf16.mxu0 %v2683
  %5079 = vmatpush1.bf16.msra.mxu0 %v2682
  %5080 = vmatprep.subr.bf16.mxu0 %v2658
  %5081 = vmatpush1.bf16.msra.mxu0 %v2657
  %5082 = vmatprep.subr.bf16.mxu0 %v2633
  %5083 = vmatpush1.bf16.msra.mxu0 %v2632
  %5084 = vmatprep.subr.bf16.mxu0 %v2608
  %5085 = vmatpush1.bf16.msra.mxu0 %v2607
  %5086 = vmatprep.subr.bf16.mxu0 %v2583
  %5087 = vmatpush1.bf16.msra.mxu0 %v2582
  %5088 = vmatprep.subr.bf16.mxu0 0
  %5089 = vmatpush2.bf16.msra.mxu0 0
  %5090 = vmatprep.subr.bf16.mxu0 0
  %5091 = vmatpush2.bf16.msra.mxu0 0
  %5092 = vmatprep.subr.bf16.mxu0 0
  %5093 = vmatpush2.bf16.msra.mxu0 0
  %5094 = vmatprep.subr.bf16.mxu0 0
  %5095 = vmatpush2.bf16.msra.mxu0 0
  %5096 = vmatprep.subr.bf16.mxu0 0
  %5097 = vmatpush2.bf16.msra.mxu0 0
  %5098 = vmatprep.subr.bf16.mxu0 0
  %5099 = vmatpush2.bf16.msra.mxu0 0
  %5100 = vmatprep.subr.bf16.mxu0 0
  %5101 = vmatpush2.bf16.msra.mxu0 0
  %5102 = vmatprep.subr.bf16.mxu0 0
  %5103 = vmatpush2.bf16.msra.mxu0 0
  %5104 = vmatprep.mubr.bf16.mxu0 0
  %5105 = vmatmul.mubr.bf16.gmra.mxu0 %v1727
  %v5106 = vpop.f32.mrf.mxu0
  %v5107 = vpop.f32.mrf.mxu0
  %v5108 = vpop.f32.mrf.mxu0
  %v5109 = vpop.f32.mrf.mxu0
  %5110 = vmatprep.mubr.bf16.mxu0 0
  %5111 = vmatmul.mubr.bf16.gmra.mxu0 %v1728
  %v5112 = vpop.f32.mrf.mxu0
  %v5113 = vpop.f32.mrf.mxu0
  %v5114 = vpop.f32.mrf.mxu0
  %v5115 = vpop.f32.mrf.mxu0
  %5116 = vmatprep.mubr.bf16.mxu0 0
  %5117 = vmatmul.mubr.bf16.gmra.mxu0 %v1729
  %v5118 = vpop.f32.mrf.mxu0
  %v5119 = vpop.f32.mrf.mxu0
  %v5120 = vpop.f32.mrf.mxu0
  %v5121 = vpop.f32.mrf.mxu0
  %5122 = vmatprep.mubr.bf16.mxu0 0
  %5123 = vmatmul.mubr.bf16.gmra.mxu0 %v1730
  %v5124 = vpop.f32.mrf.mxu0
  %v5125 = vadd.f32 0.0, %v5124
  %v5126 = vpop.f32.mrf.mxu0
  %v5127 = vadd.f32 0.0, %v5126
  %v5128 = vpop.f32.mrf.mxu0
  %v5129 = vadd.f32 0.0, %v5128
  %v5130 = vpop.f32.mrf.mxu0
  %v5131 = vadd.f32 0.0, %v5130
  %5132 = vmatprep.mubr.bf16.mxu0 0
  %5133 = vmatmul.mubr.bf16.gmra.mxu0 %v1731
  %v5134 = vpop.f32.mrf.mxu0
  %v5135 = vadd.f32 0.0, %v5134
  %v5136 = vpop.f32.mrf.mxu0
  %v5137 = vadd.f32 0.0, %v5136
  %v5138 = vpop.f32.mrf.mxu0
  %v5139 = vadd.f32 0.0, %v5138
  %v5140 = vpop.f32.mrf.mxu0
  %v5141 = vadd.f32 0.0, %v5140
  %5142 = vmatprep.mubr.bf16.mxu0 0
  %5143 = vmatmul.mubr.bf16.gmra.mxu0 %v1732
  %v5144 = vpop.f32.mrf.mxu0
  %v5145 = vadd.f32 0.0, %v5144
  %v5146 = vpop.f32.mrf.mxu0
  %v5147 = vadd.f32 0.0, %v5146
  %v5148 = vpop.f32.mrf.mxu0
  %v5149 = vadd.f32 0.0, %v5148
  %v5150 = vpop.f32.mrf.mxu0
  %v5151 = vadd.f32 0.0, %v5150
  %5152 = vmatprep.mubr.bf16.mxu0 0
  %5153 = vmatmul.mubr.bf16.gmra.mxu0 %v1733
  %v5154 = vpop.f32.mrf.mxu0
  %v5155 = vadd.f32 0.0, %v5154
  %v5156 = vpop.f32.mrf.mxu0
  %v5157 = vadd.f32 0.0, %v5156
  %v5158 = vpop.f32.mrf.mxu0
  %v5159 = vadd.f32 0.0, %v5158
  %v5160 = vpop.f32.mrf.mxu0
  %v5161 = vadd.f32 0.0, %v5160
  %5162 = vmatprep.mubr.bf16.mxu0 0
  %5163 = vmatmul.mubr.bf16.gmra.mxu0 %v1734
  %v5164 = vpop.f32.mrf.mxu0
  %v5165 = vadd.f32 0.0, %v5164
  %v5166 = vpop.f32.mrf.mxu0
  %v5167 = vadd.f32 0.0, %v5166
  %v5168 = vpop.f32.mrf.mxu0
  %v5169 = vadd.f32 0.0, %v5168
  %v5170 = vpop.f32.mrf.mxu0
  %v5171 = vadd.f32 0.0, %v5170
  %5172 = vmatprep.mubr.bf16.mxu0 0
  %5173 = vmatmul.mubr.bf16.gmra.mxu0 %v1735
  %v5174 = vpop.f32.mrf.mxu0
  %v5175 = vadd.f32 0.0, %v5174
  %v5176 = vpop.f32.mrf.mxu0
  %v5177 = vadd.f32 0.0, %v5176
  %v5178 = vpop.f32.mrf.mxu0
  %v5179 = vadd.f32 0.0, %v5178
  %v5180 = vpop.f32.mrf.mxu0
  %v5181 = vadd.f32 0.0, %v5180
  %5182 = vmatprep.mubr.bf16.mxu0 0
  %5183 = vmatmul.mubr.bf16.gmra.mxu0 %v1736
  %v5184 = vpop.f32.mrf.mxu0
  %v5185 = vadd.f32 0.0, %v5184
  %v5186 = vpop.f32.mrf.mxu0
  %v5187 = vadd.f32 0.0, %v5186
  %v5188 = vpop.f32.mrf.mxu0
  %v5189 = vadd.f32 0.0, %v5188
  %v5190 = vpop.f32.mrf.mxu0
  %v5191 = vadd.f32 0.0, %v5190
  %5192 = vmatprep.mubr.bf16.mxu0 0
  %5193 = vmatmul.mubr.bf16.gmra.mxu0 %v1737
  %v5194 = vpop.f32.mrf.mxu0
  %v5195 = vadd.f32 0.0, %v5194
  %v5196 = vpop.f32.mrf.mxu0
  %v5197 = vadd.f32 0.0, %v5196
  %v5198 = vpop.f32.mrf.mxu0
  %v5199 = vadd.f32 0.0, %v5198
  %v5200 = vpop.f32.mrf.mxu0
  %v5201 = vadd.f32 0.0, %v5200
  %5202 = vmatprep.mubr.bf16.mxu0 0
  %5203 = vmatmul.mubr.bf16.gmra.mxu0 %v1738
  %v5204 = vpop.f32.mrf.mxu0
  %v5205 = vadd.f32 0.0, %v5204
  %v5206 = vpop.f32.mrf.mxu0
  %v5207 = vadd.f32 0.0, %v5206
  %v5208 = vpop.f32.mrf.mxu0
  %v5209 = vadd.f32 0.0, %v5208
  %v5210 = vpop.f32.mrf.mxu0
  %v5211 = vadd.f32 0.0, %v5210
  %5212 = vmatprep.mubr.bf16.mxu0 0
  %5213 = vmatmul.mubr.bf16.gmra.mxu0 %v1739
  %v5214 = vpop.f32.mrf.mxu0
  %v5215 = vadd.f32 0.0, %v5214
  %v5216 = vpop.f32.mrf.mxu0
  %v5217 = vadd.f32 0.0, %v5216
  %v5218 = vpop.f32.mrf.mxu0
  %v5219 = vadd.f32 0.0, %v5218
  %v5220 = vpop.f32.mrf.mxu0
  %v5221 = vadd.f32 0.0, %v5220
  %5222 = vmatprep.mubr.bf16.mxu0 0
  %5223 = vmatmul.mubr.bf16.gmra.mxu0 %v1740
  %v5224 = vpop.f32.mrf.mxu0
  %v5225 = vadd.f32 0.0, %v5224
  %v5226 = vpop.f32.mrf.mxu0
  %v5227 = vadd.f32 0.0, %v5226
  %v5228 = vpop.f32.mrf.mxu0
  %v5229 = vadd.f32 0.0, %v5228
  %v5230 = vpop.f32.mrf.mxu0
  %v5231 = vadd.f32 0.0, %v5230
  %5232 = vmatprep.mubr.bf16.mxu0 0
  %5233 = vmatmul.mubr.bf16.gmra.mxu0 %v1741
  %v5234 = vpop.f32.mrf.mxu0
  %v5235 = vadd.f32 0.0, %v5234
  %v5236 = vpop.f32.mrf.mxu0
  %v5237 = vadd.f32 0.0, %v5236
  %v5238 = vpop.f32.mrf.mxu0
  %v5239 = vadd.f32 0.0, %v5238
  %v5240 = vpop.f32.mrf.mxu0
  %v5241 = vadd.f32 0.0, %v5240
  %5242 = vmatprep.mubr.bf16.mxu0 0
  %5243 = vmatmul.mubr.bf16.gmra.mxu0 %v1742
  %v5244 = vpop.f32.mrf.mxu0
  %v5245 = vadd.f32 0.0, %v5244
  %v5246 = vpop.f32.mrf.mxu0
  %v5247 = vadd.f32 0.0, %v5246
  %v5248 = vpop.f32.mrf.mxu0
  %v5249 = vadd.f32 0.0, %v5248
  %v5250 = vpop.f32.mrf.mxu0
  %v5251 = vadd.f32 0.0, %v5250
  %5252 = vmatprep.mubr.bf16.mxu0 0
  %5253 = vmatmul.mubr.bf16.gmra.mxu0 %v1743
  %v5254 = vpop.f32.mrf.mxu0
  %v5255 = vadd.f32 0.0, %v5254
  %v5256 = vpop.f32.mrf.mxu0
  %v5257 = vadd.f32 0.0, %v5256
  %v5258 = vpop.f32.mrf.mxu0
  %v5259 = vadd.f32 0.0, %v5258
  %v5260 = vpop.f32.mrf.mxu0
  %v5261 = vadd.f32 0.0, %v5260
  %5262 = vmatprep.mubr.bf16.mxu0 0
  %5263 = vmatmul.mubr.bf16.gmra.mxu0 %v1744
  %v5264 = vpop.f32.mrf.mxu0
  %v5265 = vadd.f32 0.0, %v5264
  %v5266 = vpop.f32.mrf.mxu0
  %v5267 = vadd.f32 0.0, %v5266
  %v5268 = vpop.f32.mrf.mxu0
  %v5269 = vadd.f32 0.0, %v5268
  %v5270 = vpop.f32.mrf.mxu0
  %v5271 = vadd.f32 0.0, %v5270
  %5272 = vmatprep.mubr.bf16.mxu0 0
  %5273 = vmatmul.mubr.bf16.gmra.mxu0 %v1745
  %v5274 = vpop.f32.mrf.mxu0
  %v5275 = vadd.f32 0.0, %v5274
  %v5276 = vpop.f32.mrf.mxu0
  %v5277 = vadd.f32 0.0, %v5276
  %v5278 = vpop.f32.mrf.mxu0
  %v5279 = vadd.f32 0.0, %v5278
  %v5280 = vpop.f32.mrf.mxu0
  %v5281 = vadd.f32 0.0, %v5280
  %5282 = vdwg.mxu0
  %5283 = vmatprep.subr.bf16.mxu0 %v2760
  %5284 = vmatpush1.bf16.msra.mxu0 %v2759
  %5285 = vmatprep.subr.bf16.mxu0 %v2735
  %5286 = vmatpush1.bf16.msra.mxu0 %v2734
  %5287 = vmatprep.subr.bf16.mxu0 %v2710
  %5288 = vmatpush1.bf16.msra.mxu0 %v2709
  %5289 = vmatprep.subr.bf16.mxu0 %v2685
  %5290 = vmatpush1.bf16.msra.mxu0 %v2684
  %5291 = vmatprep.subr.bf16.mxu0 %v2660
  %5292 = vmatpush1.bf16.msra.mxu0 %v2659
  %5293 = vmatprep.subr.bf16.mxu0 %v2635
  %5294 = vmatpush1.bf16.msra.mxu0 %v2634
  %5295 = vmatprep.subr.bf16.mxu0 %v2610
  %5296 = vmatpush1.bf16.msra.mxu0 %v2609
  %5297 = vmatprep.subr.bf16.mxu0 %v2585
  %5298 = vmatpush1.bf16.msra.mxu0 %v2584
  %5299 = vmatprep.subr.bf16.mxu0 0
  %5300 = vmatpush2.bf16.msra.mxu0 0
  %5301 = vmatprep.subr.bf16.mxu0 0
  %5302 = vmatpush2.bf16.msra.mxu0 0
  %5303 = vmatprep.subr.bf16.mxu0 0
  %5304 = vmatpush2.bf16.msra.mxu0 0
  %5305 = vmatprep.subr.bf16.mxu0 0
  %5306 = vmatpush2.bf16.msra.mxu0 0
  %5307 = vmatprep.subr.bf16.mxu0 0
  %5308 = vmatpush2.bf16.msra.mxu0 0
  %5309 = vmatprep.subr.bf16.mxu0 0
  %5310 = vmatpush2.bf16.msra.mxu0 0
  %5311 = vmatprep.subr.bf16.mxu0 0
  %5312 = vmatpush2.bf16.msra.mxu0 0
  %5313 = vmatprep.subr.bf16.mxu0 0
  %5314 = vmatpush2.bf16.msra.mxu0 0
  %5315 = vmatprep.mubr.bf16.mxu0 0
  %5316 = vmatmul.mubr.bf16.gmra.mxu0 %v1727
  %v5317 = vpop.f32.mrf.mxu0
  %v5318 = vpop.f32.mrf.mxu0
  %v5319 = vpop.f32.mrf.mxu0
  %v5320 = vpop.f32.mrf.mxu0
  %5321 = vmatprep.mubr.bf16.mxu0 0
  %5322 = vmatmul.mubr.bf16.gmra.mxu0 %v1728
  %v5323 = vpop.f32.mrf.mxu0
  %v5324 = vpop.f32.mrf.mxu0
  %v5325 = vpop.f32.mrf.mxu0
  %v5326 = vpop.f32.mrf.mxu0
  %5327 = vmatprep.mubr.bf16.mxu0 0
  %5328 = vmatmul.mubr.bf16.gmra.mxu0 %v1729
  %v5329 = vpop.f32.mrf.mxu0
  %v5330 = vpop.f32.mrf.mxu0
  %v5331 = vpop.f32.mrf.mxu0
  %v5332 = vpop.f32.mrf.mxu0
  %5333 = vmatprep.mubr.bf16.mxu0 0
  %5334 = vmatmul.mubr.bf16.gmra.mxu0 %v1730
  %v5335 = vpop.f32.mrf.mxu0
  %v5336 = vadd.f32 0.0, %v5335
  %v5337 = vpop.f32.mrf.mxu0
  %v5338 = vadd.f32 0.0, %v5337
  %v5339 = vpop.f32.mrf.mxu0
  %v5340 = vadd.f32 0.0, %v5339
  %v5341 = vpop.f32.mrf.mxu0
  %v5342 = vadd.f32 0.0, %v5341
  %5343 = vmatprep.mubr.bf16.mxu0 0
  %5344 = vmatmul.mubr.bf16.gmra.mxu0 %v1731
  %v5345 = vpop.f32.mrf.mxu0
  %v5346 = vadd.f32 0.0, %v5345
  %v5347 = vpop.f32.mrf.mxu0
  %v5348 = vadd.f32 0.0, %v5347
  %v5349 = vpop.f32.mrf.mxu0
  %v5350 = vadd.f32 0.0, %v5349
  %v5351 = vpop.f32.mrf.mxu0
  %v5352 = vadd.f32 0.0, %v5351
  %5353 = vmatprep.mubr.bf16.mxu0 0
  %5354 = vmatmul.mubr.bf16.gmra.mxu0 %v1732
  %v5355 = vpop.f32.mrf.mxu0
  %v5356 = vadd.f32 0.0, %v5355
  %v5357 = vpop.f32.mrf.mxu0
  %v5358 = vadd.f32 0.0, %v5357
  %v5359 = vpop.f32.mrf.mxu0
  %v5360 = vadd.f32 0.0, %v5359
  %v5361 = vpop.f32.mrf.mxu0
  %v5362 = vadd.f32 0.0, %v5361
  %5363 = vmatprep.mubr.bf16.mxu0 0
  %5364 = vmatmul.mubr.bf16.gmra.mxu0 %v1733
  %v5365 = vpop.f32.mrf.mxu0
  %v5366 = vadd.f32 0.0, %v5365
  %v5367 = vpop.f32.mrf.mxu0
  %v5368 = vadd.f32 0.0, %v5367
  %v5369 = vpop.f32.mrf.mxu0
  %v5370 = vadd.f32 0.0, %v5369
  %v5371 = vpop.f32.mrf.mxu0
  %v5372 = vadd.f32 0.0, %v5371
  %5373 = vmatprep.mubr.bf16.mxu0 0
  %5374 = vmatmul.mubr.bf16.gmra.mxu0 %v1734
  %v5375 = vpop.f32.mrf.mxu0
  %v5376 = vadd.f32 0.0, %v5375
  %v5377 = vpop.f32.mrf.mxu0
  %v5378 = vadd.f32 0.0, %v5377
  %v5379 = vpop.f32.mrf.mxu0
  %v5380 = vadd.f32 0.0, %v5379
  %v5381 = vpop.f32.mrf.mxu0
  %v5382 = vadd.f32 0.0, %v5381
  %5383 = vmatprep.mubr.bf16.mxu0 0
  %5384 = vmatmul.mubr.bf16.gmra.mxu0 %v1735
  %v5385 = vpop.f32.mrf.mxu0
  %v5386 = vadd.f32 0.0, %v5385
  %v5387 = vpop.f32.mrf.mxu0
  %v5388 = vadd.f32 0.0, %v5387
  %v5389 = vpop.f32.mrf.mxu0
  %v5390 = vadd.f32 0.0, %v5389
  %v5391 = vpop.f32.mrf.mxu0
  %v5392 = vadd.f32 0.0, %v5391
  %5393 = vmatprep.mubr.bf16.mxu0 0
  %5394 = vmatmul.mubr.bf16.gmra.mxu0 %v1736
  %v5395 = vpop.f32.mrf.mxu0
  %v5396 = vadd.f32 0.0, %v5395
  %v5397 = vpop.f32.mrf.mxu0
  %v5398 = vadd.f32 0.0, %v5397
  %v5399 = vpop.f32.mrf.mxu0
  %v5400 = vadd.f32 0.0, %v5399
  %v5401 = vpop.f32.mrf.mxu0
  %v5402 = vadd.f32 0.0, %v5401
  %5403 = vmatprep.mubr.bf16.mxu0 0
  %5404 = vmatmul.mubr.bf16.gmra.mxu0 %v1737
  %v5405 = vpop.f32.mrf.mxu0
  %v5406 = vadd.f32 0.0, %v5405
  %v5407 = vpop.f32.mrf.mxu0
  %v5408 = vadd.f32 0.0, %v5407
  %v5409 = vpop.f32.mrf.mxu0
  %v5410 = vadd.f32 0.0, %v5409
  %v5411 = vpop.f32.mrf.mxu0
  %v5412 = vadd.f32 0.0, %v5411
  %5413 = vmatprep.mubr.bf16.mxu0 0
  %5414 = vmatmul.mubr.bf16.gmra.mxu0 %v1738
  %v5415 = vpop.f32.mrf.mxu0
  %v5416 = vadd.f32 0.0, %v5415
  %v5417 = vpop.f32.mrf.mxu0
  %v5418 = vadd.f32 0.0, %v5417
  %v5419 = vpop.f32.mrf.mxu0
  %v5420 = vadd.f32 0.0, %v5419
  %v5421 = vpop.f32.mrf.mxu0
  %v5422 = vadd.f32 0.0, %v5421
  %5423 = vmatprep.mubr.bf16.mxu0 0
  %5424 = vmatmul.mubr.bf16.gmra.mxu0 %v1739
  %v5425 = vpop.f32.mrf.mxu0
  %v5426 = vadd.f32 0.0, %v5425
  %v5427 = vpop.f32.mrf.mxu0
  %v5428 = vadd.f32 0.0, %v5427
  %v5429 = vpop.f32.mrf.mxu0
  %v5430 = vadd.f32 0.0, %v5429
  %v5431 = vpop.f32.mrf.mxu0
  %v5432 = vadd.f32 0.0, %v5431
  %5433 = vmatprep.mubr.bf16.mxu0 0
  %5434 = vmatmul.mubr.bf16.gmra.mxu0 %v1740
  %v5435 = vpop.f32.mrf.mxu0
  %v5436 = vadd.f32 0.0, %v5435
  %v5437 = vpop.f32.mrf.mxu0
  %v5438 = vadd.f32 0.0, %v5437
  %v5439 = vpop.f32.mrf.mxu0
  %v5440 = vadd.f32 0.0, %v5439
  %v5441 = vpop.f32.mrf.mxu0
  %v5442 = vadd.f32 0.0, %v5441
  %5443 = vmatprep.mubr.bf16.mxu0 0
  %5444 = vmatmul.mubr.bf16.gmra.mxu0 %v1741
  %v5445 = vpop.f32.mrf.mxu0
  %v5446 = vadd.f32 0.0, %v5445
  %v5447 = vpop.f32.mrf.mxu0
  %v5448 = vadd.f32 0.0, %v5447
  %v5449 = vpop.f32.mrf.mxu0
  %v5450 = vadd.f32 0.0, %v5449
  %v5451 = vpop.f32.mrf.mxu0
  %v5452 = vadd.f32 0.0, %v5451
  %5453 = vmatprep.mubr.bf16.mxu0 0
  %5454 = vmatmul.mubr.bf16.gmra.mxu0 %v1742
  %v5455 = vpop.f32.mrf.mxu0
  %v5456 = vadd.f32 0.0, %v5455
  %v5457 = vpop.f32.mrf.mxu0
  %v5458 = vadd.f32 0.0, %v5457
  %v5459 = vpop.f32.mrf.mxu0
  %v5460 = vadd.f32 0.0, %v5459
  %v5461 = vpop.f32.mrf.mxu0
  %v5462 = vadd.f32 0.0, %v5461
  %5463 = vmatprep.mubr.bf16.mxu0 0
  %5464 = vmatmul.mubr.bf16.gmra.mxu0 %v1743
  %v5465 = vpop.f32.mrf.mxu0
  %v5466 = vadd.f32 0.0, %v5465
  %v5467 = vpop.f32.mrf.mxu0
  %v5468 = vadd.f32 0.0, %v5467
  %v5469 = vpop.f32.mrf.mxu0
  %v5470 = vadd.f32 0.0, %v5469
  %v5471 = vpop.f32.mrf.mxu0
  %v5472 = vadd.f32 0.0, %v5471
  %5473 = vmatprep.mubr.bf16.mxu0 0
  %5474 = vmatmul.mubr.bf16.gmra.mxu0 %v1744
  %v5475 = vpop.f32.mrf.mxu0
  %v5476 = vadd.f32 0.0, %v5475
  %v5477 = vpop.f32.mrf.mxu0
  %v5478 = vadd.f32 0.0, %v5477
  %v5479 = vpop.f32.mrf.mxu0
  %v5480 = vadd.f32 0.0, %v5479
  %v5481 = vpop.f32.mrf.mxu0
  %v5482 = vadd.f32 0.0, %v5481
  %5483 = vmatprep.mubr.bf16.mxu0 0
  %5484 = vmatmul.mubr.bf16.gmra.mxu0 %v1745
  %v5485 = vpop.f32.mrf.mxu0
  %v5486 = vadd.f32 0.0, %v5485
  %v5487 = vpop.f32.mrf.mxu0
  %v5488 = vadd.f32 0.0, %v5487
  %v5489 = vpop.f32.mrf.mxu0
  %v5490 = vadd.f32 0.0, %v5489
  %v5491 = vpop.f32.mrf.mxu0
  %v5492 = vadd.f32 0.0, %v5491
  %5493 = vdwg.mxu0
  %5494 = vmatprep.subr.bf16.mxu0 0
  %5495 = vmatpush1.bf16.msra.mxu0 %v2761
  %5496 = vmatprep.subr.bf16.mxu0 0
  %5497 = vmatpush1.bf16.msra.mxu0 %v2736
  %5498 = vmatprep.subr.bf16.mxu0 0
  %5499 = vmatpush1.bf16.msra.mxu0 %v2711
  %5500 = vmatprep.subr.bf16.mxu0 0
  %5501 = vmatpush1.bf16.msra.mxu0 %v2686
  %5502 = vmatprep.subr.bf16.mxu0 0
  %5503 = vmatpush1.bf16.msra.mxu0 %v2661
  %5504 = vmatprep.subr.bf16.mxu0 0
  %5505 = vmatpush1.bf16.msra.mxu0 %v2636
  %5506 = vmatprep.subr.bf16.mxu0 0
  %5507 = vmatpush1.bf16.msra.mxu0 %v2611
  %5508 = vmatprep.subr.bf16.mxu0 0
  %5509 = vmatpush1.bf16.msra.mxu0 %v2586
  %5510 = vmatprep.subr.bf16.mxu0 0
  %5511 = vmatpush2.bf16.msra.mxu0 0
  %5512 = vmatprep.subr.bf16.mxu0 0
  %5513 = vmatpush2.bf16.msra.mxu0 0
  %5514 = vmatprep.subr.bf16.mxu0 0
  %5515 = vmatpush2.bf16.msra.mxu0 0
  %5516 = vmatprep.subr.bf16.mxu0 0
  %5517 = vmatpush2.bf16.msra.mxu0 0
  %5518 = vmatprep.subr.bf16.mxu0 0
  %5519 = vmatpush2.bf16.msra.mxu0 0
  %5520 = vmatprep.subr.bf16.mxu0 0
  %5521 = vmatpush2.bf16.msra.mxu0 0
  %5522 = vmatprep.subr.bf16.mxu0 0
  %5523 = vmatpush2.bf16.msra.mxu0 0
  %5524 = vmatprep.subr.bf16.mxu0 0
  %5525 = vmatpush2.bf16.msra.mxu0 0
  %5526 = vmatprep.mubr.bf16.mxu0 0
  %5527 = vmatmul.mubr.bf16.gmra.mxu0 %v1727
  %v5528 = vpop.f32.mrf.mxu0
  %v5529 = vpop.f32.mrf.mxu0
  %v5530 = vpop.f32.mrf.mxu0
  %v5531 = vpop.f32.mrf.mxu0
  %5532 = vmatprep.mubr.bf16.mxu0 0
  %5533 = vmatmul.mubr.bf16.gmra.mxu0 %v1728
  %v5534 = vpop.f32.mrf.mxu0
  %v5535 = vpop.f32.mrf.mxu0
  %v5536 = vpop.f32.mrf.mxu0
  %v5537 = vpop.f32.mrf.mxu0
  %5538 = vmatprep.mubr.bf16.mxu0 0
  %5539 = vmatmul.mubr.bf16.gmra.mxu0 %v1729
  %v5540 = vpop.f32.mrf.mxu0
  %v5541 = vpop.f32.mrf.mxu0
  %v5542 = vpop.f32.mrf.mxu0
  %v5543 = vpop.f32.mrf.mxu0
  %5544 = vmatprep.mubr.bf16.mxu0 0
  %5545 = vmatmul.mubr.bf16.gmra.mxu0 %v1730
  %v5546 = vpop.f32.mrf.mxu0
  %v5547 = vadd.f32 0.0, %v5546
  %v5548 = vpop.f32.mrf.mxu0
  %v5549 = vpop.f32.mrf.mxu0
  %v5550 = vadd.f32 0.0, %v5549
  %v5551 = vpop.f32.mrf.mxu0
  %5552 = vmatprep.mubr.bf16.mxu0 0
  %5553 = vmatmul.mubr.bf16.gmra.mxu0 %v1731
  %v5554 = vpop.f32.mrf.mxu0
  %v5555 = vadd.f32 0.0, %v5554
  %v5556 = vpop.f32.mrf.mxu0
  %v5557 = vpop.f32.mrf.mxu0
  %v5558 = vadd.f32 0.0, %v5557
  %v5559 = vpop.f32.mrf.mxu0
  %5560 = vmatprep.mubr.bf16.mxu0 0
  %5561 = vmatmul.mubr.bf16.gmra.mxu0 %v1732
  %v5562 = vpop.f32.mrf.mxu0
  %v5563 = vadd.f32 0.0, %v5562
  %v5564 = vpop.f32.mrf.mxu0
  %v5565 = vpop.f32.mrf.mxu0
  %v5566 = vadd.f32 0.0, %v5565
  %v5567 = vpop.f32.mrf.mxu0
  %5568 = vmatprep.mubr.bf16.mxu0 0
  %5569 = vmatmul.mubr.bf16.gmra.mxu0 %v1733
  %v5570 = vpop.f32.mrf.mxu0
  %v5571 = vadd.f32 0.0, %v5570
  %v5572 = vpop.f32.mrf.mxu0
  %v5573 = vpop.f32.mrf.mxu0
  %v5574 = vadd.f32 0.0, %v5573
  %v5575 = vpop.f32.mrf.mxu0
  %5576 = vmatprep.mubr.bf16.mxu0 0
  %5577 = vmatmul.mubr.bf16.gmra.mxu0 %v1734
  %v5578 = vpop.f32.mrf.mxu0
  %v5579 = vadd.f32 0.0, %v5578
  %v5580 = vpop.f32.mrf.mxu0
  %v5581 = vpop.f32.mrf.mxu0
  %v5582 = vadd.f32 0.0, %v5581
  %v5583 = vpop.f32.mrf.mxu0
  %5584 = vmatprep.mubr.bf16.mxu0 0
  %5585 = vmatmul.mubr.bf16.gmra.mxu0 %v1735
  %v5586 = vpop.f32.mrf.mxu0
  %v5587 = vadd.f32 0.0, %v5586
  %v5588 = vpop.f32.mrf.mxu0
  %v5589 = vpop.f32.mrf.mxu0
  %v5590 = vadd.f32 0.0, %v5589
  %v5591 = vpop.f32.mrf.mxu0
  %5592 = vmatprep.mubr.bf16.mxu0 0
  %5593 = vmatmul.mubr.bf16.gmra.mxu0 %v1736
  %v5594 = vpop.f32.mrf.mxu0
  %v5595 = vadd.f32 0.0, %v5594
  %v5596 = vpop.f32.mrf.mxu0
  %v5597 = vpop.f32.mrf.mxu0
  %v5598 = vadd.f32 0.0, %v5597
  %v5599 = vpop.f32.mrf.mxu0
  %5600 = vmatprep.mubr.bf16.mxu0 0
  %5601 = vmatmul.mubr.bf16.gmra.mxu0 %v1737
  %v5602 = vpop.f32.mrf.mxu0
  %v5603 = vadd.f32 0.0, %v5602
  %v5604 = vpop.f32.mrf.mxu0
  %v5605 = vpop.f32.mrf.mxu0
  %v5606 = vadd.f32 0.0, %v5605
  %v5607 = vpop.f32.mrf.mxu0
  %5608 = vmatprep.mubr.bf16.mxu0 0
  %5609 = vmatmul.mubr.bf16.gmra.mxu0 %v1738
  %v5610 = vpop.f32.mrf.mxu0
  %v5611 = vadd.f32 0.0, %v5610
  %v5612 = vpop.f32.mrf.mxu0
  %v5613 = vpop.f32.mrf.mxu0
  %v5614 = vadd.f32 0.0, %v5613
  %v5615 = vpop.f32.mrf.mxu0
  %5616 = vmatprep.mubr.bf16.mxu0 0
  %5617 = vmatmul.mubr.bf16.gmra.mxu0 %v1739
  %v5618 = vpop.f32.mrf.mxu0
  %v5619 = vadd.f32 0.0, %v5618
  %v5620 = vpop.f32.mrf.mxu0
  %v5621 = vpop.f32.mrf.mxu0
  %v5622 = vadd.f32 0.0, %v5621
  %v5623 = vpop.f32.mrf.mxu0
  %5624 = vmatprep.mubr.bf16.mxu0 0
  %5625 = vmatmul.mubr.bf16.gmra.mxu0 %v1740
  %v5626 = vpop.f32.mrf.mxu0
  %v5627 = vadd.f32 0.0, %v5626
  %v5628 = vpop.f32.mrf.mxu0
  %v5629 = vpop.f32.mrf.mxu0
  %v5630 = vadd.f32 0.0, %v5629
  %v5631 = vpop.f32.mrf.mxu0
  %5632 = vmatprep.mubr.bf16.mxu0 0
  %5633 = vmatmul.mubr.bf16.gmra.mxu0 %v1741
  %v5634 = vpop.f32.mrf.mxu0
  %v5635 = vadd.f32 0.0, %v5634
  %v5636 = vpop.f32.mrf.mxu0
  %v5637 = vpop.f32.mrf.mxu0
  %v5638 = vadd.f32 0.0, %v5637
  %v5639 = vpop.f32.mrf.mxu0
  %5640 = vmatprep.mubr.bf16.mxu0 0
  %5641 = vmatmul.mubr.bf16.gmra.mxu0 %v1742
  %v5642 = vpop.f32.mrf.mxu0
  %v5643 = vadd.f32 0.0, %v5642
  %v5644 = vpop.f32.mrf.mxu0
  %v5645 = vpop.f32.mrf.mxu0
  %v5646 = vadd.f32 0.0, %v5645
  %v5647 = vpop.f32.mrf.mxu0
  %5648 = vmatprep.mubr.bf16.mxu0 0
  %5649 = vmatmul.mubr.bf16.gmra.mxu0 %v1743
  %v5650 = vpop.f32.mrf.mxu0
  %v5651 = vadd.f32 0.0, %v5650
  %v5652 = vpop.f32.mrf.mxu0
  %v5653 = vpop.f32.mrf.mxu0
  %v5654 = vadd.f32 0.0, %v5653
  %v5655 = vpop.f32.mrf.mxu0
  %5656 = vmatprep.mubr.bf16.mxu0 0
  %5657 = vmatmul.mubr.bf16.gmra.mxu0 %v1744
  %v5658 = vpop.f32.mrf.mxu0
  %v5659 = vadd.f32 0.0, %v5658
  %v5660 = vpop.f32.mrf.mxu0
  %v5661 = vpop.f32.mrf.mxu0
  %v5662 = vadd.f32 0.0, %v5661
  %v5663 = vpop.f32.mrf.mxu0
  %5664 = vmatprep.mubr.bf16.mxu0 0
  %5665 = vmatmul.mubr.bf16.gmra.mxu0 %v1745
  %v5666 = vpop.f32.mrf.mxu0
  %v5667 = vadd.f32 0.0, %v5666
  %v5668 = vpop.f32.mrf.mxu0
  %v5669 = vpop.f32.mrf.mxu0
  %v5670 = vadd.f32 0.0, %v5669
  %v5671 = vpop.f32.mrf.mxu0
  %5672 = vdwg.mxu0
  %v5673 = vadd.f32 %v3419, %v3424
  %v5674 = vadd.f32 %v3422, %v3430
  %v5675 = vadd.f32 %v3428, %v3434
  %v5676 = vadd.f32 %v3432, %v3440
  %v5677 = vadd.f32 %v3438, %v3444
  %v5678 = vadd.f32 %v3442, %v3450
  %v5679 = vadd.f32 %v3448, %v3454
  %v5680 = vadd.f32 %v3452, %v3460
  %v5681 = vadd.f32 %v3458, %v3464
  %v5682 = vadd.f32 %v3462, %v3470
  %v5683 = vadd.f32 %v3468, %v3474
  %v5684 = vadd.f32 %v3472, %v3480
  %v5685 = vadd.f32 %v3478, %v3484
  %v5686 = vadd.f32 %v3482, %v3490
  %v5687 = vadd.f32 %v3488, %v3494
  %v5688 = vadd.f32 %v3492, %v3500
  %v5689 = vadd.f32 %v3498, %v3504
  %v5690 = vadd.f32 %v3502, %v3510
  %v5691 = vadd.f32 %v3508, %v3514
  %v5692 = vadd.f32 %v3512, %v3520
  %v5693 = vadd.f32 %v3518, %v3524
  %v5694 = vadd.f32 %v3522, %v3530
  %v5695 = vadd.f32 %v3528, %v3534
  %v5696 = vadd.f32 %v3532, %v3540
  %v5697 = vadd.f32 %v3538, %v3544
  %v5698 = vadd.f32 %v3542, %v3550
  %v5699 = vadd.f32 %v3548, %v3554
  %v5700 = vadd.f32 %v3552, %v3560
  %v5701 = vadd.f32 %v3558, %v3564
  %v5702 = vadd.f32 %v3562, %v3570
  %v5703 = vadd.f32 %v3568, %v3574
  %v5704 = vadd.f32 %v3572, %v3579
  %v5705 = vadd.f32 %v2997, %v3850
  %v5706 = vadd.f32 %v3001, %v3854
  %v5707 = vadd.f32 %v3007, %v3860
  %v5708 = vadd.f32 %v3011, %v3864
  %v5709 = vadd.f32 %v3017, %v3870
  %v5710 = vadd.f32 %v3021, %v3874
  %v5711 = vadd.f32 %v3027, %v3880
  %v5712 = vadd.f32 %v3031, %v3884
  %v5713 = vadd.f32 %v3037, %v3890
  %v5714 = vadd.f32 %v3041, %v3894
  %v5715 = vadd.f32 %v3047, %v3900
  %v5716 = vadd.f32 %v3051, %v3904
  %v5717 = vadd.f32 %v3057, %v3910
  %v5718 = vadd.f32 %v3061, %v3914
  %v5719 = vadd.f32 %v3067, %v3920
  %v5720 = vadd.f32 %v3071, %v3924
  %v5721 = vadd.f32 %v3077, %v3930
  %v5722 = vadd.f32 %v3081, %v3934
  %v5723 = vadd.f32 %v3087, %v3940
  %v5724 = vadd.f32 %v3091, %v3944
  %v5725 = vadd.f32 %v3097, %v3950
  %v5726 = vadd.f32 %v3101, %v3954
  %v5727 = vadd.f32 %v3107, %v3960
  %v5728 = vadd.f32 %v3111, %v3964
  %v5729 = vadd.f32 %v3117, %v3970
  %v5730 = vadd.f32 %v3121, %v3974
  %v5731 = vadd.f32 %v3127, %v3980
  %v5732 = vadd.f32 %v3131, %v3984
  %v5733 = vadd.f32 %v3137, %v3990
  %v5734 = vadd.f32 %v3141, %v3994
  %v5735 = vadd.f32 %v3147, %v4000
  %v5736 = vadd.f32 %v3151, %v4003
  %v5737 = vadd.f32 %v5705, %v4060
  %v5738 = vadd.f32 %v5706, %v4066
  %v5739 = vadd.f32 %v5707, %v4070
  %v5740 = vadd.f32 %v5708, %v4076
  %v5741 = vadd.f32 %v5709, %v4080
  %v5742 = vadd.f32 %v5710, %v4086
  %v5743 = vadd.f32 %v5711, %v4090
  %v5744 = vadd.f32 %v5712, %v4096
  %v5745 = vadd.f32 %v5713, %v4100
  %v5746 = vadd.f32 %v5714, %v4106
  %v5747 = vadd.f32 %v5715, %v4110
  %v5748 = vadd.f32 %v5716, %v4116
  %v5749 = vadd.f32 %v5717, %v4120
  %v5750 = vadd.f32 %v5718, %v4126
  %v5751 = vadd.f32 %v5719, %v4130
  %v5752 = vadd.f32 %v5720, %v4136
  %v5753 = vadd.f32 %v5721, %v4140
  %v5754 = vadd.f32 %v5722, %v4146
  %v5755 = vadd.f32 %v5723, %v4150
  %v5756 = vadd.f32 %v5724, %v4156
  %v5757 = vadd.f32 %v5725, %v4160
  %v5758 = vadd.f32 %v5726, %v4166
  %v5759 = vadd.f32 %v5727, %v4170
  %v5760 = vadd.f32 %v5728, %v4176
  %v5761 = vadd.f32 %v5729, %v4180
  %v5762 = vadd.f32 %v5730, %v4186
  %v5763 = vadd.f32 %v5731, %v4190
  %v5764 = vadd.f32 %v5732, %v4196
  %v5765 = vadd.f32 %v5733, %v4200
  %v5766 = vadd.f32 %v5734, %v4206
  %v5767 = vadd.f32 %v5735, %v4210
  %v5768 = vadd.f32 %v5736, %v4216
  %v5769 = vadd.f32 %v2999, %v4062
  %v5770 = vadd.f32 %v3003, %v4068
  %v5771 = vadd.f32 %v3009, %v4072
  %v5772 = vadd.f32 %v3013, %v4078
  %v5773 = vadd.f32 %v3019, %v4082
  %v5774 = vadd.f32 %v3023, %v4088
  %v5775 = vadd.f32 %v3029, %v4092
  %v5776 = vadd.f32 %v3033, %v4098
  %v5777 = vadd.f32 %v3039, %v4102
  %v5778 = vadd.f32 %v3043, %v4108
  %v5779 = vadd.f32 %v3049, %v4112
  %v5780 = vadd.f32 %v3053, %v4118
  %v5781 = vadd.f32 %v3059, %v4122
  %v5782 = vadd.f32 %v3063, %v4128
  %v5783 = vadd.f32 %v3069, %v4132
  %v5784 = vadd.f32 %v3073, %v4138
  %v5785 = vadd.f32 %v3079, %v4142
  %v5786 = vadd.f32 %v3083, %v4148
  %v5787 = vadd.f32 %v3089, %v4152
  %v5788 = vadd.f32 %v3093, %v4158
  %v5789 = vadd.f32 %v3099, %v4162
  %v5790 = vadd.f32 %v3103, %v4168
  %v5791 = vadd.f32 %v3109, %v4172
  %v5792 = vadd.f32 %v3113, %v4178
  %v5793 = vadd.f32 %v3119, %v4182
  %v5794 = vadd.f32 %v3123, %v4188
  %v5795 = vadd.f32 %v3129, %v4192
  %v5796 = vadd.f32 %v3133, %v4198
  %v5797 = vadd.f32 %v3139, %v4202
  %v5798 = vadd.f32 %v3143, %v4208
  %v5799 = vadd.f32 %v3149, %v4212
  %v5800 = vadd.f32 %v3153, %v4218
  %v5801 = vadd.f32 %v3208, %v4271
  %v5802 = vadd.f32 %v3212, %v4277
  %v5803 = vadd.f32 %v3218, %v4281
  %v5804 = vadd.f32 %v3222, %v4287
  %v5805 = vadd.f32 %v3228, %v4291
  %v5806 = vadd.f32 %v3232, %v4297
  %v5807 = vadd.f32 %v3238, %v4301
  %v5808 = vadd.f32 %v3242, %v4307
  %v5809 = vadd.f32 %v3248, %v4311
  %v5810 = vadd.f32 %v3252, %v4317
  %v5811 = vadd.f32 %v3258, %v4321
  %v5812 = vadd.f32 %v3262, %v4327
  %v5813 = vadd.f32 %v3268, %v4331
  %v5814 = vadd.f32 %v3272, %v4337
  %v5815 = vadd.f32 %v3278, %v4341
  %v5816 = vadd.f32 %v3282, %v4347
  %v5817 = vadd.f32 %v3288, %v4351
  %v5818 = vadd.f32 %v3292, %v4357
  %v5819 = vadd.f32 %v3298, %v4361
  %v5820 = vadd.f32 %v3302, %v4367
  %v5821 = vadd.f32 %v3308, %v4371
  %v5822 = vadd.f32 %v3312, %v4377
  %v5823 = vadd.f32 %v3318, %v4381
  %v5824 = vadd.f32 %v3322, %v4387
  %v5825 = vadd.f32 %v3328, %v4391
  %v5826 = vadd.f32 %v3332, %v4397
  %v5827 = vadd.f32 %v3338, %v4401
  %v5828 = vadd.f32 %v3342, %v4407
  %v5829 = vadd.f32 %v3348, %v4411
  %v5830 = vadd.f32 %v3352, %v4417
  %v5831 = vadd.f32 %v3358, %v4421
  %v5832 = vadd.f32 %v3362, %v4427
  %v5833 = vadd.f32 %v3210, %v4273
  %v5834 = vadd.f32 %v3214, %v4279
  %v5835 = vadd.f32 %v3220, %v4283
  %v5836 = vadd.f32 %v3224, %v4289
  %v5837 = vadd.f32 %v3230, %v4293
  %v5838 = vadd.f32 %v3234, %v4299
  %v5839 = vadd.f32 %v3240, %v4303
  %v5840 = vadd.f32 %v3244, %v4309
  %v5841 = vadd.f32 %v3250, %v4313
  %v5842 = vadd.f32 %v3254, %v4319
  %v5843 = vadd.f32 %v3260, %v4323
  %v5844 = vadd.f32 %v3264, %v4329
  %v5845 = vadd.f32 %v3270, %v4333
  %v5846 = vadd.f32 %v3274, %v4339
  %v5847 = vadd.f32 %v3280, %v4343
  %v5848 = vadd.f32 %v3284, %v4349
  %v5849 = vadd.f32 %v3290, %v4353
  %v5850 = vadd.f32 %v3294, %v4359
  %v5851 = vadd.f32 %v3300, %v4363
  %v5852 = vadd.f32 %v3304, %v4369
  %v5853 = vadd.f32 %v3310, %v4373
  %v5854 = vadd.f32 %v3314, %v4379
  %v5855 = vadd.f32 %v3320, %v4383
  %v5856 = vadd.f32 %v3324, %v4389
  %v5857 = vadd.f32 %v3330, %v4393
  %v5858 = vadd.f32 %v3334, %v4399
  %v5859 = vadd.f32 %v3340, %v4403
  %v5860 = vadd.f32 %v3344, %v4409
  %v5861 = vadd.f32 %v3350, %v4413
  %v5862 = vadd.f32 %v3354, %v4419
  %v5863 = vadd.f32 %v3360, %v4423
  %v5864 = vadd.f32 %v3364, %v4429
  %v5865 = vadd.f32 %v5673, %v4482
  %v5866 = vadd.f32 %v5674, %v4487
  %v5867 = vadd.f32 %v5675, %v4491
  %v5868 = vadd.f32 %v5676, %v4497
  %v5869 = vadd.f32 %v5677, %v4501
  %v5870 = vadd.f32 %v5678, %v4507
  %v5871 = vadd.f32 %v5679, %v4511
  %v5872 = vadd.f32 %v5680, %v4517
  %v5873 = vadd.f32 %v5681, %v4521
  %v5874 = vadd.f32 %v5682, %v4527
  %v5875 = vadd.f32 %v5683, %v4531
  %v5876 = vadd.f32 %v5684, %v4537
  %v5877 = vadd.f32 %v5685, %v4541
  %v5878 = vadd.f32 %v5686, %v4547
  %v5879 = vadd.f32 %v5687, %v4551
  %v5880 = vadd.f32 %v5688, %v4557
  %v5881 = vadd.f32 %v5689, %v4561
  %v5882 = vadd.f32 %v5690, %v4567
  %v5883 = vadd.f32 %v5691, %v4571
  %v5884 = vadd.f32 %v5692, %v4577
  %v5885 = vadd.f32 %v5693, %v4581
  %v5886 = vadd.f32 %v5694, %v4587
  %v5887 = vadd.f32 %v5695, %v4591
  %v5888 = vadd.f32 %v5696, %v4597
  %v5889 = vadd.f32 %v5697, %v4601
  %v5890 = vadd.f32 %v5698, %v4607
  %v5891 = vadd.f32 %v5699, %v4611
  %v5892 = vadd.f32 %v5700, %v4617
  %v5893 = vadd.f32 %v5701, %v4621
  %v5894 = vadd.f32 %v5702, %v4627
  %v5895 = vadd.f32 %v5703, %v4631
  %v5896 = vadd.f32 %v5704, %v4637
  %v5897 = vadd.f32 %v5865, %v4489
  %v5898 = vadd.f32 %v5866, %v4493
  %v5899 = vadd.f32 %v5867, %v4499
  %v5900 = vadd.f32 %v5868, %v4503
  %v5901 = vadd.f32 %v5869, %v4509
  %v5902 = vadd.f32 %v5870, %v4513
  %v5903 = vadd.f32 %v5871, %v4519
  %v5904 = vadd.f32 %v5872, %v4523
  %v5905 = vadd.f32 %v5873, %v4529
  %v5906 = vadd.f32 %v5874, %v4533
  %v5907 = vadd.f32 %v5875, %v4539
  %v5908 = vadd.f32 %v5876, %v4543
  %v5909 = vadd.f32 %v5877, %v4549
  %v5910 = vadd.f32 %v5878, %v4553
  %v5911 = vadd.f32 %v5879, %v4559
  %v5912 = vadd.f32 %v5880, %v4563
  %v5913 = vadd.f32 %v5881, %v4569
  %v5914 = vadd.f32 %v5882, %v4573
  %v5915 = vadd.f32 %v5883, %v4579
  %v5916 = vadd.f32 %v5884, %v4583
  %v5917 = vadd.f32 %v5885, %v4589
  %v5918 = vadd.f32 %v5886, %v4593
  %v5919 = vadd.f32 %v5887, %v4599
  %v5920 = vadd.f32 %v5888, %v4603
  %v5921 = vadd.f32 %v5889, %v4609
  %v5922 = vadd.f32 %v5890, %v4613
  %v5923 = vadd.f32 %v5891, %v4619
  %v5924 = vadd.f32 %v5892, %v4623
  %v5925 = vadd.f32 %v5893, %v4629
  %v5926 = vadd.f32 %v5894, %v4633
  %v5927 = vadd.f32 %v5895, %v4639
  %v5928 = vadd.f32 %v5896, %v4642
  %v5929 = vadd.f32 %v3632, %v4697
  %v5930 = vadd.f32 %v3638, %v4701
  %v5931 = vadd.f32 %v3642, %v4707
  %v5932 = vadd.f32 %v3648, %v4711
  %v5933 = vadd.f32 %v3652, %v4717
  %v5934 = vadd.f32 %v3658, %v4721
  %v5935 = vadd.f32 %v3662, %v4727
  %v5936 = vadd.f32 %v3668, %v4731
  %v5937 = vadd.f32 %v3672, %v4737
  %v5938 = vadd.f32 %v3678, %v4741
  %v5939 = vadd.f32 %v3682, %v4747
  %v5940 = vadd.f32 %v3688, %v4751
  %v5941 = vadd.f32 %v3692, %v4757
  %v5942 = vadd.f32 %v3698, %v4761
  %v5943 = vadd.f32 %v3702, %v4767
  %v5944 = vadd.f32 %v3708, %v4771
  %v5945 = vadd.f32 %v3712, %v4777
  %v5946 = vadd.f32 %v3718, %v4781
  %v5947 = vadd.f32 %v3722, %v4787
  %v5948 = vadd.f32 %v3728, %v4791
  %v5949 = vadd.f32 %v3732, %v4797
  %v5950 = vadd.f32 %v3738, %v4801
  %v5951 = vadd.f32 %v3742, %v4807
  %v5952 = vadd.f32 %v3748, %v4811
  %v5953 = vadd.f32 %v3752, %v4817
  %v5954 = vadd.f32 %v3758, %v4821
  %v5955 = vadd.f32 %v3762, %v4827
  %v5956 = vadd.f32 %v3768, %v4831
  %v5957 = vadd.f32 %v3772, %v4837
  %v5958 = vadd.f32 %v3778, %v4841
  %v5959 = vadd.f32 %v3782, %v4847
  %v5960 = vadd.f32 %v3788, %v4851
  %v5961 = vadd.f32 %v3634, %v4699
  %v5962 = vadd.f32 %v3640, %v4703
  %v5963 = vadd.f32 %v3644, %v4709
  %v5964 = vadd.f32 %v3650, %v4713
  %v5965 = vadd.f32 %v3654, %v4719
  %v5966 = vadd.f32 %v3660, %v4723
  %v5967 = vadd.f32 %v3664, %v4729
  %v5968 = vadd.f32 %v3670, %v4733
  %v5969 = vadd.f32 %v3674, %v4739
  %v5970 = vadd.f32 %v3680, %v4743
  %v5971 = vadd.f32 %v3684, %v4749
  %v5972 = vadd.f32 %v3690, %v4753
  %v5973 = vadd.f32 %v3694, %v4759
  %v5974 = vadd.f32 %v3700, %v4763
  %v5975 = vadd.f32 %v3704, %v4769
  %v5976 = vadd.f32 %v3710, %v4773
  %v5977 = vadd.f32 %v3714, %v4779
  %v5978 = vadd.f32 %v3720, %v4783
  %v5979 = vadd.f32 %v3724, %v4789
  %v5980 = vadd.f32 %v3730, %v4793
  %v5981 = vadd.f32 %v3734, %v4799
  %v5982 = vadd.f32 %v3740, %v4803
  %v5983 = vadd.f32 %v3744, %v4809
  %v5984 = vadd.f32 %v3750, %v4813
  %v5985 = vadd.f32 %v3754, %v4819
  %v5986 = vadd.f32 %v3760, %v4823
  %v5987 = vadd.f32 %v3764, %v4829
  %v5988 = vadd.f32 %v3770, %v4833
  %v5989 = vadd.f32 %v3774, %v4839
  %v5990 = vadd.f32 %v3780, %v4843
  %v5991 = vadd.f32 %v3784, %v4849
  %v5992 = vadd.f32 %v3790, %v4853
  %v5993 = vadd.f32 %v3843, %v4908
  %v5994 = vadd.f32 %v3848, %v4911
  %v5995 = vadd.f32 %v3852, %v4917
  %v5996 = vadd.f32 %v3858, %v4921
  %v5997 = vadd.f32 %v3862, %v4927
  %v5998 = vadd.f32 %v3868, %v4931
  %v5999 = vadd.f32 %v3872, %v4937
  %v6000 = vadd.f32 %v3878, %v4941
  %v6001 = vadd.f32 %v3882, %v4947
  %v6002 = vadd.f32 %v3888, %v4951
  %v6003 = vadd.f32 %v3892, %v4957
  %v6004 = vadd.f32 %v3898, %v4961
  %v6005 = vadd.f32 %v3902, %v4967
  %v6006 = vadd.f32 %v3908, %v4971
  %v6007 = vadd.f32 %v3912, %v4977
  %v6008 = vadd.f32 %v3918, %v4981
  %v6009 = vadd.f32 %v3922, %v4987
  %v6010 = vadd.f32 %v3928, %v4991
  %v6011 = vadd.f32 %v3932, %v4997
  %v6012 = vadd.f32 %v3938, %v5001
  %v6013 = vadd.f32 %v3942, %v5007
  %v6014 = vadd.f32 %v3948, %v5011
  %v6015 = vadd.f32 %v3952, %v5017
  %v6016 = vadd.f32 %v3958, %v5021
  %v6017 = vadd.f32 %v3962, %v5027
  %v6018 = vadd.f32 %v3968, %v5031
  %v6019 = vadd.f32 %v3972, %v5037
  %v6020 = vadd.f32 %v3978, %v5041
  %v6021 = vadd.f32 %v3982, %v5047
  %v6022 = vadd.f32 %v3988, %v5051
  %v6023 = vadd.f32 %v3992, %v5057
  %v6024 = vadd.f32 %v3998, %v5061
  %v6025 = vadd.f32 %v5737, %v4913
  %v6026 = vadd.f32 %v5738, %v4919
  %v6027 = vadd.f32 %v5739, %v4923
  %v6028 = vadd.f32 %v5740, %v4929
  %v6029 = vadd.f32 %v5741, %v4933
  %v6030 = vadd.f32 %v5742, %v4939
  %v6031 = vadd.f32 %v5743, %v4943
  %v6032 = vadd.f32 %v5744, %v4949
  %v6033 = vadd.f32 %v5745, %v4953
  %v6034 = vadd.f32 %v5746, %v4959
  %v6035 = vadd.f32 %v5747, %v4963
  %v6036 = vadd.f32 %v5748, %v4969
  %v6037 = vadd.f32 %v5749, %v4973
  %v6038 = vadd.f32 %v5750, %v4979
  %v6039 = vadd.f32 %v5751, %v4983
  %v6040 = vadd.f32 %v5752, %v4989
  %v6041 = vadd.f32 %v5753, %v4993
  %v6042 = vadd.f32 %v5754, %v4999
  %v6043 = vadd.f32 %v5755, %v5003
  %v6044 = vadd.f32 %v5756, %v5009
  %v6045 = vadd.f32 %v5757, %v5013
  %v6046 = vadd.f32 %v5758, %v5019
  %v6047 = vadd.f32 %v5759, %v5023
  %v6048 = vadd.f32 %v5760, %v5029
  %v6049 = vadd.f32 %v5761, %v5033
  %v6050 = vadd.f32 %v5762, %v5039
  %v6051 = vadd.f32 %v5763, %v5043
  %v6052 = vadd.f32 %v5764, %v5049
  %v6053 = vadd.f32 %v5765, %v5053
  %v6054 = vadd.f32 %v5766, %v5059
  %v6055 = vadd.f32 %v5767, %v5063
  %v6056 = vadd.f32 %v5768, %v5068
  %v6057 = vadd.f32 %v6025, %v5125
  %v6058 = vadd.f32 %v6026, %v5129
  %v6059 = vadd.f32 %v6027, %v5135
  %v6060 = vadd.f32 %v6028, %v5139
  %v6061 = vadd.f32 %v6029, %v5145
  %v6062 = vadd.f32 %v6030, %v5149
  %v6063 = vadd.f32 %v6031, %v5155
  %v6064 = vadd.f32 %v6032, %v5159
  %v6065 = vadd.f32 %v6033, %v5165
  %v6066 = vadd.f32 %v6034, %v5169
  %v6067 = vadd.f32 %v6035, %v5175
  %v6068 = vadd.f32 %v6036, %v5179
  %v6069 = vadd.f32 %v6037, %v5185
  %v6070 = vadd.f32 %v6038, %v5189
  %v6071 = vadd.f32 %v6039, %v5195
  %v6072 = vadd.f32 %v6040, %v5199
  %v6073 = vadd.f32 %v6041, %v5205
  %v6074 = vadd.f32 %v6042, %v5209
  %v6075 = vadd.f32 %v6043, %v5215
  %v6076 = vadd.f32 %v6044, %v5219
  %v6077 = vadd.f32 %v6045, %v5225
  %v6078 = vadd.f32 %v6046, %v5229
  %v6079 = vadd.f32 %v6047, %v5235
  %v6080 = vadd.f32 %v6048, %v5239
  %v6081 = vadd.f32 %v6049, %v5245
  %v6082 = vadd.f32 %v6050, %v5249
  %v6083 = vadd.f32 %v6051, %v5255
  %v6084 = vadd.f32 %v6052, %v5259
  %v6085 = vadd.f32 %v6053, %v5265
  %v6086 = vadd.f32 %v6054, %v5269
  %v6087 = vadd.f32 %v6055, %v5275
  %v6088 = vadd.f32 %v6056, %v5279
  %v6089 = vadd.f32 %v5769, %v5127
  %v6090 = vadd.f32 %v5770, %v5131
  %v6091 = vadd.f32 %v5771, %v5137
  %v6092 = vadd.f32 %v5772, %v5141
  %v6093 = vadd.f32 %v5773, %v5147
  %v6094 = vadd.f32 %v5774, %v5151
  %v6095 = vadd.f32 %v5775, %v5157
  %v6096 = vadd.f32 %v5776, %v5161
  %v6097 = vadd.f32 %v5777, %v5167
  %v6098 = vadd.f32 %v5778, %v5171
  %v6099 = vadd.f32 %v5779, %v5177
  %v6100 = vadd.f32 %v5780, %v5181
  %v6101 = vadd.f32 %v5781, %v5187
  %v6102 = vadd.f32 %v5782, %v5191
  %v6103 = vadd.f32 %v5783, %v5197
  %v6104 = vadd.f32 %v5784, %v5201
  %v6105 = vadd.f32 %v5785, %v5207
  %v6106 = vadd.f32 %v5786, %v5211
  %v6107 = vadd.f32 %v5787, %v5217
  %v6108 = vadd.f32 %v5788, %v5221
  %v6109 = vadd.f32 %v5789, %v5227
  %v6110 = vadd.f32 %v5790, %v5231
  %v6111 = vadd.f32 %v5791, %v5237
  %v6112 = vadd.f32 %v5792, %v5241
  %v6113 = vadd.f32 %v5793, %v5247
  %v6114 = vadd.f32 %v5794, %v5251
  %v6115 = vadd.f32 %v5795, %v5257
  %v6116 = vadd.f32 %v5796, %v5261
  %v6117 = vadd.f32 %v5797, %v5267
  %v6118 = vadd.f32 %v5798, %v5271
  %v6119 = vadd.f32 %v5799, %v5277
  %v6120 = vadd.f32 %v5800, %v5281
  %v6121 = vadd.f32 %v5801, %v5336
  %v6122 = vadd.f32 %v5802, %v5340
  %v6123 = vadd.f32 %v5803, %v5346
  %v6124 = vadd.f32 %v5804, %v5350
  %v6125 = vadd.f32 %v5805, %v5356
  %v6126 = vadd.f32 %v5806, %v5360
  %v6127 = vadd.f32 %v5807, %v5366
  %v6128 = vadd.f32 %v5808, %v5370
  %v6129 = vadd.f32 %v5809, %v5376
  %v6130 = vadd.f32 %v5810, %v5380
  %v6131 = vadd.f32 %v5811, %v5386
  %v6132 = vadd.f32 %v5812, %v5390
  %v6133 = vadd.f32 %v5813, %v5396
  %v6134 = vadd.f32 %v5814, %v5400
  %v6135 = vadd.f32 %v5815, %v5406
  %v6136 = vadd.f32 %v5816, %v5410
  %v6137 = vadd.f32 %v5817, %v5416
  %v6138 = vadd.f32 %v5818, %v5420
  %v6139 = vadd.f32 %v5819, %v5426
  %v6140 = vadd.f32 %v5820, %v5430
  %v6141 = vadd.f32 %v5821, %v5436
  %v6142 = vadd.f32 %v5822, %v5440
  %v6143 = vadd.f32 %v5823, %v5446
  %v6144 = vadd.f32 %v5824, %v5450
  %v6145 = vadd.f32 %v5825, %v5456
  %v6146 = vadd.f32 %v5826, %v5460
  %v6147 = vadd.f32 %v5827, %v5466
  %v6148 = vadd.f32 %v5828, %v5470
  %v6149 = vadd.f32 %v5829, %v5476
  %v6150 = vadd.f32 %v5830, %v5480
  %v6151 = vadd.f32 %v5831, %v5486
  %v6152 = vadd.f32 %v5832, %v5490
  %v6153 = vadd.f32 %v5833, %v5338
  %v6154 = vadd.f32 %v5834, %v5342
  %v6155 = vadd.f32 %v5835, %v5348
  %v6156 = vadd.f32 %v5836, %v5352
  %v6157 = vadd.f32 %v5837, %v5358
  %v6158 = vadd.f32 %v5838, %v5362
  %v6159 = vadd.f32 %v5839, %v5368
  %v6160 = vadd.f32 %v5840, %v5372
  %v6161 = vadd.f32 %v5841, %v5378
  %v6162 = vadd.f32 %v5842, %v5382
  %v6163 = vadd.f32 %v5843, %v5388
  %v6164 = vadd.f32 %v5844, %v5392
  %v6165 = vadd.f32 %v5845, %v5398
  %v6166 = vadd.f32 %v5846, %v5402
  %v6167 = vadd.f32 %v5847, %v5408
  %v6168 = vadd.f32 %v5848, %v5412
  %v6169 = vadd.f32 %v5849, %v5418
  %v6170 = vadd.f32 %v5850, %v5422
  %v6171 = vadd.f32 %v5851, %v5428
  %v6172 = vadd.f32 %v5852, %v5432
  %v6173 = vadd.f32 %v5853, %v5438
  %v6174 = vadd.f32 %v5854, %v5442
  %v6175 = vadd.f32 %v5855, %v5448
  %v6176 = vadd.f32 %v5856, %v5452
  %v6177 = vadd.f32 %v5857, %v5458
  %v6178 = vadd.f32 %v5858, %v5462
  %v6179 = vadd.f32 %v5859, %v5468
  %v6180 = vadd.f32 %v5860, %v5472
  %v6181 = vadd.f32 %v5861, %v5478
  %v6182 = vadd.f32 %v5862, %v5482
  %v6183 = vadd.f32 %v5863, %v5488
  %v6184 = vadd.f32 %v5864, %v5492
  %v6185 = vadd.f32 %v5897, %v5547
  %v6186 = vadd.f32 %v5898, %v5550
  %v6187 = vadd.f32 %v5899, %v5555
  %v6188 = vadd.f32 %v5900, %v5558
  %v6189 = vadd.f32 %v5901, %v5563
  %v6190 = vadd.f32 %v5902, %v5566
  %v6191 = vadd.f32 %v5903, %v5571
  %v6192 = vadd.f32 %v5904, %v5574
  %v6193 = vadd.f32 %v5905, %v5579
  %v6194 = vadd.f32 %v5906, %v5582
  %v6195 = vadd.f32 %v5907, %v5587
  %v6196 = vadd.f32 %v5908, %v5590
  %v6197 = vadd.f32 %v5909, %v5595
  %v6198 = vadd.f32 %v5910, %v5598
  %v6199 = vadd.f32 %v5911, %v5603
  %v6200 = vadd.f32 %v5912, %v5606
  %v6201 = vadd.f32 %v5913, %v5611
  %v6202 = vadd.f32 %v5914, %v5614
  %v6203 = vadd.f32 %v5915, %v5619
  %v6204 = vadd.f32 %v5916, %v5622
  %v6205 = vadd.f32 %v5917, %v5627
  %v6206 = vadd.f32 %v5918, %v5630
  %v6207 = vadd.f32 %v5919, %v5635
  %v6208 = vadd.f32 %v5920, %v5638
  %v6209 = vadd.f32 %v5921, %v5643
  %v6210 = vadd.f32 %v5922, %v5646
  %v6211 = vadd.f32 %v5923, %v5651
  %v6212 = vadd.f32 %v5924, %v5654
  %v6213 = vadd.f32 %v5925, %v5659
  %v6214 = vadd.f32 %v5926, %v5662
  %v6215 = vadd.f32 %v5927, %v5667
  %v6216 = vadd.f32 %v5928, %v5670
  %v6217 = vld [vmem:[%s1] sm:$0xff]
  %v6218 = vld [vmem:[%s1 + $0x8] sm:$0xff]
  %v6219 = vld [vmem:[%s1 + $0x10] sm:$0xff]
  %v6220 = vld [vmem:[%s1 + $0x18] sm:$0xff]
  %v6221 = vld [vmem:[%s1 + $0x20] sm:$0xff]
  %v6222 = vld [vmem:[%s1 + $0x28] sm:$0xff]
  %v6223 = vld [vmem:[%s1 + $0x30] sm:$0xff]
  %v6224 = vld [vmem:[%s1 + $0x38] sm:$0xff]
  %v6225 = vld [vmem:[%s1 + $0x40] sm:$0xff]
  %v6226 = vld [vmem:[%s1 + $0x48] sm:$0xff]
  %v6227 = vld [vmem:[%s1 + $0x50] sm:$0xff]
  %v6228 = vld [vmem:[%s1 + $0x58] sm:$0xff]
  %v6229 = vld [vmem:[%s1 + $0x60] sm:$0xff]
  %v6230 = vld [vmem:[%s1 + $0x68] sm:$0xff]
  %v6231 = vld [vmem:[%s1 + $0x70] sm:$0xff]
  %v6232 = vld [vmem:[%s1 + $0x78] sm:$0xff]
  %v6233 = vld [vmem:[%s1 + $0x80] sm:$0xff]
  %v6234 = vld [vmem:[%s1 + $0x88] sm:$0xff]
  %v6235 = vld [vmem:[%s1 + $0x90] sm:$0xff]
  %v6236 = vld [vmem:[%s1 + $0x98] sm:$0xff]
  %v6237 = vld [vmem:[%s1 + $0xa0] sm:$0xff]
  %v6238 = vld [vmem:[%s1 + $0xa8] sm:$0xff]
  %v6239 = vld [vmem:[%s1 + $0xb0] sm:$0xff]
  %v6240 = vld [vmem:[%s1 + $0xb8] sm:$0xff]
  %v6241 = vld [vmem:[%s1 + $0xc0] sm:$0xff]
  %v6242 = vld [vmem:[%s1 + $0xc8] sm:$0xff]
  %v6243 = vld [vmem:[%s1 + $0xd0] sm:$0xff]
  %v6244 = vld [vmem:[%s1 + $0xd8] sm:$0xff]
  %v6245 = vld [vmem:[%s1 + $0xe0] sm:$0xff]
  %v6246 = vld [vmem:[%s1 + $0xe8] sm:$0xff]
  %v6247 = vld [vmem:[%s1 + $0xf0] sm:$0xff]
  %v6248 = vld [vmem:[%s1 + $0xf8] sm:$0xff]
  %v6249 = vld [vmem:[%s1 + $0x100] sm:$0xff]
  %v6250 = vld [vmem:[%s1 + $0x108] sm:$0xff]
  %v6251 = vld [vmem:[%s1 + $0x110] sm:$0xff]
  %v6252 = vld [vmem:[%s1 + $0x118] sm:$0xff]
  %v6253 = vld [vmem:[%s1 + $0x120] sm:$0xff]
  %v6254 = vld [vmem:[%s1 + $0x128] sm:$0xff]
  %v6255 = vld [vmem:[%s1 + $0x130] sm:$0xff]
  %v6256 = vld [vmem:[%s1 + $0x138] sm:$0xff]
  %v6257 = vld [vmem:[%s1 + $0x140] sm:$0xff]
  %v6258 = vld [vmem:[%s1 + $0x148] sm:$0xff]
  %v6259 = vld [vmem:[%s1 + $0x150] sm:$0xff]
  %v6260 = vld [vmem:[%s1 + $0x158] sm:$0xff]
  %v6261 = vld [vmem:[%s1 + $0x160] sm:$0xff]
  %v6262 = vld [vmem:[%s1 + $0x168] sm:$0xff]
  %v6263 = vld [vmem:[%s1 + $0x170] sm:$0xff]
  %v6264 = vld [vmem:[%s1 + $0x178] sm:$0xff]
  %v6265 = vld [vmem:[%s1 + $0x180] sm:$0xff]
  %v6266 = vld [vmem:[%s1 + $0x188] sm:$0xff]
  %v6267 = vld [vmem:[%s1 + $0x190] sm:$0xff]
  %v6268 = vld [vmem:[%s1 + $0x198] sm:$0xff]
  %v6269 = vld [vmem:[%s1 + $0x1a0] sm:$0xff]
  %v6270 = vld [vmem:[%s1 + $0x1a8] sm:$0xff]
  %v6271 = vld [vmem:[%s1 + $0x1b0] sm:$0xff]
  %v6272 = vld [vmem:[%s1 + $0x1b8] sm:$0xff]
  %v6273 = vld [vmem:[%s1 + $0x1c0] sm:$0xff]
  %v6274 = vld [vmem:[%s1 + $0x1c8] sm:$0xff]
  %v6275 = vld [vmem:[%s1 + $0x1d0] sm:$0xff]
  %v6276 = vld [vmem:[%s1 + $0x1d8] sm:$0xff]
  %v6277 = vld [vmem:[%s1 + $0x1e0] sm:$0xff]
  %v6278 = vld [vmem:[%s1 + $0x1e8] sm:$0xff]
  %v6279 = vld [vmem:[%s1 + $0x1f0] sm:$0xff]
  %v6280 = vld [vmem:[%s1 + $0x1f8] sm:$0xff]
  %v6281 = vpack.c.bf16 %v6058, %v6057
  %v6282 = vpack.c.bf16 %v6060, %v6059
  %v6283 = vpack.c.bf16 %v6062, %v6061
  %v6284 = vpack.c.bf16 %v6064, %v6063
  %v6285 = vpack.c.bf16 %v6066, %v6065
  %v6286 = vpack.c.bf16 %v6068, %v6067
  %v6287 = vpack.c.bf16 %v6070, %v6069
  %v6288 = vpack.c.bf16 %v6072, %v6071
  %v6289 = vpack.c.bf16 %v6074, %v6073
  %v6290 = vpack.c.bf16 %v6076, %v6075
  %v6291 = vpack.c.bf16 %v6078, %v6077
  %v6292 = vpack.c.bf16 %v6080, %v6079
  %v6293 = vpack.c.bf16 %v6082, %v6081
  %v6294 = vpack.c.bf16 %v6084, %v6083
  %v6295 = vpack.c.bf16 %v6086, %v6085
  %v6296 = vpack.c.bf16 %v6088, %v6087
  %s6297 = scalar_lea.vmem %s1, 512
  %v6298 = vld [vmem:[%s6297] sm:$0xff]
  %v6299 = vld [vmem:[%s6297 + $0x8] sm:$0xff]
  %v6300 = vld [vmem:[%s6297 + $0x10] sm:$0xff]
  %v6301 = vld [vmem:[%s6297 + $0x18] sm:$0xff]
  %v6302 = vld [vmem:[%s6297 + $0x20] sm:$0xff]
  %v6303 = vld [vmem:[%s6297 + $0x28] sm:$0xff]
  %v6304 = vld [vmem:[%s6297 + $0x30] sm:$0xff]
  %v6305 = vld [vmem:[%s6297 + $0x38] sm:$0xff]
  %v6306 = vld [vmem:[%s6297 + $0x40] sm:$0xff]
  %v6307 = vld [vmem:[%s6297 + $0x48] sm:$0xff]
  %v6308 = vld [vmem:[%s6297 + $0x50] sm:$0xff]
  %v6309 = vld [vmem:[%s6297 + $0x58] sm:$0xff]
  %v6310 = vld [vmem:[%s6297 + $0x60] sm:$0xff]
  %v6311 = vld [vmem:[%s6297 + $0x68] sm:$0xff]
  %v6312 = vld [vmem:[%s6297 + $0x70] sm:$0xff]
  %v6313 = vld [vmem:[%s6297 + $0x78] sm:$0xff]
  %v6314 = vld [vmem:[%s6297 + $0x80] sm:$0xff]
  %v6315 = vld [vmem:[%s6297 + $0x88] sm:$0xff]
  %v6316 = vld [vmem:[%s6297 + $0x90] sm:$0xff]
  %v6317 = vld [vmem:[%s6297 + $0x98] sm:$0xff]
  %v6318 = vld [vmem:[%s6297 + $0xa0] sm:$0xff]
  %v6319 = vld [vmem:[%s6297 + $0xa8] sm:$0xff]
  %v6320 = vld [vmem:[%s6297 + $0xb0] sm:$0xff]
  %v6321 = vld [vmem:[%s6297 + $0xb8] sm:$0xff]
  %v6322 = vld [vmem:[%s6297 + $0xc0] sm:$0xff]
  %v6323 = vld [vmem:[%s6297 + $0xc8] sm:$0xff]
  %v6324 = vld [vmem:[%s6297 + $0xd0] sm:$0xff]
  %v6325 = vld [vmem:[%s6297 + $0xd8] sm:$0xff]
  %v6326 = vld [vmem:[%s6297 + $0xe0] sm:$0xff]
  %v6327 = vld [vmem:[%s6297 + $0xe8] sm:$0xff]
  %v6328 = vld [vmem:[%s6297 + $0xf0] sm:$0xff]
  %v6329 = vld [vmem:[%s6297 + $0xf8] sm:$0xff]
  %v6330 = vld [vmem:[%s6297 + $0x100] sm:$0xff]
  %v6331 = vld [vmem:[%s6297 + $0x108] sm:$0xff]
  %v6332 = vld [vmem:[%s6297 + $0x110] sm:$0xff]
  %v6333 = vld [vmem:[%s6297 + $0x118] sm:$0xff]
  %v6334 = vld [vmem:[%s6297 + $0x120] sm:$0xff]
  %v6335 = vld [vmem:[%s6297 + $0x128] sm:$0xff]
  %v6336 = vld [vmem:[%s6297 + $0x130] sm:$0xff]
  %v6337 = vld [vmem:[%s6297 + $0x138] sm:$0xff]
  %v6338 = vld [vmem:[%s6297 + $0x140] sm:$0xff]
  %v6339 = vld [vmem:[%s6297 + $0x148] sm:$0xff]
  %v6340 = vld [vmem:[%s6297 + $0x150] sm:$0xff]
  %v6341 = vld [vmem:[%s6297 + $0x158] sm:$0xff]
  %v6342 = vld [vmem:[%s6297 + $0x160] sm:$0xff]
  %v6343 = vld [vmem:[%s6297 + $0x168] sm:$0xff]
  %v6344 = vld [vmem:[%s6297 + $0x170] sm:$0xff]
  %v6345 = vld [vmem:[%s6297 + $0x178] sm:$0xff]
  %v6346 = vld [vmem:[%s6297 + $0x180] sm:$0xff]
  %v6347 = vld [vmem:[%s6297 + $0x188] sm:$0xff]
  %v6348 = vld [vmem:[%s6297 + $0x190] sm:$0xff]
  %v6349 = vld [vmem:[%s6297 + $0x198] sm:$0xff]
  %v6350 = vld [vmem:[%s6297 + $0x1a0] sm:$0xff]
  %v6351 = vld [vmem:[%s6297 + $0x1a8] sm:$0xff]
  %v6352 = vld [vmem:[%s6297 + $0x1b0] sm:$0xff]
  %v6353 = vld [vmem:[%s6297 + $0x1b8] sm:$0xff]
  %v6354 = vld [vmem:[%s6297 + $0x1c0] sm:$0xff]
  %v6355 = vld [vmem:[%s6297 + $0x1c8] sm:$0xff]
  %v6356 = vld [vmem:[%s6297 + $0x1d0] sm:$0xff]
  %v6357 = vld [vmem:[%s6297 + $0x1d8] sm:$0xff]
  %v6358 = vld [vmem:[%s6297 + $0x1e0] sm:$0xff]
  %v6359 = vld [vmem:[%s6297 + $0x1e8] sm:$0xff]
  %v6360 = vld [vmem:[%s6297 + $0x1f0] sm:$0xff]
  %v6361 = vld [vmem:[%s6297 + $0x1f8] sm:$0xff]
  %v6362 = vpack.c.bf16 %v6090, %v6089
  %v6363 = vpack.c.bf16 %v6092, %v6091
  %v6364 = vpack.c.bf16 %v6094, %v6093
  %v6365 = vpack.c.bf16 %v6096, %v6095
  %v6366 = vpack.c.bf16 %v6098, %v6097
  %v6367 = vpack.c.bf16 %v6100, %v6099
  %v6368 = vpack.c.bf16 %v6102, %v6101
  %v6369 = vpack.c.bf16 %v6104, %v6103
  %v6370 = vpack.c.bf16 %v6106, %v6105
  %v6371 = vpack.c.bf16 %v6108, %v6107
  %v6372 = vpack.c.bf16 %v6110, %v6109
  %v6373 = vpack.c.bf16 %v6112, %v6111
  %v6374 = vpack.c.bf16 %v6114, %v6113
  %v6375 = vpack.c.bf16 %v6116, %v6115
  %v6376 = vpack.c.bf16 %v6118, %v6117
  %v6377 = vpack.c.bf16 %v6120, %v6119
  %v6442 = vunpack.c.l.b16 %v6298
  %v6443 = vunpack.c.h.b16 %v6298
  %v6444 = vunpack.c.l.b16 %v6299
  %v6445 = vunpack.c.h.b16 %v6299
  %v6446 = vunpack.c.l.b16 %v6300
  %v6447 = vunpack.c.h.b16 %v6300
  %v6448 = vunpack.c.l.b16 %v6301
  %v6449 = vunpack.c.h.b16 %v6301
  %v6450 = vunpack.c.l.b16 %v6302
  %v6451 = vunpack.c.h.b16 %v6302
  %v6452 = vunpack.c.l.b16 %v6303
  %v6453 = vunpack.c.h.b16 %v6303
  %v6454 = vunpack.c.l.b16 %v6304
  %v6455 = vunpack.c.h.b16 %v6304
  %v6456 = vunpack.c.l.b16 %v6305
  %v6457 = vunpack.c.h.b16 %v6305
  %v6458 = vunpack.c.l.b16 %v6306
  %v6459 = vunpack.c.h.b16 %v6306
  %v6460 = vunpack.c.l.b16 %v6307
  %v6461 = vunpack.c.h.b16 %v6307
  %v6462 = vunpack.c.l.b16 %v6308
  %v6463 = vunpack.c.h.b16 %v6308
  %v6464 = vunpack.c.l.b16 %v6309
  %v6465 = vunpack.c.h.b16 %v6309
  %v6466 = vunpack.c.l.b16 %v6310
  %v6467 = vunpack.c.h.b16 %v6310
  %v6468 = vunpack.c.l.b16 %v6311
  %v6469 = vunpack.c.h.b16 %v6311
  %v6470 = vunpack.c.l.b16 %v6312
  %v6471 = vunpack.c.h.b16 %v6312
  %v6472 = vunpack.c.l.b16 %v6313
  %v6473 = vunpack.c.h.b16 %v6313
  %v6474 = vunpack.c.l.b16 %v6314
  %v6475 = vunpack.c.h.b16 %v6314
  %v6476 = vunpack.c.l.b16 %v6315
  %v6477 = vunpack.c.h.b16 %v6315
  %v6478 = vunpack.c.l.b16 %v6316
  %v6479 = vunpack.c.h.b16 %v6316
  %v6480 = vunpack.c.l.b16 %v6317
  %v6481 = vunpack.c.h.b16 %v6317
  %v6482 = vunpack.c.l.b16 %v6318
  %v6483 = vunpack.c.h.b16 %v6318
  %v6484 = vunpack.c.l.b16 %v6319
  %v6485 = vunpack.c.h.b16 %v6319
  %v6486 = vunpack.c.l.b16 %v6320
  %v6487 = vunpack.c.h.b16 %v6320
  %v6488 = vunpack.c.l.b16 %v6321
  %v6489 = vunpack.c.h.b16 %v6321
  %v6490 = vunpack.c.l.b16 %v6322
  %v6491 = vunpack.c.h.b16 %v6322
  %v6492 = vunpack.c.l.b16 %v6323
  %v6493 = vunpack.c.h.b16 %v6323
  %v6494 = vunpack.c.l.b16 %v6324
  %v6495 = vunpack.c.h.b16 %v6324
  %v6496 = vunpack.c.l.b16 %v6325
  %v6497 = vunpack.c.h.b16 %v6325
  %v6498 = vunpack.c.l.b16 %v6326
  %v6499 = vunpack.c.h.b16 %v6326
  %v6500 = vunpack.c.l.b16 %v6327
  %v6501 = vunpack.c.h.b16 %v6327
  %v6502 = vunpack.c.l.b16 %v6328
  %v6503 = vunpack.c.h.b16 %v6328
  %v6504 = vunpack.c.l.b16 %v6329
  %v6505 = vunpack.c.h.b16 %v6329
  %v6506 = vunpack.c.l.b16 %v6330
  %v6507 = vunpack.c.h.b16 %v6330
  %v6508 = vunpack.c.l.b16 %v6331
  %v6509 = vunpack.c.h.b16 %v6331
  %v6510 = vunpack.c.l.b16 %v6332
  %v6511 = vunpack.c.h.b16 %v6332
  %v6512 = vunpack.c.l.b16 %v6333
  %v6513 = vunpack.c.h.b16 %v6333
  %v6514 = vunpack.c.l.b16 %v6334
  %v6515 = vunpack.c.h.b16 %v6334
  %v6516 = vunpack.c.l.b16 %v6335
  %v6517 = vunpack.c.h.b16 %v6335
  %v6518 = vunpack.c.l.b16 %v6336
  %v6519 = vunpack.c.h.b16 %v6336
  %v6520 = vunpack.c.l.b16 %v6337
  %v6521 = vunpack.c.h.b16 %v6337
  %v6522 = vunpack.c.l.b16 %v6338
  %v6523 = vunpack.c.h.b16 %v6338
  %v6524 = vunpack.c.l.b16 %v6339
  %v6525 = vunpack.c.h.b16 %v6339
  %v6526 = vunpack.c.l.b16 %v6340
  %v6527 = vunpack.c.h.b16 %v6340
  %v6528 = vunpack.c.l.b16 %v6341
  %v6529 = vunpack.c.h.b16 %v6341
  %v6530 = vunpack.c.l.b16 %v6342
  %v6531 = vunpack.c.h.b16 %v6342
  %v6532 = vunpack.c.l.b16 %v6343
  %v6533 = vunpack.c.h.b16 %v6343
  %v6534 = vunpack.c.l.b16 %v6344
  %v6535 = vunpack.c.h.b16 %v6344
  %v6536 = vunpack.c.l.b16 %v6345
  %v6537 = vunpack.c.h.b16 %v6345
  %v6538 = vunpack.c.l.b16 %v6346
  %v6539 = vunpack.c.h.b16 %v6346
  %v6540 = vunpack.c.l.b16 %v6347
  %v6541 = vunpack.c.h.b16 %v6347
  %v6542 = vunpack.c.l.b16 %v6348
  %v6543 = vunpack.c.h.b16 %v6348
  %v6544 = vunpack.c.l.b16 %v6349
  %v6545 = vunpack.c.h.b16 %v6349
  %v6546 = vunpack.c.l.b16 %v6350
  %v6547 = vunpack.c.h.b16 %v6350
  %v6548 = vunpack.c.l.b16 %v6351
  %v6549 = vunpack.c.h.b16 %v6351
  %v6550 = vunpack.c.l.b16 %v6352
  %v6551 = vunpack.c.h.b16 %v6352
  %v6552 = vunpack.c.l.b16 %v6353
  %v6553 = vunpack.c.h.b16 %v6353
  %v6554 = vunpack.c.l.b16 %v6354
  %v6555 = vunpack.c.h.b16 %v6354
  %v6556 = vunpack.c.l.b16 %v6355
  %v6557 = vunpack.c.h.b16 %v6355
  %v6558 = vunpack.c.l.b16 %v6356
  %v6559 = vunpack.c.h.b16 %v6356
  %v6560 = vunpack.c.l.b16 %v6357
  %v6561 = vunpack.c.h.b16 %v6357
  %v6562 = vunpack.c.l.b16 %v6358
  %v6563 = vunpack.c.h.b16 %v6358
  %v6564 = vunpack.c.l.b16 %v6359
  %v6565 = vunpack.c.h.b16 %v6359
  %v6566 = vunpack.c.l.b16 %v6360
  %v6567 = vunpack.c.h.b16 %v6360
  %v6568 = vunpack.c.l.b16 %v6361
  %v6569 = vunpack.c.h.b16 %v6361
  %v6570 = vpack.c.b16 %v6444, %v6442
  %v6571 = vpack.c.b16 %v6445, %v6443
  %v6572 = vpack.c.b16 %v6448, %v6446
  %v6573 = vpack.c.b16 %v6449, %v6447
  %v6574 = vpack.c.b16 %v6452, %v6450
  %v6575 = vpack.c.b16 %v6453, %v6451
  %v6576 = vpack.c.b16 %v6456, %v6454
  %v6577 = vpack.c.b16 %v6457, %v6455
  %v6578 = vpack.c.b16 %v6460, %v6458
  %v6579 = vpack.c.b16 %v6461, %v6459
  %v6580 = vpack.c.b16 %v6464, %v6462
  %v6581 = vpack.c.b16 %v6465, %v6463
  %v6582 = vpack.c.b16 %v6468, %v6466
  %v6583 = vpack.c.b16 %v6469, %v6467
  %v6584 = vpack.c.b16 %v6472, %v6470
  %v6585 = vpack.c.b16 %v6473, %v6471
  %v6586 = vpack.c.b16 %v6476, %v6474
  %v6587 = vpack.c.b16 %v6477, %v6475
  %v6588 = vpack.c.b16 %v6480, %v6478
  %v6589 = vpack.c.b16 %v6481, %v6479
  %v6590 = vpack.c.b16 %v6484, %v6482
  %v6591 = vpack.c.b16 %v6485, %v6483
  %v6592 = vpack.c.b16 %v6488, %v6486
  %v6593 = vpack.c.b16 %v6489, %v6487
  %v6594 = vpack.c.b16 %v6492, %v6490
  %v6595 = vpack.c.b16 %v6493, %v6491
  %v6596 = vpack.c.b16 %v6496, %v6494
  %v6597 = vpack.c.b16 %v6497, %v6495
  %v6598 = vpack.c.b16 %v6500, %v6498
  %v6599 = vpack.c.b16 %v6501, %v6499
  %v6600 = vpack.c.b16 %v6504, %v6502
  %v6601 = vpack.c.b16 %v6505, %v6503
  %v6602 = vpack.c.b16 %v6508, %v6506
  %v6603 = vpack.c.b16 %v6509, %v6507
  %v6604 = vpack.c.b16 %v6512, %v6510
  %v6605 = vpack.c.b16 %v6513, %v6511
  %v6606 = vpack.c.b16 %v6516, %v6514
  %v6607 = vpack.c.b16 %v6517, %v6515
  %v6608 = vpack.c.b16 %v6520, %v6518
  %v6609 = vpack.c.b16 %v6521, %v6519
  %v6610 = vpack.c.b16 %v6524, %v6522
  %v6611 = vpack.c.b16 %v6525, %v6523
  %v6612 = vpack.c.b16 %v6528, %v6526
  %v6613 = vpack.c.b16 %v6529, %v6527
  %v6614 = vpack.c.b16 %v6532, %v6530
  %v6615 = vpack.c.b16 %v6533, %v6531
  %v6616 = vpack.c.b16 %v6536, %v6534
  %v6617 = vpack.c.b16 %v6537, %v6535
  %v6618 = vpack.c.b16 %v6540, %v6538
  %v6619 = vpack.c.b16 %v6541, %v6539
  %v6620 = vpack.c.b16 %v6544, %v6542
  %v6621 = vpack.c.b16 %v6545, %v6543
  %v6622 = vpack.c.b16 %v6548, %v6546
  %v6623 = vpack.c.b16 %v6549, %v6547
  %v6624 = vpack.c.b16 %v6552, %v6550
  %v6625 = vpack.c.b16 %v6553, %v6551
  %v6626 = vpack.c.b16 %v6556, %v6554
  %v6627 = vpack.c.b16 %v6557, %v6555
  %v6628 = vpack.c.b16 %v6560, %v6558
  %v6629 = vpack.c.b16 %v6561, %v6559
  %v6630 = vpack.c.b16 %v6564, %v6562
  %v6631 = vpack.c.b16 %v6565, %v6563
  %v6632 = vpack.c.b16 %v6568, %v6566
  %v6633 = vpack.c.b16 %v6569, %v6567
  %6698 = vmatprep.subr.bf16.mxu0 0
  %6699 = vmatpush1.bf16.msra.mxu0 %v6369
  %6700 = vmatprep.subr.bf16.mxu0 0
  %6701 = vmatpush1.bf16.msra.mxu0 %v6368
  %6702 = vmatprep.subr.bf16.mxu0 0
  %6703 = vmatpush1.bf16.msra.mxu0 %v6367
  %6704 = vmatprep.subr.bf16.mxu0 0
  %6705 = vmatpush1.bf16.msra.mxu0 %v6366
  %6706 = vmatprep.subr.bf16.mxu0 0
  %6707 = vmatpush1.bf16.msra.mxu0 %v6365
  %6708 = vmatprep.subr.bf16.mxu0 0
  %6709 = vmatpush1.bf16.msra.mxu0 %v6364
  %6710 = vmatprep.subr.bf16.mxu0 0
  %6711 = vmatpush1.bf16.msra.mxu0 %v6363
  %6712 = vmatprep.subr.bf16.mxu0 0
  %6713 = vmatpush1.bf16.msra.mxu0 %v6362
  %6714 = vmatprep.subr.bf16.mxu0 0
  %6715 = vmatpush2.bf16.msra.mxu0 %v6377
  %6716 = vmatprep.subr.bf16.mxu0 0
  %6717 = vmatpush2.bf16.msra.mxu0 %v6376
  %6718 = vmatprep.subr.bf16.mxu0 0
  %6719 = vmatpush2.bf16.msra.mxu0 %v6375
  %6720 = vmatprep.subr.bf16.mxu0 0
  %6721 = vmatpush2.bf16.msra.mxu0 %v6374
  %6722 = vmatprep.subr.bf16.mxu0 0
  %6723 = vmatpush2.bf16.msra.mxu0 %v6373
  %6724 = vmatprep.subr.bf16.mxu0 0
  %6725 = vmatpush2.bf16.msra.mxu0 %v6372
  %6726 = vmatprep.subr.bf16.mxu0 0
  %6727 = vmatpush2.bf16.msra.mxu0 %v6371
  %6728 = vmatprep.subr.bf16.mxu0 0
  %6729 = vmatpush2.bf16.msra.mxu0 %v6370
  %6730 = vmatprep.mubr.bf16.mxu0 %v6571
  %6731 = vmatmul.mubr.bf16.gmra.mxu0 %v6570
  %v6732 = vpop.f32.mrf.mxu0
  %v6733 = vadd.f32 0.0, %v6732
  %v6734 = vpop.f32.mrf.mxu0
  %v6735 = vpop.f32.mrf.mxu0
  %v6736 = vadd.f32 0.0, %v6735
  %v6737 = vpop.f32.mrf.mxu0
  %6738 = vmatprep.mubr.bf16.mxu0 %v6573
  %6739 = vmatmul.mubr.bf16.gmra.mxu0 %v6572
  %v6740 = vpop.f32.mrf.mxu0
  %v6741 = vadd.f32 0.0, %v6740
  %v6742 = vpop.f32.mrf.mxu0
  %v6743 = vpop.f32.mrf.mxu0
  %v6744 = vadd.f32 0.0, %v6743
  %v6745 = vpop.f32.mrf.mxu0
  %6746 = vmatprep.mubr.bf16.mxu0 %v6575
  %6747 = vmatmul.mubr.bf16.gmra.mxu0 %v6574
  %v6748 = vpop.f32.mrf.mxu0
  %v6749 = vadd.f32 0.0, %v6748
  %v6750 = vpop.f32.mrf.mxu0
  %v6751 = vpop.f32.mrf.mxu0
  %v6752 = vadd.f32 0.0, %v6751
  %v6753 = vpop.f32.mrf.mxu0
  %6754 = vmatprep.mubr.bf16.mxu0 %v6577
  %6755 = vmatmul.mubr.bf16.gmra.mxu0 %v6576
  %v6756 = vpop.f32.mrf.mxu0
  %v6757 = vadd.f32 0.0, %v6756
  %v6758 = vpop.f32.mrf.mxu0
  %v6759 = vpop.f32.mrf.mxu0
  %v6760 = vadd.f32 0.0, %v6759
  %v6761 = vpop.f32.mrf.mxu0
  %6762 = vmatprep.mubr.bf16.mxu0 %v6579
  %6763 = vmatmul.mubr.bf16.gmra.mxu0 %v6578
  %v6764 = vpop.f32.mrf.mxu0
  %v6765 = vadd.f32 0.0, %v6764
  %v6766 = vpop.f32.mrf.mxu0
  %v6767 = vpop.f32.mrf.mxu0
  %v6768 = vadd.f32 0.0, %v6767
  %v6769 = vpop.f32.mrf.mxu0
  %6770 = vmatprep.mubr.bf16.mxu0 %v6581
  %6771 = vmatmul.mubr.bf16.gmra.mxu0 %v6580
  %v6772 = vpop.f32.mrf.mxu0
  %v6773 = vadd.f32 0.0, %v6772
  %v6774 = vpop.f32.mrf.mxu0
  %v6775 = vpop.f32.mrf.mxu0
  %v6776 = vadd.f32 0.0, %v6775
  %v6777 = vpop.f32.mrf.mxu0
  %6778 = vmatprep.mubr.bf16.mxu0 %v6583
  %6779 = vmatmul.mubr.bf16.gmra.mxu0 %v6582
  %v6780 = vpop.f32.mrf.mxu0
  %v6781 = vadd.f32 0.0, %v6780
  %v6782 = vpop.f32.mrf.mxu0
  %v6783 = vpop.f32.mrf.mxu0
  %v6784 = vadd.f32 0.0, %v6783
  %v6785 = vpop.f32.mrf.mxu0
  %6786 = vmatprep.mubr.bf16.mxu0 %v6585
  %6787 = vmatmul.mubr.bf16.gmra.mxu0 %v6584
  %v6788 = vpop.f32.mrf.mxu0
  %v6789 = vadd.f32 0.0, %v6788
  %v6790 = vpop.f32.mrf.mxu0
  %v6791 = vpop.f32.mrf.mxu0
  %v6792 = vadd.f32 0.0, %v6791
  %v6793 = vpop.f32.mrf.mxu0
  %6794 = vmatprep.mubr.bf16.mxu0 %v6587
  %6795 = vmatmul.mubr.bf16.gmra.mxu0 %v6586
  %v6796 = vpop.f32.mrf.mxu0
  %v6797 = vadd.f32 0.0, %v6796
  %v6798 = vpop.f32.mrf.mxu0
  %v6799 = vpop.f32.mrf.mxu0
  %v6800 = vadd.f32 0.0, %v6799
  %v6801 = vpop.f32.mrf.mxu0
  %6802 = vmatprep.mubr.bf16.mxu0 %v6589
  %6803 = vmatmul.mubr.bf16.gmra.mxu0 %v6588
  %v6804 = vpop.f32.mrf.mxu0
  %v6805 = vadd.f32 0.0, %v6804
  %v6806 = vpop.f32.mrf.mxu0
  %v6807 = vpop.f32.mrf.mxu0
  %v6808 = vadd.f32 0.0, %v6807
  %v6809 = vpop.f32.mrf.mxu0
  %6810 = vmatprep.mubr.bf16.mxu0 %v6591
  %6811 = vmatmul.mubr.bf16.gmra.mxu0 %v6590
  %v6812 = vpop.f32.mrf.mxu0
  %v6813 = vadd.f32 0.0, %v6812
  %v6814 = vpop.f32.mrf.mxu0
  %v6815 = vpop.f32.mrf.mxu0
  %v6816 = vadd.f32 0.0, %v6815
  %v6817 = vpop.f32.mrf.mxu0
  %6818 = vmatprep.mubr.bf16.mxu0 %v6593
  %6819 = vmatmul.mubr.bf16.gmra.mxu0 %v6592
  %v6820 = vpop.f32.mrf.mxu0
  %v6821 = vadd.f32 0.0, %v6820
  %v6822 = vpop.f32.mrf.mxu0
  %v6823 = vpop.f32.mrf.mxu0
  %v6824 = vadd.f32 0.0, %v6823
  %v6825 = vpop.f32.mrf.mxu0
  %6826 = vmatprep.mubr.bf16.mxu0 %v6595
  %6827 = vmatmul.mubr.bf16.gmra.mxu0 %v6594
  %v6828 = vpop.f32.mrf.mxu0
  %v6829 = vadd.f32 0.0, %v6828
  %v6830 = vpop.f32.mrf.mxu0
  %v6831 = vpop.f32.mrf.mxu0
  %v6832 = vadd.f32 0.0, %v6831
  %v6833 = vpop.f32.mrf.mxu0
  %6834 = vmatprep.mubr.bf16.mxu0 %v6597
  %6835 = vmatmul.mubr.bf16.gmra.mxu0 %v6596
  %v6836 = vpop.f32.mrf.mxu0
  %v6837 = vadd.f32 0.0, %v6836
  %v6838 = vpop.f32.mrf.mxu0
  %v6839 = vpop.f32.mrf.mxu0
  %v6840 = vadd.f32 0.0, %v6839
  %v6841 = vpop.f32.mrf.mxu0
  %6842 = vmatprep.mubr.bf16.mxu0 %v6599
  %6843 = vmatmul.mubr.bf16.gmra.mxu0 %v6598
  %v6844 = vpop.f32.mrf.mxu0
  %v6845 = vadd.f32 0.0, %v6844
  %v6846 = vpop.f32.mrf.mxu0
  %v6847 = vpop.f32.mrf.mxu0
  %v6848 = vadd.f32 0.0, %v6847
  %v6849 = vpop.f32.mrf.mxu0
  %6850 = vmatprep.mubr.bf16.mxu0 %v6601
  %6851 = vmatmul.mubr.bf16.gmra.mxu0 %v6600
  %v6852 = vpop.f32.mrf.mxu0
  %v6853 = vadd.f32 0.0, %v6852
  %v6854 = vpop.f32.mrf.mxu0
  %v6855 = vpop.f32.mrf.mxu0
  %v6856 = vadd.f32 0.0, %v6855
  %v6857 = vpop.f32.mrf.mxu0
  %6858 = vmatprep.mubr.bf16.mxu0 %v6603
  %6859 = vmatmul.mubr.bf16.gmra.mxu0 %v6602
  %v6860 = vpop.f32.mrf.mxu0
  %v6861 = vadd.f32 0.0, %v6860
  %v6862 = vpop.f32.mrf.mxu0
  %v6863 = vpop.f32.mrf.mxu0
  %v6864 = vadd.f32 0.0, %v6863
  %v6865 = vpop.f32.mrf.mxu0
  %6866 = vmatprep.mubr.bf16.mxu0 %v6605
  %6867 = vmatmul.mubr.bf16.gmra.mxu0 %v6604
  %v6868 = vpop.f32.mrf.mxu0
  %v6869 = vadd.f32 0.0, %v6868
  %v6870 = vpop.f32.mrf.mxu0
  %v6871 = vpop.f32.mrf.mxu0
  %v6872 = vadd.f32 0.0, %v6871
  %v6873 = vpop.f32.mrf.mxu0
  %6874 = vmatprep.mubr.bf16.mxu0 %v6607
  %6875 = vmatmul.mubr.bf16.gmra.mxu0 %v6606
  %v6876 = vpop.f32.mrf.mxu0
  %v6877 = vadd.f32 0.0, %v6876
  %v6878 = vpop.f32.mrf.mxu0
  %v6879 = vpop.f32.mrf.mxu0
  %v6880 = vadd.f32 0.0, %v6879
  %v6881 = vpop.f32.mrf.mxu0
  %6882 = vmatprep.mubr.bf16.mxu0 %v6609
  %6883 = vmatmul.mubr.bf16.gmra.mxu0 %v6608
  %v6884 = vpop.f32.mrf.mxu0
  %v6885 = vadd.f32 0.0, %v6884
  %v6886 = vpop.f32.mrf.mxu0
  %v6887 = vpop.f32.mrf.mxu0
  %v6888 = vadd.f32 0.0, %v6887
  %v6889 = vpop.f32.mrf.mxu0
  %6890 = vmatprep.mubr.bf16.mxu0 %v6611
  %6891 = vmatmul.mubr.bf16.gmra.mxu0 %v6610
  %v6892 = vpop.f32.mrf.mxu0
  %v6893 = vadd.f32 0.0, %v6892
  %v6894 = vpop.f32.mrf.mxu0
  %v6895 = vpop.f32.mrf.mxu0
  %v6896 = vadd.f32 0.0, %v6895
  %v6897 = vpop.f32.mrf.mxu0
  %6898 = vmatprep.mubr.bf16.mxu0 %v6613
  %6899 = vmatmul.mubr.bf16.gmra.mxu0 %v6612
  %v6900 = vpop.f32.mrf.mxu0
  %v6901 = vadd.f32 0.0, %v6900
  %v6902 = vpop.f32.mrf.mxu0
  %v6903 = vpop.f32.mrf.mxu0
  %v6904 = vadd.f32 0.0, %v6903
  %v6905 = vpop.f32.mrf.mxu0
  %6906 = vmatprep.mubr.bf16.mxu0 %v6615
  %6907 = vmatmul.mubr.bf16.gmra.mxu0 %v6614
  %v6908 = vpop.f32.mrf.mxu0
  %v6909 = vadd.f32 0.0, %v6908
  %v6910 = vpop.f32.mrf.mxu0
  %v6911 = vpop.f32.mrf.mxu0
  %v6912 = vadd.f32 0.0, %v6911
  %v6913 = vpop.f32.mrf.mxu0
  %6914 = vmatprep.mubr.bf16.mxu0 %v6617
  %6915 = vmatmul.mubr.bf16.gmra.mxu0 %v6616
  %v6916 = vpop.f32.mrf.mxu0
  %v6917 = vadd.f32 0.0, %v6916
  %v6918 = vpop.f32.mrf.mxu0
  %v6919 = vpop.f32.mrf.mxu0
  %v6920 = vadd.f32 0.0, %v6919
  %v6921 = vpop.f32.mrf.mxu0
  %6922 = vmatprep.mubr.bf16.mxu0 %v6619
  %6923 = vmatmul.mubr.bf16.gmra.mxu0 %v6618
  %v6924 = vpop.f32.mrf.mxu0
  %v6925 = vadd.f32 0.0, %v6924
  %v6926 = vpop.f32.mrf.mxu0
  %v6927 = vpop.f32.mrf.mxu0
  %v6928 = vadd.f32 0.0, %v6927
  %v6929 = vpop.f32.mrf.mxu0
  %6930 = vmatprep.mubr.bf16.mxu0 %v6621
  %6931 = vmatmul.mubr.bf16.gmra.mxu0 %v6620
  %v6932 = vpop.f32.mrf.mxu0
  %v6933 = vadd.f32 0.0, %v6932
  %v6934 = vpop.f32.mrf.mxu0
  %v6935 = vpop.f32.mrf.mxu0
  %v6936 = vadd.f32 0.0, %v6935
  %v6937 = vpop.f32.mrf.mxu0
  %6938 = vmatprep.mubr.bf16.mxu0 %v6623
  %6939 = vmatmul.mubr.bf16.gmra.mxu0 %v6622
  %v6940 = vpop.f32.mrf.mxu0
  %v6941 = vadd.f32 0.0, %v6940
  %v6942 = vpop.f32.mrf.mxu0
  %v6943 = vpop.f32.mrf.mxu0
  %v6944 = vadd.f32 0.0, %v6943
  %v6945 = vpop.f32.mrf.mxu0
  %6946 = vmatprep.mubr.bf16.mxu0 %v6625
  %6947 = vmatmul.mubr.bf16.gmra.mxu0 %v6624
  %v6948 = vpop.f32.mrf.mxu0
  %v6949 = vadd.f32 0.0, %v6948
  %v6950 = vpop.f32.mrf.mxu0
  %v6951 = vpop.f32.mrf.mxu0
  %v6952 = vadd.f32 0.0, %v6951
  %v6953 = vpop.f32.mrf.mxu0
  %6954 = vmatprep.mubr.bf16.mxu0 %v6627
  %6955 = vmatmul.mubr.bf16.gmra.mxu0 %v6626
  %v6956 = vpop.f32.mrf.mxu0
  %v6957 = vadd.f32 0.0, %v6956
  %v6958 = vpop.f32.mrf.mxu0
  %v6959 = vpop.f32.mrf.mxu0
  %v6960 = vadd.f32 0.0, %v6959
  %v6961 = vpop.f32.mrf.mxu0
  %6962 = vmatprep.mubr.bf16.mxu0 %v6629
  %6963 = vmatmul.mubr.bf16.gmra.mxu0 %v6628
  %v6964 = vpop.f32.mrf.mxu0
  %v6965 = vadd.f32 0.0, %v6964
  %v6966 = vpop.f32.mrf.mxu0
  %v6967 = vpop.f32.mrf.mxu0
  %v6968 = vadd.f32 0.0, %v6967
  %v6969 = vpop.f32.mrf.mxu0
  %6970 = vmatprep.mubr.bf16.mxu0 %v6631
  %6971 = vmatmul.mubr.bf16.gmra.mxu0 %v6630
  %v6972 = vpop.f32.mrf.mxu0
  %v6973 = vadd.f32 0.0, %v6972
  %v6974 = vpop.f32.mrf.mxu0
  %v6975 = vpop.f32.mrf.mxu0
  %v6976 = vadd.f32 0.0, %v6975
  %v6977 = vpop.f32.mrf.mxu0
  %6978 = vmatprep.mubr.bf16.mxu0 %v6633
  %6979 = vmatmul.mubr.bf16.gmra.mxu0 %v6632
  %v6980 = vpop.f32.mrf.mxu0
  %v6981 = vadd.f32 0.0, %v6980
  %v6982 = vpop.f32.mrf.mxu0
  %v6983 = vpop.f32.mrf.mxu0
  %v6984 = vadd.f32 0.0, %v6983
  %v6985 = vpop.f32.mrf.mxu0
  %6986 = vdwg.mxu0
  %v7051 = vunpack.c.l.b16 %v6217
  %v7052 = vunpack.c.h.b16 %v6217
  %v7053 = vunpack.c.l.b16 %v6218
  %v7054 = vunpack.c.h.b16 %v6218
  %v7055 = vunpack.c.l.b16 %v6219
  %v7056 = vunpack.c.h.b16 %v6219
  %v7057 = vunpack.c.l.b16 %v6220
  %v7058 = vunpack.c.h.b16 %v6220
  %v7059 = vunpack.c.l.b16 %v6221
  %v7060 = vunpack.c.h.b16 %v6221
  %v7061 = vunpack.c.l.b16 %v6222
  %v7062 = vunpack.c.h.b16 %v6222
  %v7063 = vunpack.c.l.b16 %v6223
  %v7064 = vunpack.c.h.b16 %v6223
  %v7065 = vunpack.c.l.b16 %v6224
  %v7066 = vunpack.c.h.b16 %v6224
  %v7067 = vunpack.c.l.b16 %v6225
  %v7068 = vunpack.c.h.b16 %v6225
  %v7069 = vunpack.c.l.b16 %v6226
  %v7070 = vunpack.c.h.b16 %v6226
  %v7071 = vunpack.c.l.b16 %v6227
  %v7072 = vunpack.c.h.b16 %v6227
  %v7073 = vunpack.c.l.b16 %v6228
  %v7074 = vunpack.c.h.b16 %v6228
  %v7075 = vunpack.c.l.b16 %v6229
  %v7076 = vunpack.c.h.b16 %v6229
  %v7077 = vunpack.c.l.b16 %v6230
  %v7078 = vunpack.c.h.b16 %v6230
  %v7079 = vunpack.c.l.b16 %v6231
  %v7080 = vunpack.c.h.b16 %v6231
  %v7081 = vunpack.c.l.b16 %v6232
  %v7082 = vunpack.c.h.b16 %v6232
  %v7083 = vunpack.c.l.b16 %v6233
  %v7084 = vunpack.c.h.b16 %v6233
  %v7085 = vunpack.c.l.b16 %v6234
  %v7086 = vunpack.c.h.b16 %v6234
  %v7087 = vunpack.c.l.b16 %v6235
  %v7088 = vunpack.c.h.b16 %v6235
  %v7089 = vunpack.c.l.b16 %v6236
  %v7090 = vunpack.c.h.b16 %v6236
  %v7091 = vunpack.c.l.b16 %v6237
  %v7092 = vunpack.c.h.b16 %v6237
  %v7093 = vunpack.c.l.b16 %v6238
  %v7094 = vunpack.c.h.b16 %v6238
  %v7095 = vunpack.c.l.b16 %v6239
  %v7096 = vunpack.c.h.b16 %v6239
  %v7097 = vunpack.c.l.b16 %v6240
  %v7098 = vunpack.c.h.b16 %v6240
  %v7099 = vunpack.c.l.b16 %v6241
  %v7100 = vunpack.c.h.b16 %v6241
  %v7101 = vunpack.c.l.b16 %v6242
  %v7102 = vunpack.c.h.b16 %v6242
  %v7103 = vunpack.c.l.b16 %v6243
  %v7104 = vunpack.c.h.b16 %v6243
  %v7105 = vunpack.c.l.b16 %v6244
  %v7106 = vunpack.c.h.b16 %v6244
  %v7107 = vunpack.c.l.b16 %v6245
  %v7108 = vunpack.c.h.b16 %v6245
  %v7109 = vunpack.c.l.b16 %v6246
  %v7110 = vunpack.c.h.b16 %v6246
  %v7111 = vunpack.c.l.b16 %v6247
  %v7112 = vunpack.c.h.b16 %v6247
  %v7113 = vunpack.c.l.b16 %v6248
  %v7114 = vunpack.c.h.b16 %v6248
  %v7115 = vunpack.c.l.b16 %v6249
  %v7116 = vunpack.c.h.b16 %v6249
  %v7117 = vunpack.c.l.b16 %v6250
  %v7118 = vunpack.c.h.b16 %v6250
  %v7119 = vunpack.c.l.b16 %v6251
  %v7120 = vunpack.c.h.b16 %v6251
  %v7121 = vunpack.c.l.b16 %v6252
  %v7122 = vunpack.c.h.b16 %v6252
  %v7123 = vunpack.c.l.b16 %v6253
  %v7124 = vunpack.c.h.b16 %v6253
  %v7125 = vunpack.c.l.b16 %v6254
  %v7126 = vunpack.c.h.b16 %v6254
  %v7127 = vunpack.c.l.b16 %v6255
  %v7128 = vunpack.c.h.b16 %v6255
  %v7129 = vunpack.c.l.b16 %v6256
  %v7130 = vunpack.c.h.b16 %v6256
  %v7131 = vunpack.c.l.b16 %v6257
  %v7132 = vunpack.c.h.b16 %v6257
  %v7133 = vunpack.c.l.b16 %v6258
  %v7134 = vunpack.c.h.b16 %v6258
  %v7135 = vunpack.c.l.b16 %v6259
  %v7136 = vunpack.c.h.b16 %v6259
  %v7137 = vunpack.c.l.b16 %v6260
  %v7138 = vunpack.c.h.b16 %v6260
  %v7139 = vunpack.c.l.b16 %v6261
  %v7140 = vunpack.c.h.b16 %v6261
  %v7141 = vunpack.c.l.b16 %v6262
  %v7142 = vunpack.c.h.b16 %v6262
  %v7143 = vunpack.c.l.b16 %v6263
  %v7144 = vunpack.c.h.b16 %v6263
  %v7145 = vunpack.c.l.b16 %v6264
  %v7146 = vunpack.c.h.b16 %v6264
  %v7147 = vunpack.c.l.b16 %v6265
  %v7148 = vunpack.c.h.b16 %v6265
  %v7149 = vunpack.c.l.b16 %v6266
  %v7150 = vunpack.c.h.b16 %v6266
  %v7151 = vunpack.c.l.b16 %v6267
  %v7152 = vunpack.c.h.b16 %v6267
  %v7153 = vunpack.c.l.b16 %v6268
  %v7154 = vunpack.c.h.b16 %v6268
  %v7155 = vunpack.c.l.b16 %v6269
  %v7156 = vunpack.c.h.b16 %v6269
  %v7157 = vunpack.c.l.b16 %v6270
  %v7158 = vunpack.c.h.b16 %v6270
  %v7159 = vunpack.c.l.b16 %v6271
  %v7160 = vunpack.c.h.b16 %v6271
  %v7161 = vunpack.c.l.b16 %v6272
  %v7162 = vunpack.c.h.b16 %v6272
  %v7163 = vunpack.c.l.b16 %v6273
  %v7164 = vunpack.c.h.b16 %v6273
  %v7165 = vunpack.c.l.b16 %v6274
  %v7166 = vunpack.c.h.b16 %v6274
  %v7167 = vunpack.c.l.b16 %v6275
  %v7168 = vunpack.c.h.b16 %v6275
  %v7169 = vunpack.c.l.b16 %v6276
  %v7170 = vunpack.c.h.b16 %v6276
  %v7171 = vunpack.c.l.b16 %v6277
  %v7172 = vunpack.c.h.b16 %v6277
  %v7173 = vunpack.c.l.b16 %v6278
  %v7174 = vunpack.c.h.b16 %v6278
  %v7175 = vunpack.c.l.b16 %v6279
  %v7176 = vunpack.c.h.b16 %v6279
  %v7177 = vunpack.c.l.b16 %v6280
  %v7178 = vunpack.c.h.b16 %v6280
  %v7179 = vpack.c.b16 %v7053, %v7051
  %v7180 = vpack.c.b16 %v7054, %v7052
  %v7181 = vpack.c.b16 %v7057, %v7055
  %v7182 = vpack.c.b16 %v7058, %v7056
  %v7183 = vpack.c.b16 %v7061, %v7059
  %v7184 = vpack.c.b16 %v7062, %v7060
  %v7185 = vpack.c.b16 %v7065, %v7063
  %v7186 = vpack.c.b16 %v7066, %v7064
  %v7187 = vpack.c.b16 %v7069, %v7067
  %v7188 = vpack.c.b16 %v7070, %v7068
  %v7189 = vpack.c.b16 %v7073, %v7071
  %v7190 = vpack.c.b16 %v7074, %v7072
  %v7191 = vpack.c.b16 %v7077, %v7075
  %v7192 = vpack.c.b16 %v7078, %v7076
  %v7193 = vpack.c.b16 %v7081, %v7079
  %v7194 = vpack.c.b16 %v7082, %v7080
  %v7195 = vpack.c.b16 %v7085, %v7083
  %v7196 = vpack.c.b16 %v7086, %v7084
  %v7197 = vpack.c.b16 %v7089, %v7087
  %v7198 = vpack.c.b16 %v7090, %v7088
  %v7199 = vpack.c.b16 %v7093, %v7091
  %v7200 = vpack.c.b16 %v7094, %v7092
  %v7201 = vpack.c.b16 %v7097, %v7095
  %v7202 = vpack.c.b16 %v7098, %v7096
  %v7203 = vpack.c.b16 %v7101, %v7099
  %v7204 = vpack.c.b16 %v7102, %v7100
  %v7205 = vpack.c.b16 %v7105, %v7103
  %v7206 = vpack.c.b16 %v7106, %v7104
  %v7207 = vpack.c.b16 %v7109, %v7107
  %v7208 = vpack.c.b16 %v7110, %v7108
  %v7209 = vpack.c.b16 %v7113, %v7111
  %v7210 = vpack.c.b16 %v7114, %v7112
  %v7211 = vpack.c.b16 %v7117, %v7115
  %v7212 = vpack.c.b16 %v7118, %v7116
  %v7213 = vpack.c.b16 %v7121, %v7119
  %v7214 = vpack.c.b16 %v7122, %v7120
  %v7215 = vpack.c.b16 %v7125, %v7123
  %v7216 = vpack.c.b16 %v7126, %v7124
  %v7217 = vpack.c.b16 %v7129, %v7127
  %v7218 = vpack.c.b16 %v7130, %v7128
  %v7219 = vpack.c.b16 %v7133, %v7131
  %v7220 = vpack.c.b16 %v7134, %v7132
  %v7221 = vpack.c.b16 %v7137, %v7135
  %v7222 = vpack.c.b16 %v7138, %v7136
  %v7223 = vpack.c.b16 %v7141, %v7139
  %v7224 = vpack.c.b16 %v7142, %v7140
  %v7225 = vpack.c.b16 %v7145, %v7143
  %v7226 = vpack.c.b16 %v7146, %v7144
  %v7227 = vpack.c.b16 %v7149, %v7147
  %v7228 = vpack.c.b16 %v7150, %v7148
  %v7229 = vpack.c.b16 %v7153, %v7151
  %v7230 = vpack.c.b16 %v7154, %v7152
  %v7231 = vpack.c.b16 %v7157, %v7155
  %v7232 = vpack.c.b16 %v7158, %v7156
  %v7233 = vpack.c.b16 %v7161, %v7159
  %v7234 = vpack.c.b16 %v7162, %v7160
  %v7235 = vpack.c.b16 %v7165, %v7163
  %v7236 = vpack.c.b16 %v7166, %v7164
  %v7237 = vpack.c.b16 %v7169, %v7167
  %v7238 = vpack.c.b16 %v7170, %v7168
  %v7239 = vpack.c.b16 %v7173, %v7171
  %v7240 = vpack.c.b16 %v7174, %v7172
  %v7241 = vpack.c.b16 %v7177, %v7175
  %v7242 = vpack.c.b16 %v7178, %v7176
  %7307 = vmatprep.subr.bf16.mxu0 0
  %7308 = vmatpush1.bf16.msra.mxu0 %v6288
  %7309 = vmatprep.subr.bf16.mxu0 0
  %7310 = vmatpush1.bf16.msra.mxu0 %v6287
  %7311 = vmatprep.subr.bf16.mxu0 0
  %7312 = vmatpush1.bf16.msra.mxu0 %v6286
  %7313 = vmatprep.subr.bf16.mxu0 0
  %7314 = vmatpush1.bf16.msra.mxu0 %v6285
  %7315 = vmatprep.subr.bf16.mxu0 0
  %7316 = vmatpush1.bf16.msra.mxu0 %v6284
  %7317 = vmatprep.subr.bf16.mxu0 0
  %7318 = vmatpush1.bf16.msra.mxu0 %v6283
  %7319 = vmatprep.subr.bf16.mxu0 0
  %7320 = vmatpush1.bf16.msra.mxu0 %v6282
  %7321 = vmatprep.subr.bf16.mxu0 0
  %7322 = vmatpush1.bf16.msra.mxu0 %v6281
  %7323 = vmatprep.subr.bf16.mxu0 0
  %7324 = vmatpush2.bf16.msra.mxu0 %v6296
  %7325 = vmatprep.subr.bf16.mxu0 0
  %7326 = vmatpush2.bf16.msra.mxu0 %v6295
  %7327 = vmatprep.subr.bf16.mxu0 0
  %7328 = vmatpush2.bf16.msra.mxu0 %v6294
  %7329 = vmatprep.subr.bf16.mxu0 0
  %7330 = vmatpush2.bf16.msra.mxu0 %v6293
  %7331 = vmatprep.subr.bf16.mxu0 0
  %7332 = vmatpush2.bf16.msra.mxu0 %v6292
  %7333 = vmatprep.subr.bf16.mxu0 0
  %7334 = vmatpush2.bf16.msra.mxu0 %v6291
  %7335 = vmatprep.subr.bf16.mxu0 0
  %7336 = vmatpush2.bf16.msra.mxu0 %v6290
  %7337 = vmatprep.subr.bf16.mxu0 0
  %7338 = vmatpush2.bf16.msra.mxu0 %v6289
  %7339 = vmatprep.mubr.bf16.mxu0 %v7180
  %7340 = vmatmul.mubr.bf16.gmra.mxu0 %v7179
  %v7341 = vpop.f32.mrf.mxu0
  %v7342 = vadd.f32 %v6733, %v7341
  %v7343 = vpop.f32.mrf.mxu0
  %v7344 = vpop.f32.mrf.mxu0
  %v7345 = vadd.f32 %v6736, %v7344
  %v7346 = vpop.f32.mrf.mxu0
  %7347 = vmatprep.mubr.bf16.mxu0 %v7182
  %7348 = vmatmul.mubr.bf16.gmra.mxu0 %v7181
  %v7349 = vpop.f32.mrf.mxu0
  %v7350 = vadd.f32 %v6741, %v7349
  %v7351 = vpop.f32.mrf.mxu0
  %v7352 = vpop.f32.mrf.mxu0
  %v7353 = vadd.f32 %v6744, %v7352
  %v7354 = vpop.f32.mrf.mxu0
  %7355 = vmatprep.mubr.bf16.mxu0 %v7184
  %7356 = vmatmul.mubr.bf16.gmra.mxu0 %v7183
  %v7357 = vpop.f32.mrf.mxu0
  %v7358 = vadd.f32 %v6749, %v7357
  %v7359 = vpop.f32.mrf.mxu0
  %v7360 = vpop.f32.mrf.mxu0
  %v7361 = vadd.f32 %v6752, %v7360
  %v7362 = vpop.f32.mrf.mxu0
  %7363 = vmatprep.mubr.bf16.mxu0 %v7186
  %7364 = vmatmul.mubr.bf16.gmra.mxu0 %v7185
  %v7365 = vpop.f32.mrf.mxu0
  %v7366 = vadd.f32 %v6757, %v7365
  %v7367 = vpop.f32.mrf.mxu0
  %v7368 = vpop.f32.mrf.mxu0
  %v7369 = vadd.f32 %v6760, %v7368
  %v7370 = vpop.f32.mrf.mxu0
  %7371 = vmatprep.mubr.bf16.mxu0 %v7188
  %7372 = vmatmul.mubr.bf16.gmra.mxu0 %v7187
  %v7373 = vpop.f32.mrf.mxu0
  %v7374 = vadd.f32 %v6765, %v7373
  %v7375 = vpop.f32.mrf.mxu0
  %v7376 = vpop.f32.mrf.mxu0
  %v7377 = vadd.f32 %v6768, %v7376
  %v7378 = vpop.f32.mrf.mxu0
  %7379 = vmatprep.mubr.bf16.mxu0 %v7190
  %7380 = vmatmul.mubr.bf16.gmra.mxu0 %v7189
  %v7381 = vpop.f32.mrf.mxu0
  %v7382 = vadd.f32 %v6773, %v7381
  %v7383 = vpop.f32.mrf.mxu0
  %v7384 = vpop.f32.mrf.mxu0
  %v7385 = vadd.f32 %v6776, %v7384
  %v7386 = vpop.f32.mrf.mxu0
  %7387 = vmatprep.mubr.bf16.mxu0 %v7192
  %7388 = vmatmul.mubr.bf16.gmra.mxu0 %v7191
  %v7389 = vpop.f32.mrf.mxu0
  %v7390 = vadd.f32 %v6781, %v7389
  %v7391 = vpop.f32.mrf.mxu0
  %v7392 = vpop.f32.mrf.mxu0
  %v7393 = vadd.f32 %v6784, %v7392
  %v7394 = vpop.f32.mrf.mxu0
  %7395 = vmatprep.mubr.bf16.mxu0 %v7194
  %7396 = vmatmul.mubr.bf16.gmra.mxu0 %v7193
  %v7397 = vpop.f32.mrf.mxu0
  %v7398 = vadd.f32 %v6789, %v7397
  %v7399 = vpop.f32.mrf.mxu0
  %v7400 = vpop.f32.mrf.mxu0
  %v7401 = vadd.f32 %v6792, %v7400
  %v7402 = vpop.f32.mrf.mxu0
  %7403 = vmatprep.mubr.bf16.mxu0 %v7196
  %7404 = vmatmul.mubr.bf16.gmra.mxu0 %v7195
  %v7405 = vpop.f32.mrf.mxu0
  %v7406 = vadd.f32 %v6797, %v7405
  %v7407 = vpop.f32.mrf.mxu0
  %v7408 = vpop.f32.mrf.mxu0
  %v7409 = vadd.f32 %v6800, %v7408
  %v7410 = vpop.f32.mrf.mxu0
  %7411 = vmatprep.mubr.bf16.mxu0 %v7198
  %7412 = vmatmul.mubr.bf16.gmra.mxu0 %v7197
  %v7413 = vpop.f32.mrf.mxu0
  %v7414 = vadd.f32 %v6805, %v7413
  %v7415 = vpop.f32.mrf.mxu0
  %v7416 = vpop.f32.mrf.mxu0
  %v7417 = vadd.f32 %v6808, %v7416
  %v7418 = vpop.f32.mrf.mxu0
  %7419 = vmatprep.mubr.bf16.mxu0 %v7200
  %7420 = vmatmul.mubr.bf16.gmra.mxu0 %v7199
  %v7421 = vpop.f32.mrf.mxu0
  %v7422 = vadd.f32 %v6813, %v7421
  %v7423 = vpop.f32.mrf.mxu0
  %v7424 = vpop.f32.mrf.mxu0
  %v7425 = vadd.f32 %v6816, %v7424
  %v7426 = vpop.f32.mrf.mxu0
  %7427 = vmatprep.mubr.bf16.mxu0 %v7202
  %7428 = vmatmul.mubr.bf16.gmra.mxu0 %v7201
  %v7429 = vpop.f32.mrf.mxu0
  %v7430 = vadd.f32 %v6821, %v7429
  %v7431 = vpop.f32.mrf.mxu0
  %v7432 = vpop.f32.mrf.mxu0
  %v7433 = vadd.f32 %v6824, %v7432
  %v7434 = vpop.f32.mrf.mxu0
  %7435 = vmatprep.mubr.bf16.mxu0 %v7204
  %7436 = vmatmul.mubr.bf16.gmra.mxu0 %v7203
  %v7437 = vpop.f32.mrf.mxu0
  %v7438 = vadd.f32 %v6829, %v7437
  %v7439 = vpop.f32.mrf.mxu0
  %v7440 = vpop.f32.mrf.mxu0
  %v7441 = vadd.f32 %v6832, %v7440
  %v7442 = vpop.f32.mrf.mxu0
  %7443 = vmatprep.mubr.bf16.mxu0 %v7206
  %7444 = vmatmul.mubr.bf16.gmra.mxu0 %v7205
  %v7445 = vpop.f32.mrf.mxu0
  %v7446 = vadd.f32 %v6837, %v7445
  %v7447 = vpop.f32.mrf.mxu0
  %v7448 = vpop.f32.mrf.mxu0
  %v7449 = vadd.f32 %v6840, %v7448
  %v7450 = vpop.f32.mrf.mxu0
  %7451 = vmatprep.mubr.bf16.mxu0 %v7208
  %7452 = vmatmul.mubr.bf16.gmra.mxu0 %v7207
  %v7453 = vpop.f32.mrf.mxu0
  %v7454 = vadd.f32 %v6845, %v7453
  %v7455 = vpop.f32.mrf.mxu0
  %v7456 = vpop.f32.mrf.mxu0
  %v7457 = vadd.f32 %v6848, %v7456
  %v7458 = vpop.f32.mrf.mxu0
  %7459 = vmatprep.mubr.bf16.mxu0 %v7210
  %7460 = vmatmul.mubr.bf16.gmra.mxu0 %v7209
  %v7461 = vpop.f32.mrf.mxu0
  %v7462 = vadd.f32 %v6853, %v7461
  %v7463 = vpop.f32.mrf.mxu0
  %v7464 = vpop.f32.mrf.mxu0
  %v7465 = vadd.f32 %v6856, %v7464
  %v7466 = vpop.f32.mrf.mxu0
  %7467 = vmatprep.mubr.bf16.mxu0 %v7212
  %7468 = vmatmul.mubr.bf16.gmra.mxu0 %v7211
  %v7469 = vpop.f32.mrf.mxu0
  %v7470 = vadd.f32 %v6861, %v7469
  %v7471 = vpop.f32.mrf.mxu0
  %v7472 = vpop.f32.mrf.mxu0
  %v7473 = vadd.f32 %v6864, %v7472
  %v7474 = vpop.f32.mrf.mxu0
  %7475 = vmatprep.mubr.bf16.mxu0 %v7214
  %7476 = vmatmul.mubr.bf16.gmra.mxu0 %v7213
  %v7477 = vpop.f32.mrf.mxu0
  %v7478 = vadd.f32 %v6869, %v7477
  %v7479 = vpop.f32.mrf.mxu0
  %v7480 = vpop.f32.mrf.mxu0
  %v7481 = vadd.f32 %v6872, %v7480
  %v7482 = vpop.f32.mrf.mxu0
  %7483 = vmatprep.mubr.bf16.mxu0 %v7216
  %7484 = vmatmul.mubr.bf16.gmra.mxu0 %v7215
  %v7485 = vpop.f32.mrf.mxu0
  %v7486 = vadd.f32 %v6877, %v7485
  %v7487 = vpop.f32.mrf.mxu0
  %v7488 = vpop.f32.mrf.mxu0
  %v7489 = vadd.f32 %v6880, %v7488
  %v7490 = vpop.f32.mrf.mxu0
  %7491 = vmatprep.mubr.bf16.mxu0 %v7218
  %7492 = vmatmul.mubr.bf16.gmra.mxu0 %v7217
  %v7493 = vpop.f32.mrf.mxu0
  %v7494 = vadd.f32 %v6885, %v7493
  %v7495 = vpop.f32.mrf.mxu0
  %v7496 = vpop.f32.mrf.mxu0
  %v7497 = vadd.f32 %v6888, %v7496
  %v7498 = vpop.f32.mrf.mxu0
  %7499 = vmatprep.mubr.bf16.mxu0 %v7220
  %7500 = vmatmul.mubr.bf16.gmra.mxu0 %v7219
  %v7501 = vpop.f32.mrf.mxu0
  %v7502 = vadd.f32 %v6893, %v7501
  %v7503 = vpop.f32.mrf.mxu0
  %v7504 = vpop.f32.mrf.mxu0
  %v7505 = vadd.f32 %v6896, %v7504
  %v7506 = vpop.f32.mrf.mxu0
  %7507 = vmatprep.mubr.bf16.mxu0 %v7222
  %7508 = vmatmul.mubr.bf16.gmra.mxu0 %v7221
  %v7509 = vpop.f32.mrf.mxu0
  %v7510 = vadd.f32 %v6901, %v7509
  %v7511 = vpop.f32.mrf.mxu0
  %v7512 = vpop.f32.mrf.mxu0
  %v7513 = vadd.f32 %v6904, %v7512
  %v7514 = vpop.f32.mrf.mxu0
  %7515 = vmatprep.mubr.bf16.mxu0 %v7224
  %7516 = vmatmul.mubr.bf16.gmra.mxu0 %v7223
  %v7517 = vpop.f32.mrf.mxu0
  %v7518 = vadd.f32 %v6909, %v7517
  %v7519 = vpop.f32.mrf.mxu0
  %v7520 = vpop.f32.mrf.mxu0
  %v7521 = vadd.f32 %v6912, %v7520
  %v7522 = vpop.f32.mrf.mxu0
  %7523 = vmatprep.mubr.bf16.mxu0 %v7226
  %7524 = vmatmul.mubr.bf16.gmra.mxu0 %v7225
  %v7525 = vpop.f32.mrf.mxu0
  %v7526 = vadd.f32 %v6917, %v7525
  %v7527 = vpop.f32.mrf.mxu0
  %v7528 = vpop.f32.mrf.mxu0
  %v7529 = vadd.f32 %v6920, %v7528
  %v7530 = vpop.f32.mrf.mxu0
  %7531 = vmatprep.mubr.bf16.mxu0 %v7228
  %7532 = vmatmul.mubr.bf16.gmra.mxu0 %v7227
  %v7533 = vpop.f32.mrf.mxu0
  %v7534 = vadd.f32 %v6925, %v7533
  %v7535 = vpop.f32.mrf.mxu0
  %v7536 = vpop.f32.mrf.mxu0
  %v7537 = vadd.f32 %v6928, %v7536
  %v7538 = vpop.f32.mrf.mxu0
  %7539 = vmatprep.mubr.bf16.mxu0 %v7230
  %7540 = vmatmul.mubr.bf16.gmra.mxu0 %v7229
  %v7541 = vpop.f32.mrf.mxu0
  %v7542 = vadd.f32 %v6933, %v7541
  %v7543 = vpop.f32.mrf.mxu0
  %v7544 = vpop.f32.mrf.mxu0
  %v7545 = vadd.f32 %v6936, %v7544
  %v7546 = vpop.f32.mrf.mxu0
  %7547 = vmatprep.mubr.bf16.mxu0 %v7232
  %7548 = vmatmul.mubr.bf16.gmra.mxu0 %v7231
  %v7549 = vpop.f32.mrf.mxu0
  %v7550 = vadd.f32 %v6941, %v7549
  %v7551 = vpop.f32.mrf.mxu0
  %v7552 = vpop.f32.mrf.mxu0
  %v7553 = vadd.f32 %v6944, %v7552
  %v7554 = vpop.f32.mrf.mxu0
  %7555 = vmatprep.mubr.bf16.mxu0 %v7234
  %7556 = vmatmul.mubr.bf16.gmra.mxu0 %v7233
  %v7557 = vpop.f32.mrf.mxu0
  %v7558 = vadd.f32 %v6949, %v7557
  %v7559 = vpop.f32.mrf.mxu0
  %v7560 = vpop.f32.mrf.mxu0
  %v7561 = vadd.f32 %v6952, %v7560
  %v7562 = vpop.f32.mrf.mxu0
  %7563 = vmatprep.mubr.bf16.mxu0 %v7236
  %7564 = vmatmul.mubr.bf16.gmra.mxu0 %v7235
  %v7565 = vpop.f32.mrf.mxu0
  %v7566 = vadd.f32 %v6957, %v7565
  %v7567 = vpop.f32.mrf.mxu0
  %v7568 = vpop.f32.mrf.mxu0
  %v7569 = vadd.f32 %v6960, %v7568
  %v7570 = vpop.f32.mrf.mxu0
  %7571 = vmatprep.mubr.bf16.mxu0 %v7238
  %7572 = vmatmul.mubr.bf16.gmra.mxu0 %v7237
  %v7573 = vpop.f32.mrf.mxu0
  %v7574 = vadd.f32 %v6965, %v7573
  %v7575 = vpop.f32.mrf.mxu0
  %v7576 = vpop.f32.mrf.mxu0
  %v7577 = vadd.f32 %v6968, %v7576
  %v7578 = vpop.f32.mrf.mxu0
  %7579 = vmatprep.mubr.bf16.mxu0 %v7240
  %7580 = vmatmul.mubr.bf16.gmra.mxu0 %v7239
  %v7581 = vpop.f32.mrf.mxu0
  %v7582 = vadd.f32 %v6973, %v7581
  %v7583 = vpop.f32.mrf.mxu0
  %v7584 = vpop.f32.mrf.mxu0
  %v7585 = vadd.f32 %v6976, %v7584
  %v7586 = vpop.f32.mrf.mxu0
  %7587 = vmatprep.mubr.bf16.mxu0 %v7242
  %7588 = vmatmul.mubr.bf16.gmra.mxu0 %v7241
  %v7589 = vpop.f32.mrf.mxu0
  %v7590 = vadd.f32 %v6981, %v7589
  %v7591 = vpop.f32.mrf.mxu0
  %v7592 = vpop.f32.mrf.mxu0
  %v7593 = vadd.f32 %v6984, %v7592
  %v7594 = vpop.f32.mrf.mxu0
  %7595 = vdwg.mxu0
  %s7596 = scalar_lea.vmem %s1, 1024
  %v7597 = vld [vmem:[%s7596] sm:$0xff]
  %v7598 = vld [vmem:[%s7596 + $0x8] sm:$0xff]
  %v7599 = vld [vmem:[%s7596 + $0x10] sm:$0xff]
  %v7600 = vld [vmem:[%s7596 + $0x18] sm:$0xff]
  %v7601 = vld [vmem:[%s7596 + $0x20] sm:$0xff]
  %v7602 = vld [vmem:[%s7596 + $0x28] sm:$0xff]
  %v7603 = vld [vmem:[%s7596 + $0x30] sm:$0xff]
  %v7604 = vld [vmem:[%s7596 + $0x38] sm:$0xff]
  %v7605 = vld [vmem:[%s7596 + $0x40] sm:$0xff]
  %v7606 = vld [vmem:[%s7596 + $0x48] sm:$0xff]
  %v7607 = vld [vmem:[%s7596 + $0x50] sm:$0xff]
  %v7608 = vld [vmem:[%s7596 + $0x58] sm:$0xff]
  %v7609 = vld [vmem:[%s7596 + $0x60] sm:$0xff]
  %v7610 = vld [vmem:[%s7596 + $0x68] sm:$0xff]
  %v7611 = vld [vmem:[%s7596 + $0x70] sm:$0xff]
  %v7612 = vld [vmem:[%s7596 + $0x78] sm:$0xff]
  %v7613 = vld [vmem:[%s7596 + $0x80] sm:$0xff]
  %v7614 = vld [vmem:[%s7596 + $0x88] sm:$0xff]
  %v7615 = vld [vmem:[%s7596 + $0x90] sm:$0xff]
  %v7616 = vld [vmem:[%s7596 + $0x98] sm:$0xff]
  %v7617 = vld [vmem:[%s7596 + $0xa0] sm:$0xff]
  %v7618 = vld [vmem:[%s7596 + $0xa8] sm:$0xff]
  %v7619 = vld [vmem:[%s7596 + $0xb0] sm:$0xff]
  %v7620 = vld [vmem:[%s7596 + $0xb8] sm:$0xff]
  %v7621 = vld [vmem:[%s7596 + $0xc0] sm:$0xff]
  %v7622 = vld [vmem:[%s7596 + $0xc8] sm:$0xff]
  %v7623 = vld [vmem:[%s7596 + $0xd0] sm:$0xff]
  %v7624 = vld [vmem:[%s7596 + $0xd8] sm:$0xff]
  %v7625 = vld [vmem:[%s7596 + $0xe0] sm:$0xff]
  %v7626 = vld [vmem:[%s7596 + $0xe8] sm:$0xff]
  %v7627 = vld [vmem:[%s7596 + $0xf0] sm:$0xff]
  %v7628 = vld [vmem:[%s7596 + $0xf8] sm:$0xff]
  %v7629 = vld [vmem:[%s7596 + $0x100] sm:$0xff]
  %v7630 = vld [vmem:[%s7596 + $0x108] sm:$0xff]
  %v7631 = vld [vmem:[%s7596 + $0x110] sm:$0xff]
  %v7632 = vld [vmem:[%s7596 + $0x118] sm:$0xff]
  %v7633 = vld [vmem:[%s7596 + $0x120] sm:$0xff]
  %v7634 = vld [vmem:[%s7596 + $0x128] sm:$0xff]
  %v7635 = vld [vmem:[%s7596 + $0x130] sm:$0xff]
  %v7636 = vld [vmem:[%s7596 + $0x138] sm:$0xff]
  %v7637 = vld [vmem:[%s7596 + $0x140] sm:$0xff]
  %v7638 = vld [vmem:[%s7596 + $0x148] sm:$0xff]
  %v7639 = vld [vmem:[%s7596 + $0x150] sm:$0xff]
  %v7640 = vld [vmem:[%s7596 + $0x158] sm:$0xff]
  %v7641 = vld [vmem:[%s7596 + $0x160] sm:$0xff]
  %v7642 = vld [vmem:[%s7596 + $0x168] sm:$0xff]
  %v7643 = vld [vmem:[%s7596 + $0x170] sm:$0xff]
  %v7644 = vld [vmem:[%s7596 + $0x178] sm:$0xff]
  %v7645 = vld [vmem:[%s7596 + $0x180] sm:$0xff]
  %v7646 = vld [vmem:[%s7596 + $0x188] sm:$0xff]
  %v7647 = vld [vmem:[%s7596 + $0x190] sm:$0xff]
  %v7648 = vld [vmem:[%s7596 + $0x198] sm:$0xff]
  %v7649 = vld [vmem:[%s7596 + $0x1a0] sm:$0xff]
  %v7650 = vld [vmem:[%s7596 + $0x1a8] sm:$0xff]
  %v7651 = vld [vmem:[%s7596 + $0x1b0] sm:$0xff]
  %v7652 = vld [vmem:[%s7596 + $0x1b8] sm:$0xff]
  %v7653 = vld [vmem:[%s7596 + $0x1c0] sm:$0xff]
  %v7654 = vld [vmem:[%s7596 + $0x1c8] sm:$0xff]
  %v7655 = vld [vmem:[%s7596 + $0x1d0] sm:$0xff]
  %v7656 = vld [vmem:[%s7596 + $0x1d8] sm:$0xff]
  %v7657 = vld [vmem:[%s7596 + $0x1e0] sm:$0xff]
  %v7658 = vld [vmem:[%s7596 + $0x1e8] sm:$0xff]
  %v7659 = vld [vmem:[%s7596 + $0x1f0] sm:$0xff]
  %v7660 = vld [vmem:[%s7596 + $0x1f8] sm:$0xff]
  %v7661 = vpack.c.bf16 %v6122, %v6121
  %v7662 = vpack.c.bf16 %v6124, %v6123
  %v7663 = vpack.c.bf16 %v6126, %v6125
  %v7664 = vpack.c.bf16 %v6128, %v6127
  %v7665 = vpack.c.bf16 %v6130, %v6129
  %v7666 = vpack.c.bf16 %v6132, %v6131
  %v7667 = vpack.c.bf16 %v6134, %v6133
  %v7668 = vpack.c.bf16 %v6136, %v6135
  %v7669 = vpack.c.bf16 %v6138, %v6137
  %v7670 = vpack.c.bf16 %v6140, %v6139
  %v7671 = vpack.c.bf16 %v6142, %v6141
  %v7672 = vpack.c.bf16 %v6144, %v6143
  %v7673 = vpack.c.bf16 %v6146, %v6145
  %v7674 = vpack.c.bf16 %v6148, %v6147
  %v7675 = vpack.c.bf16 %v6150, %v6149
  %v7676 = vpack.c.bf16 %v6152, %v6151
  %v7741 = vunpack.c.l.b16 %v7597
  %v7742 = vunpack.c.h.b16 %v7597
  %v7743 = vunpack.c.l.b16 %v7598
  %v7744 = vunpack.c.h.b16 %v7598
  %v7745 = vunpack.c.l.b16 %v7599
  %v7746 = vunpack.c.h.b16 %v7599
  %v7747 = vunpack.c.l.b16 %v7600
  %v7748 = vunpack.c.h.b16 %v7600
  %v7749 = vunpack.c.l.b16 %v7601
  %v7750 = vunpack.c.h.b16 %v7601
  %v7751 = vunpack.c.l.b16 %v7602
  %v7752 = vunpack.c.h.b16 %v7602
  %v7753 = vunpack.c.l.b16 %v7603
  %v7754 = vunpack.c.h.b16 %v7603
  %v7755 = vunpack.c.l.b16 %v7604
  %v7756 = vunpack.c.h.b16 %v7604
  %v7757 = vunpack.c.l.b16 %v7605
  %v7758 = vunpack.c.h.b16 %v7605
  %v7759 = vunpack.c.l.b16 %v7606
  %v7760 = vunpack.c.h.b16 %v7606
  %v7761 = vunpack.c.l.b16 %v7607
  %v7762 = vunpack.c.h.b16 %v7607
  %v7763 = vunpack.c.l.b16 %v7608
  %v7764 = vunpack.c.h.b16 %v7608
  %v7765 = vunpack.c.l.b16 %v7609
  %v7766 = vunpack.c.h.b16 %v7609
  %v7767 = vunpack.c.l.b16 %v7610
  %v7768 = vunpack.c.h.b16 %v7610
  %v7769 = vunpack.c.l.b16 %v7611
  %v7770 = vunpack.c.h.b16 %v7611
  %v7771 = vunpack.c.l.b16 %v7612
  %v7772 = vunpack.c.h.b16 %v7612
  %v7773 = vunpack.c.l.b16 %v7613
  %v7774 = vunpack.c.h.b16 %v7613
  %v7775 = vunpack.c.l.b16 %v7614
  %v7776 = vunpack.c.h.b16 %v7614
  %v7777 = vunpack.c.l.b16 %v7615
  %v7778 = vunpack.c.h.b16 %v7615
  %v7779 = vunpack.c.l.b16 %v7616
  %v7780 = vunpack.c.h.b16 %v7616
  %v7781 = vunpack.c.l.b16 %v7617
  %v7782 = vunpack.c.h.b16 %v7617
  %v7783 = vunpack.c.l.b16 %v7618
  %v7784 = vunpack.c.h.b16 %v7618
  %v7785 = vunpack.c.l.b16 %v7619
  %v7786 = vunpack.c.h.b16 %v7619
  %v7787 = vunpack.c.l.b16 %v7620
  %v7788 = vunpack.c.h.b16 %v7620
  %v7789 = vunpack.c.l.b16 %v7621
  %v7790 = vunpack.c.h.b16 %v7621
  %v7791 = vunpack.c.l.b16 %v7622
  %v7792 = vunpack.c.h.b16 %v7622
  %v7793 = vunpack.c.l.b16 %v7623
  %v7794 = vunpack.c.h.b16 %v7623
  %v7795 = vunpack.c.l.b16 %v7624
  %v7796 = vunpack.c.h.b16 %v7624
  %v7797 = vunpack.c.l.b16 %v7625
  %v7798 = vunpack.c.h.b16 %v7625
  %v7799 = vunpack.c.l.b16 %v7626
  %v7800 = vunpack.c.h.b16 %v7626
  %v7801 = vunpack.c.l.b16 %v7627
  %v7802 = vunpack.c.h.b16 %v7627
  %v7803 = vunpack.c.l.b16 %v7628
  %v7804 = vunpack.c.h.b16 %v7628
  %v7805 = vunpack.c.l.b16 %v7629
  %v7806 = vunpack.c.h.b16 %v7629
  %v7807 = vunpack.c.l.b16 %v7630
  %v7808 = vunpack.c.h.b16 %v7630
  %v7809 = vunpack.c.l.b16 %v7631
  %v7810 = vunpack.c.h.b16 %v7631
  %v7811 = vunpack.c.l.b16 %v7632
  %v7812 = vunpack.c.h.b16 %v7632
  %v7813 = vunpack.c.l.b16 %v7633
  %v7814 = vunpack.c.h.b16 %v7633
  %v7815 = vunpack.c.l.b16 %v7634
  %v7816 = vunpack.c.h.b16 %v7634
  %v7817 = vunpack.c.l.b16 %v7635
  %v7818 = vunpack.c.h.b16 %v7635
  %v7819 = vunpack.c.l.b16 %v7636
  %v7820 = vunpack.c.h.b16 %v7636
  %v7821 = vunpack.c.l.b16 %v7637
  %v7822 = vunpack.c.h.b16 %v7637
  %v7823 = vunpack.c.l.b16 %v7638
  %v7824 = vunpack.c.h.b16 %v7638
  %v7825 = vunpack.c.l.b16 %v7639
  %v7826 = vunpack.c.h.b16 %v7639
  %v7827 = vunpack.c.l.b16 %v7640
  %v7828 = vunpack.c.h.b16 %v7640
  %v7829 = vunpack.c.l.b16 %v7641
  %v7830 = vunpack.c.h.b16 %v7641
  %v7831 = vunpack.c.l.b16 %v7642
  %v7832 = vunpack.c.h.b16 %v7642
  %v7833 = vunpack.c.l.b16 %v7643
  %v7834 = vunpack.c.h.b16 %v7643
  %v7835 = vunpack.c.l.b16 %v7644
  %v7836 = vunpack.c.h.b16 %v7644
  %v7837 = vunpack.c.l.b16 %v7645
  %v7838 = vunpack.c.h.b16 %v7645
  %v7839 = vunpack.c.l.b16 %v7646
  %v7840 = vunpack.c.h.b16 %v7646
  %v7841 = vunpack.c.l.b16 %v7647
  %v7842 = vunpack.c.h.b16 %v7647
  %v7843 = vunpack.c.l.b16 %v7648
  %v7844 = vunpack.c.h.b16 %v7648
  %v7845 = vunpack.c.l.b16 %v7649
  %v7846 = vunpack.c.h.b16 %v7649
  %v7847 = vunpack.c.l.b16 %v7650
  %v7848 = vunpack.c.h.b16 %v7650
  %v7849 = vunpack.c.l.b16 %v7651
  %v7850 = vunpack.c.h.b16 %v7651
  %v7851 = vunpack.c.l.b16 %v7652
  %v7852 = vunpack.c.h.b16 %v7652
  %v7853 = vunpack.c.l.b16 %v7653
  %v7854 = vunpack.c.h.b16 %v7653
  %v7855 = vunpack.c.l.b16 %v7654
  %v7856 = vunpack.c.h.b16 %v7654
  %v7857 = vunpack.c.l.b16 %v7655
  %v7858 = vunpack.c.h.b16 %v7655
  %v7859 = vunpack.c.l.b16 %v7656
  %v7860 = vunpack.c.h.b16 %v7656
  %v7861 = vunpack.c.l.b16 %v7657
  %v7862 = vunpack.c.h.b16 %v7657
  %v7863 = vunpack.c.l.b16 %v7658
  %v7864 = vunpack.c.h.b16 %v7658
  %v7865 = vunpack.c.l.b16 %v7659
  %v7866 = vunpack.c.h.b16 %v7659
  %v7867 = vunpack.c.l.b16 %v7660
  %v7868 = vunpack.c.h.b16 %v7660
  %v7869 = vpack.c.b16 %v7743, %v7741
  %v7870 = vpack.c.b16 %v7744, %v7742
  %v7871 = vpack.c.b16 %v7747, %v7745
  %v7872 = vpack.c.b16 %v7748, %v7746
  %v7873 = vpack.c.b16 %v7751, %v7749
  %v7874 = vpack.c.b16 %v7752, %v7750
  %v7875 = vpack.c.b16 %v7755, %v7753
  %v7876 = vpack.c.b16 %v7756, %v7754
  %v7877 = vpack.c.b16 %v7759, %v7757
  %v7878 = vpack.c.b16 %v7760, %v7758
  %v7879 = vpack.c.b16 %v7763, %v7761
  %v7880 = vpack.c.b16 %v7764, %v7762
  %v7881 = vpack.c.b16 %v7767, %v7765
  %v7882 = vpack.c.b16 %v7768, %v7766
  %v7883 = vpack.c.b16 %v7771, %v7769
  %v7884 = vpack.c.b16 %v7772, %v7770
  %v7885 = vpack.c.b16 %v7775, %v7773
  %v7886 = vpack.c.b16 %v7776, %v7774
  %v7887 = vpack.c.b16 %v7779, %v7777
  %v7888 = vpack.c.b16 %v7780, %v7778
  %v7889 = vpack.c.b16 %v7783, %v7781
  %v7890 = vpack.c.b16 %v7784, %v7782
  %v7891 = vpack.c.b16 %v7787, %v7785
  %v7892 = vpack.c.b16 %v7788, %v7786
  %v7893 = vpack.c.b16 %v7791, %v7789
  %v7894 = vpack.c.b16 %v7792, %v7790
  %v7895 = vpack.c.b16 %v7795, %v7793
  %v7896 = vpack.c.b16 %v7796, %v7794
  %v7897 = vpack.c.b16 %v7799, %v7797
  %v7898 = vpack.c.b16 %v7800, %v7798
  %v7899 = vpack.c.b16 %v7803, %v7801
  %v7900 = vpack.c.b16 %v7804, %v7802
  %v7901 = vpack.c.b16 %v7807, %v7805
  %v7902 = vpack.c.b16 %v7808, %v7806
  %v7903 = vpack.c.b16 %v7811, %v7809
  %v7904 = vpack.c.b16 %v7812, %v7810
  %v7905 = vpack.c.b16 %v7815, %v7813
  %v7906 = vpack.c.b16 %v7816, %v7814
  %v7907 = vpack.c.b16 %v7819, %v7817
  %v7908 = vpack.c.b16 %v7820, %v7818
  %v7909 = vpack.c.b16 %v7823, %v7821
  %v7910 = vpack.c.b16 %v7824, %v7822
  %v7911 = vpack.c.b16 %v7827, %v7825
  %v7912 = vpack.c.b16 %v7828, %v7826
  %v7913 = vpack.c.b16 %v7831, %v7829
  %v7914 = vpack.c.b16 %v7832, %v7830
  %v7915 = vpack.c.b16 %v7835, %v7833
  %v7916 = vpack.c.b16 %v7836, %v7834
  %v7917 = vpack.c.b16 %v7839, %v7837
  %v7918 = vpack.c.b16 %v7840, %v7838
  %v7919 = vpack.c.b16 %v7843, %v7841
  %v7920 = vpack.c.b16 %v7844, %v7842
  %v7921 = vpack.c.b16 %v7847, %v7845
  %v7922 = vpack.c.b16 %v7848, %v7846
  %v7923 = vpack.c.b16 %v7851, %v7849
  %v7924 = vpack.c.b16 %v7852, %v7850
  %v7925 = vpack.c.b16 %v7855, %v7853
  %v7926 = vpack.c.b16 %v7856, %v7854
  %v7927 = vpack.c.b16 %v7859, %v7857
  %v7928 = vpack.c.b16 %v7860, %v7858
  %v7929 = vpack.c.b16 %v7863, %v7861
  %v7930 = vpack.c.b16 %v7864, %v7862
  %v7931 = vpack.c.b16 %v7867, %v7865
  %v7932 = vpack.c.b16 %v7868, %v7866
  %7997 = vmatprep.subr.bf16.mxu0 0
  %7998 = vmatpush1.bf16.msra.mxu0 %v7668
  %7999 = vmatprep.subr.bf16.mxu0 0
  %8000 = vmatpush1.bf16.msra.mxu0 %v7667
  %8001 = vmatprep.subr.bf16.mxu0 0
  %8002 = vmatpush1.bf16.msra.mxu0 %v7666
  %8003 = vmatprep.subr.bf16.mxu0 0
  %8004 = vmatpush1.bf16.msra.mxu0 %v7665
  %8005 = vmatprep.subr.bf16.mxu0 0
  %8006 = vmatpush1.bf16.msra.mxu0 %v7664
  %8007 = vmatprep.subr.bf16.mxu0 0
  %8008 = vmatpush1.bf16.msra.mxu0 %v7663
  %8009 = vmatprep.subr.bf16.mxu0 0
  %8010 = vmatpush1.bf16.msra.mxu0 %v7662
  %8011 = vmatprep.subr.bf16.mxu0 0
  %8012 = vmatpush1.bf16.msra.mxu0 %v7661
  %8013 = vmatprep.subr.bf16.mxu0 0
  %8014 = vmatpush2.bf16.msra.mxu0 %v7676
  %8015 = vmatprep.subr.bf16.mxu0 0
  %8016 = vmatpush2.bf16.msra.mxu0 %v7675
  %8017 = vmatprep.subr.bf16.mxu0 0
  %8018 = vmatpush2.bf16.msra.mxu0 %v7674
  %8019 = vmatprep.subr.bf16.mxu0 0
  %8020 = vmatpush2.bf16.msra.mxu0 %v7673
  %8021 = vmatprep.subr.bf16.mxu0 0
  %8022 = vmatpush2.bf16.msra.mxu0 %v7672
  %8023 = vmatprep.subr.bf16.mxu0 0
  %8024 = vmatpush2.bf16.msra.mxu0 %v7671
  %8025 = vmatprep.subr.bf16.mxu0 0
  %8026 = vmatpush2.bf16.msra.mxu0 %v7670
  %8027 = vmatprep.subr.bf16.mxu0 0
  %8028 = vmatpush2.bf16.msra.mxu0 %v7669
  %8029 = vmatprep.mubr.bf16.mxu0 %v7870
  %8030 = vmatmul.mubr.bf16.gmra.mxu0 %v7869
  %v8031 = vpop.f32.mrf.mxu0
  %v8032 = vadd.f32 0.0, %v8031
  %v8033 = vpop.f32.mrf.mxu0
  %v8034 = vpop.f32.mrf.mxu0
  %v8035 = vadd.f32 0.0, %v8034
  %v8036 = vpop.f32.mrf.mxu0
  %8037 = vmatprep.mubr.bf16.mxu0 %v7872
  %8038 = vmatmul.mubr.bf16.gmra.mxu0 %v7871
  %v8039 = vpop.f32.mrf.mxu0
  %v8040 = vadd.f32 0.0, %v8039
  %v8041 = vpop.f32.mrf.mxu0
  %v8042 = vpop.f32.mrf.mxu0
  %v8043 = vadd.f32 0.0, %v8042
  %v8044 = vpop.f32.mrf.mxu0
  %8045 = vmatprep.mubr.bf16.mxu0 %v7874
  %8046 = vmatmul.mubr.bf16.gmra.mxu0 %v7873
  %v8047 = vpop.f32.mrf.mxu0
  %v8048 = vadd.f32 0.0, %v8047
  %v8049 = vpop.f32.mrf.mxu0
  %v8050 = vpop.f32.mrf.mxu0
  %v8051 = vadd.f32 0.0, %v8050
  %v8052 = vpop.f32.mrf.mxu0
  %8053 = vmatprep.mubr.bf16.mxu0 %v7876
  %8054 = vmatmul.mubr.bf16.gmra.mxu0 %v7875
  %v8055 = vpop.f32.mrf.mxu0
  %v8056 = vadd.f32 0.0, %v8055
  %v8057 = vpop.f32.mrf.mxu0
  %v8058 = vpop.f32.mrf.mxu0
  %v8059 = vadd.f32 0.0, %v8058
  %v8060 = vpop.f32.mrf.mxu0
  %8061 = vmatprep.mubr.bf16.mxu0 %v7878
  %8062 = vmatmul.mubr.bf16.gmra.mxu0 %v7877
  %v8063 = vpop.f32.mrf.mxu0
  %v8064 = vadd.f32 0.0, %v8063
  %v8065 = vpop.f32.mrf.mxu0
  %v8066 = vpop.f32.mrf.mxu0
  %v8067 = vadd.f32 0.0, %v8066
  %v8068 = vpop.f32.mrf.mxu0
  %8069 = vmatprep.mubr.bf16.mxu0 %v7880
  %8070 = vmatmul.mubr.bf16.gmra.mxu0 %v7879
  %v8071 = vpop.f32.mrf.mxu0
  %v8072 = vadd.f32 0.0, %v8071
  %v8073 = vpop.f32.mrf.mxu0
  %v8074 = vpop.f32.mrf.mxu0
  %v8075 = vadd.f32 0.0, %v8074
  %v8076 = vpop.f32.mrf.mxu0
  %8077 = vmatprep.mubr.bf16.mxu0 %v7882
  %8078 = vmatmul.mubr.bf16.gmra.mxu0 %v7881
  %v8079 = vpop.f32.mrf.mxu0
  %v8080 = vadd.f32 0.0, %v8079
  %v8081 = vpop.f32.mrf.mxu0
  %v8082 = vpop.f32.mrf.mxu0
  %v8083 = vadd.f32 0.0, %v8082
  %v8084 = vpop.f32.mrf.mxu0
  %8085 = vmatprep.mubr.bf16.mxu0 %v7884
  %8086 = vmatmul.mubr.bf16.gmra.mxu0 %v7883
  %v8087 = vpop.f32.mrf.mxu0
  %v8088 = vadd.f32 0.0, %v8087
  %v8089 = vpop.f32.mrf.mxu0
  %v8090 = vpop.f32.mrf.mxu0
  %v8091 = vadd.f32 0.0, %v8090
  %v8092 = vpop.f32.mrf.mxu0
  %8093 = vmatprep.mubr.bf16.mxu0 %v7886
  %8094 = vmatmul.mubr.bf16.gmra.mxu0 %v7885
  %v8095 = vpop.f32.mrf.mxu0
  %v8096 = vadd.f32 0.0, %v8095
  %v8097 = vpop.f32.mrf.mxu0
  %v8098 = vpop.f32.mrf.mxu0
  %v8099 = vadd.f32 0.0, %v8098
  %v8100 = vpop.f32.mrf.mxu0
  %8101 = vmatprep.mubr.bf16.mxu0 %v7888
  %8102 = vmatmul.mubr.bf16.gmra.mxu0 %v7887
  %v8103 = vpop.f32.mrf.mxu0
  %v8104 = vadd.f32 0.0, %v8103
  %v8105 = vpop.f32.mrf.mxu0
  %v8106 = vpop.f32.mrf.mxu0
  %v8107 = vadd.f32 0.0, %v8106
  %v8108 = vpop.f32.mrf.mxu0
  %8109 = vmatprep.mubr.bf16.mxu0 %v7890
  %8110 = vmatmul.mubr.bf16.gmra.mxu0 %v7889
  %v8111 = vpop.f32.mrf.mxu0
  %v8112 = vadd.f32 0.0, %v8111
  %v8113 = vpop.f32.mrf.mxu0
  %v8114 = vpop.f32.mrf.mxu0
  %v8115 = vadd.f32 0.0, %v8114
  %v8116 = vpop.f32.mrf.mxu0
  %8117 = vmatprep.mubr.bf16.mxu0 %v7892
  %8118 = vmatmul.mubr.bf16.gmra.mxu0 %v7891
  %v8119 = vpop.f32.mrf.mxu0
  %v8120 = vadd.f32 0.0, %v8119
  %v8121 = vpop.f32.mrf.mxu0
  %v8122 = vpop.f32.mrf.mxu0
  %v8123 = vadd.f32 0.0, %v8122
  %v8124 = vpop.f32.mrf.mxu0
  %8125 = vmatprep.mubr.bf16.mxu0 %v7894
  %8126 = vmatmul.mubr.bf16.gmra.mxu0 %v7893
  %v8127 = vpop.f32.mrf.mxu0
  %v8128 = vadd.f32 0.0, %v8127
  %v8129 = vpop.f32.mrf.mxu0
  %v8130 = vpop.f32.mrf.mxu0
  %v8131 = vadd.f32 0.0, %v8130
  %v8132 = vpop.f32.mrf.mxu0
  %8133 = vmatprep.mubr.bf16.mxu0 %v7896
  %8134 = vmatmul.mubr.bf16.gmra.mxu0 %v7895
  %v8135 = vpop.f32.mrf.mxu0
  %v8136 = vadd.f32 0.0, %v8135
  %v8137 = vpop.f32.mrf.mxu0
  %v8138 = vpop.f32.mrf.mxu0
  %v8139 = vadd.f32 0.0, %v8138
  %v8140 = vpop.f32.mrf.mxu0
  %8141 = vmatprep.mubr.bf16.mxu0 %v7898
  %8142 = vmatmul.mubr.bf16.gmra.mxu0 %v7897
  %v8143 = vpop.f32.mrf.mxu0
  %v8144 = vadd.f32 0.0, %v8143
  %v8145 = vpop.f32.mrf.mxu0
  %v8146 = vpop.f32.mrf.mxu0
  %v8147 = vadd.f32 0.0, %v8146
  %v8148 = vpop.f32.mrf.mxu0
  %8149 = vmatprep.mubr.bf16.mxu0 %v7900
  %8150 = vmatmul.mubr.bf16.gmra.mxu0 %v7899
  %v8151 = vpop.f32.mrf.mxu0
  %v8152 = vadd.f32 0.0, %v8151
  %v8153 = vpop.f32.mrf.mxu0
  %v8154 = vpop.f32.mrf.mxu0
  %v8155 = vadd.f32 0.0, %v8154
  %v8156 = vpop.f32.mrf.mxu0
  %8157 = vmatprep.mubr.bf16.mxu0 %v7902
  %8158 = vmatmul.mubr.bf16.gmra.mxu0 %v7901
  %v8159 = vpop.f32.mrf.mxu0
  %v8160 = vadd.f32 0.0, %v8159
  %v8161 = vpop.f32.mrf.mxu0
  %v8162 = vpop.f32.mrf.mxu0
  %v8163 = vadd.f32 0.0, %v8162
  %v8164 = vpop.f32.mrf.mxu0
  %8165 = vmatprep.mubr.bf16.mxu0 %v7904
  %8166 = vmatmul.mubr.bf16.gmra.mxu0 %v7903
  %v8167 = vpop.f32.mrf.mxu0
  %v8168 = vadd.f32 0.0, %v8167
  %v8169 = vpop.f32.mrf.mxu0
  %v8170 = vpop.f32.mrf.mxu0
  %v8171 = vadd.f32 0.0, %v8170
  %v8172 = vpop.f32.mrf.mxu0
  %8173 = vmatprep.mubr.bf16.mxu0 %v7906
  %8174 = vmatmul.mubr.bf16.gmra.mxu0 %v7905
  %v8175 = vpop.f32.mrf.mxu0
  %v8176 = vadd.f32 0.0, %v8175
  %v8177 = vpop.f32.mrf.mxu0
  %v8178 = vpop.f32.mrf.mxu0
  %v8179 = vadd.f32 0.0, %v8178
  %v8180 = vpop.f32.mrf.mxu0
  %8181 = vmatprep.mubr.bf16.mxu0 %v7908
  %8182 = vmatmul.mubr.bf16.gmra.mxu0 %v7907
  %v8183 = vpop.f32.mrf.mxu0
  %v8184 = vadd.f32 0.0, %v8183
  %v8185 = vpop.f32.mrf.mxu0
  %v8186 = vpop.f32.mrf.mxu0
  %v8187 = vadd.f32 0.0, %v8186
  %v8188 = vpop.f32.mrf.mxu0
  %8189 = vmatprep.mubr.bf16.mxu0 %v7910
  %8190 = vmatmul.mubr.bf16.gmra.mxu0 %v7909
  %v8191 = vpop.f32.mrf.mxu0
  %v8192 = vadd.f32 0.0, %v8191
  %v8193 = vpop.f32.mrf.mxu0
  %v8194 = vpop.f32.mrf.mxu0
  %v8195 = vadd.f32 0.0, %v8194
  %v8196 = vpop.f32.mrf.mxu0
  %8197 = vmatprep.mubr.bf16.mxu0 %v7912
  %8198 = vmatmul.mubr.bf16.gmra.mxu0 %v7911
  %v8199 = vpop.f32.mrf.mxu0
  %v8200 = vadd.f32 0.0, %v8199
  %v8201 = vpop.f32.mrf.mxu0
  %v8202 = vpop.f32.mrf.mxu0
  %v8203 = vadd.f32 0.0, %v8202
  %v8204 = vpop.f32.mrf.mxu0
  %8205 = vmatprep.mubr.bf16.mxu0 %v7914
  %8206 = vmatmul.mubr.bf16.gmra.mxu0 %v7913
  %v8207 = vpop.f32.mrf.mxu0
  %v8208 = vadd.f32 0.0, %v8207
  %v8209 = vpop.f32.mrf.mxu0
  %v8210 = vpop.f32.mrf.mxu0
  %v8211 = vadd.f32 0.0, %v8210
  %v8212 = vpop.f32.mrf.mxu0
  %8213 = vmatprep.mubr.bf16.mxu0 %v7916
  %8214 = vmatmul.mubr.bf16.gmra.mxu0 %v7915
  %v8215 = vpop.f32.mrf.mxu0
  %v8216 = vadd.f32 0.0, %v8215
  %v8217 = vpop.f32.mrf.mxu0
  %v8218 = vpop.f32.mrf.mxu0
  %v8219 = vadd.f32 0.0, %v8218
  %v8220 = vpop.f32.mrf.mxu0
  %8221 = vmatprep.mubr.bf16.mxu0 %v7918
  %8222 = vmatmul.mubr.bf16.gmra.mxu0 %v7917
  %v8223 = vpop.f32.mrf.mxu0
  %v8224 = vadd.f32 0.0, %v8223
  %v8225 = vpop.f32.mrf.mxu0
  %v8226 = vpop.f32.mrf.mxu0
  %v8227 = vadd.f32 0.0, %v8226
  %v8228 = vpop.f32.mrf.mxu0
  %8229 = vmatprep.mubr.bf16.mxu0 %v7920
  %8230 = vmatmul.mubr.bf16.gmra.mxu0 %v7919
  %v8231 = vpop.f32.mrf.mxu0
  %v8232 = vadd.f32 0.0, %v8231
  %v8233 = vpop.f32.mrf.mxu0
  %v8234 = vpop.f32.mrf.mxu0
  %v8235 = vadd.f32 0.0, %v8234
  %v8236 = vpop.f32.mrf.mxu0
  %8237 = vmatprep.mubr.bf16.mxu0 %v7922
  %8238 = vmatmul.mubr.bf16.gmra.mxu0 %v7921
  %v8239 = vpop.f32.mrf.mxu0
  %v8240 = vadd.f32 0.0, %v8239
  %v8241 = vpop.f32.mrf.mxu0
  %v8242 = vpop.f32.mrf.mxu0
  %v8243 = vadd.f32 0.0, %v8242
  %v8244 = vpop.f32.mrf.mxu0
  %8245 = vmatprep.mubr.bf16.mxu0 %v7924
  %8246 = vmatmul.mubr.bf16.gmra.mxu0 %v7923
  %v8247 = vpop.f32.mrf.mxu0
  %v8248 = vadd.f32 0.0, %v8247
  %v8249 = vpop.f32.mrf.mxu0
  %v8250 = vpop.f32.mrf.mxu0
  %v8251 = vadd.f32 0.0, %v8250
  %v8252 = vpop.f32.mrf.mxu0
  %8253 = vmatprep.mubr.bf16.mxu0 %v7926
  %8254 = vmatmul.mubr.bf16.gmra.mxu0 %v7925
  %v8255 = vpop.f32.mrf.mxu0
  %v8256 = vadd.f32 0.0, %v8255
  %v8257 = vpop.f32.mrf.mxu0
  %v8258 = vpop.f32.mrf.mxu0
  %v8259 = vadd.f32 0.0, %v8258
  %v8260 = vpop.f32.mrf.mxu0
  %8261 = vmatprep.mubr.bf16.mxu0 %v7928
  %8262 = vmatmul.mubr.bf16.gmra.mxu0 %v7927
  %v8263 = vpop.f32.mrf.mxu0
  %v8264 = vadd.f32 0.0, %v8263
  %v8265 = vpop.f32.mrf.mxu0
  %v8266 = vpop.f32.mrf.mxu0
  %v8267 = vadd.f32 0.0, %v8266
  %v8268 = vpop.f32.mrf.mxu0
  %8269 = vmatprep.mubr.bf16.mxu0 %v7930
  %8270 = vmatmul.mubr.bf16.gmra.mxu0 %v7929
  %v8271 = vpop.f32.mrf.mxu0
  %v8272 = vadd.f32 0.0, %v8271
  %v8273 = vpop.f32.mrf.mxu0
  %v8274 = vpop.f32.mrf.mxu0
  %v8275 = vadd.f32 0.0, %v8274
  %v8276 = vpop.f32.mrf.mxu0
  %8277 = vmatprep.mubr.bf16.mxu0 %v7932
  %8278 = vmatmul.mubr.bf16.gmra.mxu0 %v7931
  %v8279 = vpop.f32.mrf.mxu0
  %v8280 = vadd.f32 0.0, %v8279
  %v8281 = vpop.f32.mrf.mxu0
  %v8282 = vpop.f32.mrf.mxu0
  %v8283 = vadd.f32 0.0, %v8282
  %v8284 = vpop.f32.mrf.mxu0
  %8285 = vdwg.mxu0
  %v8286 = vadd.f32 %v7342, %v8032
  %v8287 = vadd.f32 %v7345, %v8035
  %v8288 = vadd.f32 %v7350, %v8040
  %v8289 = vadd.f32 %v7353, %v8043
  %v8290 = vadd.f32 %v7358, %v8048
  %v8291 = vadd.f32 %v7361, %v8051
  %v8292 = vadd.f32 %v7366, %v8056
  %v8293 = vadd.f32 %v7369, %v8059
  %v8294 = vadd.f32 %v7374, %v8064
  %v8295 = vadd.f32 %v7377, %v8067
  %v8296 = vadd.f32 %v7382, %v8072
  %v8297 = vadd.f32 %v7385, %v8075
  %v8298 = vadd.f32 %v7390, %v8080
  %v8299 = vadd.f32 %v7393, %v8083
  %v8300 = vadd.f32 %v7398, %v8088
  %v8301 = vadd.f32 %v7401, %v8091
  %v8302 = vadd.f32 %v7406, %v8096
  %v8303 = vadd.f32 %v7409, %v8099
  %v8304 = vadd.f32 %v7414, %v8104
  %v8305 = vadd.f32 %v7417, %v8107
  %v8306 = vadd.f32 %v7422, %v8112
  %v8307 = vadd.f32 %v7425, %v8115
  %v8308 = vadd.f32 %v7430, %v8120
  %v8309 = vadd.f32 %v7433, %v8123
  %v8310 = vadd.f32 %v7438, %v8128
  %v8311 = vadd.f32 %v7441, %v8131
  %v8312 = vadd.f32 %v7446, %v8136
  %v8313 = vadd.f32 %v7449, %v8139
  %v8314 = vadd.f32 %v7454, %v8144
  %v8315 = vadd.f32 %v7457, %v8147
  %v8316 = vadd.f32 %v7462, %v8152
  %v8317 = vadd.f32 %v7465, %v8155
  %v8318 = vadd.f32 %v7470, %v8160
  %v8319 = vadd.f32 %v7473, %v8163
  %v8320 = vadd.f32 %v7478, %v8168
  %v8321 = vadd.f32 %v7481, %v8171
  %v8322 = vadd.f32 %v7486, %v8176
  %v8323 = vadd.f32 %v7489, %v8179
  %v8324 = vadd.f32 %v7494, %v8184
  %v8325 = vadd.f32 %v7497, %v8187
  %v8326 = vadd.f32 %v7502, %v8192
  %v8327 = vadd.f32 %v7505, %v8195
  %v8328 = vadd.f32 %v7510, %v8200
  %v8329 = vadd.f32 %v7513, %v8203
  %v8330 = vadd.f32 %v7518, %v8208
  %v8331 = vadd.f32 %v7521, %v8211
  %v8332 = vadd.f32 %v7526, %v8216
  %v8333 = vadd.f32 %v7529, %v8219
  %v8334 = vadd.f32 %v7534, %v8224
  %v8335 = vadd.f32 %v7537, %v8227
  %v8336 = vadd.f32 %v7542, %v8232
  %v8337 = vadd.f32 %v7545, %v8235
  %v8338 = vadd.f32 %v7550, %v8240
  %v8339 = vadd.f32 %v7553, %v8243
  %v8340 = vadd.f32 %v7558, %v8248
  %v8341 = vadd.f32 %v7561, %v8251
  %v8342 = vadd.f32 %v7566, %v8256
  %v8343 = vadd.f32 %v7569, %v8259
  %v8344 = vadd.f32 %v7574, %v8264
  %v8345 = vadd.f32 %v7577, %v8267
  %v8346 = vadd.f32 %v7582, %v8272
  %v8347 = vadd.f32 %v7585, %v8275
  %v8348 = vadd.f32 %v7590, %v8280
  %v8349 = vadd.f32 %v7593, %v8283
  %s8350 = scalar_lea.vmem %s1, 1536
  %v8351 = vld [vmem:[%s8350] sm:$0xff]
  %v8352 = vld [vmem:[%s8350 + $0x8] sm:$0xff]
  %v8353 = vld [vmem:[%s8350 + $0x10] sm:$0xff]
  %v8354 = vld [vmem:[%s8350 + $0x18] sm:$0xff]
  %v8355 = vld [vmem:[%s8350 + $0x20] sm:$0xff]
  %v8356 = vld [vmem:[%s8350 + $0x28] sm:$0xff]
  %v8357 = vld [vmem:[%s8350 + $0x30] sm:$0xff]
  %v8358 = vld [vmem:[%s8350 + $0x38] sm:$0xff]
  %v8359 = vld [vmem:[%s8350 + $0x40] sm:$0xff]
  %v8360 = vld [vmem:[%s8350 + $0x48] sm:$0xff]
  %v8361 = vld [vmem:[%s8350 + $0x50] sm:$0xff]
  %v8362 = vld [vmem:[%s8350 + $0x58] sm:$0xff]
  %v8363 = vld [vmem:[%s8350 + $0x60] sm:$0xff]
  %v8364 = vld [vmem:[%s8350 + $0x68] sm:$0xff]
  %v8365 = vld [vmem:[%s8350 + $0x70] sm:$0xff]
  %v8366 = vld [vmem:[%s8350 + $0x78] sm:$0xff]
  %v8367 = vld [vmem:[%s8350 + $0x80] sm:$0xff]
  %v8368 = vld [vmem:[%s8350 + $0x88] sm:$0xff]
  %v8369 = vld [vmem:[%s8350 + $0x90] sm:$0xff]
  %v8370 = vld [vmem:[%s8350 + $0x98] sm:$0xff]
  %v8371 = vld [vmem:[%s8350 + $0xa0] sm:$0xff]
  %v8372 = vld [vmem:[%s8350 + $0xa8] sm:$0xff]
  %v8373 = vld [vmem:[%s8350 + $0xb0] sm:$0xff]
  %v8374 = vld [vmem:[%s8350 + $0xb8] sm:$0xff]
  %v8375 = vld [vmem:[%s8350 + $0xc0] sm:$0xff]
  %v8376 = vld [vmem:[%s8350 + $0xc8] sm:$0xff]
  %v8377 = vld [vmem:[%s8350 + $0xd0] sm:$0xff]
  %v8378 = vld [vmem:[%s8350 + $0xd8] sm:$0xff]
  %v8379 = vld [vmem:[%s8350 + $0xe0] sm:$0xff]
  %v8380 = vld [vmem:[%s8350 + $0xe8] sm:$0xff]
  %v8381 = vld [vmem:[%s8350 + $0xf0] sm:$0xff]
  %v8382 = vld [vmem:[%s8350 + $0xf8] sm:$0xff]
  %v8383 = vld [vmem:[%s8350 + $0x100] sm:$0xff]
  %v8384 = vld [vmem:[%s8350 + $0x108] sm:$0xff]
  %v8385 = vld [vmem:[%s8350 + $0x110] sm:$0xff]
  %v8386 = vld [vmem:[%s8350 + $0x118] sm:$0xff]
  %v8387 = vld [vmem:[%s8350 + $0x120] sm:$0xff]
  %v8388 = vld [vmem:[%s8350 + $0x128] sm:$0xff]
  %v8389 = vld [vmem:[%s8350 + $0x130] sm:$0xff]
  %v8390 = vld [vmem:[%s8350 + $0x138] sm:$0xff]
  %v8391 = vld [vmem:[%s8350 + $0x140] sm:$0xff]
  %v8392 = vld [vmem:[%s8350 + $0x148] sm:$0xff]
  %v8393 = vld [vmem:[%s8350 + $0x150] sm:$0xff]
  %v8394 = vld [vmem:[%s8350 + $0x158] sm:$0xff]
  %v8395 = vld [vmem:[%s8350 + $0x160] sm:$0xff]
  %v8396 = vld [vmem:[%s8350 + $0x168] sm:$0xff]
  %v8397 = vld [vmem:[%s8350 + $0x170] sm:$0xff]
  %v8398 = vld [vmem:[%s8350 + $0x178] sm:$0xff]
  %v8399 = vld [vmem:[%s8350 + $0x180] sm:$0xff]
  %v8400 = vld [vmem:[%s8350 + $0x188] sm:$0xff]
  %v8401 = vld [vmem:[%s8350 + $0x190] sm:$0xff]
  %v8402 = vld [vmem:[%s8350 + $0x198] sm:$0xff]
  %v8403 = vld [vmem:[%s8350 + $0x1a0] sm:$0xff]
  %v8404 = vld [vmem:[%s8350 + $0x1a8] sm:$0xff]
  %v8405 = vld [vmem:[%s8350 + $0x1b0] sm:$0xff]
  %v8406 = vld [vmem:[%s8350 + $0x1b8] sm:$0xff]
  %v8407 = vld [vmem:[%s8350 + $0x1c0] sm:$0xff]
  %v8408 = vld [vmem:[%s8350 + $0x1c8] sm:$0xff]
  %v8409 = vld [vmem:[%s8350 + $0x1d0] sm:$0xff]
  %v8410 = vld [vmem:[%s8350 + $0x1d8] sm:$0xff]
  %v8411 = vld [vmem:[%s8350 + $0x1e0] sm:$0xff]
  %v8412 = vld [vmem:[%s8350 + $0x1e8] sm:$0xff]
  %v8413 = vld [vmem:[%s8350 + $0x1f0] sm:$0xff]
  %v8414 = vld [vmem:[%s8350 + $0x1f8] sm:$0xff]
  %v8415 = vpack.c.bf16 %v6154, %v6153
  %v8416 = vpack.c.bf16 %v6156, %v6155
  %v8417 = vpack.c.bf16 %v6158, %v6157
  %v8418 = vpack.c.bf16 %v6160, %v6159
  %v8419 = vpack.c.bf16 %v6162, %v6161
  %v8420 = vpack.c.bf16 %v6164, %v6163
  %v8421 = vpack.c.bf16 %v6166, %v6165
  %v8422 = vpack.c.bf16 %v6168, %v6167
  %v8423 = vpack.c.bf16 %v6170, %v6169
  %v8424 = vpack.c.bf16 %v6172, %v6171
  %v8425 = vpack.c.bf16 %v6174, %v6173
  %v8426 = vpack.c.bf16 %v6176, %v6175
  %v8427 = vpack.c.bf16 %v6178, %v6177
  %v8428 = vpack.c.bf16 %v6180, %v6179
  %v8429 = vpack.c.bf16 %v6182, %v6181
  %v8430 = vpack.c.bf16 %v6184, %v6183
  %v8495 = vunpack.c.l.b16 %v8351
  %v8496 = vunpack.c.h.b16 %v8351
  %v8497 = vunpack.c.l.b16 %v8352
  %v8498 = vunpack.c.h.b16 %v8352
  %v8499 = vunpack.c.l.b16 %v8353
  %v8500 = vunpack.c.h.b16 %v8353
  %v8501 = vunpack.c.l.b16 %v8354
  %v8502 = vunpack.c.h.b16 %v8354
  %v8503 = vunpack.c.l.b16 %v8355
  %v8504 = vunpack.c.h.b16 %v8355
  %v8505 = vunpack.c.l.b16 %v8356
  %v8506 = vunpack.c.h.b16 %v8356
  %v8507 = vunpack.c.l.b16 %v8357
  %v8508 = vunpack.c.h.b16 %v8357
  %v8509 = vunpack.c.l.b16 %v8358
  %v8510 = vunpack.c.h.b16 %v8358
  %v8511 = vunpack.c.l.b16 %v8359
  %v8512 = vunpack.c.h.b16 %v8359
  %v8513 = vunpack.c.l.b16 %v8360
  %v8514 = vunpack.c.h.b16 %v8360
  %v8515 = vunpack.c.l.b16 %v8361
  %v8516 = vunpack.c.h.b16 %v8361
  %v8517 = vunpack.c.l.b16 %v8362
  %v8518 = vunpack.c.h.b16 %v8362
  %v8519 = vunpack.c.l.b16 %v8363
  %v8520 = vunpack.c.h.b16 %v8363
  %v8521 = vunpack.c.l.b16 %v8364
  %v8522 = vunpack.c.h.b16 %v8364
  %v8523 = vunpack.c.l.b16 %v8365
  %v8524 = vunpack.c.h.b16 %v8365
  %v8525 = vunpack.c.l.b16 %v8366
  %v8526 = vunpack.c.h.b16 %v8366
  %v8527 = vunpack.c.l.b16 %v8367
  %v8528 = vunpack.c.h.b16 %v8367
  %v8529 = vunpack.c.l.b16 %v8368
  %v8530 = vunpack.c.h.b16 %v8368
  %v8531 = vunpack.c.l.b16 %v8369
  %v8532 = vunpack.c.h.b16 %v8369
  %v8533 = vunpack.c.l.b16 %v8370
  %v8534 = vunpack.c.h.b16 %v8370
  %v8535 = vunpack.c.l.b16 %v8371
  %v8536 = vunpack.c.h.b16 %v8371
  %v8537 = vunpack.c.l.b16 %v8372
  %v8538 = vunpack.c.h.b16 %v8372
  %v8539 = vunpack.c.l.b16 %v8373
  %v8540 = vunpack.c.h.b16 %v8373
  %v8541 = vunpack.c.l.b16 %v8374
  %v8542 = vunpack.c.h.b16 %v8374
  %v8543 = vunpack.c.l.b16 %v8375
  %v8544 = vunpack.c.h.b16 %v8375
  %v8545 = vunpack.c.l.b16 %v8376
  %v8546 = vunpack.c.h.b16 %v8376
  %v8547 = vunpack.c.l.b16 %v8377
  %v8548 = vunpack.c.h.b16 %v8377
  %v8549 = vunpack.c.l.b16 %v8378
  %v8550 = vunpack.c.h.b16 %v8378
  %v8551 = vunpack.c.l.b16 %v8379
  %v8552 = vunpack.c.h.b16 %v8379
  %v8553 = vunpack.c.l.b16 %v8380
  %v8554 = vunpack.c.h.b16 %v8380
  %v8555 = vunpack.c.l.b16 %v8381
  %v8556 = vunpack.c.h.b16 %v8381
  %v8557 = vunpack.c.l.b16 %v8382
  %v8558 = vunpack.c.h.b16 %v8382
  %v8559 = vunpack.c.l.b16 %v8383
  %v8560 = vunpack.c.h.b16 %v8383
  %v8561 = vunpack.c.l.b16 %v8384
  %v8562 = vunpack.c.h.b16 %v8384
  %v8563 = vunpack.c.l.b16 %v8385
  %v8564 = vunpack.c.h.b16 %v8385
  %v8565 = vunpack.c.l.b16 %v8386
  %v8566 = vunpack.c.h.b16 %v8386
  %v8567 = vunpack.c.l.b16 %v8387
  %v8568 = vunpack.c.h.b16 %v8387
  %v8569 = vunpack.c.l.b16 %v8388
  %v8570 = vunpack.c.h.b16 %v8388
  %v8571 = vunpack.c.l.b16 %v8389
  %v8572 = vunpack.c.h.b16 %v8389
  %v8573 = vunpack.c.l.b16 %v8390
  %v8574 = vunpack.c.h.b16 %v8390
  %v8575 = vunpack.c.l.b16 %v8391
  %v8576 = vunpack.c.h.b16 %v8391
  %v8577 = vunpack.c.l.b16 %v8392
  %v8578 = vunpack.c.h.b16 %v8392
  %v8579 = vunpack.c.l.b16 %v8393
  %v8580 = vunpack.c.h.b16 %v8393
  %v8581 = vunpack.c.l.b16 %v8394
  %v8582 = vunpack.c.h.b16 %v8394
  %v8583 = vunpack.c.l.b16 %v8395
  %v8584 = vunpack.c.h.b16 %v8395
  %v8585 = vunpack.c.l.b16 %v8396
  %v8586 = vunpack.c.h.b16 %v8396
  %v8587 = vunpack.c.l.b16 %v8397
  %v8588 = vunpack.c.h.b16 %v8397
  %v8589 = vunpack.c.l.b16 %v8398
  %v8590 = vunpack.c.h.b16 %v8398
  %v8591 = vunpack.c.l.b16 %v8399
  %v8592 = vunpack.c.h.b16 %v8399
  %v8593 = vunpack.c.l.b16 %v8400
  %v8594 = vunpack.c.h.b16 %v8400
  %v8595 = vunpack.c.l.b16 %v8401
  %v8596 = vunpack.c.h.b16 %v8401
  %v8597 = vunpack.c.l.b16 %v8402
  %v8598 = vunpack.c.h.b16 %v8402
  %v8599 = vunpack.c.l.b16 %v8403
  %v8600 = vunpack.c.h.b16 %v8403
  %v8601 = vunpack.c.l.b16 %v8404
  %v8602 = vunpack.c.h.b16 %v8404
  %v8603 = vunpack.c.l.b16 %v8405
  %v8604 = vunpack.c.h.b16 %v8405
  %v8605 = vunpack.c.l.b16 %v8406
  %v8606 = vunpack.c.h.b16 %v8406
  %v8607 = vunpack.c.l.b16 %v8407
  %v8608 = vunpack.c.h.b16 %v8407
  %v8609 = vunpack.c.l.b16 %v8408
  %v8610 = vunpack.c.h.b16 %v8408
  %v8611 = vunpack.c.l.b16 %v8409
  %v8612 = vunpack.c.h.b16 %v8409
  %v8613 = vunpack.c.l.b16 %v8410
  %v8614 = vunpack.c.h.b16 %v8410
  %v8615 = vunpack.c.l.b16 %v8411
  %v8616 = vunpack.c.h.b16 %v8411
  %v8617 = vunpack.c.l.b16 %v8412
  %v8618 = vunpack.c.h.b16 %v8412
  %v8619 = vunpack.c.l.b16 %v8413
  %v8620 = vunpack.c.h.b16 %v8413
  %v8621 = vunpack.c.l.b16 %v8414
  %v8622 = vunpack.c.h.b16 %v8414
  %v8623 = vpack.c.b16 %v8497, %v8495
  %v8624 = vpack.c.b16 %v8498, %v8496
  %v8625 = vpack.c.b16 %v8501, %v8499
  %v8626 = vpack.c.b16 %v8502, %v8500
  %v8627 = vpack.c.b16 %v8505, %v8503
  %v8628 = vpack.c.b16 %v8506, %v8504
  %v8629 = vpack.c.b16 %v8509, %v8507
  %v8630 = vpack.c.b16 %v8510, %v8508
  %v8631 = vpack.c.b16 %v8513, %v8511
  %v8632 = vpack.c.b16 %v8514, %v8512
  %v8633 = vpack.c.b16 %v8517, %v8515
  %v8634 = vpack.c.b16 %v8518, %v8516
  %v8635 = vpack.c.b16 %v8521, %v8519
  %v8636 = vpack.c.b16 %v8522, %v8520
  %v8637 = vpack.c.b16 %v8525, %v8523
  %v8638 = vpack.c.b16 %v8526, %v8524
  %v8639 = vpack.c.b16 %v8529, %v8527
  %v8640 = vpack.c.b16 %v8530, %v8528
  %v8641 = vpack.c.b16 %v8533, %v8531
  %v8642 = vpack.c.b16 %v8534, %v8532
  %v8643 = vpack.c.b16 %v8537, %v8535
  %v8644 = vpack.c.b16 %v8538, %v8536
  %v8645 = vpack.c.b16 %v8541, %v8539
  %v8646 = vpack.c.b16 %v8542, %v8540
  %v8647 = vpack.c.b16 %v8545, %v8543
  %v8648 = vpack.c.b16 %v8546, %v8544
  %v8649 = vpack.c.b16 %v8549, %v8547
  %v8650 = vpack.c.b16 %v8550, %v8548
  %v8651 = vpack.c.b16 %v8553, %v8551
  %v8652 = vpack.c.b16 %v8554, %v8552
  %v8653 = vpack.c.b16 %v8557, %v8555
  %v8654 = vpack.c.b16 %v8558, %v8556
  %v8655 = vpack.c.b16 %v8561, %v8559
  %v8656 = vpack.c.b16 %v8562, %v8560
  %v8657 = vpack.c.b16 %v8565, %v8563
  %v8658 = vpack.c.b16 %v8566, %v8564
  %v8659 = vpack.c.b16 %v8569, %v8567
  %v8660 = vpack.c.b16 %v8570, %v8568
  %v8661 = vpack.c.b16 %v8573, %v8571
  %v8662 = vpack.c.b16 %v8574, %v8572
  %v8663 = vpack.c.b16 %v8577, %v8575
  %v8664 = vpack.c.b16 %v8578, %v8576
  %v8665 = vpack.c.b16 %v8581, %v8579
  %v8666 = vpack.c.b16 %v8582, %v8580
  %v8667 = vpack.c.b16 %v8585, %v8583
  %v8668 = vpack.c.b16 %v8586, %v8584
  %v8669 = vpack.c.b16 %v8589, %v8587
  %v8670 = vpack.c.b16 %v8590, %v8588
  %v8671 = vpack.c.b16 %v8593, %v8591
  %v8672 = vpack.c.b16 %v8594, %v8592
  %v8673 = vpack.c.b16 %v8597, %v8595
  %v8674 = vpack.c.b16 %v8598, %v8596
  %v8675 = vpack.c.b16 %v8601, %v8599
  %v8676 = vpack.c.b16 %v8602, %v8600
  %v8677 = vpack.c.b16 %v8605, %v8603
  %v8678 = vpack.c.b16 %v8606, %v8604
  %v8679 = vpack.c.b16 %v8609, %v8607
  %v8680 = vpack.c.b16 %v8610, %v8608
  %v8681 = vpack.c.b16 %v8613, %v8611
  %v8682 = vpack.c.b16 %v8614, %v8612
  %v8683 = vpack.c.b16 %v8617, %v8615
  %v8684 = vpack.c.b16 %v8618, %v8616
  %v8685 = vpack.c.b16 %v8621, %v8619
  %v8686 = vpack.c.b16 %v8622, %v8620
  %8751 = vmatprep.subr.bf16.mxu0 0
  %8752 = vmatpush1.bf16.msra.mxu0 %v8422
  %8753 = vmatprep.subr.bf16.mxu0 0
  %8754 = vmatpush1.bf16.msra.mxu0 %v8421
  %8755 = vmatprep.subr.bf16.mxu0 0
  %8756 = vmatpush1.bf16.msra.mxu0 %v8420
  %8757 = vmatprep.subr.bf16.mxu0 0
  %8758 = vmatpush1.bf16.msra.mxu0 %v8419
  %8759 = vmatprep.subr.bf16.mxu0 0
  %8760 = vmatpush1.bf16.msra.mxu0 %v8418
  %8761 = vmatprep.subr.bf16.mxu0 0
  %8762 = vmatpush1.bf16.msra.mxu0 %v8417
  %8763 = vmatprep.subr.bf16.mxu0 0
  %8764 = vmatpush1.bf16.msra.mxu0 %v8416
  %8765 = vmatprep.subr.bf16.mxu0 0
  %8766 = vmatpush1.bf16.msra.mxu0 %v8415
  %8767 = vmatprep.subr.bf16.mxu0 0
  %8768 = vmatpush2.bf16.msra.mxu0 %v8430
  %8769 = vmatprep.subr.bf16.mxu0 0
  %8770 = vmatpush2.bf16.msra.mxu0 %v8429
  %8771 = vmatprep.subr.bf16.mxu0 0
  %8772 = vmatpush2.bf16.msra.mxu0 %v8428
  %8773 = vmatprep.subr.bf16.mxu0 0
  %8774 = vmatpush2.bf16.msra.mxu0 %v8427
  %8775 = vmatprep.subr.bf16.mxu0 0
  %8776 = vmatpush2.bf16.msra.mxu0 %v8426
  %8777 = vmatprep.subr.bf16.mxu0 0
  %8778 = vmatpush2.bf16.msra.mxu0 %v8425
  %8779 = vmatprep.subr.bf16.mxu0 0
  %8780 = vmatpush2.bf16.msra.mxu0 %v8424
  %8781 = vmatprep.subr.bf16.mxu0 0
  %8782 = vmatpush2.bf16.msra.mxu0 %v8423
  %8783 = vmatprep.mubr.bf16.mxu0 %v8624
  %8784 = vmatmul.mubr.bf16.gmra.mxu0 %v8623
  %v8785 = vpop.f32.mrf.mxu0
  %v8786 = vadd.f32 0.0, %v8785
  %v8787 = vpop.f32.mrf.mxu0
  %v8788 = vpop.f32.mrf.mxu0
  %v8789 = vadd.f32 0.0, %v8788
  %v8790 = vpop.f32.mrf.mxu0
  %8791 = vmatprep.mubr.bf16.mxu0 %v8626
  %8792 = vmatmul.mubr.bf16.gmra.mxu0 %v8625
  %v8793 = vpop.f32.mrf.mxu0
  %v8794 = vadd.f32 0.0, %v8793
  %v8795 = vpop.f32.mrf.mxu0
  %v8796 = vpop.f32.mrf.mxu0
  %v8797 = vadd.f32 0.0, %v8796
  %v8798 = vpop.f32.mrf.mxu0
  %8799 = vmatprep.mubr.bf16.mxu0 %v8628
  %8800 = vmatmul.mubr.bf16.gmra.mxu0 %v8627
  %v8801 = vpop.f32.mrf.mxu0
  %v8802 = vadd.f32 0.0, %v8801
  %v8803 = vpop.f32.mrf.mxu0
  %v8804 = vpop.f32.mrf.mxu0
  %v8805 = vadd.f32 0.0, %v8804
  %v8806 = vpop.f32.mrf.mxu0
  %8807 = vmatprep.mubr.bf16.mxu0 %v8630
  %8808 = vmatmul.mubr.bf16.gmra.mxu0 %v8629
  %v8809 = vpop.f32.mrf.mxu0
  %v8810 = vadd.f32 0.0, %v8809
  %v8811 = vpop.f32.mrf.mxu0
  %v8812 = vpop.f32.mrf.mxu0
  %v8813 = vadd.f32 0.0, %v8812
  %v8814 = vpop.f32.mrf.mxu0
  %8815 = vmatprep.mubr.bf16.mxu0 %v8632
  %8816 = vmatmul.mubr.bf16.gmra.mxu0 %v8631
  %v8817 = vpop.f32.mrf.mxu0
  %v8818 = vadd.f32 0.0, %v8817
  %v8819 = vpop.f32.mrf.mxu0
  %v8820 = vpop.f32.mrf.mxu0
  %v8821 = vadd.f32 0.0, %v8820
  %v8822 = vpop.f32.mrf.mxu0
  %8823 = vmatprep.mubr.bf16.mxu0 %v8634
  %8824 = vmatmul.mubr.bf16.gmra.mxu0 %v8633
  %v8825 = vpop.f32.mrf.mxu0
  %v8826 = vadd.f32 0.0, %v8825
  %v8827 = vpop.f32.mrf.mxu0
  %v8828 = vpop.f32.mrf.mxu0
  %v8829 = vadd.f32 0.0, %v8828
  %v8830 = vpop.f32.mrf.mxu0
  %8831 = vmatprep.mubr.bf16.mxu0 %v8636
  %8832 = vmatmul.mubr.bf16.gmra.mxu0 %v8635
  %v8833 = vpop.f32.mrf.mxu0
  %v8834 = vadd.f32 0.0, %v8833
  %v8835 = vpop.f32.mrf.mxu0
  %v8836 = vpop.f32.mrf.mxu0
  %v8837 = vadd.f32 0.0, %v8836
  %v8838 = vpop.f32.mrf.mxu0
  %8839 = vmatprep.mubr.bf16.mxu0 %v8638
  %8840 = vmatmul.mubr.bf16.gmra.mxu0 %v8637
  %v8841 = vpop.f32.mrf.mxu0
  %v8842 = vadd.f32 0.0, %v8841
  %v8843 = vpop.f32.mrf.mxu0
  %v8844 = vpop.f32.mrf.mxu0
  %v8845 = vadd.f32 0.0, %v8844
  %v8846 = vpop.f32.mrf.mxu0
  %8847 = vmatprep.mubr.bf16.mxu0 %v8640
  %8848 = vmatmul.mubr.bf16.gmra.mxu0 %v8639
  %v8849 = vpop.f32.mrf.mxu0
  %v8850 = vadd.f32 0.0, %v8849
  %v8851 = vpop.f32.mrf.mxu0
  %v8852 = vpop.f32.mrf.mxu0
  %v8853 = vadd.f32 0.0, %v8852
  %v8854 = vpop.f32.mrf.mxu0
  %8855 = vmatprep.mubr.bf16.mxu0 %v8642
  %8856 = vmatmul.mubr.bf16.gmra.mxu0 %v8641
  %v8857 = vpop.f32.mrf.mxu0
  %v8858 = vadd.f32 0.0, %v8857
  %v8859 = vpop.f32.mrf.mxu0
  %v8860 = vpop.f32.mrf.mxu0
  %v8861 = vadd.f32 0.0, %v8860
  %v8862 = vpop.f32.mrf.mxu0
  %8863 = vmatprep.mubr.bf16.mxu0 %v8644
  %8864 = vmatmul.mubr.bf16.gmra.mxu0 %v8643
  %v8865 = vpop.f32.mrf.mxu0
  %v8866 = vadd.f32 0.0, %v8865
  %v8867 = vpop.f32.mrf.mxu0
  %v8868 = vpop.f32.mrf.mxu0
  %v8869 = vadd.f32 0.0, %v8868
  %v8870 = vpop.f32.mrf.mxu0
  %8871 = vmatprep.mubr.bf16.mxu0 %v8646
  %8872 = vmatmul.mubr.bf16.gmra.mxu0 %v8645
  %v8873 = vpop.f32.mrf.mxu0
  %v8874 = vadd.f32 0.0, %v8873
  %v8875 = vpop.f32.mrf.mxu0
  %v8876 = vpop.f32.mrf.mxu0
  %v8877 = vadd.f32 0.0, %v8876
  %v8878 = vpop.f32.mrf.mxu0
  %8879 = vmatprep.mubr.bf16.mxu0 %v8648
  %8880 = vmatmul.mubr.bf16.gmra.mxu0 %v8647
  %v8881 = vpop.f32.mrf.mxu0
  %v8882 = vadd.f32 0.0, %v8881
  %v8883 = vpop.f32.mrf.mxu0
  %v8884 = vpop.f32.mrf.mxu0
  %v8885 = vadd.f32 0.0, %v8884
  %v8886 = vpop.f32.mrf.mxu0
  %8887 = vmatprep.mubr.bf16.mxu0 %v8650
  %8888 = vmatmul.mubr.bf16.gmra.mxu0 %v8649
  %v8889 = vpop.f32.mrf.mxu0
  %v8890 = vadd.f32 0.0, %v8889
  %v8891 = vpop.f32.mrf.mxu0
  %v8892 = vpop.f32.mrf.mxu0
  %v8893 = vadd.f32 0.0, %v8892
  %v8894 = vpop.f32.mrf.mxu0
  %8895 = vmatprep.mubr.bf16.mxu0 %v8652
  %8896 = vmatmul.mubr.bf16.gmra.mxu0 %v8651
  %v8897 = vpop.f32.mrf.mxu0
  %v8898 = vadd.f32 0.0, %v8897
  %v8899 = vpop.f32.mrf.mxu0
  %v8900 = vpop.f32.mrf.mxu0
  %v8901 = vadd.f32 0.0, %v8900
  %v8902 = vpop.f32.mrf.mxu0
  %8903 = vmatprep.mubr.bf16.mxu0 %v8654
  %8904 = vmatmul.mubr.bf16.gmra.mxu0 %v8653
  %v8905 = vpop.f32.mrf.mxu0
  %v8906 = vadd.f32 0.0, %v8905
  %v8907 = vpop.f32.mrf.mxu0
  %v8908 = vpop.f32.mrf.mxu0
  %v8909 = vadd.f32 0.0, %v8908
  %v8910 = vpop.f32.mrf.mxu0
  %8911 = vmatprep.mubr.bf16.mxu0 %v8656
  %8912 = vmatmul.mubr.bf16.gmra.mxu0 %v8655
  %v8913 = vpop.f32.mrf.mxu0
  %v8914 = vadd.f32 0.0, %v8913
  %v8915 = vpop.f32.mrf.mxu0
  %v8916 = vpop.f32.mrf.mxu0
  %v8917 = vadd.f32 0.0, %v8916
  %v8918 = vpop.f32.mrf.mxu0
  %8919 = vmatprep.mubr.bf16.mxu0 %v8658
  %8920 = vmatmul.mubr.bf16.gmra.mxu0 %v8657
  %v8921 = vpop.f32.mrf.mxu0
  %v8922 = vadd.f32 0.0, %v8921
  %v8923 = vpop.f32.mrf.mxu0
  %v8924 = vpop.f32.mrf.mxu0
  %v8925 = vadd.f32 0.0, %v8924
  %v8926 = vpop.f32.mrf.mxu0
  %8927 = vmatprep.mubr.bf16.mxu0 %v8660
  %8928 = vmatmul.mubr.bf16.gmra.mxu0 %v8659
  %v8929 = vpop.f32.mrf.mxu0
  %v8930 = vadd.f32 0.0, %v8929
  %v8931 = vpop.f32.mrf.mxu0
  %v8932 = vpop.f32.mrf.mxu0
  %v8933 = vadd.f32 0.0, %v8932
  %v8934 = vpop.f32.mrf.mxu0
  %8935 = vmatprep.mubr.bf16.mxu0 %v8662
  %8936 = vmatmul.mubr.bf16.gmra.mxu0 %v8661
  %v8937 = vpop.f32.mrf.mxu0
  %v8938 = vadd.f32 0.0, %v8937
  %v8939 = vpop.f32.mrf.mxu0
  %v8940 = vpop.f32.mrf.mxu0
  %v8941 = vadd.f32 0.0, %v8940
  %v8942 = vpop.f32.mrf.mxu0
  %8943 = vmatprep.mubr.bf16.mxu0 %v8664
  %8944 = vmatmul.mubr.bf16.gmra.mxu0 %v8663
  %v8945 = vpop.f32.mrf.mxu0
  %v8946 = vadd.f32 0.0, %v8945
  %v8947 = vpop.f32.mrf.mxu0
  %v8948 = vpop.f32.mrf.mxu0
  %v8949 = vadd.f32 0.0, %v8948
  %v8950 = vpop.f32.mrf.mxu0
  %8951 = vmatprep.mubr.bf16.mxu0 %v8666
  %8952 = vmatmul.mubr.bf16.gmra.mxu0 %v8665
  %v8953 = vpop.f32.mrf.mxu0
  %v8954 = vadd.f32 0.0, %v8953
  %v8955 = vpop.f32.mrf.mxu0
  %v8956 = vpop.f32.mrf.mxu0
  %v8957 = vadd.f32 0.0, %v8956
  %v8958 = vpop.f32.mrf.mxu0
  %8959 = vmatprep.mubr.bf16.mxu0 %v8668
  %8960 = vmatmul.mubr.bf16.gmra.mxu0 %v8667
  %v8961 = vpop.f32.mrf.mxu0
  %v8962 = vadd.f32 0.0, %v8961
  %v8963 = vpop.f32.mrf.mxu0
  %v8964 = vpop.f32.mrf.mxu0
  %v8965 = vadd.f32 0.0, %v8964
  %v8966 = vpop.f32.mrf.mxu0
  %8967 = vmatprep.mubr.bf16.mxu0 %v8670
  %8968 = vmatmul.mubr.bf16.gmra.mxu0 %v8669
  %v8969 = vpop.f32.mrf.mxu0
  %v8970 = vadd.f32 0.0, %v8969
  %v8971 = vpop.f32.mrf.mxu0
  %v8972 = vpop.f32.mrf.mxu0
  %v8973 = vadd.f32 0.0, %v8972
  %v8974 = vpop.f32.mrf.mxu0
  %8975 = vmatprep.mubr.bf16.mxu0 %v8672
  %8976 = vmatmul.mubr.bf16.gmra.mxu0 %v8671
  %v8977 = vpop.f32.mrf.mxu0
  %v8978 = vadd.f32 0.0, %v8977
  %v8979 = vpop.f32.mrf.mxu0
  %v8980 = vpop.f32.mrf.mxu0
  %v8981 = vadd.f32 0.0, %v8980
  %v8982 = vpop.f32.mrf.mxu0
  %8983 = vmatprep.mubr.bf16.mxu0 %v8674
  %8984 = vmatmul.mubr.bf16.gmra.mxu0 %v8673
  %v8985 = vpop.f32.mrf.mxu0
  %v8986 = vadd.f32 0.0, %v8985
  %v8987 = vpop.f32.mrf.mxu0
  %v8988 = vpop.f32.mrf.mxu0
  %v8989 = vadd.f32 0.0, %v8988
  %v8990 = vpop.f32.mrf.mxu0
  %8991 = vmatprep.mubr.bf16.mxu0 %v8676
  %8992 = vmatmul.mubr.bf16.gmra.mxu0 %v8675
  %v8993 = vpop.f32.mrf.mxu0
  %v8994 = vadd.f32 0.0, %v8993
  %v8995 = vpop.f32.mrf.mxu0
  %v8996 = vpop.f32.mrf.mxu0
  %v8997 = vadd.f32 0.0, %v8996
  %v8998 = vpop.f32.mrf.mxu0
  %8999 = vmatprep.mubr.bf16.mxu0 %v8678
  %9000 = vmatmul.mubr.bf16.gmra.mxu0 %v8677
  %v9001 = vpop.f32.mrf.mxu0
  %v9002 = vadd.f32 0.0, %v9001
  %v9003 = vpop.f32.mrf.mxu0
  %v9004 = vpop.f32.mrf.mxu0
  %v9005 = vadd.f32 0.0, %v9004
  %v9006 = vpop.f32.mrf.mxu0
  %9007 = vmatprep.mubr.bf16.mxu0 %v8680
  %9008 = vmatmul.mubr.bf16.gmra.mxu0 %v8679
  %v9009 = vpop.f32.mrf.mxu0
  %v9010 = vadd.f32 0.0, %v9009
  %v9011 = vpop.f32.mrf.mxu0
  %v9012 = vpop.f32.mrf.mxu0
  %v9013 = vadd.f32 0.0, %v9012
  %v9014 = vpop.f32.mrf.mxu0
  %9015 = vmatprep.mubr.bf16.mxu0 %v8682
  %9016 = vmatmul.mubr.bf16.gmra.mxu0 %v8681
  %v9017 = vpop.f32.mrf.mxu0
  %v9018 = vadd.f32 0.0, %v9017
  %v9019 = vpop.f32.mrf.mxu0
  %v9020 = vpop.f32.mrf.mxu0
  %v9021 = vadd.f32 0.0, %v9020
  %v9022 = vpop.f32.mrf.mxu0
  %9023 = vmatprep.mubr.bf16.mxu0 %v8684
  %9024 = vmatmul.mubr.bf16.gmra.mxu0 %v8683
  %v9025 = vpop.f32.mrf.mxu0
  %v9026 = vadd.f32 0.0, %v9025
  %v9027 = vpop.f32.mrf.mxu0
  %v9028 = vpop.f32.mrf.mxu0
  %v9029 = vadd.f32 0.0, %v9028
  %v9030 = vpop.f32.mrf.mxu0
  %9031 = vmatprep.mubr.bf16.mxu0 %v8686
  %9032 = vmatmul.mubr.bf16.gmra.mxu0 %v8685
  %v9033 = vpop.f32.mrf.mxu0
  %v9034 = vadd.f32 0.0, %v9033
  %v9035 = vpop.f32.mrf.mxu0
  %v9036 = vpop.f32.mrf.mxu0
  %v9037 = vadd.f32 0.0, %v9036
  %v9038 = vpop.f32.mrf.mxu0
  %9039 = vdwg.mxu0
  %v9040 = vadd.f32 %v8286, %v8786
  %v9041 = vadd.f32 %v8287, %v8789
  %v9042 = vadd.f32 %v8288, %v8794
  %v9043 = vadd.f32 %v8289, %v8797
  %v9044 = vadd.f32 %v8290, %v8802
  %v9045 = vadd.f32 %v8291, %v8805
  %v9046 = vadd.f32 %v8292, %v8810
  %v9047 = vadd.f32 %v8293, %v8813
  %v9048 = vadd.f32 %v8294, %v8818
  %v9049 = vadd.f32 %v8295, %v8821
  %v9050 = vadd.f32 %v8296, %v8826
  %v9051 = vadd.f32 %v8297, %v8829
  %v9052 = vadd.f32 %v8298, %v8834
  %v9053 = vadd.f32 %v8299, %v8837
  %v9054 = vadd.f32 %v8300, %v8842
  %v9055 = vadd.f32 %v8301, %v8845
  %v9056 = vadd.f32 %v8302, %v8850
  %v9057 = vadd.f32 %v8303, %v8853
  %v9058 = vadd.f32 %v8304, %v8858
  %v9059 = vadd.f32 %v8305, %v8861
  %v9060 = vadd.f32 %v8306, %v8866
  %v9061 = vadd.f32 %v8307, %v8869
  %v9062 = vadd.f32 %v8308, %v8874
  %v9063 = vadd.f32 %v8309, %v8877
  %v9064 = vadd.f32 %v8310, %v8882
  %v9065 = vadd.f32 %v8311, %v8885
  %v9066 = vadd.f32 %v8312, %v8890
  %v9067 = vadd.f32 %v8313, %v8893
  %v9068 = vadd.f32 %v8314, %v8898
  %v9069 = vadd.f32 %v8315, %v8901
  %v9070 = vadd.f32 %v8316, %v8906
  %v9071 = vadd.f32 %v8317, %v8909
  %v9072 = vadd.f32 %v8318, %v8914
  %v9073 = vadd.f32 %v8319, %v8917
  %v9074 = vadd.f32 %v8320, %v8922
  %v9075 = vadd.f32 %v8321, %v8925
  %v9076 = vadd.f32 %v8322, %v8930
  %v9077 = vadd.f32 %v8323, %v8933
  %v9078 = vadd.f32 %v8324, %v8938
  %v9079 = vadd.f32 %v8325, %v8941
  %v9080 = vadd.f32 %v8326, %v8946
  %v9081 = vadd.f32 %v8327, %v8949
  %v9082 = vadd.f32 %v8328, %v8954
  %v9083 = vadd.f32 %v8329, %v8957
  %v9084 = vadd.f32 %v8330, %v8962
  %v9085 = vadd.f32 %v8331, %v8965
  %v9086 = vadd.f32 %v8332, %v8970
  %v9087 = vadd.f32 %v8333, %v8973
  %v9088 = vadd.f32 %v8334, %v8978
  %v9089 = vadd.f32 %v8335, %v8981
  %v9090 = vadd.f32 %v8336, %v8986
  %v9091 = vadd.f32 %v8337, %v8989
  %v9092 = vadd.f32 %v8338, %v8994
  %v9093 = vadd.f32 %v8339, %v8997
  %v9094 = vadd.f32 %v8340, %v9002
  %v9095 = vadd.f32 %v8341, %v9005
  %v9096 = vadd.f32 %v8342, %v9010
  %v9097 = vadd.f32 %v8343, %v9013
  %v9098 = vadd.f32 %v8344, %v9018
  %v9099 = vadd.f32 %v8345, %v9021
  %v9100 = vadd.f32 %v8346, %v9026
  %v9101 = vadd.f32 %v8347, %v9029
  %v9102 = vadd.f32 %v8348, %v9034
  %v9103 = vadd.f32 %v8349, %v9037
  %s9104 = scalar_lea.vmem %s1, 2048
  %v9105 = vld [vmem:[%s9104] sm:$0xff]
  %v9106 = vld [vmem:[%s9104 + $0x8] sm:$0xff]
  %v9107 = vld [vmem:[%s9104 + $0x10] sm:$0xff]
  %v9108 = vld [vmem:[%s9104 + $0x18] sm:$0xff]
  %v9109 = vld [vmem:[%s9104 + $0x20] sm:$0xff]
  %v9110 = vld [vmem:[%s9104 + $0x28] sm:$0xff]
  %v9111 = vld [vmem:[%s9104 + $0x30] sm:$0xff]
  %v9112 = vld [vmem:[%s9104 + $0x38] sm:$0xff]
  %v9113 = vld [vmem:[%s9104 + $0x40] sm:$0xff]
  %v9114 = vld [vmem:[%s9104 + $0x48] sm:$0xff]
  %v9115 = vld [vmem:[%s9104 + $0x50] sm:$0xff]
  %v9116 = vld [vmem:[%s9104 + $0x58] sm:$0xff]
  %v9117 = vld [vmem:[%s9104 + $0x60] sm:$0xff]
  %v9118 = vld [vmem:[%s9104 + $0x68] sm:$0xff]
  %v9119 = vld [vmem:[%s9104 + $0x70] sm:$0xff]
  %v9120 = vld [vmem:[%s9104 + $0x78] sm:$0xff]
  %v9121 = vld [vmem:[%s9104 + $0x80] sm:$0xff]
  %v9122 = vld [vmem:[%s9104 + $0x88] sm:$0xff]
  %v9123 = vld [vmem:[%s9104 + $0x90] sm:$0xff]
  %v9124 = vld [vmem:[%s9104 + $0x98] sm:$0xff]
  %v9125 = vld [vmem:[%s9104 + $0xa0] sm:$0xff]
  %v9126 = vld [vmem:[%s9104 + $0xa8] sm:$0xff]
  %v9127 = vld [vmem:[%s9104 + $0xb0] sm:$0xff]
  %v9128 = vld [vmem:[%s9104 + $0xb8] sm:$0xff]
  %v9129 = vld [vmem:[%s9104 + $0xc0] sm:$0xff]
  %v9130 = vld [vmem:[%s9104 + $0xc8] sm:$0xff]
  %v9131 = vld [vmem:[%s9104 + $0xd0] sm:$0xff]
  %v9132 = vld [vmem:[%s9104 + $0xd8] sm:$0xff]
  %v9133 = vld [vmem:[%s9104 + $0xe0] sm:$0xff]
  %v9134 = vld [vmem:[%s9104 + $0xe8] sm:$0xff]
  %v9135 = vld [vmem:[%s9104 + $0xf0] sm:$0xff]
  %v9136 = vld [vmem:[%s9104 + $0xf8] sm:$0xff]
  %v9137 = vld [vmem:[%s9104 + $0x100] sm:$0xff]
  %v9138 = vld [vmem:[%s9104 + $0x108] sm:$0xff]
  %v9139 = vld [vmem:[%s9104 + $0x110] sm:$0xff]
  %v9140 = vld [vmem:[%s9104 + $0x118] sm:$0xff]
  %v9141 = vld [vmem:[%s9104 + $0x120] sm:$0xff]
  %v9142 = vld [vmem:[%s9104 + $0x128] sm:$0xff]
  %v9143 = vld [vmem:[%s9104 + $0x130] sm:$0xff]
  %v9144 = vld [vmem:[%s9104 + $0x138] sm:$0xff]
  %v9145 = vld [vmem:[%s9104 + $0x140] sm:$0xff]
  %v9146 = vld [vmem:[%s9104 + $0x148] sm:$0xff]
  %v9147 = vld [vmem:[%s9104 + $0x150] sm:$0xff]
  %v9148 = vld [vmem:[%s9104 + $0x158] sm:$0xff]
  %v9149 = vld [vmem:[%s9104 + $0x160] sm:$0xff]
  %v9150 = vld [vmem:[%s9104 + $0x168] sm:$0xff]
  %v9151 = vld [vmem:[%s9104 + $0x170] sm:$0xff]
  %v9152 = vld [vmem:[%s9104 + $0x178] sm:$0xff]
  %v9153 = vld [vmem:[%s9104 + $0x180] sm:$0xff]
  %v9154 = vld [vmem:[%s9104 + $0x188] sm:$0xff]
  %v9155 = vld [vmem:[%s9104 + $0x190] sm:$0xff]
  %v9156 = vld [vmem:[%s9104 + $0x198] sm:$0xff]
  %v9157 = vld [vmem:[%s9104 + $0x1a0] sm:$0xff]
  %v9158 = vld [vmem:[%s9104 + $0x1a8] sm:$0xff]
  %v9159 = vld [vmem:[%s9104 + $0x1b0] sm:$0xff]
  %v9160 = vld [vmem:[%s9104 + $0x1b8] sm:$0xff]
  %v9161 = vld [vmem:[%s9104 + $0x1c0] sm:$0xff]
  %v9162 = vld [vmem:[%s9104 + $0x1c8] sm:$0xff]
  %v9163 = vld [vmem:[%s9104 + $0x1d0] sm:$0xff]
  %v9164 = vld [vmem:[%s9104 + $0x1d8] sm:$0xff]
  %v9165 = vld [vmem:[%s9104 + $0x1e0] sm:$0xff]
  %v9166 = vld [vmem:[%s9104 + $0x1e8] sm:$0xff]
  %v9167 = vld [vmem:[%s9104 + $0x1f0] sm:$0xff]
  %v9168 = vld [vmem:[%s9104 + $0x1f8] sm:$0xff]
  %v9169 = vpack.c.bf16 %v6186, %v6185
  %v9170 = vpack.c.bf16 %v6188, %v6187
  %v9171 = vpack.c.bf16 %v6190, %v6189
  %v9172 = vpack.c.bf16 %v6192, %v6191
  %v9173 = vpack.c.bf16 %v6194, %v6193
  %v9174 = vpack.c.bf16 %v6196, %v6195
  %v9175 = vpack.c.bf16 %v6198, %v6197
  %v9176 = vpack.c.bf16 %v6200, %v6199
  %v9177 = vpack.c.bf16 %v6202, %v6201
  %v9178 = vpack.c.bf16 %v6204, %v6203
  %v9179 = vpack.c.bf16 %v6206, %v6205
  %v9180 = vpack.c.bf16 %v6208, %v6207
  %v9181 = vpack.c.bf16 %v6210, %v6209
  %v9182 = vpack.c.bf16 %v6212, %v6211
  %v9183 = vpack.c.bf16 %v6214, %v6213
  %v9184 = vpack.c.bf16 %v6216, %v6215
  %v9249 = vunpack.c.l.b16 %v9105
  %v9250 = vunpack.c.h.b16 %v9105
  %v9251 = vunpack.c.l.b16 %v9106
  %v9252 = vunpack.c.h.b16 %v9106
  %v9253 = vunpack.c.l.b16 %v9107
  %v9254 = vunpack.c.h.b16 %v9107
  %v9255 = vunpack.c.l.b16 %v9108
  %v9256 = vunpack.c.h.b16 %v9108
  %v9257 = vunpack.c.l.b16 %v9109
  %v9258 = vunpack.c.h.b16 %v9109
  %v9259 = vunpack.c.l.b16 %v9110
  %v9260 = vunpack.c.h.b16 %v9110
  %v9261 = vunpack.c.l.b16 %v9111
  %v9262 = vunpack.c.h.b16 %v9111
  %v9263 = vunpack.c.l.b16 %v9112
  %v9264 = vunpack.c.h.b16 %v9112
  %v9265 = vunpack.c.l.b16 %v9113
  %v9266 = vunpack.c.h.b16 %v9113
  %v9267 = vunpack.c.l.b16 %v9114
  %v9268 = vunpack.c.h.b16 %v9114
  %v9269 = vunpack.c.l.b16 %v9115
  %v9270 = vunpack.c.h.b16 %v9115
  %v9271 = vunpack.c.l.b16 %v9116
  %v9272 = vunpack.c.h.b16 %v9116
  %v9273 = vunpack.c.l.b16 %v9117
  %v9274 = vunpack.c.h.b16 %v9117
  %v9275 = vunpack.c.l.b16 %v9118
  %v9276 = vunpack.c.h.b16 %v9118
  %v9277 = vunpack.c.l.b16 %v9119
  %v9278 = vunpack.c.h.b16 %v9119
  %v9279 = vunpack.c.l.b16 %v9120
  %v9280 = vunpack.c.h.b16 %v9120
  %v9281 = vunpack.c.l.b16 %v9121
  %v9282 = vunpack.c.h.b16 %v9121
  %v9283 = vunpack.c.l.b16 %v9122
  %v9284 = vunpack.c.h.b16 %v9122
  %v9285 = vunpack.c.l.b16 %v9123
  %v9286 = vunpack.c.h.b16 %v9123
  %v9287 = vunpack.c.l.b16 %v9124
  %v9288 = vunpack.c.h.b16 %v9124
  %v9289 = vunpack.c.l.b16 %v9125
  %v9290 = vunpack.c.h.b16 %v9125
  %v9291 = vunpack.c.l.b16 %v9126
  %v9292 = vunpack.c.h.b16 %v9126
  %v9293 = vunpack.c.l.b16 %v9127
  %v9294 = vunpack.c.h.b16 %v9127
  %v9295 = vunpack.c.l.b16 %v9128
  %v9296 = vunpack.c.h.b16 %v9128
  %v9297 = vunpack.c.l.b16 %v9129
  %v9298 = vunpack.c.h.b16 %v9129
  %v9299 = vunpack.c.l.b16 %v9130
  %v9300 = vunpack.c.h.b16 %v9130
  %v9301 = vunpack.c.l.b16 %v9131
  %v9302 = vunpack.c.h.b16 %v9131
  %v9303 = vunpack.c.l.b16 %v9132
  %v9304 = vunpack.c.h.b16 %v9132
  %v9305 = vunpack.c.l.b16 %v9133
  %v9306 = vunpack.c.h.b16 %v9133
  %v9307 = vunpack.c.l.b16 %v9134
  %v9308 = vunpack.c.h.b16 %v9134
  %v9309 = vunpack.c.l.b16 %v9135
  %v9310 = vunpack.c.h.b16 %v9135
  %v9311 = vunpack.c.l.b16 %v9136
  %v9312 = vunpack.c.h.b16 %v9136
  %v9313 = vunpack.c.l.b16 %v9137
  %v9314 = vunpack.c.h.b16 %v9137
  %v9315 = vunpack.c.l.b16 %v9138
  %v9316 = vunpack.c.h.b16 %v9138
  %v9317 = vunpack.c.l.b16 %v9139
  %v9318 = vunpack.c.h.b16 %v9139
  %v9319 = vunpack.c.l.b16 %v9140
  %v9320 = vunpack.c.h.b16 %v9140
  %v9321 = vunpack.c.l.b16 %v9141
  %v9322 = vunpack.c.h.b16 %v9141
  %v9323 = vunpack.c.l.b16 %v9142
  %v9324 = vunpack.c.h.b16 %v9142
  %v9325 = vunpack.c.l.b16 %v9143
  %v9326 = vunpack.c.h.b16 %v9143
  %v9327 = vunpack.c.l.b16 %v9144
  %v9328 = vunpack.c.h.b16 %v9144
  %v9329 = vunpack.c.l.b16 %v9145
  %v9330 = vunpack.c.h.b16 %v9145
  %v9331 = vunpack.c.l.b16 %v9146
  %v9332 = vunpack.c.h.b16 %v9146
  %v9333 = vunpack.c.l.b16 %v9147
  %v9334 = vunpack.c.h.b16 %v9147
  %v9335 = vunpack.c.l.b16 %v9148
  %v9336 = vunpack.c.h.b16 %v9148
  %v9337 = vunpack.c.l.b16 %v9149
  %v9338 = vunpack.c.h.b16 %v9149
  %v9339 = vunpack.c.l.b16 %v9150
  %v9340 = vunpack.c.h.b16 %v9150
  %v9341 = vunpack.c.l.b16 %v9151
  %v9342 = vunpack.c.h.b16 %v9151
  %v9343 = vunpack.c.l.b16 %v9152
  %v9344 = vunpack.c.h.b16 %v9152
  %v9345 = vunpack.c.l.b16 %v9153
  %v9346 = vunpack.c.h.b16 %v9153
  %v9347 = vunpack.c.l.b16 %v9154
  %v9348 = vunpack.c.h.b16 %v9154
  %v9349 = vunpack.c.l.b16 %v9155
  %v9350 = vunpack.c.h.b16 %v9155
  %v9351 = vunpack.c.l.b16 %v9156
  %v9352 = vunpack.c.h.b16 %v9156
  %v9353 = vunpack.c.l.b16 %v9157
  %v9354 = vunpack.c.h.b16 %v9157
  %v9355 = vunpack.c.l.b16 %v9158
  %v9356 = vunpack.c.h.b16 %v9158
  %v9357 = vunpack.c.l.b16 %v9159
  %v9358 = vunpack.c.h.b16 %v9159
  %v9359 = vunpack.c.l.b16 %v9160
  %v9360 = vunpack.c.h.b16 %v9160
  %v9361 = vunpack.c.l.b16 %v9161
  %v9362 = vunpack.c.h.b16 %v9161
  %v9363 = vunpack.c.l.b16 %v9162
  %v9364 = vunpack.c.h.b16 %v9162
  %v9365 = vunpack.c.l.b16 %v9163
  %v9366 = vunpack.c.h.b16 %v9163
  %v9367 = vunpack.c.l.b16 %v9164
  %v9368 = vunpack.c.h.b16 %v9164
  %v9369 = vunpack.c.l.b16 %v9165
  %v9370 = vunpack.c.h.b16 %v9165
  %v9371 = vunpack.c.l.b16 %v9166
  %v9372 = vunpack.c.h.b16 %v9166
  %v9373 = vunpack.c.l.b16 %v9167
  %v9374 = vunpack.c.h.b16 %v9167
  %v9375 = vunpack.c.l.b16 %v9168
  %v9376 = vunpack.c.h.b16 %v9168
  %v9377 = vpack.c.b16 %v9251, %v9249
  %v9378 = vpack.c.b16 %v9252, %v9250
  %v9379 = vpack.c.b16 %v9255, %v9253
  %v9380 = vpack.c.b16 %v9256, %v9254
  %v9381 = vpack.c.b16 %v9259, %v9257
  %v9382 = vpack.c.b16 %v9260, %v9258
  %v9383 = vpack.c.b16 %v9263, %v9261
  %v9384 = vpack.c.b16 %v9264, %v9262
  %v9385 = vpack.c.b16 %v9267, %v9265
  %v9386 = vpack.c.b16 %v9268, %v9266
  %v9387 = vpack.c.b16 %v9271, %v9269
  %v9388 = vpack.c.b16 %v9272, %v9270
  %v9389 = vpack.c.b16 %v9275, %v9273
  %v9390 = vpack.c.b16 %v9276, %v9274
  %v9391 = vpack.c.b16 %v9279, %v9277
  %v9392 = vpack.c.b16 %v9280, %v9278
  %v9393 = vpack.c.b16 %v9283, %v9281
  %v9394 = vpack.c.b16 %v9284, %v9282
  %v9395 = vpack.c.b16 %v9287, %v9285
  %v9396 = vpack.c.b16 %v9288, %v9286
  %v9397 = vpack.c.b16 %v9291, %v9289
  %v9398 = vpack.c.b16 %v9292, %v9290
  %v9399 = vpack.c.b16 %v9295, %v9293
  %v9400 = vpack.c.b16 %v9296, %v9294
  %v9401 = vpack.c.b16 %v9299, %v9297
  %v9402 = vpack.c.b16 %v9300, %v9298
  %v9403 = vpack.c.b16 %v9303, %v9301
  %v9404 = vpack.c.b16 %v9304, %v9302
  %v9405 = vpack.c.b16 %v9307, %v9305
  %v9406 = vpack.c.b16 %v9308, %v9306
  %v9407 = vpack.c.b16 %v9311, %v9309
  %v9408 = vpack.c.b16 %v9312, %v9310
  %v9409 = vpack.c.b16 %v9315, %v9313
  %v9410 = vpack.c.b16 %v9316, %v9314
  %v9411 = vpack.c.b16 %v9319, %v9317
  %v9412 = vpack.c.b16 %v9320, %v9318
  %v9413 = vpack.c.b16 %v9323, %v9321
  %v9414 = vpack.c.b16 %v9324, %v9322
  %v9415 = vpack.c.b16 %v9327, %v9325
  %v9416 = vpack.c.b16 %v9328, %v9326
  %v9417 = vpack.c.b16 %v9331, %v9329
  %v9418 = vpack.c.b16 %v9332, %v9330
  %v9419 = vpack.c.b16 %v9335, %v9333
  %v9420 = vpack.c.b16 %v9336, %v9334
  %v9421 = vpack.c.b16 %v9339, %v9337
  %v9422 = vpack.c.b16 %v9340, %v9338
  %v9423 = vpack.c.b16 %v9343, %v9341
  %v9424 = vpack.c.b16 %v9344, %v9342
  %v9425 = vpack.c.b16 %v9347, %v9345
  %v9426 = vpack.c.b16 %v9348, %v9346
  %v9427 = vpack.c.b16 %v9351, %v9349
  %v9428 = vpack.c.b16 %v9352, %v9350
  %v9429 = vpack.c.b16 %v9355, %v9353
  %v9430 = vpack.c.b16 %v9356, %v9354
  %v9431 = vpack.c.b16 %v9359, %v9357
  %v9432 = vpack.c.b16 %v9360, %v9358
  %v9433 = vpack.c.b16 %v9363, %v9361
  %v9434 = vpack.c.b16 %v9364, %v9362
  %v9435 = vpack.c.b16 %v9367, %v9365
  %v9436 = vpack.c.b16 %v9368, %v9366
  %v9437 = vpack.c.b16 %v9371, %v9369
  %v9438 = vpack.c.b16 %v9372, %v9370
  %v9439 = vpack.c.b16 %v9375, %v9373
  %v9440 = vpack.c.b16 %v9376, %v9374
  %9505 = vmatprep.subr.bf16.mxu0 0
  %9506 = vmatpush1.bf16.msra.mxu0 %v9176
  %9507 = vmatprep.subr.bf16.mxu0 0
  %9508 = vmatpush1.bf16.msra.mxu0 %v9175
  %9509 = vmatprep.subr.bf16.mxu0 0
  %9510 = vmatpush1.bf16.msra.mxu0 %v9174
  %9511 = vmatprep.subr.bf16.mxu0 0
  %9512 = vmatpush1.bf16.msra.mxu0 %v9173
  %9513 = vmatprep.subr.bf16.mxu0 0
  %9514 = vmatpush1.bf16.msra.mxu0 %v9172
  %9515 = vmatprep.subr.bf16.mxu0 0
  %9516 = vmatpush1.bf16.msra.mxu0 %v9171
  %9517 = vmatprep.subr.bf16.mxu0 0
  %9518 = vmatpush1.bf16.msra.mxu0 %v9170
  %9519 = vmatprep.subr.bf16.mxu0 0
  %9520 = vmatpush1.bf16.msra.mxu0 %v9169
  %9521 = vmatprep.subr.bf16.mxu0 0
  %9522 = vmatpush2.bf16.msra.mxu0 %v9184
  %9523 = vmatprep.subr.bf16.mxu0 0
  %9524 = vmatpush2.bf16.msra.mxu0 %v9183
  %9525 = vmatprep.subr.bf16.mxu0 0
  %9526 = vmatpush2.bf16.msra.mxu0 %v9182
  %9527 = vmatprep.subr.bf16.mxu0 0
  %9528 = vmatpush2.bf16.msra.mxu0 %v9181
  %9529 = vmatprep.subr.bf16.mxu0 0
  %9530 = vmatpush2.bf16.msra.mxu0 %v9180
  %9531 = vmatprep.subr.bf16.mxu0 0
  %9532 = vmatpush2.bf16.msra.mxu0 %v9179
  %9533 = vmatprep.subr.bf16.mxu0 0
  %9534 = vmatpush2.bf16.msra.mxu0 %v9178
  %9535 = vmatprep.subr.bf16.mxu0 0
  %9536 = vmatpush2.bf16.msra.mxu0 %v9177
  %9537 = vmatprep.mubr.bf16.mxu0 %v9378
  %9538 = vmatmul.mubr.bf16.gmra.mxu0 %v9377
  %v9539 = vpop.f32.mrf.mxu0
  %v9540 = vadd.f32 0.0, %v9539
  %v9541 = vpop.f32.mrf.mxu0
  %v9542 = vpop.f32.mrf.mxu0
  %v9543 = vadd.f32 0.0, %v9542
  %v9544 = vpop.f32.mrf.mxu0
  %9545 = vmatprep.mubr.bf16.mxu0 %v9380
  %9546 = vmatmul.mubr.bf16.gmra.mxu0 %v9379
  %v9547 = vpop.f32.mrf.mxu0
  %v9548 = vadd.f32 0.0, %v9547
  %v9549 = vpop.f32.mrf.mxu0
  %v9550 = vpop.f32.mrf.mxu0
  %v9551 = vadd.f32 0.0, %v9550
  %v9552 = vpop.f32.mrf.mxu0
  %9553 = vmatprep.mubr.bf16.mxu0 %v9382
  %9554 = vmatmul.mubr.bf16.gmra.mxu0 %v9381
  %v9555 = vpop.f32.mrf.mxu0
  %v9556 = vadd.f32 0.0, %v9555
  %v9557 = vpop.f32.mrf.mxu0
  %v9558 = vpop.f32.mrf.mxu0
  %v9559 = vadd.f32 0.0, %v9558
  %v9560 = vpop.f32.mrf.mxu0
  %9561 = vmatprep.mubr.bf16.mxu0 %v9384
  %9562 = vmatmul.mubr.bf16.gmra.mxu0 %v9383
  %v9563 = vpop.f32.mrf.mxu0
  %v9564 = vadd.f32 0.0, %v9563
  %v9565 = vpop.f32.mrf.mxu0
  %v9566 = vpop.f32.mrf.mxu0
  %v9567 = vadd.f32 0.0, %v9566
  %v9568 = vpop.f32.mrf.mxu0
  %9569 = vmatprep.mubr.bf16.mxu0 %v9386
  %9570 = vmatmul.mubr.bf16.gmra.mxu0 %v9385
  %v9571 = vpop.f32.mrf.mxu0
  %v9572 = vadd.f32 0.0, %v9571
  %v9573 = vpop.f32.mrf.mxu0
  %v9574 = vpop.f32.mrf.mxu0
  %v9575 = vadd.f32 0.0, %v9574
  %v9576 = vpop.f32.mrf.mxu0
  %9577 = vmatprep.mubr.bf16.mxu0 %v9388
  %9578 = vmatmul.mubr.bf16.gmra.mxu0 %v9387
  %v9579 = vpop.f32.mrf.mxu0
  %v9580 = vadd.f32 0.0, %v9579
  %v9581 = vpop.f32.mrf.mxu0
  %v9582 = vpop.f32.mrf.mxu0
  %v9583 = vadd.f32 0.0, %v9582
  %v9584 = vpop.f32.mrf.mxu0
  %9585 = vmatprep.mubr.bf16.mxu0 %v9390
  %9586 = vmatmul.mubr.bf16.gmra.mxu0 %v9389
  %v9587 = vpop.f32.mrf.mxu0
  %v9588 = vadd.f32 0.0, %v9587
  %v9589 = vpop.f32.mrf.mxu0
  %v9590 = vpop.f32.mrf.mxu0
  %v9591 = vadd.f32 0.0, %v9590
  %v9592 = vpop.f32.mrf.mxu0
  %9593 = vmatprep.mubr.bf16.mxu0 %v9392
  %9594 = vmatmul.mubr.bf16.gmra.mxu0 %v9391
  %v9595 = vpop.f32.mrf.mxu0
  %v9596 = vadd.f32 0.0, %v9595
  %v9597 = vpop.f32.mrf.mxu0
  %v9598 = vpop.f32.mrf.mxu0
  %v9599 = vadd.f32 0.0, %v9598
  %v9600 = vpop.f32.mrf.mxu0
  %9601 = vmatprep.mubr.bf16.mxu0 %v9394
  %9602 = vmatmul.mubr.bf16.gmra.mxu0 %v9393
  %v9603 = vpop.f32.mrf.mxu0
  %v9604 = vadd.f32 0.0, %v9603
  %v9605 = vpop.f32.mrf.mxu0
  %v9606 = vpop.f32.mrf.mxu0
  %v9607 = vadd.f32 0.0, %v9606
  %v9608 = vpop.f32.mrf.mxu0
  %9609 = vmatprep.mubr.bf16.mxu0 %v9396
  %9610 = vmatmul.mubr.bf16.gmra.mxu0 %v9395
  %v9611 = vpop.f32.mrf.mxu0
  %v9612 = vadd.f32 0.0, %v9611
  %v9613 = vpop.f32.mrf.mxu0
  %v9614 = vpop.f32.mrf.mxu0
  %v9615 = vadd.f32 0.0, %v9614
  %v9616 = vpop.f32.mrf.mxu0
  %9617 = vmatprep.mubr.bf16.mxu0 %v9398
  %9618 = vmatmul.mubr.bf16.gmra.mxu0 %v9397
  %v9619 = vpop.f32.mrf.mxu0
  %v9620 = vadd.f32 0.0, %v9619
  %v9621 = vpop.f32.mrf.mxu0
  %v9622 = vpop.f32.mrf.mxu0
  %v9623 = vadd.f32 0.0, %v9622
  %v9624 = vpop.f32.mrf.mxu0
  %9625 = vmatprep.mubr.bf16.mxu0 %v9400
  %9626 = vmatmul.mubr.bf16.gmra.mxu0 %v9399
  %v9627 = vpop.f32.mrf.mxu0
  %v9628 = vadd.f32 0.0, %v9627
  %v9629 = vpop.f32.mrf.mxu0
  %v9630 = vpop.f32.mrf.mxu0
  %v9631 = vadd.f32 0.0, %v9630
  %v9632 = vpop.f32.mrf.mxu0
  %9633 = vmatprep.mubr.bf16.mxu0 %v9402
  %9634 = vmatmul.mubr.bf16.gmra.mxu0 %v9401
  %v9635 = vpop.f32.mrf.mxu0
  %v9636 = vadd.f32 0.0, %v9635
  %v9637 = vpop.f32.mrf.mxu0
  %v9638 = vpop.f32.mrf.mxu0
  %v9639 = vadd.f32 0.0, %v9638
  %v9640 = vpop.f32.mrf.mxu0
  %9641 = vmatprep.mubr.bf16.mxu0 %v9404
  %9642 = vmatmul.mubr.bf16.gmra.mxu0 %v9403
  %v9643 = vpop.f32.mrf.mxu0
  %v9644 = vadd.f32 0.0, %v9643
  %v9645 = vpop.f32.mrf.mxu0
  %v9646 = vpop.f32.mrf.mxu0
  %v9647 = vadd.f32 0.0, %v9646
  %v9648 = vpop.f32.mrf.mxu0
  %9649 = vmatprep.mubr.bf16.mxu0 %v9406
  %9650 = vmatmul.mubr.bf16.gmra.mxu0 %v9405
  %v9651 = vpop.f32.mrf.mxu0
  %v9652 = vadd.f32 0.0, %v9651
  %v9653 = vpop.f32.mrf.mxu0
  %v9654 = vpop.f32.mrf.mxu0
  %v9655 = vadd.f32 0.0, %v9654
  %v9656 = vpop.f32.mrf.mxu0
  %9657 = vmatprep.mubr.bf16.mxu0 %v9408
  %9658 = vmatmul.mubr.bf16.gmra.mxu0 %v9407
  %v9659 = vpop.f32.mrf.mxu0
  %v9660 = vadd.f32 0.0, %v9659
  %v9661 = vpop.f32.mrf.mxu0
  %v9662 = vpop.f32.mrf.mxu0
  %v9663 = vadd.f32 0.0, %v9662
  %v9664 = vpop.f32.mrf.mxu0
  %9665 = vmatprep.mubr.bf16.mxu0 %v9410
  %9666 = vmatmul.mubr.bf16.gmra.mxu0 %v9409
  %v9667 = vpop.f32.mrf.mxu0
  %v9668 = vadd.f32 0.0, %v9667
  %v9669 = vpop.f32.mrf.mxu0
  %v9670 = vpop.f32.mrf.mxu0
  %v9671 = vadd.f32 0.0, %v9670
  %v9672 = vpop.f32.mrf.mxu0
  %9673 = vmatprep.mubr.bf16.mxu0 %v9412
  %9674 = vmatmul.mubr.bf16.gmra.mxu0 %v9411
  %v9675 = vpop.f32.mrf.mxu0
  %v9676 = vadd.f32 0.0, %v9675
  %v9677 = vpop.f32.mrf.mxu0
  %v9678 = vpop.f32.mrf.mxu0
  %v9679 = vadd.f32 0.0, %v9678
  %v9680 = vpop.f32.mrf.mxu0
  %9681 = vmatprep.mubr.bf16.mxu0 %v9414
  %9682 = vmatmul.mubr.bf16.gmra.mxu0 %v9413
  %v9683 = vpop.f32.mrf.mxu0
  %v9684 = vadd.f32 0.0, %v9683
  %v9685 = vpop.f32.mrf.mxu0
  %v9686 = vpop.f32.mrf.mxu0
  %v9687 = vadd.f32 0.0, %v9686
  %v9688 = vpop.f32.mrf.mxu0
  %9689 = vmatprep.mubr.bf16.mxu0 %v9416
  %9690 = vmatmul.mubr.bf16.gmra.mxu0 %v9415
  %v9691 = vpop.f32.mrf.mxu0
  %v9692 = vadd.f32 0.0, %v9691
  %v9693 = vpop.f32.mrf.mxu0
  %v9694 = vpop.f32.mrf.mxu0
  %v9695 = vadd.f32 0.0, %v9694
  %v9696 = vpop.f32.mrf.mxu0
  %9697 = vmatprep.mubr.bf16.mxu0 %v9418
  %9698 = vmatmul.mubr.bf16.gmra.mxu0 %v9417
  %v9699 = vpop.f32.mrf.mxu0
  %v9700 = vadd.f32 0.0, %v9699
  %v9701 = vpop.f32.mrf.mxu0
  %v9702 = vpop.f32.mrf.mxu0
  %v9703 = vadd.f32 0.0, %v9702
  %v9704 = vpop.f32.mrf.mxu0
  %9705 = vmatprep.mubr.bf16.mxu0 %v9420
  %9706 = vmatmul.mubr.bf16.gmra.mxu0 %v9419
  %v9707 = vpop.f32.mrf.mxu0
  %v9708 = vadd.f32 0.0, %v9707
  %v9709 = vpop.f32.mrf.mxu0
  %v9710 = vpop.f32.mrf.mxu0
  %v9711 = vadd.f32 0.0, %v9710
  %v9712 = vpop.f32.mrf.mxu0
  %9713 = vmatprep.mubr.bf16.mxu0 %v9422
  %9714 = vmatmul.mubr.bf16.gmra.mxu0 %v9421
  %v9715 = vpop.f32.mrf.mxu0
  %v9716 = vadd.f32 0.0, %v9715
  %v9717 = vpop.f32.mrf.mxu0
  %v9718 = vpop.f32.mrf.mxu0
  %v9719 = vadd.f32 0.0, %v9718
  %v9720 = vpop.f32.mrf.mxu0
  %9721 = vmatprep.mubr.bf16.mxu0 %v9424
  %9722 = vmatmul.mubr.bf16.gmra.mxu0 %v9423
  %v9723 = vpop.f32.mrf.mxu0
  %v9724 = vadd.f32 0.0, %v9723
  %v9725 = vpop.f32.mrf.mxu0
  %v9726 = vpop.f32.mrf.mxu0
  %v9727 = vadd.f32 0.0, %v9726
  %v9728 = vpop.f32.mrf.mxu0
  %9729 = vmatprep.mubr.bf16.mxu0 %v9426
  %9730 = vmatmul.mubr.bf16.gmra.mxu0 %v9425
  %v9731 = vpop.f32.mrf.mxu0
  %v9732 = vadd.f32 0.0, %v9731
  %v9733 = vpop.f32.mrf.mxu0
  %v9734 = vpop.f32.mrf.mxu0
  %v9735 = vadd.f32 0.0, %v9734
  %v9736 = vpop.f32.mrf.mxu0
  %9737 = vmatprep.mubr.bf16.mxu0 %v9428
  %9738 = vmatmul.mubr.bf16.gmra.mxu0 %v9427
  %v9739 = vpop.f32.mrf.mxu0
  %v9740 = vadd.f32 0.0, %v9739
  %v9741 = vpop.f32.mrf.mxu0
  %v9742 = vpop.f32.mrf.mxu0
  %v9743 = vadd.f32 0.0, %v9742
  %v9744 = vpop.f32.mrf.mxu0
  %9745 = vmatprep.mubr.bf16.mxu0 %v9430
  %9746 = vmatmul.mubr.bf16.gmra.mxu0 %v9429
  %v9747 = vpop.f32.mrf.mxu0
  %v9748 = vadd.f32 0.0, %v9747
  %v9749 = vpop.f32.mrf.mxu0
  %v9750 = vpop.f32.mrf.mxu0
  %v9751 = vadd.f32 0.0, %v9750
  %v9752 = vpop.f32.mrf.mxu0
  %9753 = vmatprep.mubr.bf16.mxu0 %v9432
  %9754 = vmatmul.mubr.bf16.gmra.mxu0 %v9431
  %v9755 = vpop.f32.mrf.mxu0
  %v9756 = vadd.f32 0.0, %v9755
  %v9757 = vpop.f32.mrf.mxu0
  %v9758 = vpop.f32.mrf.mxu0
  %v9759 = vadd.f32 0.0, %v9758
  %v9760 = vpop.f32.mrf.mxu0
  %9761 = vmatprep.mubr.bf16.mxu0 %v9434
  %9762 = vmatmul.mubr.bf16.gmra.mxu0 %v9433
  %v9763 = vpop.f32.mrf.mxu0
  %v9764 = vadd.f32 0.0, %v9763
  %v9765 = vpop.f32.mrf.mxu0
  %v9766 = vpop.f32.mrf.mxu0
  %v9767 = vadd.f32 0.0, %v9766
  %v9768 = vpop.f32.mrf.mxu0
  %9769 = vmatprep.mubr.bf16.mxu0 %v9436
  %9770 = vmatmul.mubr.bf16.gmra.mxu0 %v9435
  %v9771 = vpop.f32.mrf.mxu0
  %v9772 = vadd.f32 0.0, %v9771
  %v9773 = vpop.f32.mrf.mxu0
  %v9774 = vpop.f32.mrf.mxu0
  %v9775 = vadd.f32 0.0, %v9774
  %v9776 = vpop.f32.mrf.mxu0
  %9777 = vmatprep.mubr.bf16.mxu0 %v9438
  %9778 = vmatmul.mubr.bf16.gmra.mxu0 %v9437
  %v9779 = vpop.f32.mrf.mxu0
  %v9780 = vadd.f32 0.0, %v9779
  %v9781 = vpop.f32.mrf.mxu0
  %v9782 = vpop.f32.mrf.mxu0
  %v9783 = vadd.f32 0.0, %v9782
  %v9784 = vpop.f32.mrf.mxu0
  %9785 = vmatprep.mubr.bf16.mxu0 %v9440
  %9786 = vmatmul.mubr.bf16.gmra.mxu0 %v9439
  %v9787 = vpop.f32.mrf.mxu0
  %v9788 = vadd.f32 0.0, %v9787
  %v9789 = vpop.f32.mrf.mxu0
  %v9790 = vpop.f32.mrf.mxu0
  %v9791 = vadd.f32 0.0, %v9790
  %v9792 = vpop.f32.mrf.mxu0
  %9793 = vdwg.mxu0
  %v9794 = vadd.f32 %v9040, %v9540
  %v9795 = vadd.f32 %v9041, %v9543
  %v9796 = vadd.f32 %v9042, %v9548
  %v9797 = vadd.f32 %v9043, %v9551
  %v9798 = vadd.f32 %v9044, %v9556
  %v9799 = vadd.f32 %v9045, %v9559
  %v9800 = vadd.f32 %v9046, %v9564
  %v9801 = vadd.f32 %v9047, %v9567
  %v9802 = vadd.f32 %v9048, %v9572
  %v9803 = vadd.f32 %v9049, %v9575
  %v9804 = vadd.f32 %v9050, %v9580
  %v9805 = vadd.f32 %v9051, %v9583
  %v9806 = vadd.f32 %v9052, %v9588
  %v9807 = vadd.f32 %v9053, %v9591
  %v9808 = vadd.f32 %v9054, %v9596
  %v9809 = vadd.f32 %v9055, %v9599
  %v9810 = vadd.f32 %v9056, %v9604
  %v9811 = vadd.f32 %v9057, %v9607
  %v9812 = vadd.f32 %v9058, %v9612
  %v9813 = vadd.f32 %v9059, %v9615
  %v9814 = vadd.f32 %v9060, %v9620
  %v9815 = vadd.f32 %v9061, %v9623
  %v9816 = vadd.f32 %v9062, %v9628
  %v9817 = vadd.f32 %v9063, %v9631
  %v9818 = vadd.f32 %v9064, %v9636
  %v9819 = vadd.f32 %v9065, %v9639
  %v9820 = vadd.f32 %v9066, %v9644
  %v9821 = vadd.f32 %v9067, %v9647
  %v9822 = vadd.f32 %v9068, %v9652
  %v9823 = vadd.f32 %v9069, %v9655
  %v9824 = vadd.f32 %v9070, %v9660
  %v9825 = vadd.f32 %v9071, %v9663
  %v9826 = vadd.f32 %v9072, %v9668
  %v9827 = vadd.f32 %v9073, %v9671
  %v9828 = vadd.f32 %v9074, %v9676
  %v9829 = vadd.f32 %v9075, %v9679
  %v9830 = vadd.f32 %v9076, %v9684
  %v9831 = vadd.f32 %v9077, %v9687
  %v9832 = vadd.f32 %v9078, %v9692
  %v9833 = vadd.f32 %v9079, %v9695
  %v9834 = vadd.f32 %v9080, %v9700
  %v9835 = vadd.f32 %v9081, %v9703
  %v9836 = vadd.f32 %v9082, %v9708
  %v9837 = vadd.f32 %v9083, %v9711
  %v9838 = vadd.f32 %v9084, %v9716
  %v9839 = vadd.f32 %v9085, %v9719
  %v9840 = vadd.f32 %v9086, %v9724
  %v9841 = vadd.f32 %v9087, %v9727
  %v9842 = vadd.f32 %v9088, %v9732
  %v9843 = vadd.f32 %v9089, %v9735
  %v9844 = vadd.f32 %v9090, %v9740
  %v9845 = vadd.f32 %v9091, %v9743
  %v9846 = vadd.f32 %v9092, %v9748
  %v9847 = vadd.f32 %v9093, %v9751
  %v9848 = vadd.f32 %v9094, %v9756
  %v9849 = vadd.f32 %v9095, %v9759
  %v9850 = vadd.f32 %v9096, %v9764
  %v9851 = vadd.f32 %v9097, %v9767
  %v9852 = vadd.f32 %v9098, %v9772
  %v9853 = vadd.f32 %v9099, %v9775
  %v9854 = vadd.f32 %v9100, %v9780
  %v9855 = vadd.f32 %v9101, %v9783
  %v9856 = vadd.f32 %v9102, %v9788
  %v9857 = vadd.f32 %v9103, %v9791
  %s9858 = scalar_lea.vmem %s1, 2560
  %v9859 = vld [vmem:[%s9858] sm:$0xff]
  %v9860 = vld [vmem:[%s9858 + $0x8] sm:$0xff]
  %v9861 = vld [vmem:[%s9858 + $0x10] sm:$0xff]
  %v9862 = vld [vmem:[%s9858 + $0x18] sm:$0xff]
  %v9863 = vld [vmem:[%s9858 + $0x20] sm:$0xff]
  %v9864 = vld [vmem:[%s9858 + $0x28] sm:$0xff]
  %v9865 = vld [vmem:[%s9858 + $0x30] sm:$0xff]
  %v9866 = vld [vmem:[%s9858 + $0x38] sm:$0xff]
  %v9867 = vld [vmem:[%s9858 + $0x40] sm:$0xff]
  %v9868 = vld [vmem:[%s9858 + $0x48] sm:$0xff]
  %v9869 = vld [vmem:[%s9858 + $0x50] sm:$0xff]
  %v9870 = vld [vmem:[%s9858 + $0x58] sm:$0xff]
  %v9871 = vld [vmem:[%s9858 + $0x60] sm:$0xff]
  %v9872 = vld [vmem:[%s9858 + $0x68] sm:$0xff]
  %v9873 = vld [vmem:[%s9858 + $0x70] sm:$0xff]
  %v9874 = vld [vmem:[%s9858 + $0x78] sm:$0xff]
  %v9875 = vld [vmem:[%s9858 + $0x80] sm:$0xff]
  %v9876 = vld [vmem:[%s9858 + $0x88] sm:$0xff]
  %v9877 = vld [vmem:[%s9858 + $0x90] sm:$0xff]
  %v9878 = vld [vmem:[%s9858 + $0x98] sm:$0xff]
  %v9879 = vld [vmem:[%s9858 + $0xa0] sm:$0xff]
  %v9880 = vld [vmem:[%s9858 + $0xa8] sm:$0xff]
  %v9881 = vld [vmem:[%s9858 + $0xb0] sm:$0xff]
  %v9882 = vld [vmem:[%s9858 + $0xb8] sm:$0xff]
  %v9883 = vld [vmem:[%s9858 + $0xc0] sm:$0xff]
  %v9884 = vld [vmem:[%s9858 + $0xc8] sm:$0xff]
  %v9885 = vld [vmem:[%s9858 + $0xd0] sm:$0xff]
  %v9886 = vld [vmem:[%s9858 + $0xd8] sm:$0xff]
  %v9887 = vld [vmem:[%s9858 + $0xe0] sm:$0xff]
  %v9888 = vld [vmem:[%s9858 + $0xe8] sm:$0xff]
  %v9889 = vld [vmem:[%s9858 + $0xf0] sm:$0xff]
  %v9890 = vld [vmem:[%s9858 + $0xf8] sm:$0xff]
  %v9891 = vld [vmem:[%s9858 + $0x100] sm:$0xff]
  %v9892 = vld [vmem:[%s9858 + $0x108] sm:$0xff]
  %v9893 = vld [vmem:[%s9858 + $0x110] sm:$0xff]
  %v9894 = vld [vmem:[%s9858 + $0x118] sm:$0xff]
  %v9895 = vld [vmem:[%s9858 + $0x120] sm:$0xff]
  %v9896 = vld [vmem:[%s9858 + $0x128] sm:$0xff]
  %v9897 = vld [vmem:[%s9858 + $0x130] sm:$0xff]
  %v9898 = vld [vmem:[%s9858 + $0x138] sm:$0xff]
  %v9899 = vld [vmem:[%s9858 + $0x140] sm:$0xff]
  %v9900 = vld [vmem:[%s9858 + $0x148] sm:$0xff]
  %v9901 = vld [vmem:[%s9858 + $0x150] sm:$0xff]
  %v9902 = vld [vmem:[%s9858 + $0x158] sm:$0xff]
  %v9903 = vld [vmem:[%s9858 + $0x160] sm:$0xff]
  %v9904 = vld [vmem:[%s9858 + $0x168] sm:$0xff]
  %v9905 = vld [vmem:[%s9858 + $0x170] sm:$0xff]
  %v9906 = vld [vmem:[%s9858 + $0x178] sm:$0xff]
  %v9907 = vld [vmem:[%s9858 + $0x180] sm:$0xff]
  %v9908 = vld [vmem:[%s9858 + $0x188] sm:$0xff]
  %v9909 = vld [vmem:[%s9858 + $0x190] sm:$0xff]
  %v9910 = vld [vmem:[%s9858 + $0x198] sm:$0xff]
  %v9911 = vld [vmem:[%s9858 + $0x1a0] sm:$0xff]
  %v9912 = vld [vmem:[%s9858 + $0x1a8] sm:$0xff]
  %v9913 = vld [vmem:[%s9858 + $0x1b0] sm:$0xff]
  %v9914 = vld [vmem:[%s9858 + $0x1b8] sm:$0xff]
  %v9915 = vld [vmem:[%s9858 + $0x1c0] sm:$0xff]
  %v9916 = vld [vmem:[%s9858 + $0x1c8] sm:$0xff]
  %v9917 = vld [vmem:[%s9858 + $0x1d0] sm:$0xff]
  %v9918 = vld [vmem:[%s9858 + $0x1d8] sm:$0xff]
  %v9919 = vld [vmem:[%s9858 + $0x1e0] sm:$0xff]
  %v9920 = vld [vmem:[%s9858 + $0x1e8] sm:$0xff]
  %v9921 = vld [vmem:[%s9858 + $0x1f0] sm:$0xff]
  %v9922 = vld [vmem:[%s9858 + $0x1f8] sm:$0xff]
  %v9923 = vpack.c.bf16 %v5930, %v5929
  %v9924 = vpack.c.bf16 %v5932, %v5931
  %v9925 = vpack.c.bf16 %v5934, %v5933
  %v9926 = vpack.c.bf16 %v5936, %v5935
  %v9927 = vpack.c.bf16 %v5938, %v5937
  %v9928 = vpack.c.bf16 %v5940, %v5939
  %v9929 = vpack.c.bf16 %v5942, %v5941
  %v9930 = vpack.c.bf16 %v5944, %v5943
  %v9931 = vpack.c.bf16 %v5946, %v5945
  %v9932 = vpack.c.bf16 %v5948, %v5947
  %v9933 = vpack.c.bf16 %v5950, %v5949
  %v9934 = vpack.c.bf16 %v5952, %v5951
  %v9935 = vpack.c.bf16 %v5954, %v5953
  %v9936 = vpack.c.bf16 %v5956, %v5955
  %v9937 = vpack.c.bf16 %v5958, %v5957
  %v9938 = vpack.c.bf16 %v5960, %v5959
  %v10003 = vunpack.c.l.b16 %v9859
  %v10004 = vunpack.c.h.b16 %v9859
  %v10005 = vunpack.c.l.b16 %v9860
  %v10006 = vunpack.c.h.b16 %v9860
  %v10007 = vunpack.c.l.b16 %v9861
  %v10008 = vunpack.c.h.b16 %v9861
  %v10009 = vunpack.c.l.b16 %v9862
  %v10010 = vunpack.c.h.b16 %v9862
  %v10011 = vunpack.c.l.b16 %v9863
  %v10012 = vunpack.c.h.b16 %v9863
  %v10013 = vunpack.c.l.b16 %v9864
  %v10014 = vunpack.c.h.b16 %v9864
  %v10015 = vunpack.c.l.b16 %v9865
  %v10016 = vunpack.c.h.b16 %v9865
  %v10017 = vunpack.c.l.b16 %v9866
  %v10018 = vunpack.c.h.b16 %v9866
  %v10019 = vunpack.c.l.b16 %v9867
  %v10020 = vunpack.c.h.b16 %v9867
  %v10021 = vunpack.c.l.b16 %v9868
  %v10022 = vunpack.c.h.b16 %v9868
  %v10023 = vunpack.c.l.b16 %v9869
  %v10024 = vunpack.c.h.b16 %v9869
  %v10025 = vunpack.c.l.b16 %v9870
  %v10026 = vunpack.c.h.b16 %v9870
  %v10027 = vunpack.c.l.b16 %v9871
  %v10028 = vunpack.c.h.b16 %v9871
  %v10029 = vunpack.c.l.b16 %v9872
  %v10030 = vunpack.c.h.b16 %v9872
  %v10031 = vunpack.c.l.b16 %v9873
  %v10032 = vunpack.c.h.b16 %v9873
  %v10033 = vunpack.c.l.b16 %v9874
  %v10034 = vunpack.c.h.b16 %v9874
  %v10035 = vunpack.c.l.b16 %v9875
  %v10036 = vunpack.c.h.b16 %v9875
  %v10037 = vunpack.c.l.b16 %v9876
  %v10038 = vunpack.c.h.b16 %v9876
  %v10039 = vunpack.c.l.b16 %v9877
  %v10040 = vunpack.c.h.b16 %v9877
  %v10041 = vunpack.c.l.b16 %v9878
  %v10042 = vunpack.c.h.b16 %v9878
  %v10043 = vunpack.c.l.b16 %v9879
  %v10044 = vunpack.c.h.b16 %v9879
  %v10045 = vunpack.c.l.b16 %v9880
  %v10046 = vunpack.c.h.b16 %v9880
  %v10047 = vunpack.c.l.b16 %v9881
  %v10048 = vunpack.c.h.b16 %v9881
  %v10049 = vunpack.c.l.b16 %v9882
  %v10050 = vunpack.c.h.b16 %v9882
  %v10051 = vunpack.c.l.b16 %v9883
  %v10052 = vunpack.c.h.b16 %v9883
  %v10053 = vunpack.c.l.b16 %v9884
  %v10054 = vunpack.c.h.b16 %v9884
  %v10055 = vunpack.c.l.b16 %v9885
  %v10056 = vunpack.c.h.b16 %v9885
  %v10057 = vunpack.c.l.b16 %v9886
  %v10058 = vunpack.c.h.b16 %v9886
  %v10059 = vunpack.c.l.b16 %v9887
  %v10060 = vunpack.c.h.b16 %v9887
  %v10061 = vunpack.c.l.b16 %v9888
  %v10062 = vunpack.c.h.b16 %v9888
  %v10063 = vunpack.c.l.b16 %v9889
  %v10064 = vunpack.c.h.b16 %v9889
  %v10065 = vunpack.c.l.b16 %v9890
  %v10066 = vunpack.c.h.b16 %v9890
  %v10067 = vunpack.c.l.b16 %v9891
  %v10068 = vunpack.c.h.b16 %v9891
  %v10069 = vunpack.c.l.b16 %v9892
  %v10070 = vunpack.c.h.b16 %v9892
  %v10071 = vunpack.c.l.b16 %v9893
  %v10072 = vunpack.c.h.b16 %v9893
  %v10073 = vunpack.c.l.b16 %v9894
  %v10074 = vunpack.c.h.b16 %v9894
  %v10075 = vunpack.c.l.b16 %v9895
  %v10076 = vunpack.c.h.b16 %v9895
  %v10077 = vunpack.c.l.b16 %v9896
  %v10078 = vunpack.c.h.b16 %v9896
  %v10079 = vunpack.c.l.b16 %v9897
  %v10080 = vunpack.c.h.b16 %v9897
  %v10081 = vunpack.c.l.b16 %v9898
  %v10082 = vunpack.c.h.b16 %v9898
  %v10083 = vunpack.c.l.b16 %v9899
  %v10084 = vunpack.c.h.b16 %v9899
  %v10085 = vunpack.c.l.b16 %v9900
  %v10086 = vunpack.c.h.b16 %v9900
  %v10087 = vunpack.c.l.b16 %v9901
  %v10088 = vunpack.c.h.b16 %v9901
  %v10089 = vunpack.c.l.b16 %v9902
  %v10090 = vunpack.c.h.b16 %v9902
  %v10091 = vunpack.c.l.b16 %v9903
  %v10092 = vunpack.c.h.b16 %v9903
  %v10093 = vunpack.c.l.b16 %v9904
  %v10094 = vunpack.c.h.b16 %v9904
  %v10095 = vunpack.c.l.b16 %v9905
  %v10096 = vunpack.c.h.b16 %v9905
  %v10097 = vunpack.c.l.b16 %v9906
  %v10098 = vunpack.c.h.b16 %v9906
  %v10099 = vunpack.c.l.b16 %v9907
  %v10100 = vunpack.c.h.b16 %v9907
  %v10101 = vunpack.c.l.b16 %v9908
  %v10102 = vunpack.c.h.b16 %v9908
  %v10103 = vunpack.c.l.b16 %v9909
  %v10104 = vunpack.c.h.b16 %v9909
  %v10105 = vunpack.c.l.b16 %v9910
  %v10106 = vunpack.c.h.b16 %v9910
  %v10107 = vunpack.c.l.b16 %v9911
  %v10108 = vunpack.c.h.b16 %v9911
  %v10109 = vunpack.c.l.b16 %v9912
  %v10110 = vunpack.c.h.b16 %v9912
  %v10111 = vunpack.c.l.b16 %v9913
  %v10112 = vunpack.c.h.b16 %v9913
  %v10113 = vunpack.c.l.b16 %v9914
  %v10114 = vunpack.c.h.b16 %v9914
  %v10115 = vunpack.c.l.b16 %v9915
  %v10116 = vunpack.c.h.b16 %v9915
  %v10117 = vunpack.c.l.b16 %v9916
  %v10118 = vunpack.c.h.b16 %v9916
  %v10119 = vunpack.c.l.b16 %v9917
  %v10120 = vunpack.c.h.b16 %v9917
  %v10121 = vunpack.c.l.b16 %v9918
  %v10122 = vunpack.c.h.b16 %v9918
  %v10123 = vunpack.c.l.b16 %v9919
  %v10124 = vunpack.c.h.b16 %v9919
  %v10125 = vunpack.c.l.b16 %v9920
  %v10126 = vunpack.c.h.b16 %v9920
  %v10127 = vunpack.c.l.b16 %v9921
  %v10128 = vunpack.c.h.b16 %v9921
  %v10129 = vunpack.c.l.b16 %v9922
  %v10130 = vunpack.c.h.b16 %v9922
  %v10131 = vpack.c.b16 %v10005, %v10003
  %v10132 = vpack.c.b16 %v10006, %v10004
  %v10133 = vpack.c.b16 %v10009, %v10007
  %v10134 = vpack.c.b16 %v10010, %v10008
  %v10135 = vpack.c.b16 %v10013, %v10011
  %v10136 = vpack.c.b16 %v10014, %v10012
  %v10137 = vpack.c.b16 %v10017, %v10015
  %v10138 = vpack.c.b16 %v10018, %v10016
  %v10139 = vpack.c.b16 %v10021, %v10019
  %v10140 = vpack.c.b16 %v10022, %v10020
  %v10141 = vpack.c.b16 %v10025, %v10023
  %v10142 = vpack.c.b16 %v10026, %v10024
  %v10143 = vpack.c.b16 %v10029, %v10027
  %v10144 = vpack.c.b16 %v10030, %v10028
  %v10145 = vpack.c.b16 %v10033, %v10031
  %v10146 = vpack.c.b16 %v10034, %v10032
  %v10147 = vpack.c.b16 %v10037, %v10035
  %v10148 = vpack.c.b16 %v10038, %v10036
  %v10149 = vpack.c.b16 %v10041, %v10039
  %v10150 = vpack.c.b16 %v10042, %v10040
  %v10151 = vpack.c.b16 %v10045, %v10043
  %v10152 = vpack.c.b16 %v10046, %v10044
  %v10153 = vpack.c.b16 %v10049, %v10047
  %v10154 = vpack.c.b16 %v10050, %v10048
  %v10155 = vpack.c.b16 %v10053, %v10051
  %v10156 = vpack.c.b16 %v10054, %v10052
  %v10157 = vpack.c.b16 %v10057, %v10055
  %v10158 = vpack.c.b16 %v10058, %v10056
  %v10159 = vpack.c.b16 %v10061, %v10059
  %v10160 = vpack.c.b16 %v10062, %v10060
  %v10161 = vpack.c.b16 %v10065, %v10063
  %v10162 = vpack.c.b16 %v10066, %v10064
  %v10163 = vpack.c.b16 %v10069, %v10067
  %v10164 = vpack.c.b16 %v10070, %v10068
  %v10165 = vpack.c.b16 %v10073, %v10071
  %v10166 = vpack.c.b16 %v10074, %v10072
  %v10167 = vpack.c.b16 %v10077, %v10075
  %v10168 = vpack.c.b16 %v10078, %v10076
  %v10169 = vpack.c.b16 %v10081, %v10079
  %v10170 = vpack.c.b16 %v10082, %v10080
  %v10171 = vpack.c.b16 %v10085, %v10083
  %v10172 = vpack.c.b16 %v10086, %v10084
  %v10173 = vpack.c.b16 %v10089, %v10087
  %v10174 = vpack.c.b16 %v10090, %v10088
  %v10175 = vpack.c.b16 %v10093, %v10091
  %v10176 = vpack.c.b16 %v10094, %v10092
  %v10177 = vpack.c.b16 %v10097, %v10095
  %v10178 = vpack.c.b16 %v10098, %v10096
  %v10179 = vpack.c.b16 %v10101, %v10099
  %v10180 = vpack.c.b16 %v10102, %v10100
  %v10181 = vpack.c.b16 %v10105, %v10103
  %v10182 = vpack.c.b16 %v10106, %v10104
  %v10183 = vpack.c.b16 %v10109, %v10107
  %v10184 = vpack.c.b16 %v10110, %v10108
  %v10185 = vpack.c.b16 %v10113, %v10111
  %v10186 = vpack.c.b16 %v10114, %v10112
  %v10187 = vpack.c.b16 %v10117, %v10115
  %v10188 = vpack.c.b16 %v10118, %v10116
  %v10189 = vpack.c.b16 %v10121, %v10119
  %v10190 = vpack.c.b16 %v10122, %v10120
  %v10191 = vpack.c.b16 %v10125, %v10123
  %v10192 = vpack.c.b16 %v10126, %v10124
  %v10193 = vpack.c.b16 %v10129, %v10127
  %v10194 = vpack.c.b16 %v10130, %v10128
  %10259 = vmatprep.subr.bf16.mxu0 0
  %10260 = vmatpush1.bf16.msra.mxu0 %v9930
  %10261 = vmatprep.subr.bf16.mxu0 0
  %10262 = vmatpush1.bf16.msra.mxu0 %v9929
  %10263 = vmatprep.subr.bf16.mxu0 0
  %10264 = vmatpush1.bf16.msra.mxu0 %v9928
  %10265 = vmatprep.subr.bf16.mxu0 0
  %10266 = vmatpush1.bf16.msra.mxu0 %v9927
  %10267 = vmatprep.subr.bf16.mxu0 0
  %10268 = vmatpush1.bf16.msra.mxu0 %v9926
  %10269 = vmatprep.subr.bf16.mxu0 0
  %10270 = vmatpush1.bf16.msra.mxu0 %v9925
  %10271 = vmatprep.subr.bf16.mxu0 0
  %10272 = vmatpush1.bf16.msra.mxu0 %v9924
  %10273 = vmatprep.subr.bf16.mxu0 0
  %10274 = vmatpush1.bf16.msra.mxu0 %v9923
  %10275 = vmatprep.subr.bf16.mxu0 0
  %10276 = vmatpush2.bf16.msra.mxu0 %v9938
  %10277 = vmatprep.subr.bf16.mxu0 0
  %10278 = vmatpush2.bf16.msra.mxu0 %v9937
  %10279 = vmatprep.subr.bf16.mxu0 0
  %10280 = vmatpush2.bf16.msra.mxu0 %v9936
  %10281 = vmatprep.subr.bf16.mxu0 0
  %10282 = vmatpush2.bf16.msra.mxu0 %v9935
  %10283 = vmatprep.subr.bf16.mxu0 0
  %10284 = vmatpush2.bf16.msra.mxu0 %v9934
  %10285 = vmatprep.subr.bf16.mxu0 0
  %10286 = vmatpush2.bf16.msra.mxu0 %v9933
  %10287 = vmatprep.subr.bf16.mxu0 0
  %10288 = vmatpush2.bf16.msra.mxu0 %v9932
  %10289 = vmatprep.subr.bf16.mxu0 0
  %10290 = vmatpush2.bf16.msra.mxu0 %v9931
  %10291 = vmatprep.mubr.bf16.mxu0 %v10132
  %10292 = vmatmul.mubr.bf16.gmra.mxu0 %v10131
  %v10293 = vpop.f32.mrf.mxu0
  %v10294 = vadd.f32 0.0, %v10293
  %v10295 = vpop.f32.mrf.mxu0
  %v10296 = vpop.f32.mrf.mxu0
  %v10297 = vadd.f32 0.0, %v10296
  %v10298 = vpop.f32.mrf.mxu0
  %10299 = vmatprep.mubr.bf16.mxu0 %v10134
  %10300 = vmatmul.mubr.bf16.gmra.mxu0 %v10133
  %v10301 = vpop.f32.mrf.mxu0
  %v10302 = vadd.f32 0.0, %v10301
  %v10303 = vpop.f32.mrf.mxu0
  %v10304 = vpop.f32.mrf.mxu0
  %v10305 = vadd.f32 0.0, %v10304
  %v10306 = vpop.f32.mrf.mxu0
  %10307 = vmatprep.mubr.bf16.mxu0 %v10136
  %10308 = vmatmul.mubr.bf16.gmra.mxu0 %v10135
  %v10309 = vpop.f32.mrf.mxu0
  %v10310 = vadd.f32 0.0, %v10309
  %v10311 = vpop.f32.mrf.mxu0
  %v10312 = vpop.f32.mrf.mxu0
  %v10313 = vadd.f32 0.0, %v10312
  %v10314 = vpop.f32.mrf.mxu0
  %10315 = vmatprep.mubr.bf16.mxu0 %v10138
  %10316 = vmatmul.mubr.bf16.gmra.mxu0 %v10137
  %v10317 = vpop.f32.mrf.mxu0
  %v10318 = vadd.f32 0.0, %v10317
  %v10319 = vpop.f32.mrf.mxu0
  %v10320 = vpop.f32.mrf.mxu0
  %v10321 = vadd.f32 0.0, %v10320
  %v10322 = vpop.f32.mrf.mxu0
  %10323 = vmatprep.mubr.bf16.mxu0 %v10140
  %10324 = vmatmul.mubr.bf16.gmra.mxu0 %v10139
  %v10325 = vpop.f32.mrf.mxu0
  %v10326 = vadd.f32 0.0, %v10325
  %v10327 = vpop.f32.mrf.mxu0
  %v10328 = vpop.f32.mrf.mxu0
  %v10329 = vadd.f32 0.0, %v10328
  %v10330 = vpop.f32.mrf.mxu0
  %10331 = vmatprep.mubr.bf16.mxu0 %v10142
  %10332 = vmatmul.mubr.bf16.gmra.mxu0 %v10141
  %v10333 = vpop.f32.mrf.mxu0
  %v10334 = vadd.f32 0.0, %v10333
  %v10335 = vpop.f32.mrf.mxu0
  %v10336 = vpop.f32.mrf.mxu0
  %v10337 = vadd.f32 0.0, %v10336
  %v10338 = vpop.f32.mrf.mxu0
  %10339 = vmatprep.mubr.bf16.mxu0 %v10144
  %10340 = vmatmul.mubr.bf16.gmra.mxu0 %v10143
  %v10341 = vpop.f32.mrf.mxu0
  %v10342 = vadd.f32 0.0, %v10341
  %v10343 = vpop.f32.mrf.mxu0
  %v10344 = vpop.f32.mrf.mxu0
  %v10345 = vadd.f32 0.0, %v10344
  %v10346 = vpop.f32.mrf.mxu0
  %10347 = vmatprep.mubr.bf16.mxu0 %v10146
  %10348 = vmatmul.mubr.bf16.gmra.mxu0 %v10145
  %v10349 = vpop.f32.mrf.mxu0
  %v10350 = vadd.f32 0.0, %v10349
  %v10351 = vpop.f32.mrf.mxu0
  %v10352 = vpop.f32.mrf.mxu0
  %v10353 = vadd.f32 0.0, %v10352
  %v10354 = vpop.f32.mrf.mxu0
  %10355 = vmatprep.mubr.bf16.mxu0 %v10148
  %10356 = vmatmul.mubr.bf16.gmra.mxu0 %v10147
  %v10357 = vpop.f32.mrf.mxu0
  %v10358 = vadd.f32 0.0, %v10357
  %v10359 = vpop.f32.mrf.mxu0
  %v10360 = vpop.f32.mrf.mxu0
  %v10361 = vadd.f32 0.0, %v10360
  %v10362 = vpop.f32.mrf.mxu0
  %10363 = vmatprep.mubr.bf16.mxu0 %v10150
  %10364 = vmatmul.mubr.bf16.gmra.mxu0 %v10149
  %v10365 = vpop.f32.mrf.mxu0
  %v10366 = vadd.f32 0.0, %v10365
  %v10367 = vpop.f32.mrf.mxu0
  %v10368 = vpop.f32.mrf.mxu0
  %v10369 = vadd.f32 0.0, %v10368
  %v10370 = vpop.f32.mrf.mxu0
  %10371 = vmatprep.mubr.bf16.mxu0 %v10152
  %10372 = vmatmul.mubr.bf16.gmra.mxu0 %v10151
  %v10373 = vpop.f32.mrf.mxu0
  %v10374 = vadd.f32 0.0, %v10373
  %v10375 = vpop.f32.mrf.mxu0
  %v10376 = vpop.f32.mrf.mxu0
  %v10377 = vadd.f32 0.0, %v10376
  %v10378 = vpop.f32.mrf.mxu0
  %10379 = vmatprep.mubr.bf16.mxu0 %v10154
  %10380 = vmatmul.mubr.bf16.gmra.mxu0 %v10153
  %v10381 = vpop.f32.mrf.mxu0
  %v10382 = vadd.f32 0.0, %v10381
  %v10383 = vpop.f32.mrf.mxu0
  %v10384 = vpop.f32.mrf.mxu0
  %v10385 = vadd.f32 0.0, %v10384
  %v10386 = vpop.f32.mrf.mxu0
  %10387 = vmatprep.mubr.bf16.mxu0 %v10156
  %10388 = vmatmul.mubr.bf16.gmra.mxu0 %v10155
  %v10389 = vpop.f32.mrf.mxu0
  %v10390 = vadd.f32 0.0, %v10389
  %v10391 = vpop.f32.mrf.mxu0
  %v10392 = vpop.f32.mrf.mxu0
  %v10393 = vadd.f32 0.0, %v10392
  %v10394 = vpop.f32.mrf.mxu0
  %10395 = vmatprep.mubr.bf16.mxu0 %v10158
  %10396 = vmatmul.mubr.bf16.gmra.mxu0 %v10157
  %v10397 = vpop.f32.mrf.mxu0
  %v10398 = vadd.f32 0.0, %v10397
  %v10399 = vpop.f32.mrf.mxu0
  %v10400 = vpop.f32.mrf.mxu0
  %v10401 = vadd.f32 0.0, %v10400
  %v10402 = vpop.f32.mrf.mxu0
  %10403 = vmatprep.mubr.bf16.mxu0 %v10160
  %10404 = vmatmul.mubr.bf16.gmra.mxu0 %v10159
  %v10405 = vpop.f32.mrf.mxu0
  %v10406 = vadd.f32 0.0, %v10405
  %v10407 = vpop.f32.mrf.mxu0
  %v10408 = vpop.f32.mrf.mxu0
  %v10409 = vadd.f32 0.0, %v10408
  %v10410 = vpop.f32.mrf.mxu0
  %10411 = vmatprep.mubr.bf16.mxu0 %v10162
  %10412 = vmatmul.mubr.bf16.gmra.mxu0 %v10161
  %v10413 = vpop.f32.mrf.mxu0
  %v10414 = vadd.f32 0.0, %v10413
  %v10415 = vpop.f32.mrf.mxu0
  %v10416 = vpop.f32.mrf.mxu0
  %v10417 = vadd.f32 0.0, %v10416
  %v10418 = vpop.f32.mrf.mxu0
  %10419 = vmatprep.mubr.bf16.mxu0 %v10164
  %10420 = vmatmul.mubr.bf16.gmra.mxu0 %v10163
  %v10421 = vpop.f32.mrf.mxu0
  %v10422 = vadd.f32 0.0, %v10421
  %v10423 = vpop.f32.mrf.mxu0
  %v10424 = vpop.f32.mrf.mxu0
  %v10425 = vadd.f32 0.0, %v10424
  %v10426 = vpop.f32.mrf.mxu0
  %10427 = vmatprep.mubr.bf16.mxu0 %v10166
  %10428 = vmatmul.mubr.bf16.gmra.mxu0 %v10165
  %v10429 = vpop.f32.mrf.mxu0
  %v10430 = vadd.f32 0.0, %v10429
  %v10431 = vpop.f32.mrf.mxu0
  %v10432 = vpop.f32.mrf.mxu0
  %v10433 = vadd.f32 0.0, %v10432
  %v10434 = vpop.f32.mrf.mxu0
  %10435 = vmatprep.mubr.bf16.mxu0 %v10168
  %10436 = vmatmul.mubr.bf16.gmra.mxu0 %v10167
  %v10437 = vpop.f32.mrf.mxu0
  %v10438 = vadd.f32 0.0, %v10437
  %v10439 = vpop.f32.mrf.mxu0
  %v10440 = vpop.f32.mrf.mxu0
  %v10441 = vadd.f32 0.0, %v10440
  %v10442 = vpop.f32.mrf.mxu0
  %10443 = vmatprep.mubr.bf16.mxu0 %v10170
  %10444 = vmatmul.mubr.bf16.gmra.mxu0 %v10169
  %v10445 = vpop.f32.mrf.mxu0
  %v10446 = vadd.f32 0.0, %v10445
  %v10447 = vpop.f32.mrf.mxu0
  %v10448 = vpop.f32.mrf.mxu0
  %v10449 = vadd.f32 0.0, %v10448
  %v10450 = vpop.f32.mrf.mxu0
  %10451 = vmatprep.mubr.bf16.mxu0 %v10172
  %10452 = vmatmul.mubr.bf16.gmra.mxu0 %v10171
  %v10453 = vpop.f32.mrf.mxu0
  %v10454 = vadd.f32 0.0, %v10453
  %v10455 = vpop.f32.mrf.mxu0
  %v10456 = vpop.f32.mrf.mxu0
  %v10457 = vadd.f32 0.0, %v10456
  %v10458 = vpop.f32.mrf.mxu0
  %10459 = vmatprep.mubr.bf16.mxu0 %v10174
  %10460 = vmatmul.mubr.bf16.gmra.mxu0 %v10173
  %v10461 = vpop.f32.mrf.mxu0
  %v10462 = vadd.f32 0.0, %v10461
  %v10463 = vpop.f32.mrf.mxu0
  %v10464 = vpop.f32.mrf.mxu0
  %v10465 = vadd.f32 0.0, %v10464
  %v10466 = vpop.f32.mrf.mxu0
  %10467 = vmatprep.mubr.bf16.mxu0 %v10176
  %10468 = vmatmul.mubr.bf16.gmra.mxu0 %v10175
  %v10469 = vpop.f32.mrf.mxu0
  %v10470 = vadd.f32 0.0, %v10469
  %v10471 = vpop.f32.mrf.mxu0
  %v10472 = vpop.f32.mrf.mxu0
  %v10473 = vadd.f32 0.0, %v10472
  %v10474 = vpop.f32.mrf.mxu0
  %10475 = vmatprep.mubr.bf16.mxu0 %v10178
  %10476 = vmatmul.mubr.bf16.gmra.mxu0 %v10177
  %v10477 = vpop.f32.mrf.mxu0
  %v10478 = vadd.f32 0.0, %v10477
  %v10479 = vpop.f32.mrf.mxu0
  %v10480 = vpop.f32.mrf.mxu0
  %v10481 = vadd.f32 0.0, %v10480
  %v10482 = vpop.f32.mrf.mxu0
  %10483 = vmatprep.mubr.bf16.mxu0 %v10180
  %10484 = vmatmul.mubr.bf16.gmra.mxu0 %v10179
  %v10485 = vpop.f32.mrf.mxu0
  %v10486 = vadd.f32 0.0, %v10485
  %v10487 = vpop.f32.mrf.mxu0
  %v10488 = vpop.f32.mrf.mxu0
  %v10489 = vadd.f32 0.0, %v10488
  %v10490 = vpop.f32.mrf.mxu0
  %10491 = vmatprep.mubr.bf16.mxu0 %v10182
  %10492 = vmatmul.mubr.bf16.gmra.mxu0 %v10181
  %v10493 = vpop.f32.mrf.mxu0
  %v10494 = vadd.f32 0.0, %v10493
  %v10495 = vpop.f32.mrf.mxu0
  %v10496 = vpop.f32.mrf.mxu0
  %v10497 = vadd.f32 0.0, %v10496
  %v10498 = vpop.f32.mrf.mxu0
  %10499 = vmatprep.mubr.bf16.mxu0 %v10184
  %10500 = vmatmul.mubr.bf16.gmra.mxu0 %v10183
  %v10501 = vpop.f32.mrf.mxu0
  %v10502 = vadd.f32 0.0, %v10501
  %v10503 = vpop.f32.mrf.mxu0
  %v10504 = vpop.f32.mrf.mxu0
  %v10505 = vadd.f32 0.0, %v10504
  %v10506 = vpop.f32.mrf.mxu0
  %10507 = vmatprep.mubr.bf16.mxu0 %v10186
  %10508 = vmatmul.mubr.bf16.gmra.mxu0 %v10185
  %v10509 = vpop.f32.mrf.mxu0
  %v10510 = vadd.f32 0.0, %v10509
  %v10511 = vpop.f32.mrf.mxu0
  %v10512 = vpop.f32.mrf.mxu0
  %v10513 = vadd.f32 0.0, %v10512
  %v10514 = vpop.f32.mrf.mxu0
  %10515 = vmatprep.mubr.bf16.mxu0 %v10188
  %10516 = vmatmul.mubr.bf16.gmra.mxu0 %v10187
  %v10517 = vpop.f32.mrf.mxu0
  %v10518 = vadd.f32 0.0, %v10517
  %v10519 = vpop.f32.mrf.mxu0
  %v10520 = vpop.f32.mrf.mxu0
  %v10521 = vadd.f32 0.0, %v10520
  %v10522 = vpop.f32.mrf.mxu0
  %10523 = vmatprep.mubr.bf16.mxu0 %v10190
  %10524 = vmatmul.mubr.bf16.gmra.mxu0 %v10189
  %v10525 = vpop.f32.mrf.mxu0
  %v10526 = vadd.f32 0.0, %v10525
  %v10527 = vpop.f32.mrf.mxu0
  %v10528 = vpop.f32.mrf.mxu0
  %v10529 = vadd.f32 0.0, %v10528
  %v10530 = vpop.f32.mrf.mxu0
  %10531 = vmatprep.mubr.bf16.mxu0 %v10192
  %10532 = vmatmul.mubr.bf16.gmra.mxu0 %v10191
  %v10533 = vpop.f32.mrf.mxu0
  %v10534 = vadd.f32 0.0, %v10533
  %v10535 = vpop.f32.mrf.mxu0
  %v10536 = vpop.f32.mrf.mxu0
  %v10537 = vadd.f32 0.0, %v10536
  %v10538 = vpop.f32.mrf.mxu0
  %10539 = vmatprep.mubr.bf16.mxu0 %v10194
  %10540 = vmatmul.mubr.bf16.gmra.mxu0 %v10193
  %v10541 = vpop.f32.mrf.mxu0
  %v10542 = vadd.f32 0.0, %v10541
  %v10543 = vpop.f32.mrf.mxu0
  %v10544 = vpop.f32.mrf.mxu0
  %v10545 = vadd.f32 0.0, %v10544
  %v10546 = vpop.f32.mrf.mxu0
  %10547 = vdwg.mxu0
  %v10548 = vadd.f32 %v9794, %v10294
  %v10549 = vadd.f32 %v9795, %v10297
  %v10550 = vadd.f32 %v9796, %v10302
  %v10551 = vadd.f32 %v9797, %v10305
  %v10552 = vadd.f32 %v9798, %v10310
  %v10553 = vadd.f32 %v9799, %v10313
  %v10554 = vadd.f32 %v9800, %v10318
  %v10555 = vadd.f32 %v9801, %v10321
  %v10556 = vadd.f32 %v9802, %v10326
  %v10557 = vadd.f32 %v9803, %v10329
  %v10558 = vadd.f32 %v9804, %v10334
  %v10559 = vadd.f32 %v9805, %v10337
  %v10560 = vadd.f32 %v9806, %v10342
  %v10561 = vadd.f32 %v9807, %v10345
  %v10562 = vadd.f32 %v9808, %v10350
  %v10563 = vadd.f32 %v9809, %v10353
  %v10564 = vadd.f32 %v9810, %v10358
  %v10565 = vadd.f32 %v9811, %v10361
  %v10566 = vadd.f32 %v9812, %v10366
  %v10567 = vadd.f32 %v9813, %v10369
  %v10568 = vadd.f32 %v9814, %v10374
  %v10569 = vadd.f32 %v9815, %v10377
  %v10570 = vadd.f32 %v9816, %v10382
  %v10571 = vadd.f32 %v9817, %v10385
  %v10572 = vadd.f32 %v9818, %v10390
  %v10573 = vadd.f32 %v9819, %v10393
  %v10574 = vadd.f32 %v9820, %v10398
  %v10575 = vadd.f32 %v9821, %v10401
  %v10576 = vadd.f32 %v9822, %v10406
  %v10577 = vadd.f32 %v9823, %v10409
  %v10578 = vadd.f32 %v9824, %v10414
  %v10579 = vadd.f32 %v9825, %v10417
  %v10580 = vadd.f32 %v9826, %v10422
  %v10581 = vadd.f32 %v9827, %v10425
  %v10582 = vadd.f32 %v9828, %v10430
  %v10583 = vadd.f32 %v9829, %v10433
  %v10584 = vadd.f32 %v9830, %v10438
  %v10585 = vadd.f32 %v9831, %v10441
  %v10586 = vadd.f32 %v9832, %v10446
  %v10587 = vadd.f32 %v9833, %v10449
  %v10588 = vadd.f32 %v9834, %v10454
  %v10589 = vadd.f32 %v9835, %v10457
  %v10590 = vadd.f32 %v9836, %v10462
  %v10591 = vadd.f32 %v9837, %v10465
  %v10592 = vadd.f32 %v9838, %v10470
  %v10593 = vadd.f32 %v9839, %v10473
  %v10594 = vadd.f32 %v9840, %v10478
  %v10595 = vadd.f32 %v9841, %v10481
  %v10596 = vadd.f32 %v9842, %v10486
  %v10597 = vadd.f32 %v9843, %v10489
  %v10598 = vadd.f32 %v9844, %v10494
  %v10599 = vadd.f32 %v9845, %v10497
  %v10600 = vadd.f32 %v9846, %v10502
  %v10601 = vadd.f32 %v9847, %v10505
  %v10602 = vadd.f32 %v9848, %v10510
  %v10603 = vadd.f32 %v9849, %v10513
  %v10604 = vadd.f32 %v9850, %v10518
  %v10605 = vadd.f32 %v9851, %v10521
  %v10606 = vadd.f32 %v9852, %v10526
  %v10607 = vadd.f32 %v9853, %v10529
  %v10608 = vadd.f32 %v9854, %v10534
  %v10609 = vadd.f32 %v9855, %v10537
  %v10610 = vadd.f32 %v9856, %v10542
  %v10611 = vadd.f32 %v9857, %v10545
  %s10612 = scalar_lea.vmem %s1, 3072
  %v10613 = vld [vmem:[%s10612] sm:$0xff]
  %v10614 = vld [vmem:[%s10612 + $0x8] sm:$0xff]
  %v10615 = vld [vmem:[%s10612 + $0x10] sm:$0xff]
  %v10616 = vld [vmem:[%s10612 + $0x18] sm:$0xff]
  %v10617 = vld [vmem:[%s10612 + $0x20] sm:$0xff]
  %v10618 = vld [vmem:[%s10612 + $0x28] sm:$0xff]
  %v10619 = vld [vmem:[%s10612 + $0x30] sm:$0xff]
  %v10620 = vld [vmem:[%s10612 + $0x38] sm:$0xff]
  %v10621 = vld [vmem:[%s10612 + $0x40] sm:$0xff]
  %v10622 = vld [vmem:[%s10612 + $0x48] sm:$0xff]
  %v10623 = vld [vmem:[%s10612 + $0x50] sm:$0xff]
  %v10624 = vld [vmem:[%s10612 + $0x58] sm:$0xff]
  %v10625 = vld [vmem:[%s10612 + $0x60] sm:$0xff]
  %v10626 = vld [vmem:[%s10612 + $0x68] sm:$0xff]
  %v10627 = vld [vmem:[%s10612 + $0x70] sm:$0xff]
  %v10628 = vld [vmem:[%s10612 + $0x78] sm:$0xff]
  %v10629 = vld [vmem:[%s10612 + $0x80] sm:$0xff]
  %v10630 = vld [vmem:[%s10612 + $0x88] sm:$0xff]
  %v10631 = vld [vmem:[%s10612 + $0x90] sm:$0xff]
  %v10632 = vld [vmem:[%s10612 + $0x98] sm:$0xff]
  %v10633 = vld [vmem:[%s10612 + $0xa0] sm:$0xff]
  %v10634 = vld [vmem:[%s10612 + $0xa8] sm:$0xff]
  %v10635 = vld [vmem:[%s10612 + $0xb0] sm:$0xff]
  %v10636 = vld [vmem:[%s10612 + $0xb8] sm:$0xff]
  %v10637 = vld [vmem:[%s10612 + $0xc0] sm:$0xff]
  %v10638 = vld [vmem:[%s10612 + $0xc8] sm:$0xff]
  %v10639 = vld [vmem:[%s10612 + $0xd0] sm:$0xff]
  %v10640 = vld [vmem:[%s10612 + $0xd8] sm:$0xff]
  %v10641 = vld [vmem:[%s10612 + $0xe0] sm:$0xff]
  %v10642 = vld [vmem:[%s10612 + $0xe8] sm:$0xff]
  %v10643 = vld [vmem:[%s10612 + $0xf0] sm:$0xff]
  %v10644 = vld [vmem:[%s10612 + $0xf8] sm:$0xff]
  %v10645 = vld [vmem:[%s10612 + $0x100] sm:$0xff]
  %v10646 = vld [vmem:[%s10612 + $0x108] sm:$0xff]
  %v10647 = vld [vmem:[%s10612 + $0x110] sm:$0xff]
  %v10648 = vld [vmem:[%s10612 + $0x118] sm:$0xff]
  %v10649 = vld [vmem:[%s10612 + $0x120] sm:$0xff]
  %v10650 = vld [vmem:[%s10612 + $0x128] sm:$0xff]
  %v10651 = vld [vmem:[%s10612 + $0x130] sm:$0xff]
  %v10652 = vld [vmem:[%s10612 + $0x138] sm:$0xff]
  %v10653 = vld [vmem:[%s10612 + $0x140] sm:$0xff]
  %v10654 = vld [vmem:[%s10612 + $0x148] sm:$0xff]
  %v10655 = vld [vmem:[%s10612 + $0x150] sm:$0xff]
  %v10656 = vld [vmem:[%s10612 + $0x158] sm:$0xff]
  %v10657 = vld [vmem:[%s10612 + $0x160] sm:$0xff]
  %v10658 = vld [vmem:[%s10612 + $0x168] sm:$0xff]
  %v10659 = vld [vmem:[%s10612 + $0x170] sm:$0xff]
  %v10660 = vld [vmem:[%s10612 + $0x178] sm:$0xff]
  %v10661 = vld [vmem:[%s10612 + $0x180] sm:$0xff]
  %v10662 = vld [vmem:[%s10612 + $0x188] sm:$0xff]
  %v10663 = vld [vmem:[%s10612 + $0x190] sm:$0xff]
  %v10664 = vld [vmem:[%s10612 + $0x198] sm:$0xff]
  %v10665 = vld [vmem:[%s10612 + $0x1a0] sm:$0xff]
  %v10666 = vld [vmem:[%s10612 + $0x1a8] sm:$0xff]
  %v10667 = vld [vmem:[%s10612 + $0x1b0] sm:$0xff]
  %v10668 = vld [vmem:[%s10612 + $0x1b8] sm:$0xff]
  %v10669 = vld [vmem:[%s10612 + $0x1c0] sm:$0xff]
  %v10670 = vld [vmem:[%s10612 + $0x1c8] sm:$0xff]
  %v10671 = vld [vmem:[%s10612 + $0x1d0] sm:$0xff]
  %v10672 = vld [vmem:[%s10612 + $0x1d8] sm:$0xff]
  %v10673 = vld [vmem:[%s10612 + $0x1e0] sm:$0xff]
  %v10674 = vld [vmem:[%s10612 + $0x1e8] sm:$0xff]
  %v10675 = vld [vmem:[%s10612 + $0x1f0] sm:$0xff]
  %v10676 = vld [vmem:[%s10612 + $0x1f8] sm:$0xff]
  %v10677 = vpack.c.bf16 %v5962, %v5961
  %v10678 = vpack.c.bf16 %v5964, %v5963
  %v10679 = vpack.c.bf16 %v5966, %v5965
  %v10680 = vpack.c.bf16 %v5968, %v5967
  %v10681 = vpack.c.bf16 %v5970, %v5969
  %v10682 = vpack.c.bf16 %v5972, %v5971
  %v10683 = vpack.c.bf16 %v5974, %v5973
  %v10684 = vpack.c.bf16 %v5976, %v5975
  %v10685 = vpack.c.bf16 %v5978, %v5977
  %v10686 = vpack.c.bf16 %v5980, %v5979
  %v10687 = vpack.c.bf16 %v5982, %v5981
  %v10688 = vpack.c.bf16 %v5984, %v5983
  %v10689 = vpack.c.bf16 %v5986, %v5985
  %v10690 = vpack.c.bf16 %v5988, %v5987
  %v10691 = vpack.c.bf16 %v5990, %v5989
  %v10692 = vpack.c.bf16 %v5992, %v5991
  %v10757 = vunpack.c.l.b16 %v10613
  %v10758 = vunpack.c.h.b16 %v10613
  %v10759 = vunpack.c.l.b16 %v10614
  %v10760 = vunpack.c.h.b16 %v10614
  %v10761 = vunpack.c.l.b16 %v10615
  %v10762 = vunpack.c.h.b16 %v10615
  %v10763 = vunpack.c.l.b16 %v10616
  %v10764 = vunpack.c.h.b16 %v10616
  %v10765 = vunpack.c.l.b16 %v10617
  %v10766 = vunpack.c.h.b16 %v10617
  %v10767 = vunpack.c.l.b16 %v10618
  %v10768 = vunpack.c.h.b16 %v10618
  %v10769 = vunpack.c.l.b16 %v10619
  %v10770 = vunpack.c.h.b16 %v10619
  %v10771 = vunpack.c.l.b16 %v10620
  %v10772 = vunpack.c.h.b16 %v10620
  %v10773 = vunpack.c.l.b16 %v10621
  %v10774 = vunpack.c.h.b16 %v10621
  %v10775 = vunpack.c.l.b16 %v10622
  %v10776 = vunpack.c.h.b16 %v10622
  %v10777 = vunpack.c.l.b16 %v10623
  %v10778 = vunpack.c.h.b16 %v10623
  %v10779 = vunpack.c.l.b16 %v10624
  %v10780 = vunpack.c.h.b16 %v10624
  %v10781 = vunpack.c.l.b16 %v10625
  %v10782 = vunpack.c.h.b16 %v10625
  %v10783 = vunpack.c.l.b16 %v10626
  %v10784 = vunpack.c.h.b16 %v10626
  %v10785 = vunpack.c.l.b16 %v10627
  %v10786 = vunpack.c.h.b16 %v10627
  %v10787 = vunpack.c.l.b16 %v10628
  %v10788 = vunpack.c.h.b16 %v10628
  %v10789 = vunpack.c.l.b16 %v10629
  %v10790 = vunpack.c.h.b16 %v10629
  %v10791 = vunpack.c.l.b16 %v10630
  %v10792 = vunpack.c.h.b16 %v10630
  %v10793 = vunpack.c.l.b16 %v10631
  %v10794 = vunpack.c.h.b16 %v10631
  %v10795 = vunpack.c.l.b16 %v10632
  %v10796 = vunpack.c.h.b16 %v10632
  %v10797 = vunpack.c.l.b16 %v10633
  %v10798 = vunpack.c.h.b16 %v10633
  %v10799 = vunpack.c.l.b16 %v10634
  %v10800 = vunpack.c.h.b16 %v10634
  %v10801 = vunpack.c.l.b16 %v10635
  %v10802 = vunpack.c.h.b16 %v10635
  %v10803 = vunpack.c.l.b16 %v10636
  %v10804 = vunpack.c.h.b16 %v10636
  %v10805 = vunpack.c.l.b16 %v10637
  %v10806 = vunpack.c.h.b16 %v10637
  %v10807 = vunpack.c.l.b16 %v10638
  %v10808 = vunpack.c.h.b16 %v10638
  %v10809 = vunpack.c.l.b16 %v10639
  %v10810 = vunpack.c.h.b16 %v10639
  %v10811 = vunpack.c.l.b16 %v10640
  %v10812 = vunpack.c.h.b16 %v10640
  %v10813 = vunpack.c.l.b16 %v10641
  %v10814 = vunpack.c.h.b16 %v10641
  %v10815 = vunpack.c.l.b16 %v10642
  %v10816 = vunpack.c.h.b16 %v10642
  %v10817 = vunpack.c.l.b16 %v10643
  %v10818 = vunpack.c.h.b16 %v10643
  %v10819 = vunpack.c.l.b16 %v10644
  %v10820 = vunpack.c.h.b16 %v10644
  %v10821 = vunpack.c.l.b16 %v10645
  %v10822 = vunpack.c.h.b16 %v10645
  %v10823 = vunpack.c.l.b16 %v10646
  %v10824 = vunpack.c.h.b16 %v10646
  %v10825 = vunpack.c.l.b16 %v10647
  %v10826 = vunpack.c.h.b16 %v10647
  %v10827 = vunpack.c.l.b16 %v10648
  %v10828 = vunpack.c.h.b16 %v10648
  %v10829 = vunpack.c.l.b16 %v10649
  %v10830 = vunpack.c.h.b16 %v10649
  %v10831 = vunpack.c.l.b16 %v10650
  %v10832 = vunpack.c.h.b16 %v10650
  %v10833 = vunpack.c.l.b16 %v10651
  %v10834 = vunpack.c.h.b16 %v10651
  %v10835 = vunpack.c.l.b16 %v10652
  %v10836 = vunpack.c.h.b16 %v10652
  %v10837 = vunpack.c.l.b16 %v10653
  %v10838 = vunpack.c.h.b16 %v10653
  %v10839 = vunpack.c.l.b16 %v10654
  %v10840 = vunpack.c.h.b16 %v10654
  %v10841 = vunpack.c.l.b16 %v10655
  %v10842 = vunpack.c.h.b16 %v10655
  %v10843 = vunpack.c.l.b16 %v10656
  %v10844 = vunpack.c.h.b16 %v10656
  %v10845 = vunpack.c.l.b16 %v10657
  %v10846 = vunpack.c.h.b16 %v10657
  %v10847 = vunpack.c.l.b16 %v10658
  %v10848 = vunpack.c.h.b16 %v10658
  %v10849 = vunpack.c.l.b16 %v10659
  %v10850 = vunpack.c.h.b16 %v10659
  %v10851 = vunpack.c.l.b16 %v10660
  %v10852 = vunpack.c.h.b16 %v10660
  %v10853 = vunpack.c.l.b16 %v10661
  %v10854 = vunpack.c.h.b16 %v10661
  %v10855 = vunpack.c.l.b16 %v10662
  %v10856 = vunpack.c.h.b16 %v10662
  %v10857 = vunpack.c.l.b16 %v10663
  %v10858 = vunpack.c.h.b16 %v10663
  %v10859 = vunpack.c.l.b16 %v10664
  %v10860 = vunpack.c.h.b16 %v10664
  %v10861 = vunpack.c.l.b16 %v10665
  %v10862 = vunpack.c.h.b16 %v10665
  %v10863 = vunpack.c.l.b16 %v10666
  %v10864 = vunpack.c.h.b16 %v10666
  %v10865 = vunpack.c.l.b16 %v10667
  %v10866 = vunpack.c.h.b16 %v10667
  %v10867 = vunpack.c.l.b16 %v10668
  %v10868 = vunpack.c.h.b16 %v10668
  %v10869 = vunpack.c.l.b16 %v10669
  %v10870 = vunpack.c.h.b16 %v10669
  %v10871 = vunpack.c.l.b16 %v10670
  %v10872 = vunpack.c.h.b16 %v10670
  %v10873 = vunpack.c.l.b16 %v10671
  %v10874 = vunpack.c.h.b16 %v10671
  %v10875 = vunpack.c.l.b16 %v10672
  %v10876 = vunpack.c.h.b16 %v10672
  %v10877 = vunpack.c.l.b16 %v10673
  %v10878 = vunpack.c.h.b16 %v10673
  %v10879 = vunpack.c.l.b16 %v10674
  %v10880 = vunpack.c.h.b16 %v10674
  %v10881 = vunpack.c.l.b16 %v10675
  %v10882 = vunpack.c.h.b16 %v10675
  %v10883 = vunpack.c.l.b16 %v10676
  %v10884 = vunpack.c.h.b16 %v10676
  %v10885 = vpack.c.b16 %v10759, %v10757
  %v10886 = vpack.c.b16 %v10760, %v10758
  %v10887 = vpack.c.b16 %v10763, %v10761
  %v10888 = vpack.c.b16 %v10764, %v10762
  %v10889 = vpack.c.b16 %v10767, %v10765
  %v10890 = vpack.c.b16 %v10768, %v10766
  %v10891 = vpack.c.b16 %v10771, %v10769
  %v10892 = vpack.c.b16 %v10772, %v10770
  %v10893 = vpack.c.b16 %v10775, %v10773
  %v10894 = vpack.c.b16 %v10776, %v10774
  %v10895 = vpack.c.b16 %v10779, %v10777
  %v10896 = vpack.c.b16 %v10780, %v10778
  %v10897 = vpack.c.b16 %v10783, %v10781
  %v10898 = vpack.c.b16 %v10784, %v10782
  %v10899 = vpack.c.b16 %v10787, %v10785
  %v10900 = vpack.c.b16 %v10788, %v10786
  %v10901 = vpack.c.b16 %v10791, %v10789
  %v10902 = vpack.c.b16 %v10792, %v10790
  %v10903 = vpack.c.b16 %v10795, %v10793
  %v10904 = vpack.c.b16 %v10796, %v10794
  %v10905 = vpack.c.b16 %v10799, %v10797
  %v10906 = vpack.c.b16 %v10800, %v10798
  %v10907 = vpack.c.b16 %v10803, %v10801
  %v10908 = vpack.c.b16 %v10804, %v10802
  %v10909 = vpack.c.b16 %v10807, %v10805
  %v10910 = vpack.c.b16 %v10808, %v10806
  %v10911 = vpack.c.b16 %v10811, %v10809
  %v10912 = vpack.c.b16 %v10812, %v10810
  %v10913 = vpack.c.b16 %v10815, %v10813
  %v10914 = vpack.c.b16 %v10816, %v10814
  %v10915 = vpack.c.b16 %v10819, %v10817
  %v10916 = vpack.c.b16 %v10820, %v10818
  %v10917 = vpack.c.b16 %v10823, %v10821
  %v10918 = vpack.c.b16 %v10824, %v10822
  %v10919 = vpack.c.b16 %v10827, %v10825
  %v10920 = vpack.c.b16 %v10828, %v10826
  %v10921 = vpack.c.b16 %v10831, %v10829
  %v10922 = vpack.c.b16 %v10832, %v10830
  %v10923 = vpack.c.b16 %v10835, %v10833
  %v10924 = vpack.c.b16 %v10836, %v10834
  %v10925 = vpack.c.b16 %v10839, %v10837
  %v10926 = vpack.c.b16 %v10840, %v10838
  %v10927 = vpack.c.b16 %v10843, %v10841
  %v10928 = vpack.c.b16 %v10844, %v10842
  %v10929 = vpack.c.b16 %v10847, %v10845
  %v10930 = vpack.c.b16 %v10848, %v10846
  %v10931 = vpack.c.b16 %v10851, %v10849
  %v10932 = vpack.c.b16 %v10852, %v10850
  %v10933 = vpack.c.b16 %v10855, %v10853
  %v10934 = vpack.c.b16 %v10856, %v10854
  %v10935 = vpack.c.b16 %v10859, %v10857
  %v10936 = vpack.c.b16 %v10860, %v10858
  %v10937 = vpack.c.b16 %v10863, %v10861
  %v10938 = vpack.c.b16 %v10864, %v10862
  %v10939 = vpack.c.b16 %v10867, %v10865
  %v10940 = vpack.c.b16 %v10868, %v10866
  %v10941 = vpack.c.b16 %v10871, %v10869
  %v10942 = vpack.c.b16 %v10872, %v10870
  %v10943 = vpack.c.b16 %v10875, %v10873
  %v10944 = vpack.c.b16 %v10876, %v10874
  %v10945 = vpack.c.b16 %v10879, %v10877
  %v10946 = vpack.c.b16 %v10880, %v10878
  %v10947 = vpack.c.b16 %v10883, %v10881
  %v10948 = vpack.c.b16 %v10884, %v10882
  %11013 = vmatprep.subr.bf16.mxu0 0
  %11014 = vmatpush1.bf16.msra.mxu0 %v10684
  %11015 = vmatprep.subr.bf16.mxu0 0
  %11016 = vmatpush1.bf16.msra.mxu0 %v10683
  %11017 = vmatprep.subr.bf16.mxu0 0
  %11018 = vmatpush1.bf16.msra.mxu0 %v10682
  %11019 = vmatprep.subr.bf16.mxu0 0
  %11020 = vmatpush1.bf16.msra.mxu0 %v10681
  %11021 = vmatprep.subr.bf16.mxu0 0
  %11022 = vmatpush1.bf16.msra.mxu0 %v10680
  %11023 = vmatprep.subr.bf16.mxu0 0
  %11024 = vmatpush1.bf16.msra.mxu0 %v10679
  %11025 = vmatprep.subr.bf16.mxu0 0
  %11026 = vmatpush1.bf16.msra.mxu0 %v10678
  %11027 = vmatprep.subr.bf16.mxu0 0
  %11028 = vmatpush1.bf16.msra.mxu0 %v10677
  %11029 = vmatprep.subr.bf16.mxu0 0
  %11030 = vmatpush2.bf16.msra.mxu0 %v10692
  %11031 = vmatprep.subr.bf16.mxu0 0
  %11032 = vmatpush2.bf16.msra.mxu0 %v10691
  %11033 = vmatprep.subr.bf16.mxu0 0
  %11034 = vmatpush2.bf16.msra.mxu0 %v10690
  %11035 = vmatprep.subr.bf16.mxu0 0
  %11036 = vmatpush2.bf16.msra.mxu0 %v10689
  %11037 = vmatprep.subr.bf16.mxu0 0
  %11038 = vmatpush2.bf16.msra.mxu0 %v10688
  %11039 = vmatprep.subr.bf16.mxu0 0
  %11040 = vmatpush2.bf16.msra.mxu0 %v10687
  %11041 = vmatprep.subr.bf16.mxu0 0
  %11042 = vmatpush2.bf16.msra.mxu0 %v10686
  %11043 = vmatprep.subr.bf16.mxu0 0
  %11044 = vmatpush2.bf16.msra.mxu0 %v10685
  %11045 = vmatprep.mubr.bf16.mxu0 %v10886
  %11046 = vmatmul.mubr.bf16.gmra.mxu0 %v10885
  %v11047 = vpop.f32.mrf.mxu0
  %v11048 = vadd.f32 0.0, %v11047
  %v11049 = vpop.f32.mrf.mxu0
  %v11050 = vpop.f32.mrf.mxu0
  %v11051 = vadd.f32 0.0, %v11050
  %v11052 = vpop.f32.mrf.mxu0
  %11053 = vmatprep.mubr.bf16.mxu0 %v10888
  %11054 = vmatmul.mubr.bf16.gmra.mxu0 %v10887
  %v11055 = vpop.f32.mrf.mxu0
  %v11056 = vadd.f32 0.0, %v11055
  %v11057 = vpop.f32.mrf.mxu0
  %v11058 = vpop.f32.mrf.mxu0
  %v11059 = vadd.f32 0.0, %v11058
  %v11060 = vpop.f32.mrf.mxu0
  %11061 = vmatprep.mubr.bf16.mxu0 %v10890
  %11062 = vmatmul.mubr.bf16.gmra.mxu0 %v10889
  %v11063 = vpop.f32.mrf.mxu0
  %v11064 = vadd.f32 0.0, %v11063
  %v11065 = vpop.f32.mrf.mxu0
  %v11066 = vpop.f32.mrf.mxu0
  %v11067 = vadd.f32 0.0, %v11066
  %v11068 = vpop.f32.mrf.mxu0
  %11069 = vmatprep.mubr.bf16.mxu0 %v10892
  %11070 = vmatmul.mubr.bf16.gmra.mxu0 %v10891
  %v11071 = vpop.f32.mrf.mxu0
  %v11072 = vadd.f32 0.0, %v11071
  %v11073 = vpop.f32.mrf.mxu0
  %v11074 = vpop.f32.mrf.mxu0
  %v11075 = vadd.f32 0.0, %v11074
  %v11076 = vpop.f32.mrf.mxu0
  %11077 = vmatprep.mubr.bf16.mxu0 %v10894
  %11078 = vmatmul.mubr.bf16.gmra.mxu0 %v10893
  %v11079 = vpop.f32.mrf.mxu0
  %v11080 = vadd.f32 0.0, %v11079
  %v11081 = vpop.f32.mrf.mxu0
  %v11082 = vpop.f32.mrf.mxu0
  %v11083 = vadd.f32 0.0, %v11082
  %v11084 = vpop.f32.mrf.mxu0
  %11085 = vmatprep.mubr.bf16.mxu0 %v10896
  %11086 = vmatmul.mubr.bf16.gmra.mxu0 %v10895
  %v11087 = vpop.f32.mrf.mxu0
  %v11088 = vadd.f32 0.0, %v11087
  %v11089 = vpop.f32.mrf.mxu0
  %v11090 = vpop.f32.mrf.mxu0
  %v11091 = vadd.f32 0.0, %v11090
  %v11092 = vpop.f32.mrf.mxu0
  %11093 = vmatprep.mubr.bf16.mxu0 %v10898
  %11094 = vmatmul.mubr.bf16.gmra.mxu0 %v10897
  %v11095 = vpop.f32.mrf.mxu0
  %v11096 = vadd.f32 0.0, %v11095
  %v11097 = vpop.f32.mrf.mxu0
  %v11098 = vpop.f32.mrf.mxu0
  %v11099 = vadd.f32 0.0, %v11098
  %v11100 = vpop.f32.mrf.mxu0
  %11101 = vmatprep.mubr.bf16.mxu0 %v10900
  %11102 = vmatmul.mubr.bf16.gmra.mxu0 %v10899
  %v11103 = vpop.f32.mrf.mxu0
  %v11104 = vadd.f32 0.0, %v11103
  %v11105 = vpop.f32.mrf.mxu0
  %v11106 = vpop.f32.mrf.mxu0
  %v11107 = vadd.f32 0.0, %v11106
  %v11108 = vpop.f32.mrf.mxu0
  %11109 = vmatprep.mubr.bf16.mxu0 %v10902
  %11110 = vmatmul.mubr.bf16.gmra.mxu0 %v10901
  %v11111 = vpop.f32.mrf.mxu0
  %v11112 = vadd.f32 0.0, %v11111
  %v11113 = vpop.f32.mrf.mxu0
  %v11114 = vpop.f32.mrf.mxu0
  %v11115 = vadd.f32 0.0, %v11114
  %v11116 = vpop.f32.mrf.mxu0
  %11117 = vmatprep.mubr.bf16.mxu0 %v10904
  %11118 = vmatmul.mubr.bf16.gmra.mxu0 %v10903
  %v11119 = vpop.f32.mrf.mxu0
  %v11120 = vadd.f32 0.0, %v11119
  %v11121 = vpop.f32.mrf.mxu0
  %v11122 = vpop.f32.mrf.mxu0
  %v11123 = vadd.f32 0.0, %v11122
  %v11124 = vpop.f32.mrf.mxu0
  %11125 = vmatprep.mubr.bf16.mxu0 %v10906
  %11126 = vmatmul.mubr.bf16.gmra.mxu0 %v10905
  %v11127 = vpop.f32.mrf.mxu0
  %v11128 = vadd.f32 0.0, %v11127
  %v11129 = vpop.f32.mrf.mxu0
  %v11130 = vpop.f32.mrf.mxu0
  %v11131 = vadd.f32 0.0, %v11130
  %v11132 = vpop.f32.mrf.mxu0
  %11133 = vmatprep.mubr.bf16.mxu0 %v10908
  %11134 = vmatmul.mubr.bf16.gmra.mxu0 %v10907
  %v11135 = vpop.f32.mrf.mxu0
  %v11136 = vadd.f32 0.0, %v11135
  %v11137 = vpop.f32.mrf.mxu0
  %v11138 = vpop.f32.mrf.mxu0
  %v11139 = vadd.f32 0.0, %v11138
  %v11140 = vpop.f32.mrf.mxu0
  %11141 = vmatprep.mubr.bf16.mxu0 %v10910
  %11142 = vmatmul.mubr.bf16.gmra.mxu0 %v10909
  %v11143 = vpop.f32.mrf.mxu0
  %v11144 = vadd.f32 0.0, %v11143
  %v11145 = vpop.f32.mrf.mxu0
  %v11146 = vpop.f32.mrf.mxu0
  %v11147 = vadd.f32 0.0, %v11146
  %v11148 = vpop.f32.mrf.mxu0
  %11149 = vmatprep.mubr.bf16.mxu0 %v10912
  %11150 = vmatmul.mubr.bf16.gmra.mxu0 %v10911
  %v11151 = vpop.f32.mrf.mxu0
  %v11152 = vadd.f32 0.0, %v11151
  %v11153 = vpop.f32.mrf.mxu0
  %v11154 = vpop.f32.mrf.mxu0
  %v11155 = vadd.f32 0.0, %v11154
  %v11156 = vpop.f32.mrf.mxu0
  %11157 = vmatprep.mubr.bf16.mxu0 %v10914
  %11158 = vmatmul.mubr.bf16.gmra.mxu0 %v10913
  %v11159 = vpop.f32.mrf.mxu0
  %v11160 = vadd.f32 0.0, %v11159
  %v11161 = vpop.f32.mrf.mxu0
  %v11162 = vpop.f32.mrf.mxu0
  %v11163 = vadd.f32 0.0, %v11162
  %v11164 = vpop.f32.mrf.mxu0
  %11165 = vmatprep.mubr.bf16.mxu0 %v10916
  %11166 = vmatmul.mubr.bf16.gmra.mxu0 %v10915
  %v11167 = vpop.f32.mrf.mxu0
  %v11168 = vadd.f32 0.0, %v11167
  %v11169 = vpop.f32.mrf.mxu0
  %v11170 = vpop.f32.mrf.mxu0
  %v11171 = vadd.f32 0.0, %v11170
  %v11172 = vpop.f32.mrf.mxu0
  %11173 = vmatprep.mubr.bf16.mxu0 %v10918
  %11174 = vmatmul.mubr.bf16.gmra.mxu0 %v10917
  %v11175 = vpop.f32.mrf.mxu0
  %v11176 = vadd.f32 0.0, %v11175
  %v11177 = vpop.f32.mrf.mxu0
  %v11178 = vpop.f32.mrf.mxu0
  %v11179 = vadd.f32 0.0, %v11178
  %v11180 = vpop.f32.mrf.mxu0
  %11181 = vmatprep.mubr.bf16.mxu0 %v10920
  %11182 = vmatmul.mubr.bf16.gmra.mxu0 %v10919
  %v11183 = vpop.f32.mrf.mxu0
  %v11184 = vadd.f32 0.0, %v11183
  %v11185 = vpop.f32.mrf.mxu0
  %v11186 = vpop.f32.mrf.mxu0
  %v11187 = vadd.f32 0.0, %v11186
  %v11188 = vpop.f32.mrf.mxu0
  %11189 = vmatprep.mubr.bf16.mxu0 %v10922
  %11190 = vmatmul.mubr.bf16.gmra.mxu0 %v10921
  %v11191 = vpop.f32.mrf.mxu0
  %v11192 = vadd.f32 0.0, %v11191
  %v11193 = vpop.f32.mrf.mxu0
  %v11194 = vpop.f32.mrf.mxu0
  %v11195 = vadd.f32 0.0, %v11194
  %v11196 = vpop.f32.mrf.mxu0
  %11197 = vmatprep.mubr.bf16.mxu0 %v10924
  %11198 = vmatmul.mubr.bf16.gmra.mxu0 %v10923
  %v11199 = vpop.f32.mrf.mxu0
  %v11200 = vadd.f32 0.0, %v11199
  %v11201 = vpop.f32.mrf.mxu0
  %v11202 = vpop.f32.mrf.mxu0
  %v11203 = vadd.f32 0.0, %v11202
  %v11204 = vpop.f32.mrf.mxu0
  %11205 = vmatprep.mubr.bf16.mxu0 %v10926
  %11206 = vmatmul.mubr.bf16.gmra.mxu0 %v10925
  %v11207 = vpop.f32.mrf.mxu0
  %v11208 = vadd.f32 0.0, %v11207
  %v11209 = vpop.f32.mrf.mxu0
  %v11210 = vpop.f32.mrf.mxu0
  %v11211 = vadd.f32 0.0, %v11210
  %v11212 = vpop.f32.mrf.mxu0
  %11213 = vmatprep.mubr.bf16.mxu0 %v10928
  %11214 = vmatmul.mubr.bf16.gmra.mxu0 %v10927
  %v11215 = vpop.f32.mrf.mxu0
  %v11216 = vadd.f32 0.0, %v11215
  %v11217 = vpop.f32.mrf.mxu0
  %v11218 = vpop.f32.mrf.mxu0
  %v11219 = vadd.f32 0.0, %v11218
  %v11220 = vpop.f32.mrf.mxu0
  %11221 = vmatprep.mubr.bf16.mxu0 %v10930
  %11222 = vmatmul.mubr.bf16.gmra.mxu0 %v10929
  %v11223 = vpop.f32.mrf.mxu0
  %v11224 = vadd.f32 0.0, %v11223
  %v11225 = vpop.f32.mrf.mxu0
  %v11226 = vpop.f32.mrf.mxu0
  %v11227 = vadd.f32 0.0, %v11226
  %v11228 = vpop.f32.mrf.mxu0
  %11229 = vmatprep.mubr.bf16.mxu0 %v10932
  %11230 = vmatmul.mubr.bf16.gmra.mxu0 %v10931
  %v11231 = vpop.f32.mrf.mxu0
  %v11232 = vadd.f32 0.0, %v11231
  %v11233 = vpop.f32.mrf.mxu0
  %v11234 = vpop.f32.mrf.mxu0
  %v11235 = vadd.f32 0.0, %v11234
  %v11236 = vpop.f32.mrf.mxu0
  %11237 = vmatprep.mubr.bf16.mxu0 %v10934
  %11238 = vmatmul.mubr.bf16.gmra.mxu0 %v10933
  %v11239 = vpop.f32.mrf.mxu0
  %v11240 = vadd.f32 0.0, %v11239
  %v11241 = vpop.f32.mrf.mxu0
  %v11242 = vpop.f32.mrf.mxu0
  %v11243 = vadd.f32 0.0, %v11242
  %v11244 = vpop.f32.mrf.mxu0
  %11245 = vmatprep.mubr.bf16.mxu0 %v10936
  %11246 = vmatmul.mubr.bf16.gmra.mxu0 %v10935
  %v11247 = vpop.f32.mrf.mxu0
  %v11248 = vadd.f32 0.0, %v11247
  %v11249 = vpop.f32.mrf.mxu0
  %v11250 = vpop.f32.mrf.mxu0
  %v11251 = vadd.f32 0.0, %v11250
  %v11252 = vpop.f32.mrf.mxu0
  %11253 = vmatprep.mubr.bf16.mxu0 %v10938
  %11254 = vmatmul.mubr.bf16.gmra.mxu0 %v10937
  %v11255 = vpop.f32.mrf.mxu0
  %v11256 = vadd.f32 0.0, %v11255
  %v11257 = vpop.f32.mrf.mxu0
  %v11258 = vpop.f32.mrf.mxu0
  %v11259 = vadd.f32 0.0, %v11258
  %v11260 = vpop.f32.mrf.mxu0
  %11261 = vmatprep.mubr.bf16.mxu0 %v10940
  %11262 = vmatmul.mubr.bf16.gmra.mxu0 %v10939
  %v11263 = vpop.f32.mrf.mxu0
  %v11264 = vadd.f32 0.0, %v11263
  %v11265 = vpop.f32.mrf.mxu0
  %v11266 = vpop.f32.mrf.mxu0
  %v11267 = vadd.f32 0.0, %v11266
  %v11268 = vpop.f32.mrf.mxu0
  %11269 = vmatprep.mubr.bf16.mxu0 %v10942
  %11270 = vmatmul.mubr.bf16.gmra.mxu0 %v10941
  %v11271 = vpop.f32.mrf.mxu0
  %v11272 = vadd.f32 0.0, %v11271
  %v11273 = vpop.f32.mrf.mxu0
  %v11274 = vpop.f32.mrf.mxu0
  %v11275 = vadd.f32 0.0, %v11274
  %v11276 = vpop.f32.mrf.mxu0
  %11277 = vmatprep.mubr.bf16.mxu0 %v10944
  %11278 = vmatmul.mubr.bf16.gmra.mxu0 %v10943
  %v11279 = vpop.f32.mrf.mxu0
  %v11280 = vadd.f32 0.0, %v11279
  %v11281 = vpop.f32.mrf.mxu0
  %v11282 = vpop.f32.mrf.mxu0
  %v11283 = vadd.f32 0.0, %v11282
  %v11284 = vpop.f32.mrf.mxu0
  %11285 = vmatprep.mubr.bf16.mxu0 %v10946
  %11286 = vmatmul.mubr.bf16.gmra.mxu0 %v10945
  %v11287 = vpop.f32.mrf.mxu0
  %v11288 = vadd.f32 0.0, %v11287
  %v11289 = vpop.f32.mrf.mxu0
  %v11290 = vpop.f32.mrf.mxu0
  %v11291 = vadd.f32 0.0, %v11290
  %v11292 = vpop.f32.mrf.mxu0
  %11293 = vmatprep.mubr.bf16.mxu0 %v10948
  %11294 = vmatmul.mubr.bf16.gmra.mxu0 %v10947
  %v11295 = vpop.f32.mrf.mxu0
  %v11296 = vadd.f32 0.0, %v11295
  %v11297 = vpop.f32.mrf.mxu0
  %v11298 = vpop.f32.mrf.mxu0
  %v11299 = vadd.f32 0.0, %v11298
  %v11300 = vpop.f32.mrf.mxu0
  %11301 = vdwg.mxu0
  %v11302 = vadd.f32 %v10548, %v11048
  %v11303 = vadd.f32 %v10549, %v11051
  %v11304 = vadd.f32 %v10550, %v11056
  %v11305 = vadd.f32 %v10551, %v11059
  %v11306 = vadd.f32 %v10552, %v11064
  %v11307 = vadd.f32 %v10553, %v11067
  %v11308 = vadd.f32 %v10554, %v11072
  %v11309 = vadd.f32 %v10555, %v11075
  %v11310 = vadd.f32 %v10556, %v11080
  %v11311 = vadd.f32 %v10557, %v11083
  %v11312 = vadd.f32 %v10558, %v11088
  %v11313 = vadd.f32 %v10559, %v11091
  %v11314 = vadd.f32 %v10560, %v11096
  %v11315 = vadd.f32 %v10561, %v11099
  %v11316 = vadd.f32 %v10562, %v11104
  %v11317 = vadd.f32 %v10563, %v11107
  %v11318 = vadd.f32 %v10564, %v11112
  %v11319 = vadd.f32 %v10565, %v11115
  %v11320 = vadd.f32 %v10566, %v11120
  %v11321 = vadd.f32 %v10567, %v11123
  %v11322 = vadd.f32 %v10568, %v11128
  %v11323 = vadd.f32 %v10569, %v11131
  %v11324 = vadd.f32 %v10570, %v11136
  %v11325 = vadd.f32 %v10571, %v11139
  %v11326 = vadd.f32 %v10572, %v11144
  %v11327 = vadd.f32 %v10573, %v11147
  %v11328 = vadd.f32 %v10574, %v11152
  %v11329 = vadd.f32 %v10575, %v11155
  %v11330 = vadd.f32 %v10576, %v11160
  %v11331 = vadd.f32 %v10577, %v11163
  %v11332 = vadd.f32 %v10578, %v11168
  %v11333 = vadd.f32 %v10579, %v11171
  %v11334 = vadd.f32 %v10580, %v11176
  %v11335 = vadd.f32 %v10581, %v11179
  %v11336 = vadd.f32 %v10582, %v11184
  %v11337 = vadd.f32 %v10583, %v11187
  %v11338 = vadd.f32 %v10584, %v11192
  %v11339 = vadd.f32 %v10585, %v11195
  %v11340 = vadd.f32 %v10586, %v11200
  %v11341 = vadd.f32 %v10587, %v11203
  %v11342 = vadd.f32 %v10588, %v11208
  %v11343 = vadd.f32 %v10589, %v11211
  %v11344 = vadd.f32 %v10590, %v11216
  %v11345 = vadd.f32 %v10591, %v11219
  %v11346 = vadd.f32 %v10592, %v11224
  %v11347 = vadd.f32 %v10593, %v11227
  %v11348 = vadd.f32 %v10594, %v11232
  %v11349 = vadd.f32 %v10595, %v11235
  %v11350 = vadd.f32 %v10596, %v11240
  %v11351 = vadd.f32 %v10597, %v11243
  %v11352 = vadd.f32 %v10598, %v11248
  %v11353 = vadd.f32 %v10599, %v11251
  %v11354 = vadd.f32 %v10600, %v11256
  %v11355 = vadd.f32 %v10601, %v11259
  %v11356 = vadd.f32 %v10602, %v11264
  %v11357 = vadd.f32 %v10603, %v11267
  %v11358 = vadd.f32 %v10604, %v11272
  %v11359 = vadd.f32 %v10605, %v11275
  %v11360 = vadd.f32 %v10606, %v11280
  %v11361 = vadd.f32 %v10607, %v11283
  %v11362 = vadd.f32 %v10608, %v11288
  %v11363 = vadd.f32 %v10609, %v11291
  %v11364 = vadd.f32 %v10610, %v11296
  %v11365 = vadd.f32 %v10611, %v11299
  %s11366 = scalar_lea.vmem %s1, 3584
  %v11367 = vld [vmem:[%s11366] sm:$0xff]
  %v11368 = vld [vmem:[%s11366 + $0x8] sm:$0xff]
  %v11369 = vld [vmem:[%s11366 + $0x10] sm:$0xff]
  %v11370 = vld [vmem:[%s11366 + $0x18] sm:$0xff]
  %v11371 = vld [vmem:[%s11366 + $0x20] sm:$0xff]
  %v11372 = vld [vmem:[%s11366 + $0x28] sm:$0xff]
  %v11373 = vld [vmem:[%s11366 + $0x30] sm:$0xff]
  %v11374 = vld [vmem:[%s11366 + $0x38] sm:$0xff]
  %v11375 = vld [vmem:[%s11366 + $0x40] sm:$0xff]
  %v11376 = vld [vmem:[%s11366 + $0x48] sm:$0xff]
  %v11377 = vld [vmem:[%s11366 + $0x50] sm:$0xff]
  %v11378 = vld [vmem:[%s11366 + $0x58] sm:$0xff]
  %v11379 = vld [vmem:[%s11366 + $0x60] sm:$0xff]
  %v11380 = vld [vmem:[%s11366 + $0x68] sm:$0xff]
  %v11381 = vld [vmem:[%s11366 + $0x70] sm:$0xff]
  %v11382 = vld [vmem:[%s11366 + $0x78] sm:$0xff]
  %v11383 = vld [vmem:[%s11366 + $0x80] sm:$0xff]
  %v11384 = vld [vmem:[%s11366 + $0x88] sm:$0xff]
  %v11385 = vld [vmem:[%s11366 + $0x90] sm:$0xff]
  %v11386 = vld [vmem:[%s11366 + $0x98] sm:$0xff]
  %v11387 = vld [vmem:[%s11366 + $0xa0] sm:$0xff]
  %v11388 = vld [vmem:[%s11366 + $0xa8] sm:$0xff]
  %v11389 = vld [vmem:[%s11366 + $0xb0] sm:$0xff]
  %v11390 = vld [vmem:[%s11366 + $0xb8] sm:$0xff]
  %v11391 = vld [vmem:[%s11366 + $0xc0] sm:$0xff]
  %v11392 = vld [vmem:[%s11366 + $0xc8] sm:$0xff]
  %v11393 = vld [vmem:[%s11366 + $0xd0] sm:$0xff]
  %v11394 = vld [vmem:[%s11366 + $0xd8] sm:$0xff]
  %v11395 = vld [vmem:[%s11366 + $0xe0] sm:$0xff]
  %v11396 = vld [vmem:[%s11366 + $0xe8] sm:$0xff]
  %v11397 = vld [vmem:[%s11366 + $0xf0] sm:$0xff]
  %v11398 = vld [vmem:[%s11366 + $0xf8] sm:$0xff]
  %v11399 = vld [vmem:[%s11366 + $0x100] sm:$0xff]
  %v11400 = vld [vmem:[%s11366 + $0x108] sm:$0xff]
  %v11401 = vld [vmem:[%s11366 + $0x110] sm:$0xff]
  %v11402 = vld [vmem:[%s11366 + $0x118] sm:$0xff]
  %v11403 = vld [vmem:[%s11366 + $0x120] sm:$0xff]
  %v11404 = vld [vmem:[%s11366 + $0x128] sm:$0xff]
  %v11405 = vld [vmem:[%s11366 + $0x130] sm:$0xff]
  %v11406 = vld [vmem:[%s11366 + $0x138] sm:$0xff]
  %v11407 = vld [vmem:[%s11366 + $0x140] sm:$0xff]
  %v11408 = vld [vmem:[%s11366 + $0x148] sm:$0xff]
  %v11409 = vld [vmem:[%s11366 + $0x150] sm:$0xff]
  %v11410 = vld [vmem:[%s11366 + $0x158] sm:$0xff]
  %v11411 = vld [vmem:[%s11366 + $0x160] sm:$0xff]
  %v11412 = vld [vmem:[%s11366 + $0x168] sm:$0xff]
  %v11413 = vld [vmem:[%s11366 + $0x170] sm:$0xff]
  %v11414 = vld [vmem:[%s11366 + $0x178] sm:$0xff]
  %v11415 = vld [vmem:[%s11366 + $0x180] sm:$0xff]
  %v11416 = vld [vmem:[%s11366 + $0x188] sm:$0xff]
  %v11417 = vld [vmem:[%s11366 + $0x190] sm:$0xff]
  %v11418 = vld [vmem:[%s11366 + $0x198] sm:$0xff]
  %v11419 = vld [vmem:[%s11366 + $0x1a0] sm:$0xff]
  %v11420 = vld [vmem:[%s11366 + $0x1a8] sm:$0xff]
  %v11421 = vld [vmem:[%s11366 + $0x1b0] sm:$0xff]
  %v11422 = vld [vmem:[%s11366 + $0x1b8] sm:$0xff]
  %v11423 = vld [vmem:[%s11366 + $0x1c0] sm:$0xff]
  %v11424 = vld [vmem:[%s11366 + $0x1c8] sm:$0xff]
  %v11425 = vld [vmem:[%s11366 + $0x1d0] sm:$0xff]
  %v11426 = vld [vmem:[%s11366 + $0x1d8] sm:$0xff]
  %v11427 = vld [vmem:[%s11366 + $0x1e0] sm:$0xff]
  %v11428 = vld [vmem:[%s11366 + $0x1e8] sm:$0xff]
  %v11429 = vld [vmem:[%s11366 + $0x1f0] sm:$0xff]
  %v11430 = vld [vmem:[%s11366 + $0x1f8] sm:$0xff]
  %v11431 = vpack.c.bf16 %v5994, %v5993
  %v11432 = vpack.c.bf16 %v5996, %v5995
  %v11433 = vpack.c.bf16 %v5998, %v5997
  %v11434 = vpack.c.bf16 %v6000, %v5999
  %v11435 = vpack.c.bf16 %v6002, %v6001
  %v11436 = vpack.c.bf16 %v6004, %v6003
  %v11437 = vpack.c.bf16 %v6006, %v6005
  %v11438 = vpack.c.bf16 %v6008, %v6007
  %v11439 = vpack.c.bf16 %v6010, %v6009
  %v11440 = vpack.c.bf16 %v6012, %v6011
  %v11441 = vpack.c.bf16 %v6014, %v6013
  %v11442 = vpack.c.bf16 %v6016, %v6015
  %v11443 = vpack.c.bf16 %v6018, %v6017
  %v11444 = vpack.c.bf16 %v6020, %v6019
  %v11445 = vpack.c.bf16 %v6022, %v6021
  %v11446 = vpack.c.bf16 %v6024, %v6023
  %v11511 = vunpack.c.l.b16 %v11367
  %v11512 = vunpack.c.h.b16 %v11367
  %v11513 = vunpack.c.l.b16 %v11368
  %v11514 = vunpack.c.h.b16 %v11368
  %v11515 = vunpack.c.l.b16 %v11369
  %v11516 = vunpack.c.h.b16 %v11369
  %v11517 = vunpack.c.l.b16 %v11370
  %v11518 = vunpack.c.h.b16 %v11370
  %v11519 = vunpack.c.l.b16 %v11371
  %v11520 = vunpack.c.h.b16 %v11371
  %v11521 = vunpack.c.l.b16 %v11372
  %v11522 = vunpack.c.h.b16 %v11372
  %v11523 = vunpack.c.l.b16 %v11373
  %v11524 = vunpack.c.h.b16 %v11373
  %v11525 = vunpack.c.l.b16 %v11374
  %v11526 = vunpack.c.h.b16 %v11374
  %v11527 = vunpack.c.l.b16 %v11375
  %v11528 = vunpack.c.h.b16 %v11375
  %v11529 = vunpack.c.l.b16 %v11376
  %v11530 = vunpack.c.h.b16 %v11376
  %v11531 = vunpack.c.l.b16 %v11377
  %v11532 = vunpack.c.h.b16 %v11377
  %v11533 = vunpack.c.l.b16 %v11378
  %v11534 = vunpack.c.h.b16 %v11378
  %v11535 = vunpack.c.l.b16 %v11379
  %v11536 = vunpack.c.h.b16 %v11379
  %v11537 = vunpack.c.l.b16 %v11380
  %v11538 = vunpack.c.h.b16 %v11380
  %v11539 = vunpack.c.l.b16 %v11381
  %v11540 = vunpack.c.h.b16 %v11381
  %v11541 = vunpack.c.l.b16 %v11382
  %v11542 = vunpack.c.h.b16 %v11382
  %v11543 = vunpack.c.l.b16 %v11383
  %v11544 = vunpack.c.h.b16 %v11383
  %v11545 = vunpack.c.l.b16 %v11384
  %v11546 = vunpack.c.h.b16 %v11384
  %v11547 = vunpack.c.l.b16 %v11385
  %v11548 = vunpack.c.h.b16 %v11385
  %v11549 = vunpack.c.l.b16 %v11386
  %v11550 = vunpack.c.h.b16 %v11386
  %v11551 = vunpack.c.l.b16 %v11387
  %v11552 = vunpack.c.h.b16 %v11387
  %v11553 = vunpack.c.l.b16 %v11388
  %v11554 = vunpack.c.h.b16 %v11388
  %v11555 = vunpack.c.l.b16 %v11389
  %v11556 = vunpack.c.h.b16 %v11389
  %v11557 = vunpack.c.l.b16 %v11390
  %v11558 = vunpack.c.h.b16 %v11390
  %v11559 = vunpack.c.l.b16 %v11391
  %v11560 = vunpack.c.h.b16 %v11391
  %v11561 = vunpack.c.l.b16 %v11392
  %v11562 = vunpack.c.h.b16 %v11392
  %v11563 = vunpack.c.l.b16 %v11393
  %v11564 = vunpack.c.h.b16 %v11393
  %v11565 = vunpack.c.l.b16 %v11394
  %v11566 = vunpack.c.h.b16 %v11394
  %v11567 = vunpack.c.l.b16 %v11395
  %v11568 = vunpack.c.h.b16 %v11395
  %v11569 = vunpack.c.l.b16 %v11396
  %v11570 = vunpack.c.h.b16 %v11396
  %v11571 = vunpack.c.l.b16 %v11397
  %v11572 = vunpack.c.h.b16 %v11397
  %v11573 = vunpack.c.l.b16 %v11398
  %v11574 = vunpack.c.h.b16 %v11398
  %v11575 = vunpack.c.l.b16 %v11399
  %v11576 = vunpack.c.h.b16 %v11399
  %v11577 = vunpack.c.l.b16 %v11400
  %v11578 = vunpack.c.h.b16 %v11400
  %v11579 = vunpack.c.l.b16 %v11401
  %v11580 = vunpack.c.h.b16 %v11401
  %v11581 = vunpack.c.l.b16 %v11402
  %v11582 = vunpack.c.h.b16 %v11402
  %v11583 = vunpack.c.l.b16 %v11403
  %v11584 = vunpack.c.h.b16 %v11403
  %v11585 = vunpack.c.l.b16 %v11404
  %v11586 = vunpack.c.h.b16 %v11404
  %v11587 = vunpack.c.l.b16 %v11405
  %v11588 = vunpack.c.h.b16 %v11405
  %v11589 = vunpack.c.l.b16 %v11406
  %v11590 = vunpack.c.h.b16 %v11406
  %v11591 = vunpack.c.l.b16 %v11407
  %v11592 = vunpack.c.h.b16 %v11407
  %v11593 = vunpack.c.l.b16 %v11408
  %v11594 = vunpack.c.h.b16 %v11408
  %v11595 = vunpack.c.l.b16 %v11409
  %v11596 = vunpack.c.h.b16 %v11409
  %v11597 = vunpack.c.l.b16 %v11410
  %v11598 = vunpack.c.h.b16 %v11410
  %v11599 = vunpack.c.l.b16 %v11411
  %v11600 = vunpack.c.h.b16 %v11411
  %v11601 = vunpack.c.l.b16 %v11412
  %v11602 = vunpack.c.h.b16 %v11412
  %v11603 = vunpack.c.l.b16 %v11413
  %v11604 = vunpack.c.h.b16 %v11413
  %v11605 = vunpack.c.l.b16 %v11414
  %v11606 = vunpack.c.h.b16 %v11414
  %v11607 = vunpack.c.l.b16 %v11415
  %v11608 = vunpack.c.h.b16 %v11415
  %v11609 = vunpack.c.l.b16 %v11416
  %v11610 = vunpack.c.h.b16 %v11416
  %v11611 = vunpack.c.l.b16 %v11417
  %v11612 = vunpack.c.h.b16 %v11417
  %v11613 = vunpack.c.l.b16 %v11418
  %v11614 = vunpack.c.h.b16 %v11418
  %v11615 = vunpack.c.l.b16 %v11419
  %v11616 = vunpack.c.h.b16 %v11419
  %v11617 = vunpack.c.l.b16 %v11420
  %v11618 = vunpack.c.h.b16 %v11420
  %v11619 = vunpack.c.l.b16 %v11421
  %v11620 = vunpack.c.h.b16 %v11421
  %v11621 = vunpack.c.l.b16 %v11422
  %v11622 = vunpack.c.h.b16 %v11422
  %v11623 = vunpack.c.l.b16 %v11423
  %v11624 = vunpack.c.h.b16 %v11423
  %v11625 = vunpack.c.l.b16 %v11424
  %v11626 = vunpack.c.h.b16 %v11424
  %v11627 = vunpack.c.l.b16 %v11425
  %v11628 = vunpack.c.h.b16 %v11425
  %v11629 = vunpack.c.l.b16 %v11426
  %v11630 = vunpack.c.h.b16 %v11426
  %v11631 = vunpack.c.l.b16 %v11427
  %v11632 = vunpack.c.h.b16 %v11427
  %v11633 = vunpack.c.l.b16 %v11428
  %v11634 = vunpack.c.h.b16 %v11428
  %v11635 = vunpack.c.l.b16 %v11429
  %v11636 = vunpack.c.h.b16 %v11429
  %v11637 = vunpack.c.l.b16 %v11430
  %v11638 = vunpack.c.h.b16 %v11430
  %v11639 = vpack.c.b16 %v11513, %v11511
  %v11640 = vpack.c.b16 %v11514, %v11512
  %v11641 = vpack.c.b16 %v11517, %v11515
  %v11642 = vpack.c.b16 %v11518, %v11516
  %v11643 = vpack.c.b16 %v11521, %v11519
  %v11644 = vpack.c.b16 %v11522, %v11520
  %v11645 = vpack.c.b16 %v11525, %v11523
  %v11646 = vpack.c.b16 %v11526, %v11524
  %v11647 = vpack.c.b16 %v11529, %v11527
  %v11648 = vpack.c.b16 %v11530, %v11528
  %v11649 = vpack.c.b16 %v11533, %v11531
  %v11650 = vpack.c.b16 %v11534, %v11532
  %v11651 = vpack.c.b16 %v11537, %v11535
  %v11652 = vpack.c.b16 %v11538, %v11536
  %v11653 = vpack.c.b16 %v11541, %v11539
  %v11654 = vpack.c.b16 %v11542, %v11540
  %v11655 = vpack.c.b16 %v11545, %v11543
  %v11656 = vpack.c.b16 %v11546, %v11544
  %v11657 = vpack.c.b16 %v11549, %v11547
  %v11658 = vpack.c.b16 %v11550, %v11548
  %v11659 = vpack.c.b16 %v11553, %v11551
  %v11660 = vpack.c.b16 %v11554, %v11552
  %v11661 = vpack.c.b16 %v11557, %v11555
  %v11662 = vpack.c.b16 %v11558, %v11556
  %v11663 = vpack.c.b16 %v11561, %v11559
  %v11664 = vpack.c.b16 %v11562, %v11560
  %v11665 = vpack.c.b16 %v11565, %v11563
  %v11666 = vpack.c.b16 %v11566, %v11564
  %v11667 = vpack.c.b16 %v11569, %v11567
  %v11668 = vpack.c.b16 %v11570, %v11568
  %v11669 = vpack.c.b16 %v11573, %v11571
  %v11670 = vpack.c.b16 %v11574, %v11572
  %v11671 = vpack.c.b16 %v11577, %v11575
  %v11672 = vpack.c.b16 %v11578, %v11576
  %v11673 = vpack.c.b16 %v11581, %v11579
  %v11674 = vpack.c.b16 %v11582, %v11580
  %v11675 = vpack.c.b16 %v11585, %v11583
  %v11676 = vpack.c.b16 %v11586, %v11584
  %v11677 = vpack.c.b16 %v11589, %v11587
  %v11678 = vpack.c.b16 %v11590, %v11588
  %v11679 = vpack.c.b16 %v11593, %v11591
  %v11680 = vpack.c.b16 %v11594, %v11592
  %v11681 = vpack.c.b16 %v11597, %v11595
  %v11682 = vpack.c.b16 %v11598, %v11596
  %v11683 = vpack.c.b16 %v11601, %v11599
  %v11684 = vpack.c.b16 %v11602, %v11600
  %v11685 = vpack.c.b16 %v11605, %v11603
  %v11686 = vpack.c.b16 %v11606, %v11604
  %v11687 = vpack.c.b16 %v11609, %v11607
  %v11688 = vpack.c.b16 %v11610, %v11608
  %v11689 = vpack.c.b16 %v11613, %v11611
  %v11690 = vpack.c.b16 %v11614, %v11612
  %v11691 = vpack.c.b16 %v11617, %v11615
  %v11692 = vpack.c.b16 %v11618, %v11616
  %v11693 = vpack.c.b16 %v11621, %v11619
  %v11694 = vpack.c.b16 %v11622, %v11620
  %v11695 = vpack.c.b16 %v11625, %v11623
  %v11696 = vpack.c.b16 %v11626, %v11624
  %v11697 = vpack.c.b16 %v11629, %v11627
  %v11698 = vpack.c.b16 %v11630, %v11628
  %v11699 = vpack.c.b16 %v11633, %v11631
  %v11700 = vpack.c.b16 %v11634, %v11632
  %v11701 = vpack.c.b16 %v11637, %v11635
  %v11702 = vpack.c.b16 %v11638, %v11636
  %11767 = vmatprep.subr.bf16.mxu0 0
  %11768 = vmatpush1.bf16.msra.mxu0 %v11438
  %11769 = vmatprep.subr.bf16.mxu0 0
  %11770 = vmatpush1.bf16.msra.mxu0 %v11437
  %11771 = vmatprep.subr.bf16.mxu0 0
  %11772 = vmatpush1.bf16.msra.mxu0 %v11436
  %11773 = vmatprep.subr.bf16.mxu0 0
  %11774 = vmatpush1.bf16.msra.mxu0 %v11435
  %11775 = vmatprep.subr.bf16.mxu0 0
  %11776 = vmatpush1.bf16.msra.mxu0 %v11434
  %11777 = vmatprep.subr.bf16.mxu0 0
  %11778 = vmatpush1.bf16.msra.mxu0 %v11433
  %11779 = vmatprep.subr.bf16.mxu0 0
  %11780 = vmatpush1.bf16.msra.mxu0 %v11432
  %11781 = vmatprep.subr.bf16.mxu0 0
  %11782 = vmatpush1.bf16.msra.mxu0 %v11431
  %11783 = vmatprep.subr.bf16.mxu0 0
  %11784 = vmatpush2.bf16.msra.mxu0 %v11446
  %11785 = vmatprep.subr.bf16.mxu0 0
  %11786 = vmatpush2.bf16.msra.mxu0 %v11445
  %11787 = vmatprep.subr.bf16.mxu0 0
  %11788 = vmatpush2.bf16.msra.mxu0 %v11444
  %11789 = vmatprep.subr.bf16.mxu0 0
  %11790 = vmatpush2.bf16.msra.mxu0 %v11443
  %11791 = vmatprep.subr.bf16.mxu0 0
  %11792 = vmatpush2.bf16.msra.mxu0 %v11442
  %11793 = vmatprep.subr.bf16.mxu0 0
  %11794 = vmatpush2.bf16.msra.mxu0 %v11441
  %11795 = vmatprep.subr.bf16.mxu0 0
  %11796 = vmatpush2.bf16.msra.mxu0 %v11440
  %11797 = vmatprep.subr.bf16.mxu0 0
  %11798 = vmatpush2.bf16.msra.mxu0 %v11439
  %11799 = vmatprep.mubr.bf16.mxu0 %v11640
  %11800 = vmatmul.mubr.bf16.gmra.mxu0 %v11639
  %v11801 = vpop.f32.mrf.mxu0
  %v11802 = vadd.f32 0.0, %v11801
  %v11803 = vpop.f32.mrf.mxu0
  %v11804 = vpop.f32.mrf.mxu0
  %v11805 = vadd.f32 0.0, %v11804
  %v11806 = vpop.f32.mrf.mxu0
  %11807 = vmatprep.mubr.bf16.mxu0 %v11642
  %11808 = vmatmul.mubr.bf16.gmra.mxu0 %v11641
  %v11809 = vpop.f32.mrf.mxu0
  %v11810 = vadd.f32 0.0, %v11809
  %v11811 = vpop.f32.mrf.mxu0
  %v11812 = vpop.f32.mrf.mxu0
  %v11813 = vadd.f32 0.0, %v11812
  %v11814 = vpop.f32.mrf.mxu0
  %11815 = vmatprep.mubr.bf16.mxu0 %v11644
  %11816 = vmatmul.mubr.bf16.gmra.mxu0 %v11643
  %v11817 = vpop.f32.mrf.mxu0
  %v11818 = vadd.f32 0.0, %v11817
  %v11819 = vpop.f32.mrf.mxu0
  %v11820 = vpop.f32.mrf.mxu0
  %v11821 = vadd.f32 0.0, %v11820
  %v11822 = vpop.f32.mrf.mxu0
  %11823 = vmatprep.mubr.bf16.mxu0 %v11646
  %11824 = vmatmul.mubr.bf16.gmra.mxu0 %v11645
  %v11825 = vpop.f32.mrf.mxu0
  %v11826 = vadd.f32 0.0, %v11825
  %v11827 = vpop.f32.mrf.mxu0
  %v11828 = vpop.f32.mrf.mxu0
  %v11829 = vadd.f32 0.0, %v11828
  %v11830 = vpop.f32.mrf.mxu0
  %11831 = vmatprep.mubr.bf16.mxu0 %v11648
  %11832 = vmatmul.mubr.bf16.gmra.mxu0 %v11647
  %v11833 = vpop.f32.mrf.mxu0
  %v11834 = vadd.f32 0.0, %v11833
  %v11835 = vpop.f32.mrf.mxu0
  %v11836 = vpop.f32.mrf.mxu0
  %v11837 = vadd.f32 0.0, %v11836
  %v11838 = vpop.f32.mrf.mxu0
  %11839 = vmatprep.mubr.bf16.mxu0 %v11650
  %11840 = vmatmul.mubr.bf16.gmra.mxu0 %v11649
  %v11841 = vpop.f32.mrf.mxu0
  %v11842 = vadd.f32 0.0, %v11841
  %v11843 = vpop.f32.mrf.mxu0
  %v11844 = vpop.f32.mrf.mxu0
  %v11845 = vadd.f32 0.0, %v11844
  %v11846 = vpop.f32.mrf.mxu0
  %11847 = vmatprep.mubr.bf16.mxu0 %v11652
  %11848 = vmatmul.mubr.bf16.gmra.mxu0 %v11651
  %v11849 = vpop.f32.mrf.mxu0
  %v11850 = vadd.f32 0.0, %v11849
  %v11851 = vpop.f32.mrf.mxu0
  %v11852 = vpop.f32.mrf.mxu0
  %v11853 = vadd.f32 0.0, %v11852
  %v11854 = vpop.f32.mrf.mxu0
  %11855 = vmatprep.mubr.bf16.mxu0 %v11654
  %11856 = vmatmul.mubr.bf16.gmra.mxu0 %v11653
  %v11857 = vpop.f32.mrf.mxu0
  %v11858 = vadd.f32 0.0, %v11857
  %v11859 = vpop.f32.mrf.mxu0
  %v11860 = vpop.f32.mrf.mxu0
  %v11861 = vadd.f32 0.0, %v11860
  %v11862 = vpop.f32.mrf.mxu0
  %11863 = vmatprep.mubr.bf16.mxu0 %v11656
  %11864 = vmatmul.mubr.bf16.gmra.mxu0 %v11655
  %v11865 = vpop.f32.mrf.mxu0
  %v11866 = vadd.f32 0.0, %v11865
  %v11867 = vpop.f32.mrf.mxu0
  %v11868 = vpop.f32.mrf.mxu0
  %v11869 = vadd.f32 0.0, %v11868
  %v11870 = vpop.f32.mrf.mxu0
  %11871 = vmatprep.mubr.bf16.mxu0 %v11658
  %11872 = vmatmul.mubr.bf16.gmra.mxu0 %v11657
  %v11873 = vpop.f32.mrf.mxu0
  %v11874 = vadd.f32 0.0, %v11873
  %v11875 = vpop.f32.mrf.mxu0
  %v11876 = vpop.f32.mrf.mxu0
  %v11877 = vadd.f32 0.0, %v11876
  %v11878 = vpop.f32.mrf.mxu0
  %11879 = vmatprep.mubr.bf16.mxu0 %v11660
  %11880 = vmatmul.mubr.bf16.gmra.mxu0 %v11659
  %v11881 = vpop.f32.mrf.mxu0
  %v11882 = vadd.f32 0.0, %v11881
  %v11883 = vpop.f32.mrf.mxu0
  %v11884 = vpop.f32.mrf.mxu0
  %v11885 = vadd.f32 0.0, %v11884
  %v11886 = vpop.f32.mrf.mxu0
  %11887 = vmatprep.mubr.bf16.mxu0 %v11662
  %11888 = vmatmul.mubr.bf16.gmra.mxu0 %v11661
  %v11889 = vpop.f32.mrf.mxu0
  %v11890 = vadd.f32 0.0, %v11889
  %v11891 = vpop.f32.mrf.mxu0
  %v11892 = vpop.f32.mrf.mxu0
  %v11893 = vadd.f32 0.0, %v11892
  %v11894 = vpop.f32.mrf.mxu0
  %11895 = vmatprep.mubr.bf16.mxu0 %v11664
  %11896 = vmatmul.mubr.bf16.gmra.mxu0 %v11663
  %v11897 = vpop.f32.mrf.mxu0
  %v11898 = vadd.f32 0.0, %v11897
  %v11899 = vpop.f32.mrf.mxu0
  %v11900 = vpop.f32.mrf.mxu0
  %v11901 = vadd.f32 0.0, %v11900
  %v11902 = vpop.f32.mrf.mxu0
  %11903 = vmatprep.mubr.bf16.mxu0 %v11666
  %11904 = vmatmul.mubr.bf16.gmra.mxu0 %v11665
  %v11905 = vpop.f32.mrf.mxu0
  %v11906 = vadd.f32 0.0, %v11905
  %v11907 = vpop.f32.mrf.mxu0
  %v11908 = vpop.f32.mrf.mxu0
  %v11909 = vadd.f32 0.0, %v11908
  %v11910 = vpop.f32.mrf.mxu0
  %11911 = vmatprep.mubr.bf16.mxu0 %v11668
  %11912 = vmatmul.mubr.bf16.gmra.mxu0 %v11667
  %v11913 = vpop.f32.mrf.mxu0
  %v11914 = vadd.f32 0.0, %v11913
  %v11915 = vpop.f32.mrf.mxu0
  %v11916 = vpop.f32.mrf.mxu0
  %v11917 = vadd.f32 0.0, %v11916
  %v11918 = vpop.f32.mrf.mxu0
  %11919 = vmatprep.mubr.bf16.mxu0 %v11670
  %11920 = vmatmul.mubr.bf16.gmra.mxu0 %v11669
  %v11921 = vpop.f32.mrf.mxu0
  %v11922 = vadd.f32 0.0, %v11921
  %v11923 = vpop.f32.mrf.mxu0
  %v11924 = vpop.f32.mrf.mxu0
  %v11925 = vadd.f32 0.0, %v11924
  %v11926 = vpop.f32.mrf.mxu0
  %11927 = vmatprep.mubr.bf16.mxu0 %v11672
  %11928 = vmatmul.mubr.bf16.gmra.mxu0 %v11671
  %v11929 = vpop.f32.mrf.mxu0
  %v11930 = vadd.f32 0.0, %v11929
  %v11931 = vpop.f32.mrf.mxu0
  %v11932 = vpop.f32.mrf.mxu0
  %v11933 = vadd.f32 0.0, %v11932
  %v11934 = vpop.f32.mrf.mxu0
  %11935 = vmatprep.mubr.bf16.mxu0 %v11674
  %11936 = vmatmul.mubr.bf16.gmra.mxu0 %v11673
  %v11937 = vpop.f32.mrf.mxu0
  %v11938 = vadd.f32 0.0, %v11937
  %v11939 = vpop.f32.mrf.mxu0
  %v11940 = vpop.f32.mrf.mxu0
  %v11941 = vadd.f32 0.0, %v11940
  %v11942 = vpop.f32.mrf.mxu0
  %11943 = vmatprep.mubr.bf16.mxu0 %v11676
  %11944 = vmatmul.mubr.bf16.gmra.mxu0 %v11675
  %v11945 = vpop.f32.mrf.mxu0
  %v11946 = vadd.f32 0.0, %v11945
  %v11947 = vpop.f32.mrf.mxu0
  %v11948 = vpop.f32.mrf.mxu0
  %v11949 = vadd.f32 0.0, %v11948
  %v11950 = vpop.f32.mrf.mxu0
  %11951 = vmatprep.mubr.bf16.mxu0 %v11678
  %11952 = vmatmul.mubr.bf16.gmra.mxu0 %v11677
  %v11953 = vpop.f32.mrf.mxu0
  %v11954 = vadd.f32 0.0, %v11953
  %v11955 = vpop.f32.mrf.mxu0
  %v11956 = vpop.f32.mrf.mxu0
  %v11957 = vadd.f32 0.0, %v11956
  %v11958 = vpop.f32.mrf.mxu0
  %11959 = vmatprep.mubr.bf16.mxu0 %v11680
  %11960 = vmatmul.mubr.bf16.gmra.mxu0 %v11679
  %v11961 = vpop.f32.mrf.mxu0
  %v11962 = vadd.f32 0.0, %v11961
  %v11963 = vpop.f32.mrf.mxu0
  %v11964 = vpop.f32.mrf.mxu0
  %v11965 = vadd.f32 0.0, %v11964
  %v11966 = vpop.f32.mrf.mxu0
  %11967 = vmatprep.mubr.bf16.mxu0 %v11682
  %11968 = vmatmul.mubr.bf16.gmra.mxu0 %v11681
  %v11969 = vpop.f32.mrf.mxu0
  %v11970 = vadd.f32 0.0, %v11969
  %v11971 = vpop.f32.mrf.mxu0
  %v11972 = vpop.f32.mrf.mxu0
  %v11973 = vadd.f32 0.0, %v11972
  %v11974 = vpop.f32.mrf.mxu0
  %11975 = vmatprep.mubr.bf16.mxu0 %v11684
  %11976 = vmatmul.mubr.bf16.gmra.mxu0 %v11683
  %v11977 = vpop.f32.mrf.mxu0
  %v11978 = vadd.f32 0.0, %v11977
  %v11979 = vpop.f32.mrf.mxu0
  %v11980 = vpop.f32.mrf.mxu0
  %v11981 = vadd.f32 0.0, %v11980
  %v11982 = vpop.f32.mrf.mxu0
  %11983 = vmatprep.mubr.bf16.mxu0 %v11686
  %11984 = vmatmul.mubr.bf16.gmra.mxu0 %v11685
  %v11985 = vpop.f32.mrf.mxu0
  %v11986 = vadd.f32 0.0, %v11985
  %v11987 = vpop.f32.mrf.mxu0
  %v11988 = vpop.f32.mrf.mxu0
  %v11989 = vadd.f32 0.0, %v11988
  %v11990 = vpop.f32.mrf.mxu0
  %11991 = vmatprep.mubr.bf16.mxu0 %v11688
  %11992 = vmatmul.mubr.bf16.gmra.mxu0 %v11687
  %v11993 = vpop.f32.mrf.mxu0
  %v11994 = vadd.f32 0.0, %v11993
  %v11995 = vpop.f32.mrf.mxu0
  %v11996 = vpop.f32.mrf.mxu0
  %v11997 = vadd.f32 0.0, %v11996
  %v11998 = vpop.f32.mrf.mxu0
  %11999 = vmatprep.mubr.bf16.mxu0 %v11690
  %12000 = vmatmul.mubr.bf16.gmra.mxu0 %v11689
  %v12001 = vpop.f32.mrf.mxu0
  %v12002 = vadd.f32 0.0, %v12001
  %v12003 = vpop.f32.mrf.mxu0
  %v12004 = vpop.f32.mrf.mxu0
  %v12005 = vadd.f32 0.0, %v12004
  %v12006 = vpop.f32.mrf.mxu0
  %12007 = vmatprep.mubr.bf16.mxu0 %v11692
  %12008 = vmatmul.mubr.bf16.gmra.mxu0 %v11691
  %v12009 = vpop.f32.mrf.mxu0
  %v12010 = vadd.f32 0.0, %v12009
  %v12011 = vpop.f32.mrf.mxu0
  %v12012 = vpop.f32.mrf.mxu0
  %v12013 = vadd.f32 0.0, %v12012
  %v12014 = vpop.f32.mrf.mxu0
  %12015 = vmatprep.mubr.bf16.mxu0 %v11694
  %12016 = vmatmul.mubr.bf16.gmra.mxu0 %v11693
  %v12017 = vpop.f32.mrf.mxu0
  %v12018 = vadd.f32 0.0, %v12017
  %v12019 = vpop.f32.mrf.mxu0
  %v12020 = vpop.f32.mrf.mxu0
  %v12021 = vadd.f32 0.0, %v12020
  %v12022 = vpop.f32.mrf.mxu0
  %12023 = vmatprep.mubr.bf16.mxu0 %v11696
  %12024 = vmatmul.mubr.bf16.gmra.mxu0 %v11695
  %v12025 = vpop.f32.mrf.mxu0
  %v12026 = vadd.f32 0.0, %v12025
  %v12027 = vpop.f32.mrf.mxu0
  %v12028 = vpop.f32.mrf.mxu0
  %v12029 = vadd.f32 0.0, %v12028
  %v12030 = vpop.f32.mrf.mxu0
  %12031 = vmatprep.mubr.bf16.mxu0 %v11698
  %12032 = vmatmul.mubr.bf16.gmra.mxu0 %v11697
  %v12033 = vpop.f32.mrf.mxu0
  %v12034 = vadd.f32 0.0, %v12033
  %v12035 = vpop.f32.mrf.mxu0
  %v12036 = vpop.f32.mrf.mxu0
  %v12037 = vadd.f32 0.0, %v12036
  %v12038 = vpop.f32.mrf.mxu0
  %12039 = vmatprep.mubr.bf16.mxu0 %v11700
  %12040 = vmatmul.mubr.bf16.gmra.mxu0 %v11699
  %v12041 = vpop.f32.mrf.mxu0
  %v12042 = vadd.f32 0.0, %v12041
  %v12043 = vpop.f32.mrf.mxu0
  %v12044 = vpop.f32.mrf.mxu0
  %v12045 = vadd.f32 0.0, %v12044
  %v12046 = vpop.f32.mrf.mxu0
  %12047 = vmatprep.mubr.bf16.mxu0 %v11702
  %12048 = vmatmul.mubr.bf16.gmra.mxu0 %v11701
  %v12049 = vpop.f32.mrf.mxu0
  %v12050 = vadd.f32 0.0, %v12049
  %v12051 = vpop.f32.mrf.mxu0
  %v12052 = vpop.f32.mrf.mxu0
  %v12053 = vadd.f32 0.0, %v12052
  %v12054 = vpop.f32.mrf.mxu0
  %12055 = vdwg.mxu0
  %v12056 = vadd.f32 %v11302, %v11802
  %v12057 = vadd.f32 %v11303, %v11805
  %v12058 = vadd.f32 %v11304, %v11810
  %v12059 = vadd.f32 %v11305, %v11813
  %v12060 = vadd.f32 %v11306, %v11818
  %v12061 = vadd.f32 %v11307, %v11821
  %v12062 = vadd.f32 %v11308, %v11826
  %v12063 = vadd.f32 %v11309, %v11829
  %v12064 = vadd.f32 %v11310, %v11834
  %v12065 = vadd.f32 %v11311, %v11837
  %v12066 = vadd.f32 %v11312, %v11842
  %v12067 = vadd.f32 %v11313, %v11845
  %v12068 = vadd.f32 %v11314, %v11850
  %v12069 = vadd.f32 %v11315, %v11853
  %v12070 = vadd.f32 %v11316, %v11858
  %v12071 = vadd.f32 %v11317, %v11861
  %v12072 = vadd.f32 %v11318, %v11866
  %v12073 = vadd.f32 %v11319, %v11869
  %v12074 = vadd.f32 %v11320, %v11874
  %v12075 = vadd.f32 %v11321, %v11877
  %v12076 = vadd.f32 %v11322, %v11882
  %v12077 = vadd.f32 %v11323, %v11885
  %v12078 = vadd.f32 %v11324, %v11890
  %v12079 = vadd.f32 %v11325, %v11893
  %v12080 = vadd.f32 %v11326, %v11898
  %v12081 = vadd.f32 %v11327, %v11901
  %v12082 = vadd.f32 %v11328, %v11906
  %v12083 = vadd.f32 %v11329, %v11909
  %v12084 = vadd.f32 %v11330, %v11914
  %v12085 = vadd.f32 %v11331, %v11917
  %v12086 = vadd.f32 %v11332, %v11922
  %v12087 = vadd.f32 %v11333, %v11925
  %v12088 = vadd.f32 %v11334, %v11930
  %v12089 = vadd.f32 %v11335, %v11933
  %v12090 = vadd.f32 %v11336, %v11938
  %v12091 = vadd.f32 %v11337, %v11941
  %v12092 = vadd.f32 %v11338, %v11946
  %v12093 = vadd.f32 %v11339, %v11949
  %v12094 = vadd.f32 %v11340, %v11954
  %v12095 = vadd.f32 %v11341, %v11957
  %v12096 = vadd.f32 %v11342, %v11962
  %v12097 = vadd.f32 %v11343, %v11965
  %v12098 = vadd.f32 %v11344, %v11970
  %v12099 = vadd.f32 %v11345, %v11973
  %v12100 = vadd.f32 %v11346, %v11978
  %v12101 = vadd.f32 %v11347, %v11981
  %v12102 = vadd.f32 %v11348, %v11986
  %v12103 = vadd.f32 %v11349, %v11989
  %v12104 = vadd.f32 %v11350, %v11994
  %v12105 = vadd.f32 %v11351, %v11997
  %v12106 = vadd.f32 %v11352, %v12002
  %v12107 = vadd.f32 %v11353, %v12005
  %v12108 = vadd.f32 %v11354, %v12010
  %v12109 = vadd.f32 %v11355, %v12013
  %v12110 = vadd.f32 %v11356, %v12018
  %v12111 = vadd.f32 %v11357, %v12021
  %v12112 = vadd.f32 %v11358, %v12026
  %v12113 = vadd.f32 %v11359, %v12029
  %v12114 = vadd.f32 %v11360, %v12034
  %v12115 = vadd.f32 %v11361, %v12037
  %v12116 = vadd.f32 %v11362, %v12042
  %v12117 = vadd.f32 %v11363, %v12045
  %v12118 = vadd.f32 %v11364, %v12050
  %v12119 = vadd.f32 %v11365, %v12053
  %v12120 = vld [vmem:[%s5] sm:$0x1]
  %v12122 = vlaneseq
  %v12123 = vshrl.u32 %v12122, 7
  %v12124 = vsub.s32 0, %v12123
  %v12125 = vrot.slane %v12120, %v12124
  %v12127 = vadd.f32 %v12056, %v12125
  %v12128 = vadd.f32 %v12057, %v12125
  %v12129 = vadd.f32 %v12058, %v12125
  %v12130 = vadd.f32 %v12059, %v12125
  %v12131 = vadd.f32 %v12060, %v12125
  %v12132 = vadd.f32 %v12061, %v12125
  %v12133 = vadd.f32 %v12062, %v12125
  %v12134 = vadd.f32 %v12063, %v12125
  %v12135 = vadd.f32 %v12064, %v12125
  %v12136 = vadd.f32 %v12065, %v12125
  %v12137 = vadd.f32 %v12066, %v12125
  %v12138 = vadd.f32 %v12067, %v12125
  %v12139 = vadd.f32 %v12068, %v12125
  %v12140 = vadd.f32 %v12069, %v12125
  %v12141 = vadd.f32 %v12070, %v12125
  %v12142 = vadd.f32 %v12071, %v12125
  %v12143 = vadd.f32 %v12072, %v12125
  %v12144 = vadd.f32 %v12073, %v12125
  %v12145 = vadd.f32 %v12074, %v12125
  %v12146 = vadd.f32 %v12075, %v12125
  %v12147 = vadd.f32 %v12076, %v12125
  %v12148 = vadd.f32 %v12077, %v12125
  %v12149 = vadd.f32 %v12078, %v12125
  %v12150 = vadd.f32 %v12079, %v12125
  %v12151 = vadd.f32 %v12080, %v12125
  %v12152 = vadd.f32 %v12081, %v12125
  %v12153 = vadd.f32 %v12082, %v12125
  %v12154 = vadd.f32 %v12083, %v12125
  %v12155 = vadd.f32 %v12084, %v12125
  %v12156 = vadd.f32 %v12085, %v12125
  %v12157 = vadd.f32 %v12086, %v12125
  %v12158 = vadd.f32 %v12087, %v12125
  %v12159 = vadd.f32 %v12088, %v12125
  %v12160 = vadd.f32 %v12089, %v12125
  %v12161 = vadd.f32 %v12090, %v12125
  %v12162 = vadd.f32 %v12091, %v12125
  %v12163 = vadd.f32 %v12092, %v12125
  %v12164 = vadd.f32 %v12093, %v12125
  %v12165 = vadd.f32 %v12094, %v12125
  %v12166 = vadd.f32 %v12095, %v12125
  %v12167 = vadd.f32 %v12096, %v12125
  %v12168 = vadd.f32 %v12097, %v12125
  %v12169 = vadd.f32 %v12098, %v12125
  %v12170 = vadd.f32 %v12099, %v12125
  %v12171 = vadd.f32 %v12100, %v12125
  %v12172 = vadd.f32 %v12101, %v12125
  %v12173 = vadd.f32 %v12102, %v12125
  %v12174 = vadd.f32 %v12103, %v12125
  %v12175 = vadd.f32 %v12104, %v12125
  %v12176 = vadd.f32 %v12105, %v12125
  %v12177 = vadd.f32 %v12106, %v12125
  %v12178 = vadd.f32 %v12107, %v12125
  %v12179 = vadd.f32 %v12108, %v12125
  %v12180 = vadd.f32 %v12109, %v12125
  %v12181 = vadd.f32 %v12110, %v12125
  %v12182 = vadd.f32 %v12111, %v12125
  %v12183 = vadd.f32 %v12112, %v12125
  %v12184 = vadd.f32 %v12113, %v12125
  %v12185 = vadd.f32 %v12114, %v12125
  %v12186 = vadd.f32 %v12115, %v12125
  %v12187 = vadd.f32 %v12116, %v12125
  %v12188 = vadd.f32 %v12117, %v12125
  %v12189 = vadd.f32 %v12118, %v12125
  %v12190 = vadd.f32 %v12119, %v12125
  %v12191 = vmax.f32 %v12127, 0.0
  %v12192 = vmax.f32 %v12128, 0.0
  %v12193 = vmax.f32 %v12129, 0.0
  %v12194 = vmax.f32 %v12130, 0.0
  %v12195 = vmax.f32 %v12131, 0.0
  %v12196 = vmax.f32 %v12132, 0.0
  %v12197 = vmax.f32 %v12133, 0.0
  %v12198 = vmax.f32 %v12134, 0.0
  %v12199 = vmax.f32 %v12135, 0.0
  %v12200 = vmax.f32 %v12136, 0.0
  %v12201 = vmax.f32 %v12137, 0.0
  %v12202 = vmax.f32 %v12138, 0.0
  %v12203 = vmax.f32 %v12139, 0.0
  %v12204 = vmax.f32 %v12140, 0.0
  %v12205 = vmax.f32 %v12141, 0.0
  %v12206 = vmax.f32 %v12142, 0.0
  %v12207 = vmax.f32 %v12143, 0.0
  %v12208 = vmax.f32 %v12144, 0.0
  %v12209 = vmax.f32 %v12145, 0.0
  %v12210 = vmax.f32 %v12146, 0.0
  %v12211 = vmax.f32 %v12147, 0.0
  %v12212 = vmax.f32 %v12148, 0.0
  %v12213 = vmax.f32 %v12149, 0.0
  %v12214 = vmax.f32 %v12150, 0.0
  %v12215 = vmax.f32 %v12151, 0.0
  %v12216 = vmax.f32 %v12152, 0.0
  %v12217 = vmax.f32 %v12153, 0.0
  %v12218 = vmax.f32 %v12154, 0.0
  %v12219 = vmax.f32 %v12155, 0.0
  %v12220 = vmax.f32 %v12156, 0.0
  %v12221 = vmax.f32 %v12157, 0.0
  %v12222 = vmax.f32 %v12158, 0.0
  %v12223 = vmax.f32 %v12159, 0.0
  %v12224 = vmax.f32 %v12160, 0.0
  %v12225 = vmax.f32 %v12161, 0.0
  %v12226 = vmax.f32 %v12162, 0.0
  %v12227 = vmax.f32 %v12163, 0.0
  %v12228 = vmax.f32 %v12164, 0.0
  %v12229 = vmax.f32 %v12165, 0.0
  %v12230 = vmax.f32 %v12166, 0.0
  %v12231 = vmax.f32 %v12167, 0.0
  %v12232 = vmax.f32 %v12168, 0.0
  %v12233 = vmax.f32 %v12169, 0.0
  %v12234 = vmax.f32 %v12170, 0.0
  %v12235 = vmax.f32 %v12171, 0.0
  %v12236 = vmax.f32 %v12172, 0.0
  %v12237 = vmax.f32 %v12173, 0.0
  %v12238 = vmax.f32 %v12174, 0.0
  %v12239 = vmax.f32 %v12175, 0.0
  %v12240 = vmax.f32 %v12176, 0.0
  %v12241 = vmax.f32 %v12177, 0.0
  %v12242 = vmax.f32 %v12178, 0.0
  %v12243 = vmax.f32 %v12179, 0.0
  %v12244 = vmax.f32 %v12180, 0.0
  %v12245 = vmax.f32 %v12181, 0.0
  %v12246 = vmax.f32 %v12182, 0.0
  %v12247 = vmax.f32 %v12183, 0.0
  %v12248 = vmax.f32 %v12184, 0.0
  %v12249 = vmax.f32 %v12185, 0.0
  %v12250 = vmax.f32 %v12186, 0.0
  %v12251 = vmax.f32 %v12187, 0.0
  %v12252 = vmax.f32 %v12188, 0.0
  %v12253 = vmax.f32 %v12189, 0.0
  %v12254 = vmax.f32 %v12190, 0.0
  %v12255 = vmax.f32 %v12191, %v12207
  %v12256 = vmax.f32 %v12192, %v12208
  %v12257 = vmax.f32 %v12193, %v12209
  %v12258 = vmax.f32 %v12194, %v12210
  %v12259 = vmax.f32 %v12195, %v12211
  %v12260 = vmax.f32 %v12196, %v12212
  %v12261 = vmax.f32 %v12197, %v12213
  %v12262 = vmax.f32 %v12198, %v12214
  %v12263 = vmax.f32 %v12199, %v12215
  %v12264 = vmax.f32 %v12200, %v12216
  %v12265 = vmax.f32 %v12201, %v12217
  %v12266 = vmax.f32 %v12202, %v12218
  %v12267 = vmax.f32 %v12203, %v12219
  %v12268 = vmax.f32 %v12204, %v12220
  %v12269 = vmax.f32 %v12205, %v12221
  %v12270 = vmax.f32 %v12206, %v12222
  %v12271 = vmax.f32 %v12223, %v12239
  %v12272 = vmax.f32 %v12224, %v12240
  %v12273 = vmax.f32 %v12225, %v12241
  %v12274 = vmax.f32 %v12226, %v12242
  %v12275 = vmax.f32 %v12227, %v12243
  %v12276 = vmax.f32 %v12228, %v12244
  %v12277 = vmax.f32 %v12229, %v12245
  %v12278 = vmax.f32 %v12230, %v12246
  %v12279 = vmax.f32 %v12231, %v12247
  %v12280 = vmax.f32 %v12232, %v12248
  %v12281 = vmax.f32 %v12233, %v12249
  %v12282 = vmax.f32 %v12234, %v12250
  %v12283 = vmax.f32 %v12235, %v12251
  %v12284 = vmax.f32 %v12236, %v12252
  %v12285 = vmax.f32 %v12237, %v12253
  %v12286 = vmax.f32 %v12238, %v12254
  %v12287 = vmax.f32 %v12255, %v12271
  %v12288 = vmax.f32 %v12256, %v12272
  %v12289 = vmax.f32 %v12257, %v12273
  %v12290 = vmax.f32 %v12258, %v12274
  %v12291 = vmax.f32 %v12259, %v12275
  %v12292 = vmax.f32 %v12260, %v12276
  %v12293 = vmax.f32 %v12261, %v12277
  %v12294 = vmax.f32 %v12262, %v12278
  %v12295 = vmax.f32 %v12263, %v12279
  %v12296 = vmax.f32 %v12264, %v12280
  %v12297 = vmax.f32 %v12265, %v12281
  %v12298 = vmax.f32 %v12266, %v12282
  %v12299 = vmax.f32 %v12267, %v12283
  %v12300 = vmax.f32 %v12268, %v12284
  %v12301 = vmax.f32 %v12269, %v12285
  %v12302 = vmax.f32 %v12270, %v12286
  %v12303 = vpack.c.bf16 %v12287, %v12287
  %v12304 = vld [vmem:[%s6] sm:$0xf]
  %v12305 = vld [vmem:[%s6 + $0x4] sm:$0xf]
  %v12306 = vld [vmem:[%s6 + $0x8] sm:$0xf]
  %v12307 = vld [vmem:[%s6 + $0xc] sm:$0xf]
  %v12308 = vld [vmem:[%s6 + $0x10] sm:$0xf]
  %v12309 = vld [vmem:[%s6 + $0x14] sm:$0xf]
  %v12310 = vld [vmem:[%s6 + $0x18] sm:$0xf]
  %v12311 = vld [vmem:[%s6 + $0x1c] sm:$0xf]
  %v12312 = vld [vmem:[%s6 + $0x20] sm:$0xf]
  %v12313 = vld [vmem:[%s6 + $0x24] sm:$0xf]
  %v12314 = vld [vmem:[%s6 + $0x28] sm:$0xf]
  %v12315 = vld [vmem:[%s6 + $0x2c] sm:$0xf]
  %v12316 = vld [vmem:[%s6 + $0x30] sm:$0xf]
  %v12317 = vld [vmem:[%s6 + $0x34] sm:$0xf]
  %v12318 = vld [vmem:[%s6 + $0x38] sm:$0xf]
  %v12319 = vld [vmem:[%s6 + $0x3c] sm:$0xf]
  %v12320 = vpack.c.bf16 %v12288, %v12288
  %s12321 = scalar_lea.vmem %s6, 64
  %v12322 = vld [vmem:[%s12321] sm:$0xf]
  %v12323 = vld [vmem:[%s12321 + $0x4] sm:$0xf]
  %v12324 = vld [vmem:[%s12321 + $0x8] sm:$0xf]
  %v12325 = vld [vmem:[%s12321 + $0xc] sm:$0xf]
  %v12326 = vld [vmem:[%s12321 + $0x10] sm:$0xf]
  %v12327 = vld [vmem:[%s12321 + $0x14] sm:$0xf]
  %v12328 = vld [vmem:[%s12321 + $0x18] sm:$0xf]
  %v12329 = vld [vmem:[%s12321 + $0x1c] sm:$0xf]
  %v12330 = vld [vmem:[%s12321 + $0x20] sm:$0xf]
  %v12331 = vld [vmem:[%s12321 + $0x24] sm:$0xf]
  %v12332 = vld [vmem:[%s12321 + $0x28] sm:$0xf]
  %v12333 = vld [vmem:[%s12321 + $0x2c] sm:$0xf]
  %v12334 = vld [vmem:[%s12321 + $0x30] sm:$0xf]
  %v12335 = vld [vmem:[%s12321 + $0x34] sm:$0xf]
  %v12336 = vld [vmem:[%s12321 + $0x38] sm:$0xf]
  %v12337 = vld [vmem:[%s12321 + $0x3c] sm:$0xf]
  %v12354 = vunpack.c.l.b16 %v12322
  %v12355 = vunpack.c.l.b16 %v12323
  %v12356 = vunpack.c.l.b16 %v12324
  %v12357 = vunpack.c.l.b16 %v12325
  %v12358 = vunpack.c.l.b16 %v12326
  %v12359 = vunpack.c.l.b16 %v12327
  %v12360 = vunpack.c.l.b16 %v12328
  %v12361 = vunpack.c.l.b16 %v12329
  %v12362 = vunpack.c.l.b16 %v12330
  %v12363 = vunpack.c.l.b16 %v12331
  %v12364 = vunpack.c.l.b16 %v12332
  %v12365 = vunpack.c.l.b16 %v12333
  %v12366 = vunpack.c.l.b16 %v12334
  %v12367 = vunpack.c.l.b16 %v12335
  %v12368 = vunpack.c.l.b16 %v12336
  %v12369 = vunpack.c.l.b16 %v12337
  %v12370 = vpack.c.b16 %v12355, %v12354
  %v12371 = vpack.c.b16 %v12357, %v12356
  %v12372 = vpack.c.b16 %v12359, %v12358
  %v12373 = vpack.c.b16 %v12361, %v12360
  %v12374 = vpack.c.b16 %v12363, %v12362
  %v12375 = vpack.c.b16 %v12365, %v12364
  %v12376 = vpack.c.b16 %v12367, %v12366
  %v12377 = vpack.c.b16 %v12369, %v12368
  %12386 = vmatprep.subr.bf16.mxu0 0
  %12387 = vmatpush1.bf16.msra.mxu0 %v12377
  %12388 = vmatprep.subr.bf16.mxu0 0
  %12389 = vmatpush1.bf16.msra.mxu0 %v12376
  %12390 = vmatprep.subr.bf16.mxu0 0
  %12391 = vmatpush1.bf16.msra.mxu0 %v12375
  %12392 = vmatprep.subr.bf16.mxu0 0
  %12393 = vmatpush1.bf16.msra.mxu0 %v12374
  %12394 = vmatprep.subr.bf16.mxu0 0
  %12395 = vmatpush1.bf16.msra.mxu0 %v12373
  %12396 = vmatprep.subr.bf16.mxu0 0
  %12397 = vmatpush1.bf16.msra.mxu0 %v12372
  %12398 = vmatprep.subr.bf16.mxu0 0
  %12399 = vmatpush1.bf16.msra.mxu0 %v12371
  %12400 = vmatprep.subr.bf16.mxu0 0
  %12401 = vmatpush1.bf16.msra.mxu0 %v12370
  %12402 = vmatprep.subr.bf16.mxu0 0
  %12403 = vmatpush2.bf16.msra.mxu0 0
  %12404 = vmatprep.subr.bf16.mxu0 0
  %12405 = vmatpush2.bf16.msra.mxu0 0
  %12406 = vmatprep.subr.bf16.mxu0 0
  %12407 = vmatpush2.bf16.msra.mxu0 0
  %12408 = vmatprep.subr.bf16.mxu0 0
  %12409 = vmatpush2.bf16.msra.mxu0 0
  %12410 = vmatprep.subr.bf16.mxu0 0
  %12411 = vmatpush2.bf16.msra.mxu0 0
  %12412 = vmatprep.subr.bf16.mxu0 0
  %12413 = vmatpush2.bf16.msra.mxu0 0
  %12414 = vmatprep.subr.bf16.mxu0 0
  %12415 = vmatpush2.bf16.msra.mxu0 0
  %12416 = vmatprep.subr.bf16.mxu0 0
  %12417 = vmatpush2.bf16.msra.mxu0 0
  %12418 = vmatprep.mubr.bf16.mxu0 0
  %12419 = vmatmul.mubr.bf16.gmra.mxu0 %v12320
  %v12420 = vpop.f32.mrf.mxu0
  %v12421 = vadd.f32 0.0, %v12420
  %v12422 = vpop.f32.mrf.mxu0
  %v12423 = vpop.f32.mrf.mxu0
  %v12424 = vpop.f32.mrf.mxu0
  %12425 = vdwg.mxu0
  %v12442 = vunpack.c.l.b16 %v12304
  %v12443 = vunpack.c.l.b16 %v12305
  %v12444 = vunpack.c.l.b16 %v12306
  %v12445 = vunpack.c.l.b16 %v12307
  %v12446 = vunpack.c.l.b16 %v12308
  %v12447 = vunpack.c.l.b16 %v12309
  %v12448 = vunpack.c.l.b16 %v12310
  %v12449 = vunpack.c.l.b16 %v12311
  %v12450 = vunpack.c.l.b16 %v12312
  %v12451 = vunpack.c.l.b16 %v12313
  %v12452 = vunpack.c.l.b16 %v12314
  %v12453 = vunpack.c.l.b16 %v12315
  %v12454 = vunpack.c.l.b16 %v12316
  %v12455 = vunpack.c.l.b16 %v12317
  %v12456 = vunpack.c.l.b16 %v12318
  %v12457 = vunpack.c.l.b16 %v12319
  %v12458 = vpack.c.b16 %v12443, %v12442
  %v12459 = vpack.c.b16 %v12445, %v12444
  %v12460 = vpack.c.b16 %v12447, %v12446
  %v12461 = vpack.c.b16 %v12449, %v12448
  %v12462 = vpack.c.b16 %v12451, %v12450
  %v12463 = vpack.c.b16 %v12453, %v12452
  %v12464 = vpack.c.b16 %v12455, %v12454
  %v12465 = vpack.c.b16 %v12457, %v12456
  %12474 = vmatprep.subr.bf16.mxu0 0
  %12475 = vmatpush1.bf16.msra.mxu0 %v12465
  %12476 = vmatprep.subr.bf16.mxu0 0
  %12477 = vmatpush1.bf16.msra.mxu0 %v12464
  %12478 = vmatprep.subr.bf16.mxu0 0
  %12479 = vmatpush1.bf16.msra.mxu0 %v12463
  %12480 = vmatprep.subr.bf16.mxu0 0
  %12481 = vmatpush1.bf16.msra.mxu0 %v12462
  %12482 = vmatprep.subr.bf16.mxu0 0
  %12483 = vmatpush1.bf16.msra.mxu0 %v12461
  %12484 = vmatprep.subr.bf16.mxu0 0
  %12485 = vmatpush1.bf16.msra.mxu0 %v12460
  %12486 = vmatprep.subr.bf16.mxu0 0
  %12487 = vmatpush1.bf16.msra.mxu0 %v12459
  %12488 = vmatprep.subr.bf16.mxu0 0
  %12489 = vmatpush1.bf16.msra.mxu0 %v12458
  %12490 = vmatprep.subr.bf16.mxu0 0
  %12491 = vmatpush2.bf16.msra.mxu0 0
  %12492 = vmatprep.subr.bf16.mxu0 0
  %12493 = vmatpush2.bf16.msra.mxu0 0
  %12494 = vmatprep.subr.bf16.mxu0 0
  %12495 = vmatpush2.bf16.msra.mxu0 0
  %12496 = vmatprep.subr.bf16.mxu0 0
  %12497 = vmatpush2.bf16.msra.mxu0 0
  %12498 = vmatprep.subr.bf16.mxu0 0
  %12499 = vmatpush2.bf16.msra.mxu0 0
  %12500 = vmatprep.subr.bf16.mxu0 0
  %12501 = vmatpush2.bf16.msra.mxu0 0
  %12502 = vmatprep.subr.bf16.mxu0 0
  %12503 = vmatpush2.bf16.msra.mxu0 0
  %12504 = vmatprep.subr.bf16.mxu0 0
  %12505 = vmatpush2.bf16.msra.mxu0 0
  %12506 = vmatprep.mubr.bf16.mxu0 0
  %12507 = vmatmul.mubr.bf16.gmra.mxu0 %v12303
  %v12508 = vpop.f32.mrf.mxu0
  %v12509 = vadd.f32 %v12421, %v12508
  %v12510 = vpop.f32.mrf.mxu0
  %v12511 = vpop.f32.mrf.mxu0
  %v12512 = vpop.f32.mrf.mxu0
  %12513 = vdwg.mxu0
  %v12514 = vpack.c.bf16 %v12289, %v12289
  %s12515 = scalar_lea.vmem %s6, 128
  %v12516 = vld [vmem:[%s12515] sm:$0xf]
  %v12517 = vld [vmem:[%s12515 + $0x4] sm:$0xf]
  %v12518 = vld [vmem:[%s12515 + $0x8] sm:$0xf]
  %v12519 = vld [vmem:[%s12515 + $0xc] sm:$0xf]
  %v12520 = vld [vmem:[%s12515 + $0x10] sm:$0xf]
  %v12521 = vld [vmem:[%s12515 + $0x14] sm:$0xf]
  %v12522 = vld [vmem:[%s12515 + $0x18] sm:$0xf]
  %v12523 = vld [vmem:[%s12515 + $0x1c] sm:$0xf]
  %v12524 = vld [vmem:[%s12515 + $0x20] sm:$0xf]
  %v12525 = vld [vmem:[%s12515 + $0x24] sm:$0xf]
  %v12526 = vld [vmem:[%s12515 + $0x28] sm:$0xf]
  %v12527 = vld [vmem:[%s12515 + $0x2c] sm:$0xf]
  %v12528 = vld [vmem:[%s12515 + $0x30] sm:$0xf]
  %v12529 = vld [vmem:[%s12515 + $0x34] sm:$0xf]
  %v12530 = vld [vmem:[%s12515 + $0x38] sm:$0xf]
  %v12531 = vld [vmem:[%s12515 + $0x3c] sm:$0xf]
  %v12548 = vunpack.c.l.b16 %v12516
  %v12549 = vunpack.c.l.b16 %v12517
  %v12550 = vunpack.c.l.b16 %v12518
  %v12551 = vunpack.c.l.b16 %v12519
  %v12552 = vunpack.c.l.b16 %v12520
  %v12553 = vunpack.c.l.b16 %v12521
  %v12554 = vunpack.c.l.b16 %v12522
  %v12555 = vunpack.c.l.b16 %v12523
  %v12556 = vunpack.c.l.b16 %v12524
  %v12557 = vunpack.c.l.b16 %v12525
  %v12558 = vunpack.c.l.b16 %v12526
  %v12559 = vunpack.c.l.b16 %v12527
  %v12560 = vunpack.c.l.b16 %v12528
  %v12561 = vunpack.c.l.b16 %v12529
  %v12562 = vunpack.c.l.b16 %v12530
  %v12563 = vunpack.c.l.b16 %v12531
  %v12564 = vpack.c.b16 %v12549, %v12548
  %v12565 = vpack.c.b16 %v12551, %v12550
  %v12566 = vpack.c.b16 %v12553, %v12552
  %v12567 = vpack.c.b16 %v12555, %v12554
  %v12568 = vpack.c.b16 %v12557, %v12556
  %v12569 = vpack.c.b16 %v12559, %v12558
  %v12570 = vpack.c.b16 %v12561, %v12560
  %v12571 = vpack.c.b16 %v12563, %v12562
  %12580 = vmatprep.subr.bf16.mxu0 0
  %12581 = vmatpush1.bf16.msra.mxu0 %v12571
  %12582 = vmatprep.subr.bf16.mxu0 0
  %12583 = vmatpush1.bf16.msra.mxu0 %v12570
  %12584 = vmatprep.subr.bf16.mxu0 0
  %12585 = vmatpush1.bf16.msra.mxu0 %v12569
  %12586 = vmatprep.subr.bf16.mxu0 0
  %12587 = vmatpush1.bf16.msra.mxu0 %v12568
  %12588 = vmatprep.subr.bf16.mxu0 0
  %12589 = vmatpush1.bf16.msra.mxu0 %v12567
  %12590 = vmatprep.subr.bf16.mxu0 0
  %12591 = vmatpush1.bf16.msra.mxu0 %v12566
  %12592 = vmatprep.subr.bf16.mxu0 0
  %12593 = vmatpush1.bf16.msra.mxu0 %v12565
  %12594 = vmatprep.subr.bf16.mxu0 0
  %12595 = vmatpush1.bf16.msra.mxu0 %v12564
  %12596 = vmatprep.subr.bf16.mxu0 0
  %12597 = vmatpush2.bf16.msra.mxu0 0
  %12598 = vmatprep.subr.bf16.mxu0 0
  %12599 = vmatpush2.bf16.msra.mxu0 0
  %12600 = vmatprep.subr.bf16.mxu0 0
  %12601 = vmatpush2.bf16.msra.mxu0 0
  %12602 = vmatprep.subr.bf16.mxu0 0
  %12603 = vmatpush2.bf16.msra.mxu0 0
  %12604 = vmatprep.subr.bf16.mxu0 0
  %12605 = vmatpush2.bf16.msra.mxu0 0
  %12606 = vmatprep.subr.bf16.mxu0 0
  %12607 = vmatpush2.bf16.msra.mxu0 0
  %12608 = vmatprep.subr.bf16.mxu0 0
  %12609 = vmatpush2.bf16.msra.mxu0 0
  %12610 = vmatprep.subr.bf16.mxu0 0
  %12611 = vmatpush2.bf16.msra.mxu0 0
  %12612 = vmatprep.mubr.bf16.mxu0 0
  %12613 = vmatmul.mubr.bf16.gmra.mxu0 %v12514
  %v12614 = vpop.f32.mrf.mxu0
  %v12615 = vadd.f32 0.0, %v12614
  %v12616 = vpop.f32.mrf.mxu0
  %v12617 = vpop.f32.mrf.mxu0
  %v12618 = vpop.f32.mrf.mxu0
  %12619 = vdwg.mxu0
  %v12620 = vadd.f32 %v12509, %v12615
  %v12621 = vpack.c.bf16 %v12290, %v12290
  %s12622 = scalar_lea.vmem %s6, 192
  %v12623 = vld [vmem:[%s12622] sm:$0xf]
  %v12624 = vld [vmem:[%s12622 + $0x4] sm:$0xf]
  %v12625 = vld [vmem:[%s12622 + $0x8] sm:$0xf]
  %v12626 = vld [vmem:[%s12622 + $0xc] sm:$0xf]
  %v12627 = vld [vmem:[%s12622 + $0x10] sm:$0xf]
  %v12628 = vld [vmem:[%s12622 + $0x14] sm:$0xf]
  %v12629 = vld [vmem:[%s12622 + $0x18] sm:$0xf]
  %v12630 = vld [vmem:[%s12622 + $0x1c] sm:$0xf]
  %v12631 = vld [vmem:[%s12622 + $0x20] sm:$0xf]
  %v12632 = vld [vmem:[%s12622 + $0x24] sm:$0xf]
  %v12633 = vld [vmem:[%s12622 + $0x28] sm:$0xf]
  %v12634 = vld [vmem:[%s12622 + $0x2c] sm:$0xf]
  %v12635 = vld [vmem:[%s12622 + $0x30] sm:$0xf]
  %v12636 = vld [vmem:[%s12622 + $0x34] sm:$0xf]
  %v12637 = vld [vmem:[%s12622 + $0x38] sm:$0xf]
  %v12638 = vld [vmem:[%s12622 + $0x3c] sm:$0xf]
  %v12655 = vunpack.c.l.b16 %v12623
  %v12656 = vunpack.c.l.b16 %v12624
  %v12657 = vunpack.c.l.b16 %v12625
  %v12658 = vunpack.c.l.b16 %v12626
  %v12659 = vunpack.c.l.b16 %v12627
  %v12660 = vunpack.c.l.b16 %v12628
  %v12661 = vunpack.c.l.b16 %v12629
  %v12662 = vunpack.c.l.b16 %v12630
  %v12663 = vunpack.c.l.b16 %v12631
  %v12664 = vunpack.c.l.b16 %v12632
  %v12665 = vunpack.c.l.b16 %v12633
  %v12666 = vunpack.c.l.b16 %v12634
  %v12667 = vunpack.c.l.b16 %v12635
  %v12668 = vunpack.c.l.b16 %v12636
  %v12669 = vunpack.c.l.b16 %v12637
  %v12670 = vunpack.c.l.b16 %v12638
  %v12671 = vpack.c.b16 %v12656, %v12655
  %v12672 = vpack.c.b16 %v12658, %v12657
  %v12673 = vpack.c.b16 %v12660, %v12659
  %v12674 = vpack.c.b16 %v12662, %v12661
  %v12675 = vpack.c.b16 %v12664, %v12663
  %v12676 = vpack.c.b16 %v12666, %v12665
  %v12677 = vpack.c.b16 %v12668, %v12667
  %v12678 = vpack.c.b16 %v12670, %v12669
  %12687 = vmatprep.subr.bf16.mxu0 0
  %12688 = vmatpush1.bf16.msra.mxu0 %v12678
  %12689 = vmatprep.subr.bf16.mxu0 0
  %12690 = vmatpush1.bf16.msra.mxu0 %v12677
  %12691 = vmatprep.subr.bf16.mxu0 0
  %12692 = vmatpush1.bf16.msra.mxu0 %v12676
  %12693 = vmatprep.subr.bf16.mxu0 0
  %12694 = vmatpush1.bf16.msra.mxu0 %v12675
  %12695 = vmatprep.subr.bf16.mxu0 0
  %12696 = vmatpush1.bf16.msra.mxu0 %v12674
  %12697 = vmatprep.subr.bf16.mxu0 0
  %12698 = vmatpush1.bf16.msra.mxu0 %v12673
  %12699 = vmatprep.subr.bf16.mxu0 0
  %12700 = vmatpush1.bf16.msra.mxu0 %v12672
  %12701 = vmatprep.subr.bf16.mxu0 0
  %12702 = vmatpush1.bf16.msra.mxu0 %v12671
  %12703 = vmatprep.subr.bf16.mxu0 0
  %12704 = vmatpush2.bf16.msra.mxu0 0
  %12705 = vmatprep.subr.bf16.mxu0 0
  %12706 = vmatpush2.bf16.msra.mxu0 0
  %12707 = vmatprep.subr.bf16.mxu0 0
  %12708 = vmatpush2.bf16.msra.mxu0 0
  %12709 = vmatprep.subr.bf16.mxu0 0
  %12710 = vmatpush2.bf16.msra.mxu0 0
  %12711 = vmatprep.subr.bf16.mxu0 0
  %12712 = vmatpush2.bf16.msra.mxu0 0
  %12713 = vmatprep.subr.bf16.mxu0 0
  %12714 = vmatpush2.bf16.msra.mxu0 0
  %12715 = vmatprep.subr.bf16.mxu0 0
  %12716 = vmatpush2.bf16.msra.mxu0 0
  %12717 = vmatprep.subr.bf16.mxu0 0
  %12718 = vmatpush2.bf16.msra.mxu0 0
  %12719 = vmatprep.mubr.bf16.mxu0 0
  %12720 = vmatmul.mubr.bf16.gmra.mxu0 %v12621
  %v12721 = vpop.f32.mrf.mxu0
  %v12722 = vadd.f32 0.0, %v12721
  %v12723 = vpop.f32.mrf.mxu0
  %v12724 = vpop.f32.mrf.mxu0
  %v12725 = vpop.f32.mrf.mxu0
  %12726 = vdwg.mxu0
  %v12727 = vadd.f32 %v12620, %v12722
  %v12728 = vpack.c.bf16 %v12291, %v12291
  %s12729 = scalar_lea.vmem %s6, 256
  %v12730 = vld [vmem:[%s12729] sm:$0xf]
  %v12731 = vld [vmem:[%s12729 + $0x4] sm:$0xf]
  %v12732 = vld [vmem:[%s12729 + $0x8] sm:$0xf]
  %v12733 = vld [vmem:[%s12729 + $0xc] sm:$0xf]
  %v12734 = vld [vmem:[%s12729 + $0x10] sm:$0xf]
  %v12735 = vld [vmem:[%s12729 + $0x14] sm:$0xf]
  %v12736 = vld [vmem:[%s12729 + $0x18] sm:$0xf]
  %v12737 = vld [vmem:[%s12729 + $0x1c] sm:$0xf]
  %v12738 = vld [vmem:[%s12729 + $0x20] sm:$0xf]
  %v12739 = vld [vmem:[%s12729 + $0x24] sm:$0xf]
  %v12740 = vld [vmem:[%s12729 + $0x28] sm:$0xf]
  %v12741 = vld [vmem:[%s12729 + $0x2c] sm:$0xf]
  %v12742 = vld [vmem:[%s12729 + $0x30] sm:$0xf]
  %v12743 = vld [vmem:[%s12729 + $0x34] sm:$0xf]
  %v12744 = vld [vmem:[%s12729 + $0x38] sm:$0xf]
  %v12745 = vld [vmem:[%s12729 + $0x3c] sm:$0xf]
  %v12762 = vunpack.c.l.b16 %v12730
  %v12763 = vunpack.c.l.b16 %v12731
  %v12764 = vunpack.c.l.b16 %v12732
  %v12765 = vunpack.c.l.b16 %v12733
  %v12766 = vunpack.c.l.b16 %v12734
  %v12767 = vunpack.c.l.b16 %v12735
  %v12768 = vunpack.c.l.b16 %v12736
  %v12769 = vunpack.c.l.b16 %v12737
  %v12770 = vunpack.c.l.b16 %v12738
  %v12771 = vunpack.c.l.b16 %v12739
  %v12772 = vunpack.c.l.b16 %v12740
  %v12773 = vunpack.c.l.b16 %v12741
  %v12774 = vunpack.c.l.b16 %v12742
  %v12775 = vunpack.c.l.b16 %v12743
  %v12776 = vunpack.c.l.b16 %v12744
  %v12777 = vunpack.c.l.b16 %v12745
  %v12778 = vpack.c.b16 %v12763, %v12762
  %v12779 = vpack.c.b16 %v12765, %v12764
  %v12780 = vpack.c.b16 %v12767, %v12766
  %v12781 = vpack.c.b16 %v12769, %v12768
  %v12782 = vpack.c.b16 %v12771, %v12770
  %v12783 = vpack.c.b16 %v12773, %v12772
  %v12784 = vpack.c.b16 %v12775, %v12774
  %v12785 = vpack.c.b16 %v12777, %v12776
  %12794 = vmatprep.subr.bf16.mxu0 0
  %12795 = vmatpush1.bf16.msra.mxu0 %v12785
  %12796 = vmatprep.subr.bf16.mxu0 0
  %12797 = vmatpush1.bf16.msra.mxu0 %v12784
  %12798 = vmatprep.subr.bf16.mxu0 0
  %12799 = vmatpush1.bf16.msra.mxu0 %v12783
  %12800 = vmatprep.subr.bf16.mxu0 0
  %12801 = vmatpush1.bf16.msra.mxu0 %v12782
  %12802 = vmatprep.subr.bf16.mxu0 0
  %12803 = vmatpush1.bf16.msra.mxu0 %v12781
  %12804 = vmatprep.subr.bf16.mxu0 0
  %12805 = vmatpush1.bf16.msra.mxu0 %v12780
  %12806 = vmatprep.subr.bf16.mxu0 0
  %12807 = vmatpush1.bf16.msra.mxu0 %v12779
  %12808 = vmatprep.subr.bf16.mxu0 0
  %12809 = vmatpush1.bf16.msra.mxu0 %v12778
  %12810 = vmatprep.subr.bf16.mxu0 0
  %12811 = vmatpush2.bf16.msra.mxu0 0
  %12812 = vmatprep.subr.bf16.mxu0 0
  %12813 = vmatpush2.bf16.msra.mxu0 0
  %12814 = vmatprep.subr.bf16.mxu0 0
  %12815 = vmatpush2.bf16.msra.mxu0 0
  %12816 = vmatprep.subr.bf16.mxu0 0
  %12817 = vmatpush2.bf16.msra.mxu0 0
  %12818 = vmatprep.subr.bf16.mxu0 0
  %12819 = vmatpush2.bf16.msra.mxu0 0
  %12820 = vmatprep.subr.bf16.mxu0 0
  %12821 = vmatpush2.bf16.msra.mxu0 0
  %12822 = vmatprep.subr.bf16.mxu0 0
  %12823 = vmatpush2.bf16.msra.mxu0 0
  %12824 = vmatprep.subr.bf16.mxu0 0
  %12825 = vmatpush2.bf16.msra.mxu0 0
  %12826 = vmatprep.mubr.bf16.mxu0 0
  %12827 = vmatmul.mubr.bf16.gmra.mxu0 %v12728
  %v12828 = vpop.f32.mrf.mxu0
  %v12829 = vadd.f32 0.0, %v12828
  %v12830 = vpop.f32.mrf.mxu0
  %v12831 = vpop.f32.mrf.mxu0
  %v12832 = vpop.f32.mrf.mxu0
  %12833 = vdwg.mxu0
  %v12834 = vadd.f32 %v12727, %v12829
  %v12835 = vpack.c.bf16 %v12292, %v12292
  %s12836 = scalar_lea.vmem %s6, 320
  %v12837 = vld [vmem:[%s12836] sm:$0xf]
  %v12838 = vld [vmem:[%s12836 + $0x4] sm:$0xf]
  %v12839 = vld [vmem:[%s12836 + $0x8] sm:$0xf]
  %v12840 = vld [vmem:[%s12836 + $0xc] sm:$0xf]
  %v12841 = vld [vmem:[%s12836 + $0x10] sm:$0xf]
  %v12842 = vld [vmem:[%s12836 + $0x14] sm:$0xf]
  %v12843 = vld [vmem:[%s12836 + $0x18] sm:$0xf]
  %v12844 = vld [vmem:[%s12836 + $0x1c] sm:$0xf]
  %v12845 = vld [vmem:[%s12836 + $0x20] sm:$0xf]
  %v12846 = vld [vmem:[%s12836 + $0x24] sm:$0xf]
  %v12847 = vld [vmem:[%s12836 + $0x28] sm:$0xf]
  %v12848 = vld [vmem:[%s12836 + $0x2c] sm:$0xf]
  %v12849 = vld [vmem:[%s12836 + $0x30] sm:$0xf]
  %v12850 = vld [vmem:[%s12836 + $0x34] sm:$0xf]
  %v12851 = vld [vmem:[%s12836 + $0x38] sm:$0xf]
  %v12852 = vld [vmem:[%s12836 + $0x3c] sm:$0xf]
  %v12869 = vunpack.c.l.b16 %v12837
  %v12870 = vunpack.c.l.b16 %v12838
  %v12871 = vunpack.c.l.b16 %v12839
  %v12872 = vunpack.c.l.b16 %v12840
  %v12873 = vunpack.c.l.b16 %v12841
  %v12874 = vunpack.c.l.b16 %v12842
  %v12875 = vunpack.c.l.b16 %v12843
  %v12876 = vunpack.c.l.b16 %v12844
  %v12877 = vunpack.c.l.b16 %v12845
  %v12878 = vunpack.c.l.b16 %v12846
  %v12879 = vunpack.c.l.b16 %v12847
  %v12880 = vunpack.c.l.b16 %v12848
  %v12881 = vunpack.c.l.b16 %v12849
  %v12882 = vunpack.c.l.b16 %v12850
  %v12883 = vunpack.c.l.b16 %v12851
  %v12884 = vunpack.c.l.b16 %v12852
  %v12885 = vpack.c.b16 %v12870, %v12869
  %v12886 = vpack.c.b16 %v12872, %v12871
  %v12887 = vpack.c.b16 %v12874, %v12873
  %v12888 = vpack.c.b16 %v12876, %v12875
  %v12889 = vpack.c.b16 %v12878, %v12877
  %v12890 = vpack.c.b16 %v12880, %v12879
  %v12891 = vpack.c.b16 %v12882, %v12881
  %v12892 = vpack.c.b16 %v12884, %v12883
  %12901 = vmatprep.subr.bf16.mxu0 0
  %12902 = vmatpush1.bf16.msra.mxu0 %v12892
  %12903 = vmatprep.subr.bf16.mxu0 0
  %12904 = vmatpush1.bf16.msra.mxu0 %v12891
  %12905 = vmatprep.subr.bf16.mxu0 0
  %12906 = vmatpush1.bf16.msra.mxu0 %v12890
  %12907 = vmatprep.subr.bf16.mxu0 0
  %12908 = vmatpush1.bf16.msra.mxu0 %v12889
  %12909 = vmatprep.subr.bf16.mxu0 0
  %12910 = vmatpush1.bf16.msra.mxu0 %v12888
  %12911 = vmatprep.subr.bf16.mxu0 0
  %12912 = vmatpush1.bf16.msra.mxu0 %v12887
  %12913 = vmatprep.subr.bf16.mxu0 0
  %12914 = vmatpush1.bf16.msra.mxu0 %v12886
  %12915 = vmatprep.subr.bf16.mxu0 0
  %12916 = vmatpush1.bf16.msra.mxu0 %v12885
  %12917 = vmatprep.subr.bf16.mxu0 0
  %12918 = vmatpush2.bf16.msra.mxu0 0
  %12919 = vmatprep.subr.bf16.mxu0 0
  %12920 = vmatpush2.bf16.msra.mxu0 0
  %12921 = vmatprep.subr.bf16.mxu0 0
  %12922 = vmatpush2.bf16.msra.mxu0 0
  %12923 = vmatprep.subr.bf16.mxu0 0
  %12924 = vmatpush2.bf16.msra.mxu0 0
  %12925 = vmatprep.subr.bf16.mxu0 0
  %12926 = vmatpush2.bf16.msra.mxu0 0
  %12927 = vmatprep.subr.bf16.mxu0 0
  %12928 = vmatpush2.bf16.msra.mxu0 0
  %12929 = vmatprep.subr.bf16.mxu0 0
  %12930 = vmatpush2.bf16.msra.mxu0 0
  %12931 = vmatprep.subr.bf16.mxu0 0
  %12932 = vmatpush2.bf16.msra.mxu0 0
  %12933 = vmatprep.mubr.bf16.mxu0 0
  %12934 = vmatmul.mubr.bf16.gmra.mxu0 %v12835
  %v12935 = vpop.f32.mrf.mxu0
  %v12936 = vadd.f32 0.0, %v12935
  %v12937 = vpop.f32.mrf.mxu0
  %v12938 = vpop.f32.mrf.mxu0
  %v12939 = vpop.f32.mrf.mxu0
  %12940 = vdwg.mxu0
  %v12941 = vadd.f32 %v12834, %v12936
  %v12942 = vpack.c.bf16 %v12293, %v12293
  %s12943 = scalar_lea.vmem %s6, 384
  %v12944 = vld [vmem:[%s12943] sm:$0xf]
  %v12945 = vld [vmem:[%s12943 + $0x4] sm:$0xf]
  %v12946 = vld [vmem:[%s12943 + $0x8] sm:$0xf]
  %v12947 = vld [vmem:[%s12943 + $0xc] sm:$0xf]
  %v12948 = vld [vmem:[%s12943 + $0x10] sm:$0xf]
  %v12949 = vld [vmem:[%s12943 + $0x14] sm:$0xf]
  %v12950 = vld [vmem:[%s12943 + $0x18] sm:$0xf]
  %v12951 = vld [vmem:[%s12943 + $0x1c] sm:$0xf]
  %v12952 = vld [vmem:[%s12943 + $0x20] sm:$0xf]
  %v12953 = vld [vmem:[%s12943 + $0x24] sm:$0xf]
  %v12954 = vld [vmem:[%s12943 + $0x28] sm:$0xf]
  %v12955 = vld [vmem:[%s12943 + $0x2c] sm:$0xf]
  %v12956 = vld [vmem:[%s12943 + $0x30] sm:$0xf]
  %v12957 = vld [vmem:[%s12943 + $0x34] sm:$0xf]
  %v12958 = vld [vmem:[%s12943 + $0x38] sm:$0xf]
  %v12959 = vld [vmem:[%s12943 + $0x3c] sm:$0xf]
  %v12976 = vunpack.c.l.b16 %v12944
  %v12977 = vunpack.c.l.b16 %v12945
  %v12978 = vunpack.c.l.b16 %v12946
  %v12979 = vunpack.c.l.b16 %v12947
  %v12980 = vunpack.c.l.b16 %v12948
  %v12981 = vunpack.c.l.b16 %v12949
  %v12982 = vunpack.c.l.b16 %v12950
  %v12983 = vunpack.c.l.b16 %v12951
  %v12984 = vunpack.c.l.b16 %v12952
  %v12985 = vunpack.c.l.b16 %v12953
  %v12986 = vunpack.c.l.b16 %v12954
  %v12987 = vunpack.c.l.b16 %v12955
  %v12988 = vunpack.c.l.b16 %v12956
  %v12989 = vunpack.c.l.b16 %v12957
  %v12990 = vunpack.c.l.b16 %v12958
  %v12991 = vunpack.c.l.b16 %v12959
  %v12992 = vpack.c.b16 %v12977, %v12976
  %v12993 = vpack.c.b16 %v12979, %v12978
  %v12994 = vpack.c.b16 %v12981, %v12980
  %v12995 = vpack.c.b16 %v12983, %v12982
  %v12996 = vpack.c.b16 %v12985, %v12984
  %v12997 = vpack.c.b16 %v12987, %v12986
  %v12998 = vpack.c.b16 %v12989, %v12988
  %v12999 = vpack.c.b16 %v12991, %v12990
  %13008 = vmatprep.subr.bf16.mxu0 0
  %13009 = vmatpush1.bf16.msra.mxu0 %v12999
  %13010 = vmatprep.subr.bf16.mxu0 0
  %13011 = vmatpush1.bf16.msra.mxu0 %v12998
  %13012 = vmatprep.subr.bf16.mxu0 0
  %13013 = vmatpush1.bf16.msra.mxu0 %v12997
  %13014 = vmatprep.subr.bf16.mxu0 0
  %13015 = vmatpush1.bf16.msra.mxu0 %v12996
  %13016 = vmatprep.subr.bf16.mxu0 0
  %13017 = vmatpush1.bf16.msra.mxu0 %v12995
  %13018 = vmatprep.subr.bf16.mxu0 0
  %13019 = vmatpush1.bf16.msra.mxu0 %v12994
  %13020 = vmatprep.subr.bf16.mxu0 0
  %13021 = vmatpush1.bf16.msra.mxu0 %v12993
  %13022 = vmatprep.subr.bf16.mxu0 0
  %13023 = vmatpush1.bf16.msra.mxu0 %v12992
  %13024 = vmatprep.subr.bf16.mxu0 0
  %13025 = vmatpush2.bf16.msra.mxu0 0
  %13026 = vmatprep.subr.bf16.mxu0 0
  %13027 = vmatpush2.bf16.msra.mxu0 0
  %13028 = vmatprep.subr.bf16.mxu0 0
  %13029 = vmatpush2.bf16.msra.mxu0 0
  %13030 = vmatprep.subr.bf16.mxu0 0
  %13031 = vmatpush2.bf16.msra.mxu0 0
  %13032 = vmatprep.subr.bf16.mxu0 0
  %13033 = vmatpush2.bf16.msra.mxu0 0
  %13034 = vmatprep.subr.bf16.mxu0 0
  %13035 = vmatpush2.bf16.msra.mxu0 0
  %13036 = vmatprep.subr.bf16.mxu0 0
  %13037 = vmatpush2.bf16.msra.mxu0 0
  %13038 = vmatprep.subr.bf16.mxu0 0
  %13039 = vmatpush2.bf16.msra.mxu0 0
  %13040 = vmatprep.mubr.bf16.mxu0 0
  %13041 = vmatmul.mubr.bf16.gmra.mxu0 %v12942
  %v13042 = vpop.f32.mrf.mxu0
  %v13043 = vadd.f32 0.0, %v13042
  %v13044 = vpop.f32.mrf.mxu0
  %v13045 = vpop.f32.mrf.mxu0
  %v13046 = vpop.f32.mrf.mxu0
  %13047 = vdwg.mxu0
  %v13048 = vadd.f32 %v12941, %v13043
  %v13049 = vpack.c.bf16 %v12294, %v12294
  %s13050 = scalar_lea.vmem %s6, 448
  %v13051 = vld [vmem:[%s13050] sm:$0xf]
  %v13052 = vld [vmem:[%s13050 + $0x4] sm:$0xf]
  %v13053 = vld [vmem:[%s13050 + $0x8] sm:$0xf]
  %v13054 = vld [vmem:[%s13050 + $0xc] sm:$0xf]
  %v13055 = vld [vmem:[%s13050 + $0x10] sm:$0xf]
  %v13056 = vld [vmem:[%s13050 + $0x14] sm:$0xf]
  %v13057 = vld [vmem:[%s13050 + $0x18] sm:$0xf]
  %v13058 = vld [vmem:[%s13050 + $0x1c] sm:$0xf]
  %v13059 = vld [vmem:[%s13050 + $0x20] sm:$0xf]
  %v13060 = vld [vmem:[%s13050 + $0x24] sm:$0xf]
  %v13061 = vld [vmem:[%s13050 + $0x28] sm:$0xf]
  %v13062 = vld [vmem:[%s13050 + $0x2c] sm:$0xf]
  %v13063 = vld [vmem:[%s13050 + $0x30] sm:$0xf]
  %v13064 = vld [vmem:[%s13050 + $0x34] sm:$0xf]
  %v13065 = vld [vmem:[%s13050 + $0x38] sm:$0xf]
  %v13066 = vld [vmem:[%s13050 + $0x3c] sm:$0xf]
  %v13083 = vunpack.c.l.b16 %v13051
  %v13084 = vunpack.c.l.b16 %v13052
  %v13085 = vunpack.c.l.b16 %v13053
  %v13086 = vunpack.c.l.b16 %v13054
  %v13087 = vunpack.c.l.b16 %v13055
  %v13088 = vunpack.c.l.b16 %v13056
  %v13089 = vunpack.c.l.b16 %v13057
  %v13090 = vunpack.c.l.b16 %v13058
  %v13091 = vunpack.c.l.b16 %v13059
  %v13092 = vunpack.c.l.b16 %v13060
  %v13093 = vunpack.c.l.b16 %v13061
  %v13094 = vunpack.c.l.b16 %v13062
  %v13095 = vunpack.c.l.b16 %v13063
  %v13096 = vunpack.c.l.b16 %v13064
  %v13097 = vunpack.c.l.b16 %v13065
  %v13098 = vunpack.c.l.b16 %v13066
  %v13099 = vpack.c.b16 %v13084, %v13083
  %v13100 = vpack.c.b16 %v13086, %v13085
  %v13101 = vpack.c.b16 %v13088, %v13087
  %v13102 = vpack.c.b16 %v13090, %v13089
  %v13103 = vpack.c.b16 %v13092, %v13091
  %v13104 = vpack.c.b16 %v13094, %v13093
  %v13105 = vpack.c.b16 %v13096, %v13095
  %v13106 = vpack.c.b16 %v13098, %v13097
  %13115 = vmatprep.subr.bf16.mxu0 0
  %13116 = vmatpush1.bf16.msra.mxu0 %v13106
  %13117 = vmatprep.subr.bf16.mxu0 0
  %13118 = vmatpush1.bf16.msra.mxu0 %v13105
  %13119 = vmatprep.subr.bf16.mxu0 0
  %13120 = vmatpush1.bf16.msra.mxu0 %v13104
  %13121 = vmatprep.subr.bf16.mxu0 0
  %13122 = vmatpush1.bf16.msra.mxu0 %v13103
  %13123 = vmatprep.subr.bf16.mxu0 0
  %13124 = vmatpush1.bf16.msra.mxu0 %v13102
  %13125 = vmatprep.subr.bf16.mxu0 0
  %13126 = vmatpush1.bf16.msra.mxu0 %v13101
  %13127 = vmatprep.subr.bf16.mxu0 0
  %13128 = vmatpush1.bf16.msra.mxu0 %v13100
  %13129 = vmatprep.subr.bf16.mxu0 0
  %13130 = vmatpush1.bf16.msra.mxu0 %v13099
  %13131 = vmatprep.subr.bf16.mxu0 0
  %13132 = vmatpush2.bf16.msra.mxu0 0
  %13133 = vmatprep.subr.bf16.mxu0 0
  %13134 = vmatpush2.bf16.msra.mxu0 0
  %13135 = vmatprep.subr.bf16.mxu0 0
  %13136 = vmatpush2.bf16.msra.mxu0 0
  %13137 = vmatprep.subr.bf16.mxu0 0
  %13138 = vmatpush2.bf16.msra.mxu0 0
  %13139 = vmatprep.subr.bf16.mxu0 0
  %13140 = vmatpush2.bf16.msra.mxu0 0
  %13141 = vmatprep.subr.bf16.mxu0 0
  %13142 = vmatpush2.bf16.msra.mxu0 0
  %13143 = vmatprep.subr.bf16.mxu0 0
  %13144 = vmatpush2.bf16.msra.mxu0 0
  %13145 = vmatprep.subr.bf16.mxu0 0
  %13146 = vmatpush2.bf16.msra.mxu0 0
  %13147 = vmatprep.mubr.bf16.mxu0 0
  %13148 = vmatmul.mubr.bf16.gmra.mxu0 %v13049
  %v13149 = vpop.f32.mrf.mxu0
  %v13150 = vadd.f32 0.0, %v13149
  %v13151 = vpop.f32.mrf.mxu0
  %v13152 = vpop.f32.mrf.mxu0
  %v13153 = vpop.f32.mrf.mxu0
  %13154 = vdwg.mxu0
  %v13155 = vadd.f32 %v13048, %v13150
  %v13156 = vpack.c.bf16 %v12295, %v12295
  %s13157 = scalar_lea.vmem %s6, 512
  %v13158 = vld [vmem:[%s13157] sm:$0xf]
  %v13159 = vld [vmem:[%s13157 + $0x4] sm:$0xf]
  %v13160 = vld [vmem:[%s13157 + $0x8] sm:$0xf]
  %v13161 = vld [vmem:[%s13157 + $0xc] sm:$0xf]
  %v13162 = vld [vmem:[%s13157 + $0x10] sm:$0xf]
  %v13163 = vld [vmem:[%s13157 + $0x14] sm:$0xf]
  %v13164 = vld [vmem:[%s13157 + $0x18] sm:$0xf]
  %v13165 = vld [vmem:[%s13157 + $0x1c] sm:$0xf]
  %v13166 = vld [vmem:[%s13157 + $0x20] sm:$0xf]
  %v13167 = vld [vmem:[%s13157 + $0x24] sm:$0xf]
  %v13168 = vld [vmem:[%s13157 + $0x28] sm:$0xf]
  %v13169 = vld [vmem:[%s13157 + $0x2c] sm:$0xf]
  %v13170 = vld [vmem:[%s13157 + $0x30] sm:$0xf]
  %v13171 = vld [vmem:[%s13157 + $0x34] sm:$0xf]
  %v13172 = vld [vmem:[%s13157 + $0x38] sm:$0xf]
  %v13173 = vld [vmem:[%s13157 + $0x3c] sm:$0xf]
  %v13190 = vunpack.c.l.b16 %v13158
  %v13191 = vunpack.c.l.b16 %v13159
  %v13192 = vunpack.c.l.b16 %v13160
  %v13193 = vunpack.c.l.b16 %v13161
  %v13194 = vunpack.c.l.b16 %v13162
  %v13195 = vunpack.c.l.b16 %v13163
  %v13196 = vunpack.c.l.b16 %v13164
  %v13197 = vunpack.c.l.b16 %v13165
  %v13198 = vunpack.c.l.b16 %v13166
  %v13199 = vunpack.c.l.b16 %v13167
  %v13200 = vunpack.c.l.b16 %v13168
  %v13201 = vunpack.c.l.b16 %v13169
  %v13202 = vunpack.c.l.b16 %v13170
  %v13203 = vunpack.c.l.b16 %v13171
  %v13204 = vunpack.c.l.b16 %v13172
  %v13205 = vunpack.c.l.b16 %v13173
  %v13206 = vpack.c.b16 %v13191, %v13190
  %v13207 = vpack.c.b16 %v13193, %v13192
  %v13208 = vpack.c.b16 %v13195, %v13194
  %v13209 = vpack.c.b16 %v13197, %v13196
  %v13210 = vpack.c.b16 %v13199, %v13198
  %v13211 = vpack.c.b16 %v13201, %v13200
  %v13212 = vpack.c.b16 %v13203, %v13202
  %v13213 = vpack.c.b16 %v13205, %v13204
  %13222 = vmatprep.subr.bf16.mxu0 0
  %13223 = vmatpush1.bf16.msra.mxu0 %v13213
  %13224 = vmatprep.subr.bf16.mxu0 0
  %13225 = vmatpush1.bf16.msra.mxu0 %v13212
  %13226 = vmatprep.subr.bf16.mxu0 0
  %13227 = vmatpush1.bf16.msra.mxu0 %v13211
  %13228 = vmatprep.subr.bf16.mxu0 0
  %13229 = vmatpush1.bf16.msra.mxu0 %v13210
  %13230 = vmatprep.subr.bf16.mxu0 0
  %13231 = vmatpush1.bf16.msra.mxu0 %v13209
  %13232 = vmatprep.subr.bf16.mxu0 0
  %13233 = vmatpush1.bf16.msra.mxu0 %v13208
  %13234 = vmatprep.subr.bf16.mxu0 0
  %13235 = vmatpush1.bf16.msra.mxu0 %v13207
  %13236 = vmatprep.subr.bf16.mxu0 0
  %13237 = vmatpush1.bf16.msra.mxu0 %v13206
  %13238 = vmatprep.subr.bf16.mxu0 0
  %13239 = vmatpush2.bf16.msra.mxu0 0
  %13240 = vmatprep.subr.bf16.mxu0 0
  %13241 = vmatpush2.bf16.msra.mxu0 0
  %13242 = vmatprep.subr.bf16.mxu0 0
  %13243 = vmatpush2.bf16.msra.mxu0 0
  %13244 = vmatprep.subr.bf16.mxu0 0
  %13245 = vmatpush2.bf16.msra.mxu0 0
  %13246 = vmatprep.subr.bf16.mxu0 0
  %13247 = vmatpush2.bf16.msra.mxu0 0
  %13248 = vmatprep.subr.bf16.mxu0 0
  %13249 = vmatpush2.bf16.msra.mxu0 0
  %13250 = vmatprep.subr.bf16.mxu0 0
  %13251 = vmatpush2.bf16.msra.mxu0 0
  %13252 = vmatprep.subr.bf16.mxu0 0
  %13253 = vmatpush2.bf16.msra.mxu0 0
  %13254 = vmatprep.mubr.bf16.mxu0 0
  %13255 = vmatmul.mubr.bf16.gmra.mxu0 %v13156
  %v13256 = vpop.f32.mrf.mxu0
  %v13257 = vadd.f32 0.0, %v13256
  %v13258 = vpop.f32.mrf.mxu0
  %v13259 = vpop.f32.mrf.mxu0
  %v13260 = vpop.f32.mrf.mxu0
  %13261 = vdwg.mxu0
  %v13262 = vadd.f32 %v13155, %v13257
  %v13263 = vpack.c.bf16 %v12296, %v12296
  %s13264 = scalar_lea.vmem %s6, 576
  %v13265 = vld [vmem:[%s13264] sm:$0xf]
  %v13266 = vld [vmem:[%s13264 + $0x4] sm:$0xf]
  %v13267 = vld [vmem:[%s13264 + $0x8] sm:$0xf]
  %v13268 = vld [vmem:[%s13264 + $0xc] sm:$0xf]
  %v13269 = vld [vmem:[%s13264 + $0x10] sm:$0xf]
  %v13270 = vld [vmem:[%s13264 + $0x14] sm:$0xf]
  %v13271 = vld [vmem:[%s13264 + $0x18] sm:$0xf]
  %v13272 = vld [vmem:[%s13264 + $0x1c] sm:$0xf]
  %v13273 = vld [vmem:[%s13264 + $0x20] sm:$0xf]
  %v13274 = vld [vmem:[%s13264 + $0x24] sm:$0xf]
  %v13275 = vld [vmem:[%s13264 + $0x28] sm:$0xf]
  %v13276 = vld [vmem:[%s13264 + $0x2c] sm:$0xf]
  %v13277 = vld [vmem:[%s13264 + $0x30] sm:$0xf]
  %v13278 = vld [vmem:[%s13264 + $0x34] sm:$0xf]
  %v13279 = vld [vmem:[%s13264 + $0x38] sm:$0xf]
  %v13280 = vld [vmem:[%s13264 + $0x3c] sm:$0xf]
  %v13297 = vunpack.c.l.b16 %v13265
  %v13298 = vunpack.c.l.b16 %v13266
  %v13299 = vunpack.c.l.b16 %v13267
  %v13300 = vunpack.c.l.b16 %v13268
  %v13301 = vunpack.c.l.b16 %v13269
  %v13302 = vunpack.c.l.b16 %v13270
  %v13303 = vunpack.c.l.b16 %v13271
  %v13304 = vunpack.c.l.b16 %v13272
  %v13305 = vunpack.c.l.b16 %v13273
  %v13306 = vunpack.c.l.b16 %v13274
  %v13307 = vunpack.c.l.b16 %v13275
  %v13308 = vunpack.c.l.b16 %v13276
  %v13309 = vunpack.c.l.b16 %v13277
  %v13310 = vunpack.c.l.b16 %v13278
  %v13311 = vunpack.c.l.b16 %v13279
  %v13312 = vunpack.c.l.b16 %v13280
  %v13313 = vpack.c.b16 %v13298, %v13297
  %v13314 = vpack.c.b16 %v13300, %v13299
  %v13315 = vpack.c.b16 %v13302, %v13301
  %v13316 = vpack.c.b16 %v13304, %v13303
  %v13317 = vpack.c.b16 %v13306, %v13305
  %v13318 = vpack.c.b16 %v13308, %v13307
  %v13319 = vpack.c.b16 %v13310, %v13309
  %v13320 = vpack.c.b16 %v13312, %v13311
  %13329 = vmatprep.subr.bf16.mxu0 0
  %13330 = vmatpush1.bf16.msra.mxu0 %v13320
  %13331 = vmatprep.subr.bf16.mxu0 0
  %13332 = vmatpush1.bf16.msra.mxu0 %v13319
  %13333 = vmatprep.subr.bf16.mxu0 0
  %13334 = vmatpush1.bf16.msra.mxu0 %v13318
  %13335 = vmatprep.subr.bf16.mxu0 0
  %13336 = vmatpush1.bf16.msra.mxu0 %v13317
  %13337 = vmatprep.subr.bf16.mxu0 0
  %13338 = vmatpush1.bf16.msra.mxu0 %v13316
  %13339 = vmatprep.subr.bf16.mxu0 0
  %13340 = vmatpush1.bf16.msra.mxu0 %v13315
  %13341 = vmatprep.subr.bf16.mxu0 0
  %13342 = vmatpush1.bf16.msra.mxu0 %v13314
  %13343 = vmatprep.subr.bf16.mxu0 0
  %13344 = vmatpush1.bf16.msra.mxu0 %v13313
  %13345 = vmatprep.subr.bf16.mxu0 0
  %13346 = vmatpush2.bf16.msra.mxu0 0
  %13347 = vmatprep.subr.bf16.mxu0 0
  %13348 = vmatpush2.bf16.msra.mxu0 0
  %13349 = vmatprep.subr.bf16.mxu0 0
  %13350 = vmatpush2.bf16.msra.mxu0 0
  %13351 = vmatprep.subr.bf16.mxu0 0
  %13352 = vmatpush2.bf16.msra.mxu0 0
  %13353 = vmatprep.subr.bf16.mxu0 0
  %13354 = vmatpush2.bf16.msra.mxu0 0
  %13355 = vmatprep.subr.bf16.mxu0 0
  %13356 = vmatpush2.bf16.msra.mxu0 0
  %13357 = vmatprep.subr.bf16.mxu0 0
  %13358 = vmatpush2.bf16.msra.mxu0 0
  %13359 = vmatprep.subr.bf16.mxu0 0
  %13360 = vmatpush2.bf16.msra.mxu0 0
  %13361 = vmatprep.mubr.bf16.mxu0 0
  %13362 = vmatmul.mubr.bf16.gmra.mxu0 %v13263
  %v13363 = vpop.f32.mrf.mxu0
  %v13364 = vadd.f32 0.0, %v13363
  %v13365 = vpop.f32.mrf.mxu0
  %v13366 = vpop.f32.mrf.mxu0
  %v13367 = vpop.f32.mrf.mxu0
  %13368 = vdwg.mxu0
  %v13369 = vadd.f32 %v13262, %v13364
  %v13370 = vpack.c.bf16 %v12297, %v12297
  %s13371 = scalar_lea.vmem %s6, 640
  %v13372 = vld [vmem:[%s13371] sm:$0xf]
  %v13373 = vld [vmem:[%s13371 + $0x4] sm:$0xf]
  %v13374 = vld [vmem:[%s13371 + $0x8] sm:$0xf]
  %v13375 = vld [vmem:[%s13371 + $0xc] sm:$0xf]
  %v13376 = vld [vmem:[%s13371 + $0x10] sm:$0xf]
  %v13377 = vld [vmem:[%s13371 + $0x14] sm:$0xf]
  %v13378 = vld [vmem:[%s13371 + $0x18] sm:$0xf]
  %v13379 = vld [vmem:[%s13371 + $0x1c] sm:$0xf]
  %v13380 = vld [vmem:[%s13371 + $0x20] sm:$0xf]
  %v13381 = vld [vmem:[%s13371 + $0x24] sm:$0xf]
  %v13382 = vld [vmem:[%s13371 + $0x28] sm:$0xf]
  %v13383 = vld [vmem:[%s13371 + $0x2c] sm:$0xf]
  %v13384 = vld [vmem:[%s13371 + $0x30] sm:$0xf]
  %v13385 = vld [vmem:[%s13371 + $0x34] sm:$0xf]
  %v13386 = vld [vmem:[%s13371 + $0x38] sm:$0xf]
  %v13387 = vld [vmem:[%s13371 + $0x3c] sm:$0xf]
  %v13404 = vunpack.c.l.b16 %v13372
  %v13405 = vunpack.c.l.b16 %v13373
  %v13406 = vunpack.c.l.b16 %v13374
  %v13407 = vunpack.c.l.b16 %v13375
  %v13408 = vunpack.c.l.b16 %v13376
  %v13409 = vunpack.c.l.b16 %v13377
  %v13410 = vunpack.c.l.b16 %v13378
  %v13411 = vunpack.c.l.b16 %v13379
  %v13412 = vunpack.c.l.b16 %v13380
  %v13413 = vunpack.c.l.b16 %v13381
  %v13414 = vunpack.c.l.b16 %v13382
  %v13415 = vunpack.c.l.b16 %v13383
  %v13416 = vunpack.c.l.b16 %v13384
  %v13417 = vunpack.c.l.b16 %v13385
  %v13418 = vunpack.c.l.b16 %v13386
  %v13419 = vunpack.c.l.b16 %v13387
  %v13420 = vpack.c.b16 %v13405, %v13404
  %v13421 = vpack.c.b16 %v13407, %v13406
  %v13422 = vpack.c.b16 %v13409, %v13408
  %v13423 = vpack.c.b16 %v13411, %v13410
  %v13424 = vpack.c.b16 %v13413, %v13412
  %v13425 = vpack.c.b16 %v13415, %v13414
  %v13426 = vpack.c.b16 %v13417, %v13416
  %v13427 = vpack.c.b16 %v13419, %v13418
  %13436 = vmatprep.subr.bf16.mxu0 0
  %13437 = vmatpush1.bf16.msra.mxu0 %v13427
  %13438 = vmatprep.subr.bf16.mxu0 0
  %13439 = vmatpush1.bf16.msra.mxu0 %v13426
  %13440 = vmatprep.subr.bf16.mxu0 0
  %13441 = vmatpush1.bf16.msra.mxu0 %v13425
  %13442 = vmatprep.subr.bf16.mxu0 0
  %13443 = vmatpush1.bf16.msra.mxu0 %v13424
  %13444 = vmatprep.subr.bf16.mxu0 0
  %13445 = vmatpush1.bf16.msra.mxu0 %v13423
  %13446 = vmatprep.subr.bf16.mxu0 0
  %13447 = vmatpush1.bf16.msra.mxu0 %v13422
  %13448 = vmatprep.subr.bf16.mxu0 0
  %13449 = vmatpush1.bf16.msra.mxu0 %v13421
  %13450 = vmatprep.subr.bf16.mxu0 0
  %13451 = vmatpush1.bf16.msra.mxu0 %v13420
  %13452 = vmatprep.subr.bf16.mxu0 0
  %13453 = vmatpush2.bf16.msra.mxu0 0
  %13454 = vmatprep.subr.bf16.mxu0 0
  %13455 = vmatpush2.bf16.msra.mxu0 0
  %13456 = vmatprep.subr.bf16.mxu0 0
  %13457 = vmatpush2.bf16.msra.mxu0 0
  %13458 = vmatprep.subr.bf16.mxu0 0
  %13459 = vmatpush2.bf16.msra.mxu0 0
  %13460 = vmatprep.subr.bf16.mxu0 0
  %13461 = vmatpush2.bf16.msra.mxu0 0
  %13462 = vmatprep.subr.bf16.mxu0 0
  %13463 = vmatpush2.bf16.msra.mxu0 0
  %13464 = vmatprep.subr.bf16.mxu0 0
  %13465 = vmatpush2.bf16.msra.mxu0 0
  %13466 = vmatprep.subr.bf16.mxu0 0
  %13467 = vmatpush2.bf16.msra.mxu0 0
  %13468 = vmatprep.mubr.bf16.mxu0 0
  %13469 = vmatmul.mubr.bf16.gmra.mxu0 %v13370
  %v13470 = vpop.f32.mrf.mxu0
  %v13471 = vadd.f32 0.0, %v13470
  %v13472 = vpop.f32.mrf.mxu0
  %v13473 = vpop.f32.mrf.mxu0
  %v13474 = vpop.f32.mrf.mxu0
  %13475 = vdwg.mxu0
  %v13476 = vadd.f32 %v13369, %v13471
  %v13477 = vpack.c.bf16 %v12298, %v12298
  %s13478 = scalar_lea.vmem %s6, 704
  %v13479 = vld [vmem:[%s13478] sm:$0xf]
  %v13480 = vld [vmem:[%s13478 + $0x4] sm:$0xf]
  %v13481 = vld [vmem:[%s13478 + $0x8] sm:$0xf]
  %v13482 = vld [vmem:[%s13478 + $0xc] sm:$0xf]
  %v13483 = vld [vmem:[%s13478 + $0x10] sm:$0xf]
  %v13484 = vld [vmem:[%s13478 + $0x14] sm:$0xf]
  %v13485 = vld [vmem:[%s13478 + $0x18] sm:$0xf]
  %v13486 = vld [vmem:[%s13478 + $0x1c] sm:$0xf]
  %v13487 = vld [vmem:[%s13478 + $0x20] sm:$0xf]
  %v13488 = vld [vmem:[%s13478 + $0x24] sm:$0xf]
  %v13489 = vld [vmem:[%s13478 + $0x28] sm:$0xf]
  %v13490 = vld [vmem:[%s13478 + $0x2c] sm:$0xf]
  %v13491 = vld [vmem:[%s13478 + $0x30] sm:$0xf]
  %v13492 = vld [vmem:[%s13478 + $0x34] sm:$0xf]
  %v13493 = vld [vmem:[%s13478 + $0x38] sm:$0xf]
  %v13494 = vld [vmem:[%s13478 + $0x3c] sm:$0xf]
  %v13511 = vunpack.c.l.b16 %v13479
  %v13512 = vunpack.c.l.b16 %v13480
  %v13513 = vunpack.c.l.b16 %v13481
  %v13514 = vunpack.c.l.b16 %v13482
  %v13515 = vunpack.c.l.b16 %v13483
  %v13516 = vunpack.c.l.b16 %v13484
  %v13517 = vunpack.c.l.b16 %v13485
  %v13518 = vunpack.c.l.b16 %v13486
  %v13519 = vunpack.c.l.b16 %v13487
  %v13520 = vunpack.c.l.b16 %v13488
  %v13521 = vunpack.c.l.b16 %v13489
  %v13522 = vunpack.c.l.b16 %v13490
  %v13523 = vunpack.c.l.b16 %v13491
  %v13524 = vunpack.c.l.b16 %v13492
  %v13525 = vunpack.c.l.b16 %v13493
  %v13526 = vunpack.c.l.b16 %v13494
  %v13527 = vpack.c.b16 %v13512, %v13511
  %v13528 = vpack.c.b16 %v13514, %v13513
  %v13529 = vpack.c.b16 %v13516, %v13515
  %v13530 = vpack.c.b16 %v13518, %v13517
  %v13531 = vpack.c.b16 %v13520, %v13519
  %v13532 = vpack.c.b16 %v13522, %v13521
  %v13533 = vpack.c.b16 %v13524, %v13523
  %v13534 = vpack.c.b16 %v13526, %v13525
  %13543 = vmatprep.subr.bf16.mxu0 0
  %13544 = vmatpush1.bf16.msra.mxu0 %v13534
  %13545 = vmatprep.subr.bf16.mxu0 0
  %13546 = vmatpush1.bf16.msra.mxu0 %v13533
  %13547 = vmatprep.subr.bf16.mxu0 0
  %13548 = vmatpush1.bf16.msra.mxu0 %v13532
  %13549 = vmatprep.subr.bf16.mxu0 0
  %13550 = vmatpush1.bf16.msra.mxu0 %v13531
  %13551 = vmatprep.subr.bf16.mxu0 0
  %13552 = vmatpush1.bf16.msra.mxu0 %v13530
  %13553 = vmatprep.subr.bf16.mxu0 0
  %13554 = vmatpush1.bf16.msra.mxu0 %v13529
  %13555 = vmatprep.subr.bf16.mxu0 0
  %13556 = vmatpush1.bf16.msra.mxu0 %v13528
  %13557 = vmatprep.subr.bf16.mxu0 0
  %13558 = vmatpush1.bf16.msra.mxu0 %v13527
  %13559 = vmatprep.subr.bf16.mxu0 0
  %13560 = vmatpush2.bf16.msra.mxu0 0
  %13561 = vmatprep.subr.bf16.mxu0 0
  %13562 = vmatpush2.bf16.msra.mxu0 0
  %13563 = vmatprep.subr.bf16.mxu0 0
  %13564 = vmatpush2.bf16.msra.mxu0 0
  %13565 = vmatprep.subr.bf16.mxu0 0
  %13566 = vmatpush2.bf16.msra.mxu0 0
  %13567 = vmatprep.subr.bf16.mxu0 0
  %13568 = vmatpush2.bf16.msra.mxu0 0
  %13569 = vmatprep.subr.bf16.mxu0 0
  %13570 = vmatpush2.bf16.msra.mxu0 0
  %13571 = vmatprep.subr.bf16.mxu0 0
  %13572 = vmatpush2.bf16.msra.mxu0 0
  %13573 = vmatprep.subr.bf16.mxu0 0
  %13574 = vmatpush2.bf16.msra.mxu0 0
  %13575 = vmatprep.mubr.bf16.mxu0 0
  %13576 = vmatmul.mubr.bf16.gmra.mxu0 %v13477
  %v13577 = vpop.f32.mrf.mxu0
  %v13578 = vadd.f32 0.0, %v13577
  %v13579 = vpop.f32.mrf.mxu0
  %v13580 = vpop.f32.mrf.mxu0
  %v13581 = vpop.f32.mrf.mxu0
  %13582 = vdwg.mxu0
  %v13583 = vadd.f32 %v13476, %v13578
  %v13584 = vpack.c.bf16 %v12299, %v12299
  %s13585 = scalar_lea.vmem %s6, 768
  %v13586 = vld [vmem:[%s13585] sm:$0xf]
  %v13587 = vld [vmem:[%s13585 + $0x4] sm:$0xf]
  %v13588 = vld [vmem:[%s13585 + $0x8] sm:$0xf]
  %v13589 = vld [vmem:[%s13585 + $0xc] sm:$0xf]
  %v13590 = vld [vmem:[%s13585 + $0x10] sm:$0xf]
  %v13591 = vld [vmem:[%s13585 + $0x14] sm:$0xf]
  %v13592 = vld [vmem:[%s13585 + $0x18] sm:$0xf]
  %v13593 = vld [vmem:[%s13585 + $0x1c] sm:$0xf]
  %v13594 = vld [vmem:[%s13585 + $0x20] sm:$0xf]
  %v13595 = vld [vmem:[%s13585 + $0x24] sm:$0xf]
  %v13596 = vld [vmem:[%s13585 + $0x28] sm:$0xf]
  %v13597 = vld [vmem:[%s13585 + $0x2c] sm:$0xf]
  %v13598 = vld [vmem:[%s13585 + $0x30] sm:$0xf]
  %v13599 = vld [vmem:[%s13585 + $0x34] sm:$0xf]
  %v13600 = vld [vmem:[%s13585 + $0x38] sm:$0xf]
  %v13601 = vld [vmem:[%s13585 + $0x3c] sm:$0xf]
  %v13618 = vunpack.c.l.b16 %v13586
  %v13619 = vunpack.c.l.b16 %v13587
  %v13620 = vunpack.c.l.b16 %v13588
  %v13621 = vunpack.c.l.b16 %v13589
  %v13622 = vunpack.c.l.b16 %v13590
  %v13623 = vunpack.c.l.b16 %v13591
  %v13624 = vunpack.c.l.b16 %v13592
  %v13625 = vunpack.c.l.b16 %v13593
  %v13626 = vunpack.c.l.b16 %v13594
  %v13627 = vunpack.c.l.b16 %v13595
  %v13628 = vunpack.c.l.b16 %v13596
  %v13629 = vunpack.c.l.b16 %v13597
  %v13630 = vunpack.c.l.b16 %v13598
  %v13631 = vunpack.c.l.b16 %v13599
  %v13632 = vunpack.c.l.b16 %v13600
  %v13633 = vunpack.c.l.b16 %v13601
  %v13634 = vpack.c.b16 %v13619, %v13618
  %v13635 = vpack.c.b16 %v13621, %v13620
  %v13636 = vpack.c.b16 %v13623, %v13622
  %v13637 = vpack.c.b16 %v13625, %v13624
  %v13638 = vpack.c.b16 %v13627, %v13626
  %v13639 = vpack.c.b16 %v13629, %v13628
  %v13640 = vpack.c.b16 %v13631, %v13630
  %v13641 = vpack.c.b16 %v13633, %v13632
  %13650 = vmatprep.subr.bf16.mxu0 0
  %13651 = vmatpush1.bf16.msra.mxu0 %v13641
  %13652 = vmatprep.subr.bf16.mxu0 0
  %13653 = vmatpush1.bf16.msra.mxu0 %v13640
  %13654 = vmatprep.subr.bf16.mxu0 0
  %13655 = vmatpush1.bf16.msra.mxu0 %v13639
  %13656 = vmatprep.subr.bf16.mxu0 0
  %13657 = vmatpush1.bf16.msra.mxu0 %v13638
  %13658 = vmatprep.subr.bf16.mxu0 0
  %13659 = vmatpush1.bf16.msra.mxu0 %v13637
  %13660 = vmatprep.subr.bf16.mxu0 0
  %13661 = vmatpush1.bf16.msra.mxu0 %v13636
  %13662 = vmatprep.subr.bf16.mxu0 0
  %13663 = vmatpush1.bf16.msra.mxu0 %v13635
  %13664 = vmatprep.subr.bf16.mxu0 0
  %13665 = vmatpush1.bf16.msra.mxu0 %v13634
  %13666 = vmatprep.subr.bf16.mxu0 0
  %13667 = vmatpush2.bf16.msra.mxu0 0
  %13668 = vmatprep.subr.bf16.mxu0 0
  %13669 = vmatpush2.bf16.msra.mxu0 0
  %13670 = vmatprep.subr.bf16.mxu0 0
  %13671 = vmatpush2.bf16.msra.mxu0 0
  %13672 = vmatprep.subr.bf16.mxu0 0
  %13673 = vmatpush2.bf16.msra.mxu0 0
  %13674 = vmatprep.subr.bf16.mxu0 0
  %13675 = vmatpush2.bf16.msra.mxu0 0
  %13676 = vmatprep.subr.bf16.mxu0 0
  %13677 = vmatpush2.bf16.msra.mxu0 0
  %13678 = vmatprep.subr.bf16.mxu0 0
  %13679 = vmatpush2.bf16.msra.mxu0 0
  %13680 = vmatprep.subr.bf16.mxu0 0
  %13681 = vmatpush2.bf16.msra.mxu0 0
  %13682 = vmatprep.mubr.bf16.mxu0 0
  %13683 = vmatmul.mubr.bf16.gmra.mxu0 %v13584
  %v13684 = vpop.f32.mrf.mxu0
  %v13685 = vadd.f32 0.0, %v13684
  %v13686 = vpop.f32.mrf.mxu0
  %v13687 = vpop.f32.mrf.mxu0
  %v13688 = vpop.f32.mrf.mxu0
  %13689 = vdwg.mxu0
  %v13690 = vadd.f32 %v13583, %v13685
  %v13691 = vpack.c.bf16 %v12300, %v12300
  %s13692 = scalar_lea.vmem %s6, 832
  %v13693 = vld [vmem:[%s13692] sm:$0xf]
  %v13694 = vld [vmem:[%s13692 + $0x4] sm:$0xf]
  %v13695 = vld [vmem:[%s13692 + $0x8] sm:$0xf]
  %v13696 = vld [vmem:[%s13692 + $0xc] sm:$0xf]
  %v13697 = vld [vmem:[%s13692 + $0x10] sm:$0xf]
  %v13698 = vld [vmem:[%s13692 + $0x14] sm:$0xf]
  %v13699 = vld [vmem:[%s13692 + $0x18] sm:$0xf]
  %v13700 = vld [vmem:[%s13692 + $0x1c] sm:$0xf]
  %v13701 = vld [vmem:[%s13692 + $0x20] sm:$0xf]
  %v13702 = vld [vmem:[%s13692 + $0x24] sm:$0xf]
  %v13703 = vld [vmem:[%s13692 + $0x28] sm:$0xf]
  %v13704 = vld [vmem:[%s13692 + $0x2c] sm:$0xf]
  %v13705 = vld [vmem:[%s13692 + $0x30] sm:$0xf]
  %v13706 = vld [vmem:[%s13692 + $0x34] sm:$0xf]
  %v13707 = vld [vmem:[%s13692 + $0x38] sm:$0xf]
  %v13708 = vld [vmem:[%s13692 + $0x3c] sm:$0xf]
  %v13725 = vunpack.c.l.b16 %v13693
  %v13726 = vunpack.c.l.b16 %v13694
  %v13727 = vunpack.c.l.b16 %v13695
  %v13728 = vunpack.c.l.b16 %v13696
  %v13729 = vunpack.c.l.b16 %v13697
  %v13730 = vunpack.c.l.b16 %v13698
  %v13731 = vunpack.c.l.b16 %v13699
  %v13732 = vunpack.c.l.b16 %v13700
  %v13733 = vunpack.c.l.b16 %v13701
  %v13734 = vunpack.c.l.b16 %v13702
  %v13735 = vunpack.c.l.b16 %v13703
  %v13736 = vunpack.c.l.b16 %v13704
  %v13737 = vunpack.c.l.b16 %v13705
  %v13738 = vunpack.c.l.b16 %v13706
  %v13739 = vunpack.c.l.b16 %v13707
  %v13740 = vunpack.c.l.b16 %v13708
  %v13741 = vpack.c.b16 %v13726, %v13725
  %v13742 = vpack.c.b16 %v13728, %v13727
  %v13743 = vpack.c.b16 %v13730, %v13729
  %v13744 = vpack.c.b16 %v13732, %v13731
  %v13745 = vpack.c.b16 %v13734, %v13733
  %v13746 = vpack.c.b16 %v13736, %v13735
  %v13747 = vpack.c.b16 %v13738, %v13737
  %v13748 = vpack.c.b16 %v13740, %v13739
  %13757 = vmatprep.subr.bf16.mxu0 0
  %13758 = vmatpush1.bf16.msra.mxu0 %v13748
  %13759 = vmatprep.subr.bf16.mxu0 0
  %13760 = vmatpush1.bf16.msra.mxu0 %v13747
  %13761 = vmatprep.subr.bf16.mxu0 0
  %13762 = vmatpush1.bf16.msra.mxu0 %v13746
  %13763 = vmatprep.subr.bf16.mxu0 0
  %13764 = vmatpush1.bf16.msra.mxu0 %v13745
  %13765 = vmatprep.subr.bf16.mxu0 0
  %13766 = vmatpush1.bf16.msra.mxu0 %v13744
  %13767 = vmatprep.subr.bf16.mxu0 0
  %13768 = vmatpush1.bf16.msra.mxu0 %v13743
  %13769 = vmatprep.subr.bf16.mxu0 0
  %13770 = vmatpush1.bf16.msra.mxu0 %v13742
  %13771 = vmatprep.subr.bf16.mxu0 0
  %13772 = vmatpush1.bf16.msra.mxu0 %v13741
  %13773 = vmatprep.subr.bf16.mxu0 0
  %13774 = vmatpush2.bf16.msra.mxu0 0
  %13775 = vmatprep.subr.bf16.mxu0 0
  %13776 = vmatpush2.bf16.msra.mxu0 0
  %13777 = vmatprep.subr.bf16.mxu0 0
  %13778 = vmatpush2.bf16.msra.mxu0 0
  %13779 = vmatprep.subr.bf16.mxu0 0
  %13780 = vmatpush2.bf16.msra.mxu0 0
  %13781 = vmatprep.subr.bf16.mxu0 0
  %13782 = vmatpush2.bf16.msra.mxu0 0
  %13783 = vmatprep.subr.bf16.mxu0 0
  %13784 = vmatpush2.bf16.msra.mxu0 0
  %13785 = vmatprep.subr.bf16.mxu0 0
  %13786 = vmatpush2.bf16.msra.mxu0 0
  %13787 = vmatprep.subr.bf16.mxu0 0
  %13788 = vmatpush2.bf16.msra.mxu0 0
  %13789 = vmatprep.mubr.bf16.mxu0 0
  %13790 = vmatmul.mubr.bf16.gmra.mxu0 %v13691
  %v13791 = vpop.f32.mrf.mxu0
  %v13792 = vadd.f32 0.0, %v13791
  %v13793 = vpop.f32.mrf.mxu0
  %v13794 = vpop.f32.mrf.mxu0
  %v13795 = vpop.f32.mrf.mxu0
  %13796 = vdwg.mxu0
  %v13797 = vadd.f32 %v13690, %v13792
  %v13798 = vpack.c.bf16 %v12301, %v12301
  %s13799 = scalar_lea.vmem %s6, 896
  %v13800 = vld [vmem:[%s13799] sm:$0xf]
  %v13801 = vld [vmem:[%s13799 + $0x4] sm:$0xf]
  %v13802 = vld [vmem:[%s13799 + $0x8] sm:$0xf]
  %v13803 = vld [vmem:[%s13799 + $0xc] sm:$0xf]
  %v13804 = vld [vmem:[%s13799 + $0x10] sm:$0xf]
  %v13805 = vld [vmem:[%s13799 + $0x14] sm:$0xf]
  %v13806 = vld [vmem:[%s13799 + $0x18] sm:$0xf]
  %v13807 = vld [vmem:[%s13799 + $0x1c] sm:$0xf]
  %v13808 = vld [vmem:[%s13799 + $0x20] sm:$0xf]
  %v13809 = vld [vmem:[%s13799 + $0x24] sm:$0xf]
  %v13810 = vld [vmem:[%s13799 + $0x28] sm:$0xf]
  %v13811 = vld [vmem:[%s13799 + $0x2c] sm:$0xf]
  %v13812 = vld [vmem:[%s13799 + $0x30] sm:$0xf]
  %v13813 = vld [vmem:[%s13799 + $0x34] sm:$0xf]
  %v13814 = vld [vmem:[%s13799 + $0x38] sm:$0xf]
  %v13815 = vld [vmem:[%s13799 + $0x3c] sm:$0xf]
  %v13832 = vunpack.c.l.b16 %v13800
  %v13833 = vunpack.c.l.b16 %v13801
  %v13834 = vunpack.c.l.b16 %v13802
  %v13835 = vunpack.c.l.b16 %v13803
  %v13836 = vunpack.c.l.b16 %v13804
  %v13837 = vunpack.c.l.b16 %v13805
  %v13838 = vunpack.c.l.b16 %v13806
  %v13839 = vunpack.c.l.b16 %v13807
  %v13840 = vunpack.c.l.b16 %v13808
  %v13841 = vunpack.c.l.b16 %v13809
  %v13842 = vunpack.c.l.b16 %v13810
  %v13843 = vunpack.c.l.b16 %v13811
  %v13844 = vunpack.c.l.b16 %v13812
  %v13845 = vunpack.c.l.b16 %v13813
  %v13846 = vunpack.c.l.b16 %v13814
  %v13847 = vunpack.c.l.b16 %v13815
  %v13848 = vpack.c.b16 %v13833, %v13832
  %v13849 = vpack.c.b16 %v13835, %v13834
  %v13850 = vpack.c.b16 %v13837, %v13836
  %v13851 = vpack.c.b16 %v13839, %v13838
  %v13852 = vpack.c.b16 %v13841, %v13840
  %v13853 = vpack.c.b16 %v13843, %v13842
  %v13854 = vpack.c.b16 %v13845, %v13844
  %v13855 = vpack.c.b16 %v13847, %v13846
  %13864 = vmatprep.subr.bf16.mxu0 0
  %13865 = vmatpush1.bf16.msra.mxu0 %v13855
  %13866 = vmatprep.subr.bf16.mxu0 0
  %13867 = vmatpush1.bf16.msra.mxu0 %v13854
  %13868 = vmatprep.subr.bf16.mxu0 0
  %13869 = vmatpush1.bf16.msra.mxu0 %v13853
  %13870 = vmatprep.subr.bf16.mxu0 0
  %13871 = vmatpush1.bf16.msra.mxu0 %v13852
  %13872 = vmatprep.subr.bf16.mxu0 0
  %13873 = vmatpush1.bf16.msra.mxu0 %v13851
  %13874 = vmatprep.subr.bf16.mxu0 0
  %13875 = vmatpush1.bf16.msra.mxu0 %v13850
  %13876 = vmatprep.subr.bf16.mxu0 0
  %13877 = vmatpush1.bf16.msra.mxu0 %v13849
  %13878 = vmatprep.subr.bf16.mxu0 0
  %13879 = vmatpush1.bf16.msra.mxu0 %v13848
  %13880 = vmatprep.subr.bf16.mxu0 0
  %13881 = vmatpush2.bf16.msra.mxu0 0
  %13882 = vmatprep.subr.bf16.mxu0 0
  %13883 = vmatpush2.bf16.msra.mxu0 0
  %13884 = vmatprep.subr.bf16.mxu0 0
  %13885 = vmatpush2.bf16.msra.mxu0 0
  %13886 = vmatprep.subr.bf16.mxu0 0
  %13887 = vmatpush2.bf16.msra.mxu0 0
  %13888 = vmatprep.subr.bf16.mxu0 0
  %13889 = vmatpush2.bf16.msra.mxu0 0
  %13890 = vmatprep.subr.bf16.mxu0 0
  %13891 = vmatpush2.bf16.msra.mxu0 0
  %13892 = vmatprep.subr.bf16.mxu0 0
  %13893 = vmatpush2.bf16.msra.mxu0 0
  %13894 = vmatprep.subr.bf16.mxu0 0
  %13895 = vmatpush2.bf16.msra.mxu0 0
  %13896 = vmatprep.mubr.bf16.mxu0 0
  %13897 = vmatmul.mubr.bf16.gmra.mxu0 %v13798
  %v13898 = vpop.f32.mrf.mxu0
  %v13899 = vadd.f32 0.0, %v13898
  %v13900 = vpop.f32.mrf.mxu0
  %v13901 = vpop.f32.mrf.mxu0
  %v13902 = vpop.f32.mrf.mxu0
  %13903 = vdwg.mxu0
  %v13904 = vadd.f32 %v13797, %v13899
  %v13905 = vpack.c.bf16 %v12302, %v12302
  %s13906 = scalar_lea.vmem %s6, 960
  %v13907 = vld [vmem:[%s13906] sm:$0xf]
  %v13908 = vld [vmem:[%s13906 + $0x4] sm:$0xf]
  %v13909 = vld [vmem:[%s13906 + $0x8] sm:$0xf]
  %v13910 = vld [vmem:[%s13906 + $0xc] sm:$0xf]
  %v13911 = vld [vmem:[%s13906 + $0x10] sm:$0xf]
  %v13912 = vld [vmem:[%s13906 + $0x14] sm:$0xf]
  %v13913 = vld [vmem:[%s13906 + $0x18] sm:$0xf]
  %v13914 = vld [vmem:[%s13906 + $0x1c] sm:$0xf]
  %v13915 = vld [vmem:[%s13906 + $0x20] sm:$0xf]
  %v13916 = vld [vmem:[%s13906 + $0x24] sm:$0xf]
  %v13917 = vld [vmem:[%s13906 + $0x28] sm:$0xf]
  %v13918 = vld [vmem:[%s13906 + $0x2c] sm:$0xf]
  %v13919 = vld [vmem:[%s13906 + $0x30] sm:$0xf]
  %v13920 = vld [vmem:[%s13906 + $0x34] sm:$0xf]
  %v13921 = vld [vmem:[%s13906 + $0x38] sm:$0xf]
  %v13922 = vld [vmem:[%s13906 + $0x3c] sm:$0xf]
  %v13939 = vunpack.c.l.b16 %v13907
  %v13940 = vunpack.c.l.b16 %v13908
  %v13941 = vunpack.c.l.b16 %v13909
  %v13942 = vunpack.c.l.b16 %v13910
  %v13943 = vunpack.c.l.b16 %v13911
  %v13944 = vunpack.c.l.b16 %v13912
  %v13945 = vunpack.c.l.b16 %v13913
  %v13946 = vunpack.c.l.b16 %v13914
  %v13947 = vunpack.c.l.b16 %v13915
  %v13948 = vunpack.c.l.b16 %v13916
  %v13949 = vunpack.c.l.b16 %v13917
  %v13950 = vunpack.c.l.b16 %v13918
  %v13951 = vunpack.c.l.b16 %v13919
  %v13952 = vunpack.c.l.b16 %v13920
  %v13953 = vunpack.c.l.b16 %v13921
  %v13954 = vunpack.c.l.b16 %v13922
  %v13955 = vpack.c.b16 %v13940, %v13939
  %v13956 = vpack.c.b16 %v13942, %v13941
  %v13957 = vpack.c.b16 %v13944, %v13943
  %v13958 = vpack.c.b16 %v13946, %v13945
  %v13959 = vpack.c.b16 %v13948, %v13947
  %v13960 = vpack.c.b16 %v13950, %v13949
  %v13961 = vpack.c.b16 %v13952, %v13951
  %v13962 = vpack.c.b16 %v13954, %v13953
  %13971 = vmatprep.subr.bf16.mxu0 0
  %13972 = vmatpush1.bf16.msra.mxu0 %v13962
  %13973 = vmatprep.subr.bf16.mxu0 0
  %13974 = vmatpush1.bf16.msra.mxu0 %v13961
  %13975 = vmatprep.subr.bf16.mxu0 0
  %13976 = vmatpush1.bf16.msra.mxu0 %v13960
  %13977 = vmatprep.subr.bf16.mxu0 0
  %13978 = vmatpush1.bf16.msra.mxu0 %v13959
  %13979 = vmatprep.subr.bf16.mxu0 0
  %13980 = vmatpush1.bf16.msra.mxu0 %v13958
  %13981 = vmatprep.subr.bf16.mxu0 0
  %13982 = vmatpush1.bf16.msra.mxu0 %v13957
  %13983 = vmatprep.subr.bf16.mxu0 0
  %13984 = vmatpush1.bf16.msra.mxu0 %v13956
  %13985 = vmatprep.subr.bf16.mxu0 0
  %13986 = vmatpush1.bf16.msra.mxu0 %v13955
  %13987 = vmatprep.subr.bf16.mxu0 0
  %13988 = vmatpush2.bf16.msra.mxu0 0
  %13989 = vmatprep.subr.bf16.mxu0 0
  %13990 = vmatpush2.bf16.msra.mxu0 0
  %13991 = vmatprep.subr.bf16.mxu0 0
  %13992 = vmatpush2.bf16.msra.mxu0 0
  %13993 = vmatprep.subr.bf16.mxu0 0
  %13994 = vmatpush2.bf16.msra.mxu0 0
  %13995 = vmatprep.subr.bf16.mxu0 0
  %13996 = vmatpush2.bf16.msra.mxu0 0
  %13997 = vmatprep.subr.bf16.mxu0 0
  %13998 = vmatpush2.bf16.msra.mxu0 0
  %13999 = vmatprep.subr.bf16.mxu0 0
  %14000 = vmatpush2.bf16.msra.mxu0 0
  %14001 = vmatprep.subr.bf16.mxu0 0
  %14002 = vmatpush2.bf16.msra.mxu0 0
  %14003 = vmatprep.mubr.bf16.mxu0 0
  %14004 = vmatmul.mubr.bf16.gmra.mxu0 %v13905
  %v14005 = vpop.f32.mrf.mxu0
  %v14006 = vadd.f32 0.0, %v14005
  %v14007 = vpop.f32.mrf.mxu0
  %v14008 = vpop.f32.mrf.mxu0
  %v14009 = vpop.f32.mrf.mxu0
  %14010 = vdwg.mxu0
  %v14011 = vadd.f32 %v13904, %v14006
  %v14012 = vld [vmem:[%s7] sm:$0x1]
  %v14014 = vlaneseq
  %v14015 = vshrl.u32 %v14014, 7
  %v14016 = vsub.s32 0, %v14015
  %v14017 = vrot.slane %v14012, %v14016
  %v14019 = vadd.f32 %v14011, %v14017
  %v14020 = vmax.f32 %v14019, 0.0
  %v14021 = vpack.c.bf16 %v14020, %v14020
  %v14022 = vld [vmem:[%s8] sm:$0xf]
  %v14023 = vld [vmem:[%s8 + $0x4] sm:$0xf]
  %v14024 = vld [vmem:[%s8 + $0x8] sm:$0xf]
  %v14025 = vld [vmem:[%s8 + $0xc] sm:$0xf]
  %v14026 = vld [vmem:[%s8 + $0x10] sm:$0xf]
  %v14027 = vld [vmem:[%s8 + $0x14] sm:$0xf]
  %v14028 = vld [vmem:[%s8 + $0x18] sm:$0xf]
  %v14029 = vld [vmem:[%s8 + $0x1c] sm:$0xf]
  %v14030 = vld [vmem:[%s8 + $0x20] sm:$0xf]
  %v14031 = vld [vmem:[%s8 + $0x24] sm:$0xf]
  %v14032 = vld [vmem:[%s8 + $0x28] sm:$0xf]
  %v14033 = vld [vmem:[%s8 + $0x2c] sm:$0xf]
  %v14034 = vld [vmem:[%s8 + $0x30] sm:$0xf]
  %v14035 = vld [vmem:[%s8 + $0x34] sm:$0xf]
  %v14036 = vld [vmem:[%s8 + $0x38] sm:$0xf]
  %v14037 = vld [vmem:[%s8 + $0x3c] sm:$0xf]
  %v14038 = vld [vmem:[%s9] sm:$0x1]
  %v14040 = vlaneseq
  %v14041 = vshrl.u32 %v14040, 7
  %v14042 = vsub.s32 0, %v14041
  %v14043 = vrot.slane %v14038, %v14042
  %v14061 = vunpack.c.l.b16 %v14022
  %v14062 = vunpack.c.l.b16 %v14023
  %v14063 = vunpack.c.l.b16 %v14024
  %v14064 = vunpack.c.l.b16 %v14025
  %v14065 = vunpack.c.l.b16 %v14026
  %v14066 = vunpack.c.l.b16 %v14027
  %v14067 = vunpack.c.l.b16 %v14028
  %v14068 = vunpack.c.l.b16 %v14029
  %v14069 = vunpack.c.l.b16 %v14030
  %v14070 = vunpack.c.l.b16 %v14031
  %v14071 = vunpack.c.l.b16 %v14032
  %v14072 = vunpack.c.l.b16 %v14033
  %v14073 = vunpack.c.l.b16 %v14034
  %v14074 = vunpack.c.l.b16 %v14035
  %v14075 = vunpack.c.l.b16 %v14036
  %v14076 = vunpack.c.l.b16 %v14037
  %v14077 = vpack.c.b16 %v14062, %v14061
  %v14078 = vpack.c.b16 %v14064, %v14063
  %v14079 = vpack.c.b16 %v14066, %v14065
  %v14080 = vpack.c.b16 %v14068, %v14067
  %v14081 = vpack.c.b16 %v14070, %v14069
  %v14082 = vpack.c.b16 %v14072, %v14071
  %v14083 = vpack.c.b16 %v14074, %v14073
  %v14084 = vpack.c.b16 %v14076, %v14075
  %14093 = vmatprep.subr.bf16.mxu0 0
  %14094 = vmatpush1.bf16.msra.mxu0 %v14084
  %14095 = vmatprep.subr.bf16.mxu0 0
  %14096 = vmatpush1.bf16.msra.mxu0 %v14083
  %14097 = vmatprep.subr.bf16.mxu0 0
  %14098 = vmatpush1.bf16.msra.mxu0 %v14082
  %14099 = vmatprep.subr.bf16.mxu0 0
  %14100 = vmatpush1.bf16.msra.mxu0 %v14081
  %14101 = vmatprep.subr.bf16.mxu0 0
  %14102 = vmatpush1.bf16.msra.mxu0 %v14080
  %14103 = vmatprep.subr.bf16.mxu0 0
  %14104 = vmatpush1.bf16.msra.mxu0 %v14079
  %14105 = vmatprep.subr.bf16.mxu0 0
  %14106 = vmatpush1.bf16.msra.mxu0 %v14078
  %14107 = vmatprep.subr.bf16.mxu0 0
  %14108 = vmatpush1.bf16.msra.mxu0 %v14077
  %14109 = vmatprep.subr.bf16.mxu0 0
  %14110 = vmatpush2.bf16.msra.mxu0 0
  %14111 = vmatprep.subr.bf16.mxu0 0
  %14112 = vmatpush2.bf16.msra.mxu0 0
  %14113 = vmatprep.subr.bf16.mxu0 0
  %14114 = vmatpush2.bf16.msra.mxu0 0
  %14115 = vmatprep.subr.bf16.mxu0 0
  %14116 = vmatpush2.bf16.msra.mxu0 0
  %14117 = vmatprep.subr.bf16.mxu0 0
  %14118 = vmatpush2.bf16.msra.mxu0 0
  %14119 = vmatprep.subr.bf16.mxu0 0
  %14120 = vmatpush2.bf16.msra.mxu0 0
  %14121 = vmatprep.subr.bf16.mxu0 0
  %14122 = vmatpush2.bf16.msra.mxu0 0
  %14123 = vmatprep.subr.bf16.mxu0 0
  %14124 = vmatpush2.bf16.msra.mxu0 0
  %14125 = vmatprep.mubr.bf16.mxu0 0
  %14126 = vmatmul.mubr.bf16.gmra.mxu0 %v14021
  %v14127 = vpop.f32.mrf.mxu0
  %v14128 = vadd.f32 %v14043, %v14127
  %v14129 = vpop.f32.mrf.mxu0
  %v14130 = vpop.f32.mrf.mxu0
  %v14131 = vpop.f32.mrf.mxu0
  %14132 = vdwg.mxu0
  %v14133 = vlaneseq
  %v14134 = vand.u32 %v14133, 127
  %vm14135 = vcmp.lt.s32.totalorder %v14134, 10
  %v14136 = vsel %vm14135, %v14128, -1e+30
  %14137 = vmax.xlane.f32.xlu0 %v14136
  %v14138 = vpop.xlane.xlu0 %14137
  %v14139 = vsub.f32 %v14136, %v14138
  %v14140 = vmul.f32 %v14139, 1.442695
  %v14141 = vpow.pop %v14140
  %14142 = vadd.xlane.f32.xlu0 %v14141
  %v14143 = vpop.xlane.xlu0 %14142
  %v14144 = vlog2.pop %v14143
  %v14145 = vmul.f32 %v14144, 0.6931472
  %v14146 = vsub.f32 %v14139, %v14145
  %14147 = vst [vmem:[%s10] sm:$0xff] %v14146
  // Predicated region
  $region42: #{custom_model_forward.1} parent=0 // pred_check
    _
  $region43: #{custom_model_forward.1} parent=0 // pred_check_branch
    %14149 = sbr.rel (0) target = $region45
  $region44: #{custom_model_forward.1} parent=0 // pred_region
    _
  $region45: #{custom_model_forward.1} parent=0 // pred_fallthru
    _
  // Predicated region
  $region46: #{custom_model_forward.1} parent=0 // pred_check
    _
  $region47: #{custom_model_forward.1} parent=0 // pred_check_branch
    %14151 = sbr.rel (0) target = $region49
  $region48: #{custom_model_forward.1} parent=0 // pred_region
    _
  $region49: #{custom_model_forward.1} parent=0 // pred_fallthru
    _

</llo_original>
